<compile_context>
chip_gen: v5e
topology: v5e:2x2
jax: 0.10.0
libtpu: 0.0.40
codegen_flags: <defaults>
</compile_context>

<pallas_src>
import functools

import jax
import jax.numpy as jnp
from jax import lax
from jax.experimental import pallas as pl
from jax.experimental.pallas import tpu as pltpu


def _round_up(x, m):
    return ((x + m - 1) // m) * m


# ----------------------------------------------------------------------------
# Pallas kernel: one (TM, N) tile of  X @ W + b  [+ LeakyReLU(0.01)]
# (W and b are full-N, VMEM-resident across the whole grid.)
# ----------------------------------------------------------------------------
def _mm_bias_act_kernel(x_ref, w_ref, b_ref, o_ref, *, act):
    acc = jnp.dot(x_ref[...], w_ref[...], preferred_element_type=jnp.float32)
    acc = acc + b_ref[...]                               # (1, N) bias broadcasts
    if act:
        acc = jnp.where(acc >= 0.0, acc, 0.01 * acc)     # LeakyReLU, slope 0.01
    o_ref[...] = acc.astype(o_ref.dtype)


_SMALL_M = 16        # below this a Pallas launch is pure overhead -> jnp.dot
_SMALL_N = 16        # N=1..3 outputs (collapsed branches) -> jnp.dot
_TM_CAP = 1024       # fat M tiles amortize the ~0.35us/step grid overhead
_VMEM_LIMIT_BYTES = 48 * 1024 * 1024   # safe on v7x (64 MiB/TC), ample elsewhere


def matmul_bias(x, wm, b, *, act, out_dtype=jnp.float32):
    """y = x @ wm + b (optional LeakyReLU).  x:(M,K)  wm:(K,N)  b:(1,N)."""
    M, K = x.shape
    K2, N = wm.shape
    assert K == K2

    if M < _SMALL_M or N < _SMALL_N:
        # Tiny matmul (style vector, collapsed content/domain branch): XLA dot.
        y = jnp.dot(x.astype(jnp.float32), wm.astype(jnp.float32),
                    preferred_element_type=jnp.float32) + b.astype(jnp.float32)
        if act:
            y = jnp.where(y >= 0.0, y, 0.01 * y)
        return y.astype(out_dtype)

    xb = x.astype(jnp.bfloat16)

    # ---- M tiling only; K and N are never tiled (weights stay VMEM-resident).
    Mp8 = _round_up(M, 8)
    TM = min(_TM_CAP, Mp8)
    if Mp8 // TM < 2 and Mp8 >= 16:
        # v7x shards "parallel" grid axes over 2 TensorCores: always give the M
        # axis at least 2 steps so neither core idles.  Costs ~nothing on
        # single-TC v5e/v6e.
        TM = _round_up((Mp8 + 1) // 2, 8)
    Mp = _round_up(M, TM)
    if Mp != M:
        xb = jnp.pad(xb, ((0, Mp - M), (0, 0)))

    out = pl.pallas_call(
        functools.partial(_mm_bias_act_kernel, act=act),
        out_shape=jax.ShapeDtypeStruct((Mp, N), out_dtype),
        grid=(Mp // TM,),
        in_specs=[
            pl.BlockSpec((TM, K), lambda i: (i, 0)),   # full (unpadded) K
            pl.BlockSpec((K, N), lambda i: (0, 0)),    # full weight, DMA'd once
            pl.BlockSpec((1, N), lambda i: (0, 0)),    # full bias, DMA'd once
        ],
        out_specs=pl.BlockSpec((TM, N), lambda i: (i, 0)),   # lane-dense store
        compiler_params=pltpu.CompilerParams(
            dimension_semantics=("parallel",),
            vmem_limit_bytes=_VMEM_LIMIT_BYTES,
        ),
    )(xb, wm, b)

    if Mp != M:
        out = out[:M]
    return out


# ----------------------------------------------------------------------------
# Convolution wrappers (im2col glue + Pallas matmul)
# ----------------------------------------------------------------------------
def _im2col_3x3_s2(x):
    """x: (N,H,W,C) NHWC -> patches (N*Ho*Wo, 9*C), pad=1, stride=2."""
    N, H, W, C = x.shape
    Ho = (H - 1) // 2 + 1
    Wo = (W - 1) // 2 + 1
    xp = jnp.pad(x, ((0, 0), (1, 1), (1, 1), (0, 0)))
    cols = [xp[:, ky:ky + 2 * Ho - 1:2, kx:kx + 2 * Wo - 1:2, :]
            for ky in range(3) for kx in range(3)]
    patches = jnp.stack(cols, axis=3)              # (N, Ho, Wo, 9, C)
    return patches.reshape(N * Ho * Wo, 9 * C), Ho, Wo


def conv3x3_s2(x, wm, b, *, act, out_dtype=jnp.bfloat16):
    """3x3 stride-2 pad-1 conv.  x NHWC, wm pre-transformed (9C, O) bf16."""
    # TODO(synk): fuse im2col into the Pallas kernel to avoid the 9x
    #             patch-matrix HBM round trip.
    N = x.shape[0]
    O = wm.shape[1]
    patches, Ho, Wo = _im2col_3x3_s2(x.astype(jnp.bfloat16))   # bf16 patches
    y = matmul_bias(patches, wm, b, act=act, out_dtype=out_dtype)
    return y.reshape(N, Ho, Wo, O)


def conv3x3_s2_first(x, w_hwio, b, *, act, out_dtype=jnp.bfloat16):
    """First encoder layer (3->64, K=27): lane padding makes the Pallas matmul
    ~21% efficient for a ~14 MFLOP layer, so use XLA's conv directly."""
    y = lax.conv_general_dilated(
        x.astype(jnp.bfloat16), w_hwio,
        window_strides=(2, 2), padding=((1, 1), (1, 1)),
        dimension_numbers=("NHWC", "HWIO", "NHWC"),
        preferred_element_type=jnp.float32)
    y = y + b.reshape(1, 1, 1, -1)
    if act:
        y = jnp.where(y >= 0.0, y, 0.01 * y)
    return y.astype(out_dtype)


def nearest_resize(x, H, W):
    """F.interpolate(mode='nearest') on NHWC input."""
    n, h, w, c = x.shape
    if H % h == 0 and W % w == 0:
        # Integer upscale: cheap broadcast/reshape (no gathers).
        fh, fw = H // h, W // w
        x = jnp.broadcast_to(x[:, :, None, :, None, :], (n, h, fh, w, fw, c))
        return x.reshape(n, H, W, c)
    ri = (jnp.arange(H) * h // H).astype(jnp.int32)
    ci = (jnp.arange(W) * w // W).astype(jnp.int32)
    return x[:, ri][:, :, ci]


# ----------------------------------------------------------------------------
# Parameter construction (torch conv layout, then pre-transformed once)
# ----------------------------------------------------------------------------
def _conv_params(key, out_c, in_c, k):
    kw, kb = jax.random.split(key)
    fan_in = in_c * k * k
    scale = 1.0 / jnp.sqrt(jnp.float32(fan_in))
    w = jax.random.normal(kw, (out_c, in_c, k, k), jnp.float32) * scale
    b = jax.random.normal(kb, (out_c,), jnp.float32) * scale
    return w, b


def _to_mat_3x3(w):
    # (O,C,3,3) -> (9C, O); row order (ky, kx, c) matches _im2col_3x3_s2.
    return jnp.transpose(w, (2, 3, 1, 0)).reshape(-1, w.shape[0])


def _to_mat_1x1(w):
    # (O,C,1,1) -> (C, O)
    return w.reshape(w.shape[0], w.shape[1]).T


def init_params(key):
    keys = jax.random.split(key, 16)
    raw = {}
    chans = [3, 64, 128, 256, 512]
    for i in range(4):
        raw[f"ce_w{i}"], raw[f"ce_b{i}"] = _conv_params(keys[i], chans[i + 1], chans[i], 3)
        raw[f"se_w{i}"], raw[f"se_b{i}"] = _conv_params(keys[4 + i], chans[i + 1], chans[i], 3)
    raw["se_out_w"], raw["se_out_b"] = _conv_params(keys[8], 512, 512, 1)
    raw["cb_w0"], raw["cb_b0"] = _conv_params(keys[9], 256, 512, 1)
    raw["cb_w1"], raw["cb_b1"] = _conv_params(keys[10], 1, 256, 1)
    raw["db_w0"], raw["db_b0"] = _conv_params(keys[11], 512, 1024, 1)
    raw["db_w1"], raw["db_b1"] = _conv_params(keys[12], 256, 512, 1)
    raw["db_w2"], raw["db_b2"] = _conv_params(keys[13], 3, 256, 1)

    p = {}
    # Encoders: layer 0 kept in HWIO conv layout (handled by lax.conv);
    # layers 1-3 pre-transformed to bf16 (9C, O) matmul weights + (1, O) f32 bias.
    for enc in ("ce", "se"):
        p[f"{enc}_w0_hwio"] = jnp.transpose(raw[f"{enc}_w0"], (2, 3, 1, 0)).astype(jnp.bfloat16)
        p[f"{enc}_b0"] = raw[f"{enc}_b0"]
        for i in range(1, 4):
            p[f"{enc}_wm{i}"] = _to_mat_3x3(raw[f"{enc}_w{i}"]).astype(jnp.bfloat16)
            p[f"{enc}_b{i}"] = raw[f"{enc}_b{i}"].reshape(1, -1)

    # Style 1x1 output on a 1x1 map (tiny M): keep f32, goes through jnp.dot.
    p["se_out_wm"] = _to_mat_1x1(raw["se_out_w"])
    p["se_out_b"] = raw["se_out_b"].reshape(1, -1)

    # Content branch: collapse two activation-free 1x1 convs into one affine.
    #   y = (x@W0 + b0)@W1 + b1 = x@(W0@W1) + (b0@W1 + b1)
    w0, w1 = _to_mat_1x1(raw["cb_w0"]), _to_mat_1x1(raw["cb_w1"])
    p["cb_wm"] = w0 @ w1                                            # (512, 1)
    p["cb_b"] = (raw["cb_b0"] @ w1 + raw["cb_b1"]).reshape(1, -1)   # (1, 1)

    # Domain branch: collapse three activation-free 1x1 convs into one affine.
    d0, d1, d2 = (_to_mat_1x1(raw["db_w0"]), _to_mat_1x1(raw["db_w1"]),
                  _to_mat_1x1(raw["db_w2"]))
    p["db_wm"] = d0 @ d1 @ d2                                       # (1024, 3)
    p["db_b"] = ((raw["db_b0"] @ d1 + raw["db_b1"]) @ d2 + raw["db_b2"]).reshape(1, -1)
    return p


# ----------------------------------------------------------------------------
# OPNet forward
# ----------------------------------------------------------------------------
def encoder_trunk(x_nhwc, p, prefix):
    x = conv3x3_s2_first(x_nhwc, p[f"{prefix}_w0_hwio"], p[f"{prefix}_b0"], act=True)
    for i in range(1, 4):
        x = conv3x3_s2(x, p[f"{prefix}_wm{i}"], p[f"{prefix}_b{i}"], act=True)
    return x  # NHWC, bf16


def style_encoder(x_nhwc, p):
    x = encoder_trunk(x_nhwc, p, "se")
    # AdaptiveAvgPool2d(1): mean over spatial dims (in f32) -> (N, 512)
    x = jnp.mean(x.astype(jnp.float32), axis=(1, 2))
    # 1x1 conv on a 1x1 spatial map == affine (tiny M -> jnp.dot path).
    return matmul_bias(x, p["se_out_wm"], p["se_out_b"], act=False,
                       out_dtype=jnp.float32)          # (N, 512)


def content_branch(c_nhwc, p):
    # Collapsed 512 -> 1 affine (exact: the torch branch has no activations).
    N, H, W, C = c_nhwc.shape
    y = matmul_bias(c_nhwc.reshape(N * H * W, C), p["cb_wm"], p["cb_b"],
                    act=False, out_dtype=jnp.float32)
    return y.reshape(N, H, W, 1)


def domain_branch(s_cat, p):
    # Collapsed 1024 -> 3 affine.
    return matmul_bias(s_cat, p["db_wm"], p["db_b"], act=False,
                       out_dtype=jnp.float32)          # (N, 3)


def opnet_forward(p, imgA, imgB, pathA, pathB):
    """Inputs are NCHW (PyTorch convention)."""
    to_nhwc = lambda t: jnp.transpose(t, (0, 2, 3, 1))
    to_nchw = lambda t: jnp.transpose(t, (0, 3, 1, 2))

    # --- content path: batch A/B through the shared-weight encoder ----------
    nA = pathA.shape[0]
    if pathA.shape == pathB.shape:
        c = encoder_trunk(to_nhwc(jnp.concatenate([pathA, pathB], axis=0)), p, "ce")
        cb = content_branch(c, p)                  # batched -> 2x M per matmul
        cbA, cbB = cb[:nA], cb[nA:]
    else:
        cbA = content_branch(encoder_trunk(to_nhwc(pathA), p, "ce"), p)
        cbB = content_branch(encoder_trunk(to_nhwc(pathB), p, "ce"), p)
    pA = to_nchw(nearest_resize(cbA, pathA.shape[2], pathA.shape[3]))
    pB = to_nchw(nearest_resize(cbB, pathB.shape[2], pathB.shape[3]))

    # --- style path: batch A/B through the shared-weight encoder ------------
    if imgA.shape == imgB.shape:
        s = style_encoder(to_nhwc(jnp.concatenate([imgA, imgB], axis=0)), p)
        sA, sB = s[:imgA.shape[0]], s[imgA.shape[0]:]
    else:
        sA = style_encoder(to_nhwc(imgA), p)
        sB = style_encoder(to_nhwc(imgB), p)

    # torch.cat((sA, sB), dim=1) -> channel concat (spatial dims are 1x1)
    s_cat = jnp.concatenate([sA, sB], axis=-1)     # (N, 1024)
    domain_cls = domain_branch(s_cat, p)           # (N, 3)
    return pA, pB, domain_cls


# ----------------------------------------------------------------------------
if __name__ == "__main__":
    key = jax.random.PRNGKey(0)
    kp, k1, k2, k3, k4 = jax.random.split(key, 5)
    params = init_params(kp)

    B, C, H, W = 2, 3, 64, 64
    imgA = jax.random.normal(k1, (B, C, H, W), jnp.float32)
    imgB = jax.random.normal(k2, (B, C, H, W), jnp.float32)
    pathA = jax.random.normal(k3, (B, C, H, W), jnp.float32)
    pathB = jax.random.normal(k4, (B, C, H, W), jnp.float32)

    pA, pB, domain_cls = jax.jit(opnet_forward)(params, imgA, imgB, pathA, pathB)
    jax.block_until_ready((pA, pB, domain_cls))

    assert pA.shape == (B, 1, H, W)
    assert pB.shape == (B, 1, H, W)
    assert domain_cls.shape == (B, 3)
    print("KERNEL_OK")
</pallas_src>

<mosaic_0001>
module attributes {stable_mosaic.version = 11 : i64} {
  func.func @_mm_bias_act_kernel(%arg0: i32, %arg1: memref<512x576xbf16, #tpu.memory_space<vmem>>, %arg2: memref<576x128xbf16, #tpu.memory_space<vmem>>, %arg3: memref<1x128xf32, #tpu.memory_space<vmem>>, %arg4: memref<512x128xbf16, #tpu.memory_space<vmem>>) attributes {dimension_semantics = [#tpu.dimension_semantics<parallel>], iteration_bounds = array<i64: 2>, scalar_prefetch = 0 : i64, scratch_operands = 0 : i64, tpu.core_type = #tpu.core_type<tc>, window_params = [{transform_indices = @transform_0, window_bounds = array<i64: 512, 576>}, {pipeline_mode = #tpu.pipeline_mode<synchronous>, transform_indices = @transform_1, window_bounds = array<i64: 576, 128>}, {pipeline_mode = #tpu.pipeline_mode<synchronous>, transform_indices = @transform_2, window_bounds = array<i64: 1, 128>}, {transform_indices = @transform_3, window_bounds = array<i64: 512, 128>}]} {
    %c0 = arith.constant 0 : index
    %c0_0 = arith.constant 0 : index
    %0 = vector.load %arg1[%c0, %c0_0] : memref<512x576xbf16, #tpu.memory_space<vmem>>, vector<512x576xbf16>
    %c0_1 = arith.constant 0 : index
    %c0_2 = arith.constant 0 : index
    %1 = vector.load %arg2[%c0_1, %c0_2] : memref<576x128xbf16, #tpu.memory_space<vmem>>, vector<576x128xbf16>
    %cst = arith.constant dense<0.000000e+00> : vector<512x128xf32>
    %2 = tpu.matmul %0, %1, %cst {dimension_numbers = #tpu.dot_dimension_numbers<[1], [0], [0], [1], [0, 0, 1, 1], [], []>} : vector<512x576xbf16>, vector<576x128xbf16>, vector<512x128xf32> -> vector<512x128xf32>
    %c0_3 = arith.constant 0 : index
    %c0_4 = arith.constant 0 : index
    %3 = vector.load %arg3[%c0_3, %c0_4] : memref<1x128xf32, #tpu.memory_space<vmem>>, vector<1x128xf32>
    %4 = vector.broadcast %3 : vector<1x128xf32> to vector<512x128xf32>
    %5 = arith.addf %2, %4 : vector<512x128xf32>
    %cst_5 = arith.constant 0.000000e+00 : f32
    %6 = vector.broadcast %cst_5 : f32 to vector<512x128xf32>
    %7 = arith.cmpf oge, %5, %6 : vector<512x128xf32>
    %cst_6 = arith.constant 0.00999999977 : f32
    %8 = vector.broadcast %cst_6 : f32 to vector<512x128xf32>
    %9 = arith.mulf %8, %5 : vector<512x128xf32>
    %10 = arith.select %7, %5, %9 : vector<512x128xi1>, vector<512x128xf32>
    %11 = arith.truncf %10 : vector<512x128xf32> to vector<512x128xbf16>
    %c0_7 = arith.constant 0 : index
    %c0_8 = arith.constant 0 : index
    %12 = vector.load %arg4[%c0_7, %c0_8] : memref<512x128xbf16, #tpu.memory_space<vmem>>, vector<512x128xbf16>
    tpu.vector_store %arg4[%c0_7, %c0_8], %11 {strides = array<i32>} : memref<512x128xbf16, #tpu.memory_space<vmem>>, vector<512x128xbf16>,
    return
  }
  func.func @transform_0(%arg0: i32) -> (i32, i32) {
    %c0_i32 = arith.constant 0 : i32
    %c0_i32_0 = arith.constant 0 : i32
    return %arg0, %c0_i32 : i32, i32
  }
  func.func @transform_1(%arg0: i32) -> (i32, i32) {
    %c0_i32 = arith.constant 0 : i32
    %c0_i32_0 = arith.constant 0 : i32
    %c0_i32_1 = arith.constant 0 : i32
    return %c0_i32, %c0_i32_0 : i32, i32
  }
  func.func @transform_2(%arg0: i32) -> (i32, i32) {
    %c0_i32 = arith.constant 0 : i32
    %c0_i32_0 = arith.constant 0 : i32
    %c0_i32_1 = arith.constant 0 : i32
    return %c0_i32, %c0_i32_0 : i32, i32
  }
  func.func @transform_3(%arg0: i32) -> (i32, i32) {
    %c0_i32 = arith.constant 0 : i32
    %c0_i32_0 = arith.constant 0 : i32
    return %arg0, %c0_i32 : i32, i32
  }
}

module attributes {stable_mosaic.version = 11 : i64} {
  func.func @_mm_bias_act_kernel(%arg0: i32, %arg1: memref<128x1152xbf16, #tpu.memory_space<vmem>>, %arg2: memref<1152x256xbf16, #tpu.memory_space<vmem>>, %arg3: memref<1x256xf32, #tpu.memory_space<vmem>>, %arg4: memref<128x256xbf16, #tpu.memory_space<vmem>>) attributes {dimension_semantics = [#tpu.dimension_semantics<parallel>], iteration_bounds = array<i64: 2>, scalar_prefetch = 0 : i64, scratch_operands = 0 : i64, tpu.core_type = #tpu.core_type<tc>, window_params = [{transform_indices = @transform_0, window_bounds = array<i64: 128, 1152>}, {pipeline_mode = #tpu.pipeline_mode<synchronous>, transform_indices = @transform_1, window_bounds = array<i64: 1152, 256>}, {pipeline_mode = #tpu.pipeline_mode<synchronous>, transform_indices = @transform_2, window_bounds = array<i64: 1, 256>}, {transform_indices = @transform_3, window_bounds = array<i64: 128, 256>}]} {
    %c0 = arith.constant 0 : index
    %c0_0 = arith.constant 0 : index
    %0 = vector.load %arg1[%c0, %c0_0] : memref<128x1152xbf16, #tpu.memory_space<vmem>>, vector<128x1152xbf16>
    %c0_1 = arith.constant 0 : index
    %c0_2 = arith.constant 0 : index
    %1 = vector.load %arg2[%c0_1, %c0_2] : memref<1152x256xbf16, #tpu.memory_space<vmem>>, vector<1152x256xbf16>
    %cst = arith.constant dense<0.000000e+00> : vector<128x256xf32>
    %2 = tpu.matmul %0, %1, %cst {dimension_numbers = #tpu.dot_dimension_numbers<[1], [0], [0], [1], [0, 0, 1, 1], [], []>} : vector<128x1152xbf16>, vector<1152x256xbf16>, vector<128x256xf32> -> vector<128x256xf32>
    %c0_3 = arith.constant 0 : index
    %c0_4 = arith.constant 0 : index
    %3 = vector.load %arg3[%c0_3, %c0_4] : memref<1x256xf32, #tpu.memory_space<vmem>>, vector<1x256xf32>
    %4 = vector.broadcast %3 : vector<1x256xf32> to vector<128x256xf32>
    %5 = arith.addf %2, %4 : vector<128x256xf32>
    %cst_5 = arith.constant 0.000000e+00 : f32
    %6 = vector.broadcast %cst_5 : f32 to vector<128x256xf32>
    %7 = arith.cmpf oge, %5, %6 : vector<128x256xf32>
    %cst_6 = arith.constant 0.00999999977 : f32
    %8 = vector.broadcast %cst_6 : f32 to vector<128x256xf32>
    %9 = arith.mulf %8, %5 : vector<128x256xf32>
    %10 = arith.select %7, %5, %9 : vector<128x256xi1>, vector<128x256xf32>
    %11 = arith.truncf %10 : vector<128x256xf32> to vector<128x256xbf16>
    %c0_7 = arith.constant 0 : index
    %c0_8 = arith.constant 0 : index
    %12 = vector.load %arg4[%c0_7, %c0_8] : memref<128x256xbf16, #tpu.memory_space<vmem>>, vector<128x256xbf16>
    tpu.vector_store %arg4[%c0_7, %c0_8], %11 {strides = array<i32>} : memref<128x256xbf16, #tpu.memory_space<vmem>>, vector<128x256xbf16>,
    return
  }
  func.func @transform_0(%arg0: i32) -> (i32, i32) {
    %c0_i32 = arith.constant 0 : i32
    %c0_i32_0 = arith.constant 0 : i32
    return %arg0, %c0_i32 : i32, i32
  }
  func.func @transform_1(%arg0: i32) -> (i32, i32) {
    %c0_i32 = arith.constant 0 : i32
    %c0_i32_0 = arith.constant 0 : i32
    %c0_i32_1 = arith.constant 0 : i32
    return %c0_i32, %c0_i32_0 : i32, i32
  }
  func.func @transform_2(%arg0: i32) -> (i32, i32) {
    %c0_i32 = arith.constant 0 : i32
    %c0_i32_0 = arith.constant 0 : i32
    %c0_i32_1 = arith.constant 0 : i32
    return %c0_i32, %c0_i32_0 : i32, i32
  }
  func.func @transform_3(%arg0: i32) -> (i32, i32) {
    %c0_i32 = arith.constant 0 : i32
    %c0_i32_0 = arith.constant 0 : i32
    return %arg0, %c0_i32 : i32, i32
  }
}

module attributes {stable_mosaic.version = 11 : i64} {
  func.func @_mm_bias_act_kernel(%arg0: i32, %arg1: memref<32x2304xbf16, #tpu.memory_space<vmem>>, %arg2: memref<2304x512xbf16, #tpu.memory_space<vmem>>, %arg3: memref<1x512xf32, #tpu.memory_space<vmem>>, %arg4: memref<32x512xbf16, #tpu.memory_space<vmem>>) attributes {dimension_semantics = [#tpu.dimension_semantics<parallel>], iteration_bounds = array<i64: 2>, scalar_prefetch = 0 : i64, scratch_operands = 0 : i64, tpu.core_type = #tpu.core_type<tc>, window_params = [{transform_indices = @transform_0, window_bounds = array<i64: 32, 2304>}, {pipeline_mode = #tpu.pipeline_mode<synchronous>, transform_indices = @transform_1, window_bounds = array<i64: 2304, 512>}, {pipeline_mode = #tpu.pipeline_mode<synchronous>, transform_indices = @transform_2, window_bounds = array<i64: 1, 512>}, {transform_indices = @transform_3, window_bounds = array<i64: 32, 512>}]} {
    %c0 = arith.constant 0 : index
    %c0_0 = arith.constant 0 : index
    %0 = vector.load %arg1[%c0, %c0_0] : memref<32x2304xbf16, #tpu.memory_space<vmem>>, vector<32x2304xbf16>
    %c0_1 = arith.constant 0 : index
    %c0_2 = arith.constant 0 : index
    %1 = vector.load %arg2[%c0_1, %c0_2] : memref<2304x512xbf16, #tpu.memory_space<vmem>>, vector<2304x512xbf16>
    %cst = arith.constant dense<0.000000e+00> : vector<32x512xf32>
    %2 = tpu.matmul %0, %1, %cst {dimension_numbers = #tpu.dot_dimension_numbers<[1], [0], [0], [1], [0, 0, 1, 1], [], []>} : vector<32x2304xbf16>, vector<2304x512xbf16>, vector<32x512xf32> -> vector<32x512xf32>
    %c0_3 = arith.constant 0 : index
    %c0_4 = arith.constant 0 : index
    %3 = vector.load %arg3[%c0_3, %c0_4] : memref<1x512xf32, #tpu.memory_space<vmem>>, vector<1x512xf32>
    %4 = vector.broadcast %3 : vector<1x512xf32> to vector<32x512xf32>
    %5 = arith.addf %2, %4 : vector<32x512xf32>
    %cst_5 = arith.constant 0.000000e+00 : f32
    %6 = vector.broadcast %cst_5 : f32 to vector<32x512xf32>
    %7 = arith.cmpf oge, %5, %6 : vector<32x512xf32>
    %cst_6 = arith.constant 0.00999999977 : f32
    %8 = vector.broadcast %cst_6 : f32 to vector<32x512xf32>
    %9 = arith.mulf %8, %5 : vector<32x512xf32>
    %10 = arith.select %7, %5, %9 : vector<32x512xi1>, vector<32x512xf32>
    %11 = arith.truncf %10 : vector<32x512xf32> to vector<32x512xbf16>
    %c0_7 = arith.constant 0 : index
    %c0_8 = arith.constant 0 : index
    %12 = vector.load %arg4[%c0_7, %c0_8] : memref<32x512xbf16, #tpu.memory_space<vmem>>, vector<32x512xbf16>
    tpu.vector_store %arg4[%c0_7, %c0_8], %11 {strides = array<i32>} : memref<32x512xbf16, #tpu.memory_space<vmem>>, vector<32x512xbf16>,
    return
  }
  func.func @transform_0(%arg0: i32) -> (i32, i32) {
    %c0_i32 = arith.constant 0 : i32
    %c0_i32_0 = arith.constant 0 : i32
    return %arg0, %c0_i32 : i32, i32
  }
  func.func @transform_1(%arg0: i32) -> (i32, i32) {
    %c0_i32 = arith.constant 0 : i32
    %c0_i32_0 = arith.constant 0 : i32
    %c0_i32_1 = arith.constant 0 : i32
    return %c0_i32, %c0_i32_0 : i32, i32
  }
  func.func @transform_2(%arg0: i32) -> (i32, i32) {
    %c0_i32 = arith.constant 0 : i32
    %c0_i32_0 = arith.constant 0 : i32
    %c0_i32_1 = arith.constant 0 : i32
    return %c0_i32, %c0_i32_0 : i32, i32
  }
  func.func @transform_3(%arg0: i32) -> (i32, i32) {
    %c0_i32 = arith.constant 0 : i32
    %c0_i32_0 = arith.constant 0 : i32
    return %arg0, %c0_i32 : i32, i32
  }
}

</mosaic_0001>

<llo_original>
// kernel: opnet_forward.9
$region0: #{opnet_forward.9}
  #allocation0 [shape = 'u32[]', space=smem, size = 0x4, offset = 0x4, fixed_abs, tag = 'smem constant byte address 0x4 - core index']
  #allocation1 [shape = 'u32[72,128]{1,0:T(1,128)}', space=vmem, size = 0x9000, scoped, tag = 'internal scratch']
  %s0 = inlined_call_operand.vmem [shape: bf16[1024,576], index: 0, kind: input, shape index: {}]
  %s1 = inlined_call_operand.vmem [shape: bf16[576,128], index: 1, kind: input, shape index: {}]
  %s2 = inlined_call_operand.vmem [shape: f32[1,128], index: 2, kind: input, shape index: {}]
  %s3 = inlined_call_operand.vmem [shape: bf16[1024,128], index: 3, kind: output, shape index: {}]
  %s4 = sld [smem:[#allocation0]]
  $region45: #{opnet_forward.9} parent=0
    _
  %s6 = ssub.s32 1, %s4
  %s7 = scalar_select 0, %s6, %s4
  loop: start=0, step=1, limit=4
  $region2: #{opnet_forward.9} parent=0 // loop_pre_header
    _
  $region3: #{opnet_forward.9} parent=0 // loop_header
    %s9 = sphi 0, %s13
    %p10 = scmp.ge.s32.totalorder %s9, 4
    %s19 = sphi 0, %s21
    %s22 = sphi 0, %s19
    %s23 = sphi 0, %s22
    %s39 = sphi 0, %s23
    %s43 = sphi 0, %s43
    %s45 = sphi 0, %s43
    %s46 = sphi 0, %s45
    %s60 = sphi 0, %s46
    %s64 = sphi 0, %s64
    %s66 = sphi 0, %s64
    %s67 = sphi 0, %s66
    %s81 = sphi 0, %s67
    %s87 = sphi 0, %s89
    %s90 = sphi 0, %s87
    %s91 = sphi 0, %s90
    %s107 = sphi 0, %s91
  $region4: #{opnet_forward.9} parent=0 // loop_header_branch
    %12 = sbr.rel (%p10) target = $region8
  $region5: #{opnet_forward.9} parent=0 // loop_body
    %s14 = ssub.s32 %s9, 1
    %s15 = ssub.s32 %s9, 2
    %s16 = sadd.s32 %s9, 1
    %s17 = ssub.s32 %s9, %s16
    %p18 = scmp.eq.s32.totalorder %s17, 0
    %s20 = sadd.s32 %s19, 1
    %s21 = scalar_select %p18, %s19, %s20
    %p24 = pneg %p18
    %p25 = scmp.eq.s32.totalorder %s9, 1
    %p26 = por %p24, %p25
    %p27 = scmp.ne.s32.totalorder %s19, %s22
    %p28 = scmp.eq.s32.totalorder %s9, 0
    %p29 = por %p27, %p28
    %p30 = scmp.ne.s32.totalorder %s19, %s22
    %p31 = scmp.eq.s32.totalorder %s14, 1
    %p32 = por %p30, %p31
    %p33 = scmp.ne.s32.totalorder %s22, %s23
    %p34 = scmp.eq.s32.totalorder %s14, 0
    %p35 = por %p33, %p34
    %p36 = scmp.ne.s32.totalorder %s22, %s23
    %p37 = scmp.eq.s32.totalorder %s15, 1
    %p38 = por %p36, %p37
    %p40 = scmp.ne.s32.totalorder %s23, %s39
    %p41 = scmp.eq.s32.totalorder %s15, 0
    %p42 = por %p40, %p41
    %s44 = sadd.s32 %s43, 1
    %p47 = scmp.eq.s32.totalorder %s9, 1
    %p48 = scmp.ne.s32.totalorder %s43, %s45
    %p49 = scmp.eq.s32.totalorder %s9, 0
    %p50 = por %p48, %p49
    %p51 = scmp.ne.s32.totalorder %s43, %s45
    %p52 = scmp.eq.s32.totalorder %s14, 1
    %p53 = por %p51, %p52
    %p54 = scmp.ne.s32.totalorder %s45, %s46
    %p55 = scmp.eq.s32.totalorder %s14, 0
    %p56 = por %p54, %p55
    %p57 = scmp.ne.s32.totalorder %s45, %s46
    %p58 = scmp.eq.s32.totalorder %s15, 1
    %p59 = por %p57, %p58
    %p61 = scmp.ne.s32.totalorder %s46, %s60
    %p62 = scmp.eq.s32.totalorder %s15, 0
    %p63 = por %p61, %p62
    %s65 = sadd.s32 %s64, 1
    %p68 = scmp.eq.s32.totalorder %s9, 1
    %p69 = scmp.ne.s32.totalorder %s64, %s66
    %p70 = scmp.eq.s32.totalorder %s9, 0
    %p71 = por %p69, %p70
    %p72 = scmp.ne.s32.totalorder %s64, %s66
    %p73 = scmp.eq.s32.totalorder %s14, 1
    %p74 = por %p72, %p73
    %p75 = scmp.ne.s32.totalorder %s66, %s67
    %p76 = scmp.eq.s32.totalorder %s14, 0
    %p77 = por %p75, %p76
    %p78 = scmp.ne.s32.totalorder %s66, %s67
    %p79 = scmp.eq.s32.totalorder %s15, 1
    %p80 = por %p78, %p79
    %p82 = scmp.ne.s32.totalorder %s67, %s81
    %p83 = scmp.eq.s32.totalorder %s15, 0
    %p84 = por %p82, %p83
    %s85 = ssub.s32 %s9, %s16
    %p86 = scmp.eq.s32.totalorder %s85, 0
    %s88 = sadd.s32 %s87, 1
    %s89 = scalar_select %p86, %s87, %s88
    %p92 = pneg %p86
    %p93 = scmp.eq.s32.totalorder %s9, 1
    %p94 = por %p92, %p93
    %p95 = scmp.ne.s32.totalorder %s87, %s90
    %p96 = scmp.eq.s32.totalorder %s9, 0
    %p97 = por %p95, %p96
    %p98 = scmp.ne.s32.totalorder %s87, %s90
    %p99 = scmp.eq.s32.totalorder %s14, 1
    %p100 = por %p98, %p99
    %p101 = scmp.ne.s32.totalorder %s90, %s91
    %p102 = scmp.eq.s32.totalorder %s14, 0
    %p103 = por %p101, %p102
    %p104 = scmp.ne.s32.totalorder %s90, %s91
    %p105 = scmp.eq.s32.totalorder %s15, 1
    %p106 = por %p104, %p105
    %p108 = scmp.ne.s32.totalorder %s91, %s107
    %p109 = scmp.eq.s32.totalorder %s15, 0
    %p110 = por %p108, %p109
    %p111 = scmp.le.s32.totalorder 1, %s9
    %p112 = scmp.lt.s32.totalorder %s9, 3
    %p113 = pnand %p111, %p112
    %p114 = pneg %p113
    // Predicated region
    $region9: #{opnet_forward.9} parent=5 // pred_check
      _
    $region10: #{opnet_forward.9} parent=5 // pred_check_branch
      %116 = sbr.rel (%p113) target = $region12
    $region11: #{opnet_forward.9} parent=5 // pred_region
      %s117 = ssub.s32 %s9, 1
      // Predicated region
      $region13: #{opnet_forward.9} parent=11 // pred_check
        %p118 = pneg %p56
      $region14: #{opnet_forward.9} parent=11 // pred_check_branch
        %120 = sbr.rel (%p118) target = $region16
      $region15: #{opnet_forward.9} parent=11 // pred_region
        _
      $region16: #{opnet_forward.9} parent=11 // pred_fallthru
        _
      // Predicated region
      $region17: #{opnet_forward.9} parent=11 // pred_check
        %p121 = pneg %p77
      $region18: #{opnet_forward.9} parent=11 // pred_check_branch
        %123 = sbr.rel (%p121) target = $region20
      $region19: #{opnet_forward.9} parent=11 // pred_region
        _
      $region20: #{opnet_forward.9} parent=11 // pred_fallthru
        _
    $region12: #{opnet_forward.9} parent=5 // pred_fallthru
      _
    %p124 = scmp.lt.s32.totalorder %s9, 2
    // Predicated region
    $region21: #{opnet_forward.9} parent=5 // pred_check
      %p125 = pneg %p124
    $region22: #{opnet_forward.9} parent=5 // pred_check_branch
      %127 = sbr.rel (%p125) target = $region24
    $region23: #{opnet_forward.9} parent=5 // pred_region
      // Predicated region
      $region25: #{opnet_forward.9} parent=23 // pred_check
        %p128 = pneg %p29
      $region26: #{opnet_forward.9} parent=23 // pred_check_branch
        %130 = sbr.rel (%p128) target = $region28
      $region27: #{opnet_forward.9} parent=23 // pred_region
        %s131 = smul.u32 64, %s9
        %p132 = scmp.lt.s32.totalorder %s131, 127
        %s133 = scalar_select %p132, %s131, 127
        %s134 = smul.addr %s133, 5
        %s135 = smul.addr %s134, 4
        %s136 = scalar_lea.vmem %s0, %s135
        %s137 = smul.u32 64, %s9
      $region28: #{opnet_forward.9} parent=23 // pred_fallthru
        _
    $region24: #{opnet_forward.9} parent=5 // pred_fallthru
      _
    %p138 = scmp.le.s32.totalorder 1, %s9
    %p139 = scmp.lt.s32.totalorder %s9, 3
    %p140 = pnand %p138, %p139
    %p141 = pneg %p140
    // Predicated region
    $region29: #{opnet_forward.9} parent=5 // pred_check
      _
    $region30: #{opnet_forward.9} parent=5 // pred_check_branch
      %143 = sbr.rel (%p140) target = $region32
    $region31: #{opnet_forward.9} parent=5 // pred_region
      %s144 = ssub.s32 %s9, 1
      %s145 = smul.u32 64, %s14
      %p146 = scmp.lt.s32.totalorder %s145, 127
      %s147 = scalar_select %p146, %s145, 127
      %s148 = smul.addr %s147, 5
      %s149 = smul.addr %s148, 4
      %s150 = scalar_lea.vmem %s0, %s149
      %p151 = pneg %p35
      %p152 = pneg %p32
      %p153 = pneg %p56
      %p154 = pneg %p53
      %p155 = pneg %p77
      %p156 = pneg %p74
      %p157 = pneg %p103
      %p158 = pneg %p100
      %s159 = smul.u32 64, %s14
      %p160 = scmp.lt.s32.totalorder %s159, 127
      %s161 = scalar_select %p160, %s159, 127
      %s162 = smul.addr %s161, 4
      %s163 = scalar_lea.vmem %s3, %s162
      %s164 = smul.u32 64, %s14
      %p165 = scmp.lt.s32.totalorder %s164, 127
      %s166 = scalar_select %p165, %s164, 127
      %s167 = smul.addr %s166, 5
      %s168 = smul.addr %s167, 4
      %s169 = scalar_lea.vmem %s0, %s168
      %s170 = smul.u32 64, %s14
      %s171 = smul.u32 64, %s14
      %p172 = scmp.lt.s32.totalorder %s171, 127
      %s173 = scalar_select %p172, %s171, 127
      %s174 = smul.addr %s173, 4
      %s175 = scalar_lea.vmem %s3, %s174
      %s176 = smul.u32 64, %s14
      %v178 = vld [vmem:[%s169] sm:$0xff]
      %v179 = vld [vmem:[%s169 + $0x8] sm:$0xff]
      %v180 = vld [vmem:[%s169 + $0x10] sm:$0xf]
      %v181 = vld [vmem:[%s169 + $0x14] sm:$0xff]
      %v182 = vld [vmem:[%s169 + $0x1c] sm:$0xff]
      %v183 = vld [vmem:[%s169 + $0x24] sm:$0xf]
      %v184 = vld [vmem:[%s169 + $0x28] sm:$0xff]
      %v185 = vld [vmem:[%s169 + $0x30] sm:$0xff]
      %v186 = vld [vmem:[%s169 + $0x38] sm:$0xf]
      %v187 = vld [vmem:[%s169 + $0x3c] sm:$0xff]
      %v188 = vld [vmem:[%s169 + $0x44] sm:$0xff]
      %v189 = vld [vmem:[%s169 + $0x4c] sm:$0xf]
      %v190 = vld [vmem:[%s169 + $0x50] sm:$0xff]
      %v191 = vld [vmem:[%s169 + $0x58] sm:$0xff]
      %v192 = vld [vmem:[%s169 + $0x60] sm:$0xf]
      %v193 = vld [vmem:[%s169 + $0x64] sm:$0xff]
      %v194 = vld [vmem:[%s169 + $0x6c] sm:$0xff]
      %v195 = vld [vmem:[%s169 + $0x74] sm:$0xf]
      %v196 = vld [vmem:[%s169 + $0x78] sm:$0xff]
      %v197 = vld [vmem:[%s169 + $0x80] sm:$0xff]
      %v198 = vld [vmem:[%s169 + $0x88] sm:$0xf]
      %v199 = vld [vmem:[%s169 + $0x8c] sm:$0xff]
      %v200 = vld [vmem:[%s169 + $0x94] sm:$0xff]
      %v201 = vld [vmem:[%s169 + $0x9c] sm:$0xf]
      %v202 = vld [vmem:[%s169 + $0xa0] sm:$0xff]
      %v203 = vld [vmem:[%s169 + $0xa8] sm:$0xff]
      %v204 = vld [vmem:[%s169 + $0xb0] sm:$0xf]
      %v205 = vld [vmem:[%s169 + $0xb4] sm:$0xff]
      %v206 = vld [vmem:[%s169 + $0xbc] sm:$0xff]
      %v207 = vld [vmem:[%s169 + $0xc4] sm:$0xf]
      %v208 = vld [vmem:[%s169 + $0xc8] sm:$0xff]
      %v209 = vld [vmem:[%s169 + $0xd0] sm:$0xff]
      %v210 = vld [vmem:[%s169 + $0xd8] sm:$0xf]
      %v211 = vld [vmem:[%s169 + $0xdc] sm:$0xff]
      %v212 = vld [vmem:[%s169 + $0xe4] sm:$0xff]
      %v213 = vld [vmem:[%s169 + $0xec] sm:$0xf]
      %v214 = vld [vmem:[%s169 + $0xf0] sm:$0xff]
      %v215 = vld [vmem:[%s169 + $0xf8] sm:$0xff]
      %v216 = vld [vmem:[%s169 + $0x100] sm:$0xf]
      %v217 = vld [vmem:[%s169 + $0x104] sm:$0xff]
      %v218 = vld [vmem:[%s169 + $0x10c] sm:$0xff]
      %v219 = vld [vmem:[%s169 + $0x114] sm:$0xf]
      %v220 = vld [vmem:[%s169 + $0x118] sm:$0xff]
      %v221 = vld [vmem:[%s169 + $0x120] sm:$0xff]
      %v222 = vld [vmem:[%s169 + $0x128] sm:$0xf]
      %v223 = vld [vmem:[%s169 + $0x12c] sm:$0xff]
      %v224 = vld [vmem:[%s169 + $0x134] sm:$0xff]
      %v225 = vld [vmem:[%s169 + $0x13c] sm:$0xf]
      %v226 = vld [vmem:[%s169 + $0x140] sm:$0xff]
      %v227 = vld [vmem:[%s169 + $0x148] sm:$0xff]
      %v228 = vld [vmem:[%s169 + $0x150] sm:$0xf]
      %v229 = vld [vmem:[%s169 + $0x154] sm:$0xff]
      %v230 = vld [vmem:[%s169 + $0x15c] sm:$0xff]
      %v231 = vld [vmem:[%s169 + $0x164] sm:$0xf]
      %v232 = vld [vmem:[%s169 + $0x168] sm:$0xff]
      %v233 = vld [vmem:[%s169 + $0x170] sm:$0xff]
      %v234 = vld [vmem:[%s169 + $0x178] sm:$0xf]
      %v235 = vld [vmem:[%s169 + $0x17c] sm:$0xff]
      %v236 = vld [vmem:[%s169 + $0x184] sm:$0xff]
      %v237 = vld [vmem:[%s169 + $0x18c] sm:$0xf]
      %v238 = vld [vmem:[%s169 + $0x190] sm:$0xff]
      %v239 = vld [vmem:[%s169 + $0x198] sm:$0xff]
      %v240 = vld [vmem:[%s169 + $0x1a0] sm:$0xf]
      %v241 = vld [vmem:[%s169 + $0x1a4] sm:$0xff]
      %v242 = vld [vmem:[%s169 + $0x1ac] sm:$0xff]
      %v243 = vld [vmem:[%s169 + $0x1b4] sm:$0xf]
      %v244 = vld [vmem:[%s169 + $0x1b8] sm:$0xff]
      %v245 = vld [vmem:[%s169 + $0x1c0] sm:$0xff]
      %v246 = vld [vmem:[%s169 + $0x1c8] sm:$0xf]
      %v247 = vld [vmem:[%s169 + $0x1cc] sm:$0xff]
      %v248 = vld [vmem:[%s169 + $0x1d4] sm:$0xff]
      %v249 = vld [vmem:[%s169 + $0x1dc] sm:$0xf]
      %v250 = vld [vmem:[%s169 + $0x1e0] sm:$0xff]
      %v251 = vld [vmem:[%s169 + $0x1e8] sm:$0xff]
      %v252 = vld [vmem:[%s169 + $0x1f0] sm:$0xf]
      %v253 = vld [vmem:[%s169 + $0x1f4] sm:$0xff]
      %v254 = vld [vmem:[%s169 + $0x1fc] sm:$0xff]
      %v255 = vld [vmem:[%s169 + $0x204] sm:$0xf]
      %v256 = vld [vmem:[%s169 + $0x208] sm:$0xff]
      %v257 = vld [vmem:[%s169 + $0x210] sm:$0xff]
      %v258 = vld [vmem:[%s169 + $0x218] sm:$0xf]
      %v259 = vld [vmem:[%s169 + $0x21c] sm:$0xff]
      %v260 = vld [vmem:[%s169 + $0x224] sm:$0xff]
      %v261 = vld [vmem:[%s169 + $0x22c] sm:$0xf]
      %v262 = vld [vmem:[%s169 + $0x230] sm:$0xff]
      %v263 = vld [vmem:[%s169 + $0x238] sm:$0xff]
      %v264 = vld [vmem:[%s169 + $0x240] sm:$0xf]
      %v265 = vld [vmem:[%s169 + $0x244] sm:$0xff]
      %v266 = vld [vmem:[%s169 + $0x24c] sm:$0xff]
      %v267 = vld [vmem:[%s169 + $0x254] sm:$0xf]
      %v268 = vld [vmem:[%s169 + $0x258] sm:$0xff]
      %v269 = vld [vmem:[%s169 + $0x260] sm:$0xff]
      %v270 = vld [vmem:[%s169 + $0x268] sm:$0xf]
      %v271 = vld [vmem:[%s169 + $0x26c] sm:$0xff]
      %v272 = vld [vmem:[%s169 + $0x274] sm:$0xff]
      %v273 = vld [vmem:[%s169 + $0x27c] sm:$0xf]
      %v274 = vld [vmem:[%s169 + $0x280] sm:$0xff]
      %v275 = vld [vmem:[%s169 + $0x288] sm:$0xff]
      %v276 = vld [vmem:[%s169 + $0x290] sm:$0xf]
      %v277 = vld [vmem:[%s169 + $0x294] sm:$0xff]
      %v278 = vld [vmem:[%s169 + $0x29c] sm:$0xff]
      %v279 = vld [vmem:[%s169 + $0x2a4] sm:$0xf]
      %v280 = vld [vmem:[%s169 + $0x2a8] sm:$0xff]
      %v281 = vld [vmem:[%s169 + $0x2b0] sm:$0xff]
      %v282 = vld [vmem:[%s169 + $0x2b8] sm:$0xf]
      %v283 = vld [vmem:[%s169 + $0x2bc] sm:$0xff]
      %v284 = vld [vmem:[%s169 + $0x2c4] sm:$0xff]
      %v285 = vld [vmem:[%s169 + $0x2cc] sm:$0xf]
      %v286 = vld [vmem:[%s169 + $0x2d0] sm:$0xff]
      %v287 = vld [vmem:[%s169 + $0x2d8] sm:$0xff]
      %v288 = vld [vmem:[%s169 + $0x2e0] sm:$0xf]
      %v289 = vld [vmem:[%s169 + $0x2e4] sm:$0xff]
      %v290 = vld [vmem:[%s169 + $0x2ec] sm:$0xff]
      %v291 = vld [vmem:[%s169 + $0x2f4] sm:$0xf]
      %v292 = vld [vmem:[%s169 + $0x2f8] sm:$0xff]
      %v293 = vld [vmem:[%s169 + $0x300] sm:$0xff]
      %v294 = vld [vmem:[%s169 + $0x308] sm:$0xf]
      %v295 = vld [vmem:[%s169 + $0x30c] sm:$0xff]
      %v296 = vld [vmem:[%s169 + $0x314] sm:$0xff]
      %v297 = vld [vmem:[%s169 + $0x31c] sm:$0xf]
      %v298 = vld [vmem:[%s169 + $0x320] sm:$0xff]
      %v299 = vld [vmem:[%s169 + $0x328] sm:$0xff]
      %v300 = vld [vmem:[%s169 + $0x330] sm:$0xf]
      %v301 = vld [vmem:[%s169 + $0x334] sm:$0xff]
      %v302 = vld [vmem:[%s169 + $0x33c] sm:$0xff]
      %v303 = vld [vmem:[%s169 + $0x344] sm:$0xf]
      %v304 = vld [vmem:[%s169 + $0x348] sm:$0xff]
      %v305 = vld [vmem:[%s169 + $0x350] sm:$0xff]
      %v306 = vld [vmem:[%s169 + $0x358] sm:$0xf]
      %v307 = vld [vmem:[%s169 + $0x35c] sm:$0xff]
      %v308 = vld [vmem:[%s169 + $0x364] sm:$0xff]
      %v309 = vld [vmem:[%s169 + $0x36c] sm:$0xf]
      %v310 = vld [vmem:[%s169 + $0x370] sm:$0xff]
      %v311 = vld [vmem:[%s169 + $0x378] sm:$0xff]
      %v312 = vld [vmem:[%s169 + $0x380] sm:$0xf]
      %v313 = vld [vmem:[%s169 + $0x384] sm:$0xff]
      %v314 = vld [vmem:[%s169 + $0x38c] sm:$0xff]
      %v315 = vld [vmem:[%s169 + $0x394] sm:$0xf]
      %v316 = vld [vmem:[%s169 + $0x398] sm:$0xff]
      %v317 = vld [vmem:[%s169 + $0x3a0] sm:$0xff]
      %v318 = vld [vmem:[%s169 + $0x3a8] sm:$0xf]
      %v319 = vld [vmem:[%s169 + $0x3ac] sm:$0xff]
      %v320 = vld [vmem:[%s169 + $0x3b4] sm:$0xff]
      %v321 = vld [vmem:[%s169 + $0x3bc] sm:$0xf]
      %v322 = vld [vmem:[%s169 + $0x3c0] sm:$0xff]
      %v323 = vld [vmem:[%s169 + $0x3c8] sm:$0xff]
      %v324 = vld [vmem:[%s169 + $0x3d0] sm:$0xf]
      %v325 = vld [vmem:[%s169 + $0x3d4] sm:$0xff]
      %v326 = vld [vmem:[%s169 + $0x3dc] sm:$0xff]
      %v327 = vld [vmem:[%s169 + $0x3e4] sm:$0xf]
      %v328 = vld [vmem:[%s169 + $0x3e8] sm:$0xff]
      %v329 = vld [vmem:[%s169 + $0x3f0] sm:$0xff]
      %v330 = vld [vmem:[%s169 + $0x3f8] sm:$0xf]
      %v331 = vld [vmem:[%s169 + $0x3fc] sm:$0xff]
      %v332 = vld [vmem:[%s169 + $0x404] sm:$0xff]
      %v333 = vld [vmem:[%s169 + $0x40c] sm:$0xf]
      %v334 = vld [vmem:[%s169 + $0x410] sm:$0xff]
      %v335 = vld [vmem:[%s169 + $0x418] sm:$0xff]
      %v336 = vld [vmem:[%s169 + $0x420] sm:$0xf]
      %v337 = vld [vmem:[%s169 + $0x424] sm:$0xff]
      %v338 = vld [vmem:[%s169 + $0x42c] sm:$0xff]
      %v339 = vld [vmem:[%s169 + $0x434] sm:$0xf]
      %v340 = vld [vmem:[%s169 + $0x438] sm:$0xff]
      %v341 = vld [vmem:[%s169 + $0x440] sm:$0xff]
      %v342 = vld [vmem:[%s169 + $0x448] sm:$0xf]
      %v343 = vld [vmem:[%s169 + $0x44c] sm:$0xff]
      %v344 = vld [vmem:[%s169 + $0x454] sm:$0xff]
      %v345 = vld [vmem:[%s169 + $0x45c] sm:$0xf]
      %v346 = vld [vmem:[%s169 + $0x460] sm:$0xff]
      %v347 = vld [vmem:[%s169 + $0x468] sm:$0xff]
      %v348 = vld [vmem:[%s169 + $0x470] sm:$0xf]
      %v349 = vld [vmem:[%s169 + $0x474] sm:$0xff]
      %v350 = vld [vmem:[%s169 + $0x47c] sm:$0xff]
      %v351 = vld [vmem:[%s169 + $0x484] sm:$0xf]
      %v352 = vld [vmem:[%s169 + $0x488] sm:$0xff]
      %v353 = vld [vmem:[%s169 + $0x490] sm:$0xff]
      %v354 = vld [vmem:[%s169 + $0x498] sm:$0xf]
      %v355 = vld [vmem:[%s169 + $0x49c] sm:$0xff]
      %v356 = vld [vmem:[%s169 + $0x4a4] sm:$0xff]
      %v357 = vld [vmem:[%s169 + $0x4ac] sm:$0xf]
      %v358 = vld [vmem:[%s169 + $0x4b0] sm:$0xff]
      %v359 = vld [vmem:[%s169 + $0x4b8] sm:$0xff]
      %v360 = vld [vmem:[%s169 + $0x4c0] sm:$0xf]
      %v361 = vld [vmem:[%s169 + $0x4c4] sm:$0xff]
      %v362 = vld [vmem:[%s169 + $0x4cc] sm:$0xff]
      %v363 = vld [vmem:[%s169 + $0x4d4] sm:$0xf]
      %v364 = vld [vmem:[%s169 + $0x4d8] sm:$0xff]
      %v365 = vld [vmem:[%s169 + $0x4e0] sm:$0xff]
      %v366 = vld [vmem:[%s169 + $0x4e8] sm:$0xf]
      %v367 = vld [vmem:[%s169 + $0x4ec] sm:$0xff]
      %v368 = vld [vmem:[%s169 + $0x4f4] sm:$0xff]
      %v369 = vld [vmem:[%s169 + $0x4fc] sm:$0xf]
      %v370 = vld [vmem:[%s1] sm:$0xf]
      %v371 = vld [vmem:[%s1 + $0x4] sm:$0xf]
      %v372 = vld [vmem:[%s1 + $0x8] sm:$0xf]
      %v373 = vld [vmem:[%s1 + $0xc] sm:$0xf]
      %v374 = vld [vmem:[%s1 + $0x10] sm:$0xf]
      %v375 = vld [vmem:[%s1 + $0x14] sm:$0xf]
      %v376 = vld [vmem:[%s1 + $0x18] sm:$0xf]
      %v377 = vld [vmem:[%s1 + $0x1c] sm:$0xf]
      %v378 = vld [vmem:[%s1 + $0x20] sm:$0xf]
      %v379 = vld [vmem:[%s1 + $0x24] sm:$0xf]
      %v380 = vld [vmem:[%s1 + $0x28] sm:$0xf]
      %v381 = vld [vmem:[%s1 + $0x2c] sm:$0xf]
      %v382 = vld [vmem:[%s1 + $0x30] sm:$0xf]
      %v383 = vld [vmem:[%s1 + $0x34] sm:$0xf]
      %v384 = vld [vmem:[%s1 + $0x38] sm:$0xf]
      %v385 = vld [vmem:[%s1 + $0x3c] sm:$0xf]
      %v386 = vld [vmem:[%s1 + $0x40] sm:$0xf]
      %v387 = vld [vmem:[%s1 + $0x44] sm:$0xf]
      %v388 = vld [vmem:[%s1 + $0x48] sm:$0xf]
      %v389 = vld [vmem:[%s1 + $0x4c] sm:$0xf]
      %v390 = vld [vmem:[%s1 + $0x50] sm:$0xf]
      %v391 = vld [vmem:[%s1 + $0x54] sm:$0xf]
      %v392 = vld [vmem:[%s1 + $0x58] sm:$0xf]
      %v393 = vld [vmem:[%s1 + $0x5c] sm:$0xf]
      %v394 = vld [vmem:[%s1 + $0x60] sm:$0xf]
      %v395 = vld [vmem:[%s1 + $0x64] sm:$0xf]
      %v396 = vld [vmem:[%s1 + $0x68] sm:$0xf]
      %v397 = vld [vmem:[%s1 + $0x6c] sm:$0xf]
      %v398 = vld [vmem:[%s1 + $0x70] sm:$0xf]
      %v399 = vld [vmem:[%s1 + $0x74] sm:$0xf]
      %v400 = vld [vmem:[%s1 + $0x78] sm:$0xf]
      %v401 = vld [vmem:[%s1 + $0x7c] sm:$0xf]
      %v402 = vld [vmem:[%s1 + $0x80] sm:$0xf]
      %v403 = vld [vmem:[%s1 + $0x84] sm:$0xf]
      %v404 = vld [vmem:[%s1 + $0x88] sm:$0xf]
      %v405 = vld [vmem:[%s1 + $0x8c] sm:$0xf]
      %v406 = vld [vmem:[%s1 + $0x90] sm:$0xf]
      %v407 = vld [vmem:[%s1 + $0x94] sm:$0xf]
      %v408 = vld [vmem:[%s1 + $0x98] sm:$0xf]
      %v409 = vld [vmem:[%s1 + $0x9c] sm:$0xf]
      %v410 = vld [vmem:[%s1 + $0xa0] sm:$0xf]
      %v411 = vld [vmem:[%s1 + $0xa4] sm:$0xf]
      %v412 = vld [vmem:[%s1 + $0xa8] sm:$0xf]
      %v413 = vld [vmem:[%s1 + $0xac] sm:$0xf]
      %v414 = vld [vmem:[%s1 + $0xb0] sm:$0xf]
      %v415 = vld [vmem:[%s1 + $0xb4] sm:$0xf]
      %v416 = vld [vmem:[%s1 + $0xb8] sm:$0xf]
      %v417 = vld [vmem:[%s1 + $0xbc] sm:$0xf]
      %v418 = vld [vmem:[%s1 + $0xc0] sm:$0xf]
      %v419 = vld [vmem:[%s1 + $0xc4] sm:$0xf]
      %v420 = vld [vmem:[%s1 + $0xc8] sm:$0xf]
      %v421 = vld [vmem:[%s1 + $0xcc] sm:$0xf]
      %v422 = vld [vmem:[%s1 + $0xd0] sm:$0xf]
      %v423 = vld [vmem:[%s1 + $0xd4] sm:$0xf]
      %v424 = vld [vmem:[%s1 + $0xd8] sm:$0xf]
      %v425 = vld [vmem:[%s1 + $0xdc] sm:$0xf]
      %v426 = vld [vmem:[%s1 + $0xe0] sm:$0xf]
      %v427 = vld [vmem:[%s1 + $0xe4] sm:$0xf]
      %v428 = vld [vmem:[%s1 + $0xe8] sm:$0xf]
      %v429 = vld [vmem:[%s1 + $0xec] sm:$0xf]
      %v430 = vld [vmem:[%s1 + $0xf0] sm:$0xf]
      %v431 = vld [vmem:[%s1 + $0xf4] sm:$0xf]
      %v432 = vld [vmem:[%s1 + $0xf8] sm:$0xf]
      %v433 = vld [vmem:[%s1 + $0xfc] sm:$0xf]
      %v434 = vld [vmem:[%s1 + $0x100] sm:$0xf]
      %v435 = vld [vmem:[%s1 + $0x104] sm:$0xf]
      %v436 = vld [vmem:[%s1 + $0x108] sm:$0xf]
      %v437 = vld [vmem:[%s1 + $0x10c] sm:$0xf]
      %v438 = vld [vmem:[%s1 + $0x110] sm:$0xf]
      %v439 = vld [vmem:[%s1 + $0x114] sm:$0xf]
      %v440 = vld [vmem:[%s1 + $0x118] sm:$0xf]
      %v441 = vld [vmem:[%s1 + $0x11c] sm:$0xf]
      %v442 = vld [vmem:[%s2] sm:$0x1]
      %v444 = vperm.slane %v442, 0
      %v638 = vunpack.c.l.b16 %v178
      %v639 = vunpack.c.h.b16 %v178
      %v640 = vunpack.c.l.b16 %v179
      %v641 = vunpack.c.h.b16 %v179
      %v642 = vunpack.c.l.b16 %v180
      %v643 = vunpack.c.l.b16 %v181
      %v644 = vunpack.c.h.b16 %v181
      %v645 = vunpack.c.l.b16 %v182
      %v646 = vunpack.c.h.b16 %v182
      %v647 = vunpack.c.l.b16 %v183
      %v648 = vunpack.c.l.b16 %v184
      %v649 = vunpack.c.h.b16 %v184
      %v650 = vunpack.c.l.b16 %v185
      %v651 = vunpack.c.h.b16 %v185
      %v652 = vunpack.c.l.b16 %v186
      %v653 = vunpack.c.l.b16 %v187
      %v654 = vunpack.c.h.b16 %v187
      %v655 = vunpack.c.l.b16 %v188
      %v656 = vunpack.c.h.b16 %v188
      %v657 = vunpack.c.l.b16 %v189
      %v658 = vunpack.c.l.b16 %v190
      %v659 = vunpack.c.h.b16 %v190
      %v660 = vunpack.c.l.b16 %v191
      %v661 = vunpack.c.h.b16 %v191
      %v662 = vunpack.c.l.b16 %v192
      %v663 = vunpack.c.l.b16 %v193
      %v664 = vunpack.c.h.b16 %v193
      %v665 = vunpack.c.l.b16 %v194
      %v666 = vunpack.c.h.b16 %v194
      %v667 = vunpack.c.l.b16 %v195
      %v668 = vunpack.c.l.b16 %v196
      %v669 = vunpack.c.h.b16 %v196
      %v670 = vunpack.c.l.b16 %v197
      %v671 = vunpack.c.h.b16 %v197
      %v672 = vunpack.c.l.b16 %v198
      %v673 = vunpack.c.l.b16 %v199
      %v674 = vunpack.c.h.b16 %v199
      %v675 = vunpack.c.l.b16 %v200
      %v676 = vunpack.c.h.b16 %v200
      %v677 = vunpack.c.l.b16 %v201
      %v678 = vunpack.c.l.b16 %v202
      %v679 = vunpack.c.h.b16 %v202
      %v680 = vunpack.c.l.b16 %v203
      %v681 = vunpack.c.h.b16 %v203
      %v682 = vunpack.c.l.b16 %v204
      %v683 = vunpack.c.l.b16 %v205
      %v684 = vunpack.c.h.b16 %v205
      %v685 = vunpack.c.l.b16 %v206
      %v686 = vunpack.c.h.b16 %v206
      %v687 = vunpack.c.l.b16 %v207
      %v688 = vunpack.c.l.b16 %v208
      %v689 = vunpack.c.h.b16 %v208
      %v690 = vunpack.c.l.b16 %v209
      %v691 = vunpack.c.h.b16 %v209
      %v692 = vunpack.c.l.b16 %v210
      %v693 = vunpack.c.l.b16 %v211
      %v694 = vunpack.c.h.b16 %v211
      %v695 = vunpack.c.l.b16 %v212
      %v696 = vunpack.c.h.b16 %v212
      %v697 = vunpack.c.l.b16 %v213
      %v698 = vunpack.c.l.b16 %v214
      %v699 = vunpack.c.h.b16 %v214
      %v700 = vunpack.c.l.b16 %v215
      %v701 = vunpack.c.h.b16 %v215
      %v702 = vunpack.c.l.b16 %v216
      %v703 = vunpack.c.l.b16 %v217
      %v704 = vunpack.c.h.b16 %v217
      %v705 = vunpack.c.l.b16 %v218
      %v706 = vunpack.c.h.b16 %v218
      %v707 = vunpack.c.l.b16 %v219
      %v708 = vunpack.c.l.b16 %v220
      %v709 = vunpack.c.h.b16 %v220
      %v710 = vunpack.c.l.b16 %v221
      %v711 = vunpack.c.h.b16 %v221
      %v712 = vunpack.c.l.b16 %v222
      %v713 = vunpack.c.l.b16 %v223
      %v714 = vunpack.c.h.b16 %v223
      %v715 = vunpack.c.l.b16 %v224
      %v716 = vunpack.c.h.b16 %v224
      %v717 = vunpack.c.l.b16 %v225
      %v718 = vunpack.c.l.b16 %v226
      %v719 = vunpack.c.h.b16 %v226
      %v720 = vunpack.c.l.b16 %v227
      %v721 = vunpack.c.h.b16 %v227
      %v722 = vunpack.c.l.b16 %v228
      %v723 = vunpack.c.l.b16 %v229
      %v724 = vunpack.c.h.b16 %v229
      %v725 = vunpack.c.l.b16 %v230
      %v726 = vunpack.c.h.b16 %v230
      %v727 = vunpack.c.l.b16 %v231
      %v728 = vunpack.c.l.b16 %v232
      %v729 = vunpack.c.h.b16 %v232
      %v730 = vunpack.c.l.b16 %v233
      %v731 = vunpack.c.h.b16 %v233
      %v732 = vunpack.c.l.b16 %v234
      %v733 = vunpack.c.l.b16 %v235
      %v734 = vunpack.c.h.b16 %v235
      %v735 = vunpack.c.l.b16 %v236
      %v736 = vunpack.c.h.b16 %v236
      %v737 = vunpack.c.l.b16 %v237
      %v738 = vunpack.c.l.b16 %v238
      %v739 = vunpack.c.h.b16 %v238
      %v740 = vunpack.c.l.b16 %v239
      %v741 = vunpack.c.h.b16 %v239
      %v742 = vunpack.c.l.b16 %v240
      %v743 = vunpack.c.l.b16 %v241
      %v744 = vunpack.c.h.b16 %v241
      %v745 = vunpack.c.l.b16 %v242
      %v746 = vunpack.c.h.b16 %v242
      %v747 = vunpack.c.l.b16 %v243
      %v748 = vunpack.c.l.b16 %v244
      %v749 = vunpack.c.h.b16 %v244
      %v750 = vunpack.c.l.b16 %v245
      %v751 = vunpack.c.h.b16 %v245
      %v752 = vunpack.c.l.b16 %v246
      %v753 = vunpack.c.l.b16 %v247
      %v754 = vunpack.c.h.b16 %v247
      %v755 = vunpack.c.l.b16 %v248
      %v756 = vunpack.c.h.b16 %v248
      %v757 = vunpack.c.l.b16 %v249
      %v758 = vunpack.c.l.b16 %v250
      %v759 = vunpack.c.h.b16 %v250
      %v760 = vunpack.c.l.b16 %v251
      %v761 = vunpack.c.h.b16 %v251
      %v762 = vunpack.c.l.b16 %v252
      %v763 = vunpack.c.l.b16 %v253
      %v764 = vunpack.c.h.b16 %v253
      %v765 = vunpack.c.l.b16 %v254
      %v766 = vunpack.c.h.b16 %v254
      %v767 = vunpack.c.l.b16 %v255
      %v768 = vunpack.c.l.b16 %v256
      %v769 = vunpack.c.h.b16 %v256
      %v770 = vunpack.c.l.b16 %v257
      %v771 = vunpack.c.h.b16 %v257
      %v772 = vunpack.c.l.b16 %v258
      %v773 = vunpack.c.l.b16 %v259
      %v774 = vunpack.c.h.b16 %v259
      %v775 = vunpack.c.l.b16 %v260
      %v776 = vunpack.c.h.b16 %v260
      %v777 = vunpack.c.l.b16 %v261
      %v778 = vunpack.c.l.b16 %v262
      %v779 = vunpack.c.h.b16 %v262
      %v780 = vunpack.c.l.b16 %v263
      %v781 = vunpack.c.h.b16 %v263
      %v782 = vunpack.c.l.b16 %v264
      %v783 = vunpack.c.l.b16 %v265
      %v784 = vunpack.c.h.b16 %v265
      %v785 = vunpack.c.l.b16 %v266
      %v786 = vunpack.c.h.b16 %v266
      %v787 = vunpack.c.l.b16 %v267
      %v788 = vunpack.c.l.b16 %v268
      %v789 = vunpack.c.h.b16 %v268
      %v790 = vunpack.c.l.b16 %v269
      %v791 = vunpack.c.h.b16 %v269
      %v792 = vunpack.c.l.b16 %v270
      %v793 = vunpack.c.l.b16 %v271
      %v794 = vunpack.c.h.b16 %v271
      %v795 = vunpack.c.l.b16 %v272
      %v796 = vunpack.c.h.b16 %v272
      %v797 = vunpack.c.l.b16 %v273
      %v798 = vunpack.c.l.b16 %v274
      %v799 = vunpack.c.h.b16 %v274
      %v800 = vunpack.c.l.b16 %v275
      %v801 = vunpack.c.h.b16 %v275
      %v802 = vunpack.c.l.b16 %v276
      %v803 = vunpack.c.l.b16 %v277
      %v804 = vunpack.c.h.b16 %v277
      %v805 = vunpack.c.l.b16 %v278
      %v806 = vunpack.c.h.b16 %v278
      %v807 = vunpack.c.l.b16 %v279
      %v808 = vunpack.c.l.b16 %v280
      %v809 = vunpack.c.h.b16 %v280
      %v810 = vunpack.c.l.b16 %v281
      %v811 = vunpack.c.h.b16 %v281
      %v812 = vunpack.c.l.b16 %v282
      %v813 = vunpack.c.l.b16 %v283
      %v814 = vunpack.c.h.b16 %v283
      %v815 = vunpack.c.l.b16 %v284
      %v816 = vunpack.c.h.b16 %v284
      %v817 = vunpack.c.l.b16 %v285
      %v818 = vunpack.c.l.b16 %v286
      %v819 = vunpack.c.h.b16 %v286
      %v820 = vunpack.c.l.b16 %v287
      %v821 = vunpack.c.h.b16 %v287
      %v822 = vunpack.c.l.b16 %v288
      %v823 = vunpack.c.l.b16 %v289
      %v824 = vunpack.c.h.b16 %v289
      %v825 = vunpack.c.l.b16 %v290
      %v826 = vunpack.c.h.b16 %v290
      %v827 = vunpack.c.l.b16 %v291
      %v828 = vunpack.c.l.b16 %v292
      %v829 = vunpack.c.h.b16 %v292
      %v830 = vunpack.c.l.b16 %v293
      %v831 = vunpack.c.h.b16 %v293
      %v832 = vunpack.c.l.b16 %v294
      %v833 = vunpack.c.l.b16 %v295
      %v834 = vunpack.c.h.b16 %v295
      %v835 = vunpack.c.l.b16 %v296
      %v836 = vunpack.c.h.b16 %v296
      %v837 = vunpack.c.l.b16 %v297
      %v838 = vunpack.c.l.b16 %v298
      %v839 = vunpack.c.h.b16 %v298
      %v840 = vunpack.c.l.b16 %v299
      %v841 = vunpack.c.h.b16 %v299
      %v842 = vunpack.c.l.b16 %v300
      %v843 = vunpack.c.l.b16 %v301
      %v844 = vunpack.c.h.b16 %v301
      %v845 = vunpack.c.l.b16 %v302
      %v846 = vunpack.c.h.b16 %v302
      %v847 = vunpack.c.l.b16 %v303
      %v848 = vunpack.c.l.b16 %v304
      %v849 = vunpack.c.h.b16 %v304
      %v850 = vunpack.c.l.b16 %v305
      %v851 = vunpack.c.h.b16 %v305
      %v852 = vunpack.c.l.b16 %v306
      %v853 = vunpack.c.l.b16 %v307
      %v854 = vunpack.c.h.b16 %v307
      %v855 = vunpack.c.l.b16 %v308
      %v856 = vunpack.c.h.b16 %v308
      %v857 = vunpack.c.l.b16 %v309
      %v858 = vunpack.c.l.b16 %v310
      %v859 = vunpack.c.h.b16 %v310
      %v860 = vunpack.c.l.b16 %v311
      %v861 = vunpack.c.h.b16 %v311
      %v862 = vunpack.c.l.b16 %v312
      %v863 = vunpack.c.l.b16 %v313
      %v864 = vunpack.c.h.b16 %v313
      %v865 = vunpack.c.l.b16 %v314
      %v866 = vunpack.c.h.b16 %v314
      %v867 = vunpack.c.l.b16 %v315
      %v868 = vunpack.c.l.b16 %v316
      %v869 = vunpack.c.h.b16 %v316
      %v870 = vunpack.c.l.b16 %v317
      %v871 = vunpack.c.h.b16 %v317
      %v872 = vunpack.c.l.b16 %v318
      %v873 = vunpack.c.l.b16 %v319
      %v874 = vunpack.c.h.b16 %v319
      %v875 = vunpack.c.l.b16 %v320
      %v876 = vunpack.c.h.b16 %v320
      %v877 = vunpack.c.l.b16 %v321
      %v878 = vunpack.c.l.b16 %v322
      %v879 = vunpack.c.h.b16 %v322
      %v880 = vunpack.c.l.b16 %v323
      %v881 = vunpack.c.h.b16 %v323
      %v882 = vunpack.c.l.b16 %v324
      %v883 = vunpack.c.l.b16 %v325
      %v884 = vunpack.c.h.b16 %v325
      %v885 = vunpack.c.l.b16 %v326
      %v886 = vunpack.c.h.b16 %v326
      %v887 = vunpack.c.l.b16 %v327
      %v888 = vunpack.c.l.b16 %v328
      %v889 = vunpack.c.h.b16 %v328
      %v890 = vunpack.c.l.b16 %v329
      %v891 = vunpack.c.h.b16 %v329
      %v892 = vunpack.c.l.b16 %v330
      %v893 = vunpack.c.l.b16 %v331
      %v894 = vunpack.c.h.b16 %v331
      %v895 = vunpack.c.l.b16 %v332
      %v896 = vunpack.c.h.b16 %v332
      %v897 = vunpack.c.l.b16 %v333
      %v898 = vunpack.c.l.b16 %v334
      %v899 = vunpack.c.h.b16 %v334
      %v900 = vunpack.c.l.b16 %v335
      %v901 = vunpack.c.h.b16 %v335
      %v902 = vunpack.c.l.b16 %v336
      %v903 = vunpack.c.l.b16 %v337
      %v904 = vunpack.c.h.b16 %v337
      %v905 = vunpack.c.l.b16 %v338
      %v906 = vunpack.c.h.b16 %v338
      %v907 = vunpack.c.l.b16 %v339
      %v908 = vunpack.c.l.b16 %v340
      %v909 = vunpack.c.h.b16 %v340
      %v910 = vunpack.c.l.b16 %v341
      %v911 = vunpack.c.h.b16 %v341
      %v912 = vunpack.c.l.b16 %v342
      %v913 = vunpack.c.l.b16 %v343
      %v914 = vunpack.c.h.b16 %v343
      %v915 = vunpack.c.l.b16 %v344
      %v916 = vunpack.c.h.b16 %v344
      %v917 = vunpack.c.l.b16 %v345
      %v918 = vunpack.c.l.b16 %v346
      %v919 = vunpack.c.h.b16 %v346
      %v920 = vunpack.c.l.b16 %v347
      %v921 = vunpack.c.h.b16 %v347
      %v922 = vunpack.c.l.b16 %v348
      %v923 = vunpack.c.l.b16 %v349
      %v924 = vunpack.c.h.b16 %v349
      %v925 = vunpack.c.l.b16 %v350
      %v926 = vunpack.c.h.b16 %v350
      %v927 = vunpack.c.l.b16 %v351
      %v928 = vunpack.c.l.b16 %v352
      %v929 = vunpack.c.h.b16 %v352
      %v930 = vunpack.c.l.b16 %v353
      %v931 = vunpack.c.h.b16 %v353
      %v932 = vunpack.c.l.b16 %v354
      %v933 = vunpack.c.l.b16 %v355
      %v934 = vunpack.c.h.b16 %v355
      %v935 = vunpack.c.l.b16 %v356
      %v936 = vunpack.c.h.b16 %v356
      %v937 = vunpack.c.l.b16 %v357
      %v938 = vunpack.c.l.b16 %v358
      %v939 = vunpack.c.h.b16 %v358
      %v940 = vunpack.c.l.b16 %v359
      %v941 = vunpack.c.h.b16 %v359
      %v942 = vunpack.c.l.b16 %v360
      %v943 = vunpack.c.l.b16 %v361
      %v944 = vunpack.c.h.b16 %v361
      %v945 = vunpack.c.l.b16 %v362
      %v946 = vunpack.c.h.b16 %v362
      %v947 = vunpack.c.l.b16 %v363
      %v948 = vunpack.c.l.b16 %v364
      %v949 = vunpack.c.h.b16 %v364
      %v950 = vunpack.c.l.b16 %v365
      %v951 = vunpack.c.h.b16 %v365
      %v952 = vunpack.c.l.b16 %v366
      %v953 = vunpack.c.l.b16 %v367
      %v954 = vunpack.c.h.b16 %v367
      %v955 = vunpack.c.l.b16 %v368
      %v956 = vunpack.c.h.b16 %v368
      %v957 = vunpack.c.l.b16 %v369
      %v958 = vpack.c.b16 %v643, %v638
      %v959 = vpack.c.b16 %v644, %v639
      %v960 = vpack.c.b16 %v645, %v640
      %v961 = vpack.c.b16 %v646, %v641
      %v962 = vpack.c.b16 %v647, %v642
      %v963 = vpack.c.b16 %v653, %v648
      %v964 = vpack.c.b16 %v654, %v649
      %v965 = vpack.c.b16 %v655, %v650
      %v966 = vpack.c.b16 %v656, %v651
      %v967 = vpack.c.b16 %v657, %v652
      %v968 = vpack.c.b16 %v663, %v658
      %v969 = vpack.c.b16 %v664, %v659
      %v970 = vpack.c.b16 %v665, %v660
      %v971 = vpack.c.b16 %v666, %v661
      %v972 = vpack.c.b16 %v667, %v662
      %v973 = vpack.c.b16 %v673, %v668
      %v974 = vpack.c.b16 %v674, %v669
      %v975 = vpack.c.b16 %v675, %v670
      %v976 = vpack.c.b16 %v676, %v671
      %v977 = vpack.c.b16 %v677, %v672
      %v978 = vpack.c.b16 %v683, %v678
      %v979 = vpack.c.b16 %v684, %v679
      %v980 = vpack.c.b16 %v685, %v680
      %v981 = vpack.c.b16 %v686, %v681
      %v982 = vpack.c.b16 %v687, %v682
      %v983 = vpack.c.b16 %v693, %v688
      %v984 = vpack.c.b16 %v694, %v689
      %v985 = vpack.c.b16 %v695, %v690
      %v986 = vpack.c.b16 %v696, %v691
      %v987 = vpack.c.b16 %v697, %v692
      %v988 = vpack.c.b16 %v703, %v698
      %v989 = vpack.c.b16 %v704, %v699
      %v990 = vpack.c.b16 %v705, %v700
      %v991 = vpack.c.b16 %v706, %v701
      %v992 = vpack.c.b16 %v707, %v702
      %v993 = vpack.c.b16 %v713, %v708
      %v994 = vpack.c.b16 %v714, %v709
      %v995 = vpack.c.b16 %v715, %v710
      %v996 = vpack.c.b16 %v716, %v711
      %v997 = vpack.c.b16 %v717, %v712
      %v998 = vpack.c.b16 %v723, %v718
      %v999 = vpack.c.b16 %v724, %v719
      %v1000 = vpack.c.b16 %v725, %v720
      %v1001 = vpack.c.b16 %v726, %v721
      %v1002 = vpack.c.b16 %v727, %v722
      %v1003 = vpack.c.b16 %v733, %v728
      %v1004 = vpack.c.b16 %v734, %v729
      %v1005 = vpack.c.b16 %v735, %v730
      %v1006 = vpack.c.b16 %v736, %v731
      %v1007 = vpack.c.b16 %v737, %v732
      %v1008 = vpack.c.b16 %v743, %v738
      %v1009 = vpack.c.b16 %v744, %v739
      %v1010 = vpack.c.b16 %v745, %v740
      %v1011 = vpack.c.b16 %v746, %v741
      %v1012 = vpack.c.b16 %v747, %v742
      %v1013 = vpack.c.b16 %v753, %v748
      %v1014 = vpack.c.b16 %v754, %v749
      %v1015 = vpack.c.b16 %v755, %v750
      %v1016 = vpack.c.b16 %v756, %v751
      %v1017 = vpack.c.b16 %v757, %v752
      %v1018 = vpack.c.b16 %v763, %v758
      %v1019 = vpack.c.b16 %v764, %v759
      %v1020 = vpack.c.b16 %v765, %v760
      %v1021 = vpack.c.b16 %v766, %v761
      %v1022 = vpack.c.b16 %v767, %v762
      %v1023 = vpack.c.b16 %v773, %v768
      %v1024 = vpack.c.b16 %v774, %v769
      %v1025 = vpack.c.b16 %v775, %v770
      %v1026 = vpack.c.b16 %v776, %v771
      %v1027 = vpack.c.b16 %v777, %v772
      %v1028 = vpack.c.b16 %v783, %v778
      %v1029 = vpack.c.b16 %v784, %v779
      %v1030 = vpack.c.b16 %v785, %v780
      %v1031 = vpack.c.b16 %v786, %v781
      %v1032 = vpack.c.b16 %v787, %v782
      %v1033 = vpack.c.b16 %v793, %v788
      %v1034 = vpack.c.b16 %v794, %v789
      %v1035 = vpack.c.b16 %v795, %v790
      %v1036 = vpack.c.b16 %v796, %v791
      %v1037 = vpack.c.b16 %v797, %v792
      %v1038 = vpack.c.b16 %v803, %v798
      %v1039 = vpack.c.b16 %v804, %v799
      %v1040 = vpack.c.b16 %v805, %v800
      %v1041 = vpack.c.b16 %v806, %v801
      %v1042 = vpack.c.b16 %v807, %v802
      %v1043 = vpack.c.b16 %v813, %v808
      %v1044 = vpack.c.b16 %v814, %v809
      %v1045 = vpack.c.b16 %v815, %v810
      %v1046 = vpack.c.b16 %v816, %v811
      %v1047 = vpack.c.b16 %v817, %v812
      %v1048 = vpack.c.b16 %v823, %v818
      %v1049 = vpack.c.b16 %v824, %v819
      %v1050 = vpack.c.b16 %v825, %v820
      %v1051 = vpack.c.b16 %v826, %v821
      %v1052 = vpack.c.b16 %v827, %v822
      %v1053 = vpack.c.b16 %v833, %v828
      %v1054 = vpack.c.b16 %v834, %v829
      %v1055 = vpack.c.b16 %v835, %v830
      %v1056 = vpack.c.b16 %v836, %v831
      %v1057 = vpack.c.b16 %v837, %v832
      %v1058 = vpack.c.b16 %v843, %v838
      %v1059 = vpack.c.b16 %v844, %v839
      %v1060 = vpack.c.b16 %v845, %v840
      %v1061 = vpack.c.b16 %v846, %v841
      %v1062 = vpack.c.b16 %v847, %v842
      %v1063 = vpack.c.b16 %v853, %v848
      %v1064 = vpack.c.b16 %v854, %v849
      %v1065 = vpack.c.b16 %v855, %v850
      %v1066 = vpack.c.b16 %v856, %v851
      %v1067 = vpack.c.b16 %v857, %v852
      %v1068 = vpack.c.b16 %v863, %v858
      %v1069 = vpack.c.b16 %v864, %v859
      %v1070 = vpack.c.b16 %v865, %v860
      %v1071 = vpack.c.b16 %v866, %v861
      %v1072 = vpack.c.b16 %v867, %v862
      %v1073 = vpack.c.b16 %v873, %v868
      %v1074 = vpack.c.b16 %v874, %v869
      %v1075 = vpack.c.b16 %v875, %v870
      %v1076 = vpack.c.b16 %v876, %v871
      %v1077 = vpack.c.b16 %v877, %v872
      %v1078 = vpack.c.b16 %v883, %v878
      %v1079 = vpack.c.b16 %v884, %v879
      %v1080 = vpack.c.b16 %v885, %v880
      %v1081 = vpack.c.b16 %v886, %v881
      %v1082 = vpack.c.b16 %v887, %v882
      %v1083 = vpack.c.b16 %v893, %v888
      %v1084 = vpack.c.b16 %v894, %v889
      %v1085 = vpack.c.b16 %v895, %v890
      %v1086 = vpack.c.b16 %v896, %v891
      %v1087 = vpack.c.b16 %v897, %v892
      %v1088 = vpack.c.b16 %v903, %v898
      %v1089 = vpack.c.b16 %v904, %v899
      %v1090 = vpack.c.b16 %v905, %v900
      %v1091 = vpack.c.b16 %v906, %v901
      %v1092 = vpack.c.b16 %v907, %v902
      %v1093 = vpack.c.b16 %v913, %v908
      %v1094 = vpack.c.b16 %v914, %v909
      %v1095 = vpack.c.b16 %v915, %v910
      %v1096 = vpack.c.b16 %v916, %v911
      %v1097 = vpack.c.b16 %v917, %v912
      %v1098 = vpack.c.b16 %v923, %v918
      %v1099 = vpack.c.b16 %v924, %v919
      %v1100 = vpack.c.b16 %v925, %v920
      %v1101 = vpack.c.b16 %v926, %v921
      %v1102 = vpack.c.b16 %v927, %v922
      %v1103 = vpack.c.b16 %v933, %v928
      %v1104 = vpack.c.b16 %v934, %v929
      %v1105 = vpack.c.b16 %v935, %v930
      %v1106 = vpack.c.b16 %v936, %v931
      %v1107 = vpack.c.b16 %v937, %v932
      %v1108 = vpack.c.b16 %v943, %v938
      %v1109 = vpack.c.b16 %v944, %v939
      %v1110 = vpack.c.b16 %v945, %v940
      %v1111 = vpack.c.b16 %v946, %v941
      %v1112 = vpack.c.b16 %v947, %v942
      %v1113 = vpack.c.b16 %v953, %v948
      %v1114 = vpack.c.b16 %v954, %v949
      %v1115 = vpack.c.b16 %v955, %v950
      %v1116 = vpack.c.b16 %v956, %v951
      %v1117 = vpack.c.b16 %v957, %v952
      %v1318 = vunpack.c.l.b16 %v370
      %v1319 = vunpack.c.l.b16 %v371
      %v1320 = vunpack.c.l.b16 %v372
      %v1321 = vunpack.c.l.b16 %v373
      %v1322 = vunpack.c.l.b16 %v374
      %v1323 = vunpack.c.l.b16 %v375
      %v1324 = vunpack.c.l.b16 %v376
      %v1325 = vunpack.c.l.b16 %v377
      %v1326 = vunpack.c.l.b16 %v378
      %v1327 = vunpack.c.l.b16 %v379
      %v1328 = vunpack.c.l.b16 %v380
      %v1329 = vunpack.c.l.b16 %v381
      %v1330 = vunpack.c.l.b16 %v382
      %v1331 = vunpack.c.l.b16 %v383
      %v1332 = vunpack.c.l.b16 %v384
      %v1333 = vunpack.c.l.b16 %v385
      %v1334 = vunpack.c.l.b16 %v386
      %v1335 = vunpack.c.l.b16 %v387
      %v1336 = vunpack.c.l.b16 %v388
      %v1337 = vunpack.c.l.b16 %v389
      %v1338 = vunpack.c.l.b16 %v390
      %v1339 = vunpack.c.l.b16 %v391
      %v1340 = vunpack.c.l.b16 %v392
      %v1341 = vunpack.c.l.b16 %v393
      %v1342 = vunpack.c.l.b16 %v394
      %v1343 = vunpack.c.l.b16 %v395
      %v1344 = vunpack.c.l.b16 %v396
      %v1345 = vunpack.c.l.b16 %v397
      %v1346 = vunpack.c.l.b16 %v398
      %v1347 = vunpack.c.l.b16 %v399
      %v1348 = vunpack.c.l.b16 %v400
      %v1349 = vunpack.c.l.b16 %v401
      %v1350 = vunpack.c.l.b16 %v402
      %v1351 = vunpack.c.l.b16 %v403
      %v1352 = vunpack.c.l.b16 %v404
      %v1353 = vunpack.c.l.b16 %v405
      %v1354 = vunpack.c.l.b16 %v406
      %v1355 = vunpack.c.l.b16 %v407
      %v1356 = vunpack.c.l.b16 %v408
      %v1357 = vunpack.c.l.b16 %v409
      %v1358 = vunpack.c.l.b16 %v410
      %v1359 = vunpack.c.l.b16 %v411
      %v1360 = vunpack.c.l.b16 %v412
      %v1361 = vunpack.c.l.b16 %v413
      %v1362 = vunpack.c.l.b16 %v414
      %v1363 = vunpack.c.l.b16 %v415
      %v1364 = vunpack.c.l.b16 %v416
      %v1365 = vunpack.c.l.b16 %v417
      %v1366 = vunpack.c.l.b16 %v418
      %v1367 = vunpack.c.l.b16 %v419
      %v1368 = vunpack.c.l.b16 %v420
      %v1369 = vunpack.c.l.b16 %v421
      %v1370 = vunpack.c.l.b16 %v422
      %v1371 = vunpack.c.l.b16 %v423
      %v1372 = vunpack.c.l.b16 %v424
      %v1373 = vunpack.c.l.b16 %v425
      %v1374 = vunpack.c.l.b16 %v426
      %v1375 = vunpack.c.l.b16 %v427
      %v1376 = vunpack.c.l.b16 %v428
      %v1377 = vunpack.c.l.b16 %v429
      %v1378 = vunpack.c.l.b16 %v430
      %v1379 = vunpack.c.l.b16 %v431
      %v1380 = vunpack.c.l.b16 %v432
      %v1381 = vunpack.c.l.b16 %v433
      %v1382 = vunpack.c.l.b16 %v434
      %v1383 = vunpack.c.l.b16 %v435
      %v1384 = vunpack.c.l.b16 %v436
      %v1385 = vunpack.c.l.b16 %v437
      %v1386 = vunpack.c.l.b16 %v438
      %v1387 = vunpack.c.l.b16 %v439
      %v1388 = vunpack.c.l.b16 %v440
      %v1389 = vunpack.c.l.b16 %v441
      %v1390 = vpack.c.b16 %v1319, %v1318
      %v1391 = vpack.c.b16 %v1321, %v1320
      %v1392 = vpack.c.b16 %v1323, %v1322
      %v1393 = vpack.c.b16 %v1325, %v1324
      %v1394 = vpack.c.b16 %v1327, %v1326
      %v1395 = vpack.c.b16 %v1329, %v1328
      %v1396 = vpack.c.b16 %v1331, %v1330
      %v1397 = vpack.c.b16 %v1333, %v1332
      %v1398 = vpack.c.b16 %v1335, %v1334
      %v1399 = vpack.c.b16 %v1337, %v1336
      %v1400 = vpack.c.b16 %v1339, %v1338
      %v1401 = vpack.c.b16 %v1341, %v1340
      %v1402 = vpack.c.b16 %v1343, %v1342
      %v1403 = vpack.c.b16 %v1345, %v1344
      %v1404 = vpack.c.b16 %v1347, %v1346
      %v1405 = vpack.c.b16 %v1349, %v1348
      %v1406 = vpack.c.b16 %v1351, %v1350
      %v1407 = vpack.c.b16 %v1353, %v1352
      %v1408 = vpack.c.b16 %v1355, %v1354
      %v1409 = vpack.c.b16 %v1357, %v1356
      %v1410 = vpack.c.b16 %v1359, %v1358
      %v1411 = vpack.c.b16 %v1361, %v1360
      %v1412 = vpack.c.b16 %v1363, %v1362
      %v1413 = vpack.c.b16 %v1365, %v1364
      %v1414 = vpack.c.b16 %v1367, %v1366
      %v1415 = vpack.c.b16 %v1369, %v1368
      %v1416 = vpack.c.b16 %v1371, %v1370
      %v1417 = vpack.c.b16 %v1373, %v1372
      %v1418 = vpack.c.b16 %v1375, %v1374
      %v1419 = vpack.c.b16 %v1377, %v1376
      %v1420 = vpack.c.b16 %v1379, %v1378
      %v1421 = vpack.c.b16 %v1381, %v1380
      %v1422 = vpack.c.b16 %v1383, %v1382
      %v1423 = vpack.c.b16 %v1385, %v1384
      %v1424 = vpack.c.b16 %v1387, %v1386
      %v1425 = vpack.c.b16 %v1389, %v1388
      %vm1462 = vcmask 523264
      %v1464 = vsel %vm1462, %v962, 0
      %v1467 = vsel %vm1462, %v967, 0
      %v1470 = vsel %vm1462, %v972, 0
      %v1473 = vsel %vm1462, %v977, 0
      %v1476 = vsel %vm1462, %v982, 0
      %v1479 = vsel %vm1462, %v987, 0
      %v1482 = vsel %vm1462, %v992, 0
      %v1485 = vsel %vm1462, %v997, 0
      %v1488 = vsel %vm1462, %v1002, 0
      %v1491 = vsel %vm1462, %v1007, 0
      %v1494 = vsel %vm1462, %v1012, 0
      %v1497 = vsel %vm1462, %v1017, 0
      %v1500 = vsel %vm1462, %v1022, 0
      %v1503 = vsel %vm1462, %v1027, 0
      %v1506 = vsel %vm1462, %v1032, 0
      %v1509 = vsel %vm1462, %v1037, 0
      %v1512 = vsel %vm1462, %v1042, 0
      %v1515 = vsel %vm1462, %v1047, 0
      %v1518 = vsel %vm1462, %v1052, 0
      %v1521 = vsel %vm1462, %v1057, 0
      %v1524 = vsel %vm1462, %v1062, 0
      %v1527 = vsel %vm1462, %v1067, 0
      %v1530 = vsel %vm1462, %v1072, 0
      %v1533 = vsel %vm1462, %v1077, 0
      %v1536 = vsel %vm1462, %v1082, 0
      %v1539 = vsel %vm1462, %v1087, 0
      %v1542 = vsel %vm1462, %v1092, 0
      %v1545 = vsel %vm1462, %v1097, 0
      %v1548 = vsel %vm1462, %v1102, 0
      %v1551 = vsel %vm1462, %v1107, 0
      %v1554 = vsel %vm1462, %v1112, 0
      %v1557 = vsel %vm1462, %v1117, 0
      %1559 = vmatpush.bf16.msra.mxu0 %v1397
      %1560 = vmatpush.bf16.msra.mxu0 %v1396
      %1561 = vmatpush.bf16.msra.mxu0 %v1395
      %1562 = vmatpush.bf16.msra.mxu0 %v1394
      %1563 = vmatpush.bf16.msra.mxu0 %v1393
      %1564 = vmatpush.bf16.msra.mxu0 %v1392
      %1565 = vmatpush.bf16.msra.mxu0 %v1391
      %1566 = vmatpush.bf16.msra.mxu0 %v1390
      %1567 = vmatmul.bf16.gmra.mxu0 %v958
      %v1568 = vpop.f32.mrf.mxu0
      %v1569 = vadd.f32 %v444, %v1568
      %v1570 = vpop.f32.mrf.mxu0
      %v1571 = vadd.f32 %v444, %v1570
      %1572 = vmatmul.bf16.gmra.mxu0 %v963
      %v1573 = vpop.f32.mrf.mxu0
      %v1574 = vadd.f32 %v444, %v1573
      %v1575 = vpop.f32.mrf.mxu0
      %v1576 = vadd.f32 %v444, %v1575
      %1577 = vmatmul.bf16.gmra.mxu0 %v968
      %v1578 = vpop.f32.mrf.mxu0
      %v1579 = vadd.f32 %v444, %v1578
      %v1580 = vpop.f32.mrf.mxu0
      %v1581 = vadd.f32 %v444, %v1580
      %1582 = vmatmul.bf16.gmra.mxu0 %v973
      %v1583 = vpop.f32.mrf.mxu0
      %v1584 = vadd.f32 %v444, %v1583
      %v1585 = vpop.f32.mrf.mxu0
      %v1586 = vadd.f32 %v444, %v1585
      %1587 = vmatmul.bf16.gmra.mxu0 %v978
      %v1588 = vpop.f32.mrf.mxu0
      %v1589 = vadd.f32 %v444, %v1588
      %v1590 = vpop.f32.mrf.mxu0
      %v1591 = vadd.f32 %v444, %v1590
      %1592 = vmatmul.bf16.gmra.mxu0 %v983
      %v1593 = vpop.f32.mrf.mxu0
      %v1594 = vadd.f32 %v444, %v1593
      %v1595 = vpop.f32.mrf.mxu0
      %v1596 = vadd.f32 %v444, %v1595
      %1597 = vmatmul.bf16.gmra.mxu0 %v988
      %v1598 = vpop.f32.mrf.mxu0
      %v1599 = vadd.f32 %v444, %v1598
      %v1600 = vpop.f32.mrf.mxu0
      %v1601 = vadd.f32 %v444, %v1600
      %1602 = vmatmul.bf16.gmra.mxu0 %v993
      %v1603 = vpop.f32.mrf.mxu0
      %v1604 = vadd.f32 %v444, %v1603
      %v1605 = vpop.f32.mrf.mxu0
      %v1606 = vadd.f32 %v444, %v1605
      %1607 = vmatmul.bf16.gmra.mxu0 %v998
      %v1608 = vpop.f32.mrf.mxu0
      %v1609 = vadd.f32 %v444, %v1608
      %v1610 = vpop.f32.mrf.mxu0
      %v1611 = vadd.f32 %v444, %v1610
      %1612 = vmatmul.bf16.gmra.mxu0 %v1003
      %v1613 = vpop.f32.mrf.mxu0
      %v1614 = vadd.f32 %v444, %v1613
      %v1615 = vpop.f32.mrf.mxu0
      %v1616 = vadd.f32 %v444, %v1615
      %1617 = vmatmul.bf16.gmra.mxu0 %v1008
      %v1618 = vpop.f32.mrf.mxu0
      %v1619 = vadd.f32 %v444, %v1618
      %v1620 = vpop.f32.mrf.mxu0
      %v1621 = vadd.f32 %v444, %v1620
      %1622 = vmatmul.bf16.gmra.mxu0 %v1013
      %v1623 = vpop.f32.mrf.mxu0
      %v1624 = vadd.f32 %v444, %v1623
      %v1625 = vpop.f32.mrf.mxu0
      %v1626 = vadd.f32 %v444, %v1625
      %1627 = vmatmul.bf16.gmra.mxu0 %v1018
      %v1628 = vpop.f32.mrf.mxu0
      %v1629 = vadd.f32 %v444, %v1628
      %v1630 = vpop.f32.mrf.mxu0
      %v1631 = vadd.f32 %v444, %v1630
      %1632 = vmatmul.bf16.gmra.mxu0 %v1023
      %v1633 = vpop.f32.mrf.mxu0
      %v1634 = vadd.f32 %v444, %v1633
      %v1635 = vpop.f32.mrf.mxu0
      %v1636 = vadd.f32 %v444, %v1635
      %1637 = vmatmul.bf16.gmra.mxu0 %v1028
      %v1638 = vpop.f32.mrf.mxu0
      %v1639 = vadd.f32 %v444, %v1638
      %v1640 = vpop.f32.mrf.mxu0
      %v1641 = vadd.f32 %v444, %v1640
      %1642 = vmatmul.bf16.gmra.mxu0 %v1033
      %v1643 = vpop.f32.mrf.mxu0
      %v1644 = vadd.f32 %v444, %v1643
      %v1645 = vpop.f32.mrf.mxu0
      %v1646 = vadd.f32 %v444, %v1645
      %1647 = vmatmul.bf16.gmra.mxu0 %v1038
      %v1648 = vpop.f32.mrf.mxu0
      %v1649 = vadd.f32 %v444, %v1648
      %v1650 = vpop.f32.mrf.mxu0
      %v1651 = vadd.f32 %v444, %v1650
      %1652 = vmatmul.bf16.gmra.mxu0 %v1043
      %v1653 = vpop.f32.mrf.mxu0
      %v1654 = vadd.f32 %v444, %v1653
      %v1655 = vpop.f32.mrf.mxu0
      %v1656 = vadd.f32 %v444, %v1655
      %1657 = vmatmul.bf16.gmra.mxu0 %v1048
      %v1658 = vpop.f32.mrf.mxu0
      %v1659 = vadd.f32 %v444, %v1658
      %v1660 = vpop.f32.mrf.mxu0
      %v1661 = vadd.f32 %v444, %v1660
      %1662 = vmatmul.bf16.gmra.mxu0 %v1053
      %v1663 = vpop.f32.mrf.mxu0
      %v1664 = vadd.f32 %v444, %v1663
      %v1665 = vpop.f32.mrf.mxu0
      %v1666 = vadd.f32 %v444, %v1665
      %1667 = vmatmul.bf16.gmra.mxu0 %v1058
      %v1668 = vpop.f32.mrf.mxu0
      %v1669 = vadd.f32 %v444, %v1668
      %v1670 = vpop.f32.mrf.mxu0
      %v1671 = vadd.f32 %v444, %v1670
      %1672 = vmatmul.bf16.gmra.mxu0 %v1063
      %v1673 = vpop.f32.mrf.mxu0
      %v1674 = vadd.f32 %v444, %v1673
      %v1675 = vpop.f32.mrf.mxu0
      %v1676 = vadd.f32 %v444, %v1675
      %1677 = vmatmul.bf16.gmra.mxu0 %v1068
      %v1678 = vpop.f32.mrf.mxu0
      %v1679 = vadd.f32 %v444, %v1678
      %v1680 = vpop.f32.mrf.mxu0
      %v1681 = vadd.f32 %v444, %v1680
      %1682 = vmatmul.bf16.gmra.mxu0 %v1073
      %v1683 = vpop.f32.mrf.mxu0
      %v1684 = vadd.f32 %v444, %v1683
      %v1685 = vpop.f32.mrf.mxu0
      %v1686 = vadd.f32 %v444, %v1685
      %1687 = vmatmul.bf16.gmra.mxu0 %v1078
      %v1688 = vpop.f32.mrf.mxu0
      %v1689 = vadd.f32 %v444, %v1688
      %v1690 = vpop.f32.mrf.mxu0
      %v1691 = vadd.f32 %v444, %v1690
      %1692 = vmatmul.bf16.gmra.mxu0 %v1083
      %v1693 = vpop.f32.mrf.mxu0
      %v1694 = vadd.f32 %v444, %v1693
      %v1695 = vpop.f32.mrf.mxu0
      %v1696 = vadd.f32 %v444, %v1695
      %1697 = vmatmul.bf16.gmra.mxu0 %v1088
      %v1698 = vpop.f32.mrf.mxu0
      %v1699 = vadd.f32 %v444, %v1698
      %v1700 = vpop.f32.mrf.mxu0
      %v1701 = vadd.f32 %v444, %v1700
      %1702 = vmatmul.bf16.gmra.mxu0 %v1093
      %v1703 = vpop.f32.mrf.mxu0
      %v1704 = vadd.f32 %v444, %v1703
      %v1705 = vpop.f32.mrf.mxu0
      %v1706 = vadd.f32 %v444, %v1705
      %1707 = vmatmul.bf16.gmra.mxu0 %v1098
      %v1708 = vpop.f32.mrf.mxu0
      %v1709 = vadd.f32 %v444, %v1708
      %v1710 = vpop.f32.mrf.mxu0
      %v1711 = vadd.f32 %v444, %v1710
      %1712 = vmatmul.bf16.gmra.mxu0 %v1103
      %v1713 = vpop.f32.mrf.mxu0
      %v1714 = vadd.f32 %v444, %v1713
      %v1715 = vpop.f32.mrf.mxu0
      %v1716 = vadd.f32 %v444, %v1715
      %1717 = vmatmul.bf16.gmra.mxu0 %v1108
      %v1718 = vpop.f32.mrf.mxu0
      %v1719 = vadd.f32 %v444, %v1718
      %v1720 = vpop.f32.mrf.mxu0
      %v1721 = vadd.f32 %v444, %v1720
      %1722 = vmatmul.bf16.gmra.mxu0 %v1113
      %v1723 = vpop.f32.mrf.mxu0
      %v1724 = vadd.f32 %v444, %v1723
      %v1725 = vpop.f32.mrf.mxu0
      %v1726 = vadd.f32 %v444, %v1725
      %1727 = vdwg.mxu0
      %1728 = vmatpush.bf16.msra.mxu0 %v1405
      %1729 = vmatpush.bf16.msra.mxu0 %v1404
      %1730 = vmatpush.bf16.msra.mxu0 %v1403
      %1731 = vmatpush.bf16.msra.mxu0 %v1402
      %1732 = vmatpush.bf16.msra.mxu0 %v1401
      %1733 = vmatpush.bf16.msra.mxu0 %v1400
      %1734 = vmatpush.bf16.msra.mxu0 %v1399
      %1735 = vmatpush.bf16.msra.mxu0 %v1398
      %1736 = vmatmul.bf16.gmra.mxu0 %v959
      %v1737 = vpop.f32.mrf.mxu0
      %v1738 = vadd.f32 %v1569, %v1737
      %v1739 = vpop.f32.mrf.mxu0
      %v1740 = vadd.f32 %v1571, %v1739
      %1741 = vmatmul.bf16.gmra.mxu0 %v964
      %v1742 = vpop.f32.mrf.mxu0
      %v1743 = vadd.f32 %v1574, %v1742
      %v1744 = vpop.f32.mrf.mxu0
      %v1745 = vadd.f32 %v1576, %v1744
      %1746 = vmatmul.bf16.gmra.mxu0 %v969
      %v1747 = vpop.f32.mrf.mxu0
      %v1748 = vadd.f32 %v1579, %v1747
      %v1749 = vpop.f32.mrf.mxu0
      %v1750 = vadd.f32 %v1581, %v1749
      %1751 = vmatmul.bf16.gmra.mxu0 %v974
      %v1752 = vpop.f32.mrf.mxu0
      %v1753 = vadd.f32 %v1584, %v1752
      %v1754 = vpop.f32.mrf.mxu0
      %v1755 = vadd.f32 %v1586, %v1754
      %1756 = vmatmul.bf16.gmra.mxu0 %v979
      %v1757 = vpop.f32.mrf.mxu0
      %v1758 = vadd.f32 %v1589, %v1757
      %v1759 = vpop.f32.mrf.mxu0
      %v1760 = vadd.f32 %v1591, %v1759
      %1761 = vmatmul.bf16.gmra.mxu0 %v984
      %v1762 = vpop.f32.mrf.mxu0
      %v1763 = vadd.f32 %v1594, %v1762
      %v1764 = vpop.f32.mrf.mxu0
      %v1765 = vadd.f32 %v1596, %v1764
      %1766 = vmatmul.bf16.gmra.mxu0 %v989
      %v1767 = vpop.f32.mrf.mxu0
      %v1768 = vadd.f32 %v1599, %v1767
      %v1769 = vpop.f32.mrf.mxu0
      %v1770 = vadd.f32 %v1601, %v1769
      %1771 = vmatmul.bf16.gmra.mxu0 %v994
      %v1772 = vpop.f32.mrf.mxu0
      %v1773 = vadd.f32 %v1604, %v1772
      %v1774 = vpop.f32.mrf.mxu0
      %v1775 = vadd.f32 %v1606, %v1774
      %1776 = vmatmul.bf16.gmra.mxu0 %v999
      %v1777 = vpop.f32.mrf.mxu0
      %v1778 = vadd.f32 %v1609, %v1777
      %v1779 = vpop.f32.mrf.mxu0
      %v1780 = vadd.f32 %v1611, %v1779
      %1781 = vmatmul.bf16.gmra.mxu0 %v1004
      %v1782 = vpop.f32.mrf.mxu0
      %v1783 = vadd.f32 %v1614, %v1782
      %v1784 = vpop.f32.mrf.mxu0
      %v1785 = vadd.f32 %v1616, %v1784
      %1786 = vmatmul.bf16.gmra.mxu0 %v1009
      %v1787 = vpop.f32.mrf.mxu0
      %v1788 = vadd.f32 %v1619, %v1787
      %v1789 = vpop.f32.mrf.mxu0
      %v1790 = vadd.f32 %v1621, %v1789
      %1791 = vmatmul.bf16.gmra.mxu0 %v1014
      %v1792 = vpop.f32.mrf.mxu0
      %v1793 = vadd.f32 %v1624, %v1792
      %v1794 = vpop.f32.mrf.mxu0
      %v1795 = vadd.f32 %v1626, %v1794
      %1796 = vmatmul.bf16.gmra.mxu0 %v1019
      %v1797 = vpop.f32.mrf.mxu0
      %v1798 = vadd.f32 %v1629, %v1797
      %v1799 = vpop.f32.mrf.mxu0
      %v1800 = vadd.f32 %v1631, %v1799
      %1801 = vmatmul.bf16.gmra.mxu0 %v1024
      %v1802 = vpop.f32.mrf.mxu0
      %v1803 = vadd.f32 %v1634, %v1802
      %v1804 = vpop.f32.mrf.mxu0
      %v1805 = vadd.f32 %v1636, %v1804
      %1806 = vmatmul.bf16.gmra.mxu0 %v1029
      %v1807 = vpop.f32.mrf.mxu0
      %v1808 = vadd.f32 %v1639, %v1807
      %v1809 = vpop.f32.mrf.mxu0
      %v1810 = vadd.f32 %v1641, %v1809
      %1811 = vmatmul.bf16.gmra.mxu0 %v1034
      %v1812 = vpop.f32.mrf.mxu0
      %v1813 = vadd.f32 %v1644, %v1812
      %v1814 = vpop.f32.mrf.mxu0
      %v1815 = vadd.f32 %v1646, %v1814
      %1816 = vmatmul.bf16.gmra.mxu0 %v1039
      %v1817 = vpop.f32.mrf.mxu0
      %v1818 = vadd.f32 %v1649, %v1817
      %v1819 = vpop.f32.mrf.mxu0
      %v1820 = vadd.f32 %v1651, %v1819
      %1821 = vmatmul.bf16.gmra.mxu0 %v1044
      %v1822 = vpop.f32.mrf.mxu0
      %v1823 = vadd.f32 %v1654, %v1822
      %v1824 = vpop.f32.mrf.mxu0
      %v1825 = vadd.f32 %v1656, %v1824
      %1826 = vmatmul.bf16.gmra.mxu0 %v1049
      %v1827 = vpop.f32.mrf.mxu0
      %v1828 = vadd.f32 %v1659, %v1827
      %v1829 = vpop.f32.mrf.mxu0
      %v1830 = vadd.f32 %v1661, %v1829
      %1831 = vmatmul.bf16.gmra.mxu0 %v1054
      %v1832 = vpop.f32.mrf.mxu0
      %v1833 = vadd.f32 %v1664, %v1832
      %v1834 = vpop.f32.mrf.mxu0
      %v1835 = vadd.f32 %v1666, %v1834
      %1836 = vmatmul.bf16.gmra.mxu0 %v1059
      %v1837 = vpop.f32.mrf.mxu0
      %v1838 = vadd.f32 %v1669, %v1837
      %v1839 = vpop.f32.mrf.mxu0
      %v1840 = vadd.f32 %v1671, %v1839
      %1841 = vmatmul.bf16.gmra.mxu0 %v1064
      %v1842 = vpop.f32.mrf.mxu0
      %v1843 = vadd.f32 %v1674, %v1842
      %v1844 = vpop.f32.mrf.mxu0
      %v1845 = vadd.f32 %v1676, %v1844
      %1846 = vmatmul.bf16.gmra.mxu0 %v1069
      %v1847 = vpop.f32.mrf.mxu0
      %v1848 = vadd.f32 %v1679, %v1847
      %v1849 = vpop.f32.mrf.mxu0
      %v1850 = vadd.f32 %v1681, %v1849
      %1851 = vmatmul.bf16.gmra.mxu0 %v1074
      %v1852 = vpop.f32.mrf.mxu0
      %v1853 = vadd.f32 %v1684, %v1852
      %v1854 = vpop.f32.mrf.mxu0
      %v1855 = vadd.f32 %v1686, %v1854
      %1856 = vmatmul.bf16.gmra.mxu0 %v1079
      %v1857 = vpop.f32.mrf.mxu0
      %v1858 = vadd.f32 %v1689, %v1857
      %v1859 = vpop.f32.mrf.mxu0
      %v1860 = vadd.f32 %v1691, %v1859
      %1861 = vmatmul.bf16.gmra.mxu0 %v1084
      %v1862 = vpop.f32.mrf.mxu0
      %v1863 = vadd.f32 %v1694, %v1862
      %v1864 = vpop.f32.mrf.mxu0
      %v1865 = vadd.f32 %v1696, %v1864
      %1866 = vmatmul.bf16.gmra.mxu0 %v1089
      %v1867 = vpop.f32.mrf.mxu0
      %v1868 = vadd.f32 %v1699, %v1867
      %v1869 = vpop.f32.mrf.mxu0
      %v1870 = vadd.f32 %v1701, %v1869
      %1871 = vmatmul.bf16.gmra.mxu0 %v1094
      %v1872 = vpop.f32.mrf.mxu0
      %v1873 = vadd.f32 %v1704, %v1872
      %v1874 = vpop.f32.mrf.mxu0
      %v1875 = vadd.f32 %v1706, %v1874
      %1876 = vmatmul.bf16.gmra.mxu0 %v1099
      %v1877 = vpop.f32.mrf.mxu0
      %v1878 = vadd.f32 %v1709, %v1877
      %v1879 = vpop.f32.mrf.mxu0
      %v1880 = vadd.f32 %v1711, %v1879
      %1881 = vmatmul.bf16.gmra.mxu0 %v1104
      %v1882 = vpop.f32.mrf.mxu0
      %v1883 = vadd.f32 %v1714, %v1882
      %v1884 = vpop.f32.mrf.mxu0
      %v1885 = vadd.f32 %v1716, %v1884
      %1886 = vmatmul.bf16.gmra.mxu0 %v1109
      %v1887 = vpop.f32.mrf.mxu0
      %v1888 = vadd.f32 %v1719, %v1887
      %v1889 = vpop.f32.mrf.mxu0
      %v1890 = vadd.f32 %v1721, %v1889
      %1891 = vmatmul.bf16.gmra.mxu0 %v1114
      %v1892 = vpop.f32.mrf.mxu0
      %v1893 = vadd.f32 %v1724, %v1892
      %v1894 = vpop.f32.mrf.mxu0
      %v1895 = vadd.f32 %v1726, %v1894
      %1896 = vdwg.mxu0
      %1897 = vmatpush.bf16.msra.mxu0 %v1413
      %1898 = vmatpush.bf16.msra.mxu0 %v1412
      %1899 = vmatpush.bf16.msra.mxu0 %v1411
      %1900 = vmatpush.bf16.msra.mxu0 %v1410
      %1901 = vmatpush.bf16.msra.mxu0 %v1409
      %1902 = vmatpush.bf16.msra.mxu0 %v1408
      %1903 = vmatpush.bf16.msra.mxu0 %v1407
      %1904 = vmatpush.bf16.msra.mxu0 %v1406
      %1905 = vmatmul.bf16.gmra.mxu0 %v960
      %v1906 = vpop.f32.mrf.mxu0
      %v1907 = vadd.f32 %v1738, %v1906
      %v1908 = vpop.f32.mrf.mxu0
      %v1909 = vadd.f32 %v1740, %v1908
      %1910 = vmatmul.bf16.gmra.mxu0 %v965
      %v1911 = vpop.f32.mrf.mxu0
      %v1912 = vadd.f32 %v1743, %v1911
      %v1913 = vpop.f32.mrf.mxu0
      %v1914 = vadd.f32 %v1745, %v1913
      %1915 = vmatmul.bf16.gmra.mxu0 %v970
      %v1916 = vpop.f32.mrf.mxu0
      %v1917 = vadd.f32 %v1748, %v1916
      %v1918 = vpop.f32.mrf.mxu0
      %v1919 = vadd.f32 %v1750, %v1918
      %1920 = vmatmul.bf16.gmra.mxu0 %v975
      %v1921 = vpop.f32.mrf.mxu0
      %v1922 = vadd.f32 %v1753, %v1921
      %v1923 = vpop.f32.mrf.mxu0
      %v1924 = vadd.f32 %v1755, %v1923
      %1925 = vmatmul.bf16.gmra.mxu0 %v980
      %v1926 = vpop.f32.mrf.mxu0
      %v1927 = vadd.f32 %v1758, %v1926
      %v1928 = vpop.f32.mrf.mxu0
      %v1929 = vadd.f32 %v1760, %v1928
      %1930 = vmatmul.bf16.gmra.mxu0 %v985
      %v1931 = vpop.f32.mrf.mxu0
      %v1932 = vadd.f32 %v1763, %v1931
      %v1933 = vpop.f32.mrf.mxu0
      %v1934 = vadd.f32 %v1765, %v1933
      %1935 = vmatmul.bf16.gmra.mxu0 %v990
      %v1936 = vpop.f32.mrf.mxu0
      %v1937 = vadd.f32 %v1768, %v1936
      %v1938 = vpop.f32.mrf.mxu0
      %v1939 = vadd.f32 %v1770, %v1938
      %1940 = vmatmul.bf16.gmra.mxu0 %v995
      %v1941 = vpop.f32.mrf.mxu0
      %v1942 = vadd.f32 %v1773, %v1941
      %v1943 = vpop.f32.mrf.mxu0
      %v1944 = vadd.f32 %v1775, %v1943
      %1945 = vmatmul.bf16.gmra.mxu0 %v1000
      %v1946 = vpop.f32.mrf.mxu0
      %v1947 = vadd.f32 %v1778, %v1946
      %v1948 = vpop.f32.mrf.mxu0
      %v1949 = vadd.f32 %v1780, %v1948
      %1950 = vmatmul.bf16.gmra.mxu0 %v1005
      %v1951 = vpop.f32.mrf.mxu0
      %v1952 = vadd.f32 %v1783, %v1951
      %v1953 = vpop.f32.mrf.mxu0
      %v1954 = vadd.f32 %v1785, %v1953
      %1955 = vmatmul.bf16.gmra.mxu0 %v1010
      %v1956 = vpop.f32.mrf.mxu0
      %v1957 = vadd.f32 %v1788, %v1956
      %v1958 = vpop.f32.mrf.mxu0
      %v1959 = vadd.f32 %v1790, %v1958
      %1960 = vmatmul.bf16.gmra.mxu0 %v1015
      %v1961 = vpop.f32.mrf.mxu0
      %v1962 = vadd.f32 %v1793, %v1961
      %v1963 = vpop.f32.mrf.mxu0
      %v1964 = vadd.f32 %v1795, %v1963
      %1965 = vmatmul.bf16.gmra.mxu0 %v1020
      %v1966 = vpop.f32.mrf.mxu0
      %v1967 = vadd.f32 %v1798, %v1966
      %v1968 = vpop.f32.mrf.mxu0
      %v1969 = vadd.f32 %v1800, %v1968
      %1970 = vmatmul.bf16.gmra.mxu0 %v1025
      %v1971 = vpop.f32.mrf.mxu0
      %v1972 = vadd.f32 %v1803, %v1971
      %v1973 = vpop.f32.mrf.mxu0
      %v1974 = vadd.f32 %v1805, %v1973
      %1975 = vmatmul.bf16.gmra.mxu0 %v1030
      %v1976 = vpop.f32.mrf.mxu0
      %v1977 = vadd.f32 %v1808, %v1976
      %v1978 = vpop.f32.mrf.mxu0
      %v1979 = vadd.f32 %v1810, %v1978
      %1980 = vmatmul.bf16.gmra.mxu0 %v1035
      %v1981 = vpop.f32.mrf.mxu0
      %v1982 = vadd.f32 %v1813, %v1981
      %v1983 = vpop.f32.mrf.mxu0
      %v1984 = vadd.f32 %v1815, %v1983
      %1985 = vmatmul.bf16.gmra.mxu0 %v1040
      %v1986 = vpop.f32.mrf.mxu0
      %v1987 = vadd.f32 %v1818, %v1986
      %v1988 = vpop.f32.mrf.mxu0
      %v1989 = vadd.f32 %v1820, %v1988
      %1990 = vmatmul.bf16.gmra.mxu0 %v1045
      %v1991 = vpop.f32.mrf.mxu0
      %v1992 = vadd.f32 %v1823, %v1991
      %v1993 = vpop.f32.mrf.mxu0
      %v1994 = vadd.f32 %v1825, %v1993
      %1995 = vmatmul.bf16.gmra.mxu0 %v1050
      %v1996 = vpop.f32.mrf.mxu0
      %v1997 = vadd.f32 %v1828, %v1996
      %v1998 = vpop.f32.mrf.mxu0
      %v1999 = vadd.f32 %v1830, %v1998
      %2000 = vmatmul.bf16.gmra.mxu0 %v1055
      %v2001 = vpop.f32.mrf.mxu0
      %v2002 = vadd.f32 %v1833, %v2001
      %v2003 = vpop.f32.mrf.mxu0
      %v2004 = vadd.f32 %v1835, %v2003
      %2005 = vmatmul.bf16.gmra.mxu0 %v1060
      %v2006 = vpop.f32.mrf.mxu0
      %v2007 = vadd.f32 %v1838, %v2006
      %v2008 = vpop.f32.mrf.mxu0
      %v2009 = vadd.f32 %v1840, %v2008
      %2010 = vmatmul.bf16.gmra.mxu0 %v1065
      %v2011 = vpop.f32.mrf.mxu0
      %v2012 = vadd.f32 %v1843, %v2011
      %v2013 = vpop.f32.mrf.mxu0
      %v2014 = vadd.f32 %v1845, %v2013
      %2015 = vmatmul.bf16.gmra.mxu0 %v1070
      %v2016 = vpop.f32.mrf.mxu0
      %v2017 = vadd.f32 %v1848, %v2016
      %v2018 = vpop.f32.mrf.mxu0
      %v2019 = vadd.f32 %v1850, %v2018
      %2020 = vmatmul.bf16.gmra.mxu0 %v1075
      %v2021 = vpop.f32.mrf.mxu0
      %v2022 = vadd.f32 %v1853, %v2021
      %v2023 = vpop.f32.mrf.mxu0
      %v2024 = vadd.f32 %v1855, %v2023
      %2025 = vmatmul.bf16.gmra.mxu0 %v1080
      %v2026 = vpop.f32.mrf.mxu0
      %v2027 = vadd.f32 %v1858, %v2026
      %v2028 = vpop.f32.mrf.mxu0
      %v2029 = vadd.f32 %v1860, %v2028
      %2030 = vmatmul.bf16.gmra.mxu0 %v1085
      %v2031 = vpop.f32.mrf.mxu0
      %v2032 = vadd.f32 %v1863, %v2031
      %v2033 = vpop.f32.mrf.mxu0
      %v2034 = vadd.f32 %v1865, %v2033
      %2035 = vmatmul.bf16.gmra.mxu0 %v1090
      %v2036 = vpop.f32.mrf.mxu0
      %v2037 = vadd.f32 %v1868, %v2036
      %v2038 = vpop.f32.mrf.mxu0
      %v2039 = vadd.f32 %v1870, %v2038
      %2040 = vmatmul.bf16.gmra.mxu0 %v1095
      %v2041 = vpop.f32.mrf.mxu0
      %v2042 = vadd.f32 %v1873, %v2041
      %v2043 = vpop.f32.mrf.mxu0
      %v2044 = vadd.f32 %v1875, %v2043
      %2045 = vmatmul.bf16.gmra.mxu0 %v1100
      %v2046 = vpop.f32.mrf.mxu0
      %v2047 = vadd.f32 %v1878, %v2046
      %v2048 = vpop.f32.mrf.mxu0
      %v2049 = vadd.f32 %v1880, %v2048
      %2050 = vmatmul.bf16.gmra.mxu0 %v1105
      %v2051 = vpop.f32.mrf.mxu0
      %v2052 = vadd.f32 %v1883, %v2051
      %v2053 = vpop.f32.mrf.mxu0
      %v2054 = vadd.f32 %v1885, %v2053
      %2055 = vmatmul.bf16.gmra.mxu0 %v1110
      %v2056 = vpop.f32.mrf.mxu0
      %v2057 = vadd.f32 %v1888, %v2056
      %v2058 = vpop.f32.mrf.mxu0
      %v2059 = vadd.f32 %v1890, %v2058
      %2060 = vmatmul.bf16.gmra.mxu0 %v1115
      %v2061 = vpop.f32.mrf.mxu0
      %v2062 = vadd.f32 %v1893, %v2061
      %v2063 = vpop.f32.mrf.mxu0
      %v2064 = vadd.f32 %v1895, %v2063
      %2065 = vdwg.mxu0
      %2066 = vmatpush.bf16.msra.mxu0 %v1421
      %2067 = vmatpush.bf16.msra.mxu0 %v1420
      %2068 = vmatpush.bf16.msra.mxu0 %v1419
      %2069 = vmatpush.bf16.msra.mxu0 %v1418
      %2070 = vmatpush.bf16.msra.mxu0 %v1417
      %2071 = vmatpush.bf16.msra.mxu0 %v1416
      %2072 = vmatpush.bf16.msra.mxu0 %v1415
      %2073 = vmatpush.bf16.msra.mxu0 %v1414
      %2074 = vmatmul.bf16.gmra.mxu0 %v961
      %v2075 = vpop.f32.mrf.mxu0
      %v2076 = vadd.f32 %v1907, %v2075
      %v2077 = vpop.f32.mrf.mxu0
      %v2078 = vadd.f32 %v1909, %v2077
      %2079 = vmatmul.bf16.gmra.mxu0 %v966
      %v2080 = vpop.f32.mrf.mxu0
      %v2081 = vadd.f32 %v1912, %v2080
      %v2082 = vpop.f32.mrf.mxu0
      %v2083 = vadd.f32 %v1914, %v2082
      %2084 = vmatmul.bf16.gmra.mxu0 %v971
      %v2085 = vpop.f32.mrf.mxu0
      %v2086 = vadd.f32 %v1917, %v2085
      %v2087 = vpop.f32.mrf.mxu0
      %v2088 = vadd.f32 %v1919, %v2087
      %2089 = vmatmul.bf16.gmra.mxu0 %v976
      %v2090 = vpop.f32.mrf.mxu0
      %v2091 = vadd.f32 %v1922, %v2090
      %v2092 = vpop.f32.mrf.mxu0
      %v2093 = vadd.f32 %v1924, %v2092
      %2094 = vmatmul.bf16.gmra.mxu0 %v981
      %v2095 = vpop.f32.mrf.mxu0
      %v2096 = vadd.f32 %v1927, %v2095
      %v2097 = vpop.f32.mrf.mxu0
      %v2098 = vadd.f32 %v1929, %v2097
      %2099 = vmatmul.bf16.gmra.mxu0 %v986
      %v2100 = vpop.f32.mrf.mxu0
      %v2101 = vadd.f32 %v1932, %v2100
      %v2102 = vpop.f32.mrf.mxu0
      %v2103 = vadd.f32 %v1934, %v2102
      %2104 = vmatmul.bf16.gmra.mxu0 %v991
      %v2105 = vpop.f32.mrf.mxu0
      %v2106 = vadd.f32 %v1937, %v2105
      %v2107 = vpop.f32.mrf.mxu0
      %v2108 = vadd.f32 %v1939, %v2107
      %2109 = vmatmul.bf16.gmra.mxu0 %v996
      %v2110 = vpop.f32.mrf.mxu0
      %v2111 = vadd.f32 %v1942, %v2110
      %v2112 = vpop.f32.mrf.mxu0
      %v2113 = vadd.f32 %v1944, %v2112
      %2114 = vmatmul.bf16.gmra.mxu0 %v1001
      %v2115 = vpop.f32.mrf.mxu0
      %v2116 = vadd.f32 %v1947, %v2115
      %v2117 = vpop.f32.mrf.mxu0
      %v2118 = vadd.f32 %v1949, %v2117
      %2119 = vmatmul.bf16.gmra.mxu0 %v1006
      %v2120 = vpop.f32.mrf.mxu0
      %v2121 = vadd.f32 %v1952, %v2120
      %v2122 = vpop.f32.mrf.mxu0
      %v2123 = vadd.f32 %v1954, %v2122
      %2124 = vmatmul.bf16.gmra.mxu0 %v1011
      %v2125 = vpop.f32.mrf.mxu0
      %v2126 = vadd.f32 %v1957, %v2125
      %v2127 = vpop.f32.mrf.mxu0
      %v2128 = vadd.f32 %v1959, %v2127
      %2129 = vmatmul.bf16.gmra.mxu0 %v1016
      %v2130 = vpop.f32.mrf.mxu0
      %v2131 = vadd.f32 %v1962, %v2130
      %v2132 = vpop.f32.mrf.mxu0
      %v2133 = vadd.f32 %v1964, %v2132
      %2134 = vmatmul.bf16.gmra.mxu0 %v1021
      %v2135 = vpop.f32.mrf.mxu0
      %v2136 = vadd.f32 %v1967, %v2135
      %v2137 = vpop.f32.mrf.mxu0
      %v2138 = vadd.f32 %v1969, %v2137
      %2139 = vmatmul.bf16.gmra.mxu0 %v1026
      %v2140 = vpop.f32.mrf.mxu0
      %v2141 = vadd.f32 %v1972, %v2140
      %v2142 = vpop.f32.mrf.mxu0
      %v2143 = vadd.f32 %v1974, %v2142
      %2144 = vmatmul.bf16.gmra.mxu0 %v1031
      %v2145 = vpop.f32.mrf.mxu0
      %v2146 = vadd.f32 %v1977, %v2145
      %v2147 = vpop.f32.mrf.mxu0
      %v2148 = vadd.f32 %v1979, %v2147
      %2149 = vmatmul.bf16.gmra.mxu0 %v1036
      %v2150 = vpop.f32.mrf.mxu0
      %v2151 = vadd.f32 %v1982, %v2150
      %v2152 = vpop.f32.mrf.mxu0
      %v2153 = vadd.f32 %v1984, %v2152
      %2154 = vmatmul.bf16.gmra.mxu0 %v1041
      %v2155 = vpop.f32.mrf.mxu0
      %v2156 = vadd.f32 %v1987, %v2155
      %v2157 = vpop.f32.mrf.mxu0
      %v2158 = vadd.f32 %v1989, %v2157
      %2159 = vmatmul.bf16.gmra.mxu0 %v1046
      %v2160 = vpop.f32.mrf.mxu0
      %v2161 = vadd.f32 %v1992, %v2160
      %v2162 = vpop.f32.mrf.mxu0
      %v2163 = vadd.f32 %v1994, %v2162
      %2164 = vmatmul.bf16.gmra.mxu0 %v1051
      %v2165 = vpop.f32.mrf.mxu0
      %v2166 = vadd.f32 %v1997, %v2165
      %v2167 = vpop.f32.mrf.mxu0
      %v2168 = vadd.f32 %v1999, %v2167
      %2169 = vmatmul.bf16.gmra.mxu0 %v1056
      %v2170 = vpop.f32.mrf.mxu0
      %v2171 = vadd.f32 %v2002, %v2170
      %v2172 = vpop.f32.mrf.mxu0
      %v2173 = vadd.f32 %v2004, %v2172
      %2174 = vmatmul.bf16.gmra.mxu0 %v1061
      %v2175 = vpop.f32.mrf.mxu0
      %v2176 = vadd.f32 %v2007, %v2175
      %v2177 = vpop.f32.mrf.mxu0
      %v2178 = vadd.f32 %v2009, %v2177
      %2179 = vmatmul.bf16.gmra.mxu0 %v1066
      %v2180 = vpop.f32.mrf.mxu0
      %v2181 = vadd.f32 %v2012, %v2180
      %v2182 = vpop.f32.mrf.mxu0
      %v2183 = vadd.f32 %v2014, %v2182
      %2184 = vmatmul.bf16.gmra.mxu0 %v1071
      %v2185 = vpop.f32.mrf.mxu0
      %v2186 = vadd.f32 %v2017, %v2185
      %v2187 = vpop.f32.mrf.mxu0
      %v2188 = vadd.f32 %v2019, %v2187
      %2189 = vmatmul.bf16.gmra.mxu0 %v1076
      %v2190 = vpop.f32.mrf.mxu0
      %v2191 = vadd.f32 %v2022, %v2190
      %v2192 = vpop.f32.mrf.mxu0
      %v2193 = vadd.f32 %v2024, %v2192
      %2194 = vmatmul.bf16.gmra.mxu0 %v1081
      %v2195 = vpop.f32.mrf.mxu0
      %v2196 = vadd.f32 %v2027, %v2195
      %v2197 = vpop.f32.mrf.mxu0
      %v2198 = vadd.f32 %v2029, %v2197
      %2199 = vmatmul.bf16.gmra.mxu0 %v1086
      %v2200 = vpop.f32.mrf.mxu0
      %v2201 = vadd.f32 %v2032, %v2200
      %v2202 = vpop.f32.mrf.mxu0
      %v2203 = vadd.f32 %v2034, %v2202
      %2204 = vmatmul.bf16.gmra.mxu0 %v1091
      %v2205 = vpop.f32.mrf.mxu0
      %v2206 = vadd.f32 %v2037, %v2205
      %v2207 = vpop.f32.mrf.mxu0
      %v2208 = vadd.f32 %v2039, %v2207
      %2209 = vmatmul.bf16.gmra.mxu0 %v1096
      %v2210 = vpop.f32.mrf.mxu0
      %v2211 = vadd.f32 %v2042, %v2210
      %v2212 = vpop.f32.mrf.mxu0
      %v2213 = vadd.f32 %v2044, %v2212
      %2214 = vmatmul.bf16.gmra.mxu0 %v1101
      %v2215 = vpop.f32.mrf.mxu0
      %v2216 = vadd.f32 %v2047, %v2215
      %v2217 = vpop.f32.mrf.mxu0
      %v2218 = vadd.f32 %v2049, %v2217
      %2219 = vmatmul.bf16.gmra.mxu0 %v1106
      %v2220 = vpop.f32.mrf.mxu0
      %v2221 = vadd.f32 %v2052, %v2220
      %v2222 = vpop.f32.mrf.mxu0
      %v2223 = vadd.f32 %v2054, %v2222
      %2224 = vmatmul.bf16.gmra.mxu0 %v1111
      %v2225 = vpop.f32.mrf.mxu0
      %v2226 = vadd.f32 %v2057, %v2225
      %v2227 = vpop.f32.mrf.mxu0
      %v2228 = vadd.f32 %v2059, %v2227
      %2229 = vmatmul.bf16.gmra.mxu0 %v1116
      %v2230 = vpop.f32.mrf.mxu0
      %v2231 = vadd.f32 %v2062, %v2230
      %v2232 = vpop.f32.mrf.mxu0
      %v2233 = vadd.f32 %v2064, %v2232
      %2234 = vdwg.mxu0
      %2235 = vmatpush.bf16.msra.mxu0 0
      %2236 = vmatpush.bf16.msra.mxu0 0
      %2237 = vmatpush.bf16.msra.mxu0 0
      %2238 = vmatpush.bf16.msra.mxu0 0
      %2239 = vmatpush.bf16.msra.mxu0 %v1425
      %2240 = vmatpush.bf16.msra.mxu0 %v1424
      %2241 = vmatpush.bf16.msra.mxu0 %v1423
      %2242 = vmatpush.bf16.msra.mxu0 %v1422
      %2243 = vmatmul.bf16.gmra.mxu0 %v1464
      %v2244 = vpop.f32.mrf.mxu0
      %v2245 = vadd.f32 %v2076, %v2244
      %v2246 = vpop.f32.mrf.mxu0
      %v2247 = vadd.f32 %v2078, %v2246
      %2248 = vmatmul.bf16.gmra.mxu0 %v1467
      %v2249 = vpop.f32.mrf.mxu0
      %v2250 = vadd.f32 %v2081, %v2249
      %v2251 = vpop.f32.mrf.mxu0
      %v2252 = vadd.f32 %v2083, %v2251
      %2253 = vmatmul.bf16.gmra.mxu0 %v1470
      %v2254 = vpop.f32.mrf.mxu0
      %v2255 = vadd.f32 %v2086, %v2254
      %v2256 = vpop.f32.mrf.mxu0
      %v2257 = vadd.f32 %v2088, %v2256
      %2258 = vmatmul.bf16.gmra.mxu0 %v1473
      %v2259 = vpop.f32.mrf.mxu0
      %v2260 = vadd.f32 %v2091, %v2259
      %v2261 = vpop.f32.mrf.mxu0
      %v2262 = vadd.f32 %v2093, %v2261
      %2263 = vmatmul.bf16.gmra.mxu0 %v1476
      %v2264 = vpop.f32.mrf.mxu0
      %v2265 = vadd.f32 %v2096, %v2264
      %v2266 = vpop.f32.mrf.mxu0
      %v2267 = vadd.f32 %v2098, %v2266
      %2268 = vmatmul.bf16.gmra.mxu0 %v1479
      %v2269 = vpop.f32.mrf.mxu0
      %v2270 = vadd.f32 %v2101, %v2269
      %v2271 = vpop.f32.mrf.mxu0
      %v2272 = vadd.f32 %v2103, %v2271
      %2273 = vmatmul.bf16.gmra.mxu0 %v1482
      %v2274 = vpop.f32.mrf.mxu0
      %v2275 = vadd.f32 %v2106, %v2274
      %v2276 = vpop.f32.mrf.mxu0
      %v2277 = vadd.f32 %v2108, %v2276
      %2278 = vmatmul.bf16.gmra.mxu0 %v1485
      %v2279 = vpop.f32.mrf.mxu0
      %v2280 = vadd.f32 %v2111, %v2279
      %v2281 = vpop.f32.mrf.mxu0
      %v2282 = vadd.f32 %v2113, %v2281
      %2283 = vmatmul.bf16.gmra.mxu0 %v1488
      %v2284 = vpop.f32.mrf.mxu0
      %v2285 = vadd.f32 %v2116, %v2284
      %v2286 = vpop.f32.mrf.mxu0
      %v2287 = vadd.f32 %v2118, %v2286
      %2288 = vmatmul.bf16.gmra.mxu0 %v1491
      %v2289 = vpop.f32.mrf.mxu0
      %v2290 = vadd.f32 %v2121, %v2289
      %v2291 = vpop.f32.mrf.mxu0
      %v2292 = vadd.f32 %v2123, %v2291
      %2293 = vmatmul.bf16.gmra.mxu0 %v1494
      %v2294 = vpop.f32.mrf.mxu0
      %v2295 = vadd.f32 %v2126, %v2294
      %v2296 = vpop.f32.mrf.mxu0
      %v2297 = vadd.f32 %v2128, %v2296
      %2298 = vmatmul.bf16.gmra.mxu0 %v1497
      %v2299 = vpop.f32.mrf.mxu0
      %v2300 = vadd.f32 %v2131, %v2299
      %v2301 = vpop.f32.mrf.mxu0
      %v2302 = vadd.f32 %v2133, %v2301
      %2303 = vmatmul.bf16.gmra.mxu0 %v1500
      %v2304 = vpop.f32.mrf.mxu0
      %v2305 = vadd.f32 %v2136, %v2304
      %v2306 = vpop.f32.mrf.mxu0
      %v2307 = vadd.f32 %v2138, %v2306
      %2308 = vmatmul.bf16.gmra.mxu0 %v1503
      %v2309 = vpop.f32.mrf.mxu0
      %v2310 = vadd.f32 %v2141, %v2309
      %v2311 = vpop.f32.mrf.mxu0
      %v2312 = vadd.f32 %v2143, %v2311
      %2313 = vmatmul.bf16.gmra.mxu0 %v1506
      %v2314 = vpop.f32.mrf.mxu0
      %v2315 = vadd.f32 %v2146, %v2314
      %v2316 = vpop.f32.mrf.mxu0
      %v2317 = vadd.f32 %v2148, %v2316
      %2318 = vmatmul.bf16.gmra.mxu0 %v1509
      %v2319 = vpop.f32.mrf.mxu0
      %v2320 = vadd.f32 %v2151, %v2319
      %v2321 = vpop.f32.mrf.mxu0
      %v2322 = vadd.f32 %v2153, %v2321
      %2323 = vmatmul.bf16.gmra.mxu0 %v1512
      %v2324 = vpop.f32.mrf.mxu0
      %v2325 = vadd.f32 %v2156, %v2324
      %v2326 = vpop.f32.mrf.mxu0
      %v2327 = vadd.f32 %v2158, %v2326
      %2328 = vmatmul.bf16.gmra.mxu0 %v1515
      %v2329 = vpop.f32.mrf.mxu0
      %v2330 = vadd.f32 %v2161, %v2329
      %v2331 = vpop.f32.mrf.mxu0
      %v2332 = vadd.f32 %v2163, %v2331
      %2333 = vmatmul.bf16.gmra.mxu0 %v1518
      %v2334 = vpop.f32.mrf.mxu0
      %v2335 = vadd.f32 %v2166, %v2334
      %v2336 = vpop.f32.mrf.mxu0
      %v2337 = vadd.f32 %v2168, %v2336
      %2338 = vmatmul.bf16.gmra.mxu0 %v1521
      %v2339 = vpop.f32.mrf.mxu0
      %v2340 = vadd.f32 %v2171, %v2339
      %v2341 = vpop.f32.mrf.mxu0
      %v2342 = vadd.f32 %v2173, %v2341
      %2343 = vmatmul.bf16.gmra.mxu0 %v1524
      %v2344 = vpop.f32.mrf.mxu0
      %v2345 = vadd.f32 %v2176, %v2344
      %v2346 = vpop.f32.mrf.mxu0
      %v2347 = vadd.f32 %v2178, %v2346
      %2348 = vmatmul.bf16.gmra.mxu0 %v1527
      %v2349 = vpop.f32.mrf.mxu0
      %v2350 = vadd.f32 %v2181, %v2349
      %v2351 = vpop.f32.mrf.mxu0
      %v2352 = vadd.f32 %v2183, %v2351
      %2353 = vmatmul.bf16.gmra.mxu0 %v1530
      %v2354 = vpop.f32.mrf.mxu0
      %v2355 = vadd.f32 %v2186, %v2354
      %v2356 = vpop.f32.mrf.mxu0
      %v2357 = vadd.f32 %v2188, %v2356
      %2358 = vmatmul.bf16.gmra.mxu0 %v1533
      %v2359 = vpop.f32.mrf.mxu0
      %v2360 = vadd.f32 %v2191, %v2359
      %v2361 = vpop.f32.mrf.mxu0
      %v2362 = vadd.f32 %v2193, %v2361
      %2363 = vmatmul.bf16.gmra.mxu0 %v1536
      %v2364 = vpop.f32.mrf.mxu0
      %v2365 = vadd.f32 %v2196, %v2364
      %v2366 = vpop.f32.mrf.mxu0
      %v2367 = vadd.f32 %v2198, %v2366
      %2368 = vmatmul.bf16.gmra.mxu0 %v1539
      %v2369 = vpop.f32.mrf.mxu0
      %v2370 = vadd.f32 %v2201, %v2369
      %v2371 = vpop.f32.mrf.mxu0
      %v2372 = vadd.f32 %v2203, %v2371
      %2373 = vmatmul.bf16.gmra.mxu0 %v1542
      %v2374 = vpop.f32.mrf.mxu0
      %v2375 = vadd.f32 %v2206, %v2374
      %v2376 = vpop.f32.mrf.mxu0
      %v2377 = vadd.f32 %v2208, %v2376
      %2378 = vmatmul.bf16.gmra.mxu0 %v1545
      %v2379 = vpop.f32.mrf.mxu0
      %v2380 = vadd.f32 %v2211, %v2379
      %v2381 = vpop.f32.mrf.mxu0
      %v2382 = vadd.f32 %v2213, %v2381
      %2383 = vmatmul.bf16.gmra.mxu0 %v1548
      %v2384 = vpop.f32.mrf.mxu0
      %v2385 = vadd.f32 %v2216, %v2384
      %v2386 = vpop.f32.mrf.mxu0
      %v2387 = vadd.f32 %v2218, %v2386
      %2388 = vmatmul.bf16.gmra.mxu0 %v1551
      %v2389 = vpop.f32.mrf.mxu0
      %v2390 = vadd.f32 %v2221, %v2389
      %v2391 = vpop.f32.mrf.mxu0
      %v2392 = vadd.f32 %v2223, %v2391
      %2393 = vmatmul.bf16.gmra.mxu0 %v1554
      %v2394 = vpop.f32.mrf.mxu0
      %v2395 = vadd.f32 %v2226, %v2394
      %v2396 = vpop.f32.mrf.mxu0
      %v2397 = vadd.f32 %v2228, %v2396
      %2398 = vmatmul.bf16.gmra.mxu0 %v1557
      %v2399 = vpop.f32.mrf.mxu0
      %v2400 = vadd.f32 %v2231, %v2399
      %v2401 = vpop.f32.mrf.mxu0
      %v2402 = vadd.f32 %v2233, %v2401
      %2403 = vdwg.mxu0
      %vm2404 = vcmp.ge.f32.partialorder %v2245, 0.0
      %vm2405 = vcmp.ge.f32.partialorder %v2247, 0.0
      %vm2406 = vcmp.ge.f32.partialorder %v2250, 0.0
      %vm2407 = vcmp.ge.f32.partialorder %v2252, 0.0
      %vm2408 = vcmp.ge.f32.partialorder %v2255, 0.0
      %vm2409 = vcmp.ge.f32.partialorder %v2257, 0.0
      %vm2410 = vcmp.ge.f32.partialorder %v2260, 0.0
      %vm2411 = vcmp.ge.f32.partialorder %v2262, 0.0
      %vm2412 = vcmp.ge.f32.partialorder %v2265, 0.0
      %vm2413 = vcmp.ge.f32.partialorder %v2267, 0.0
      %vm2414 = vcmp.ge.f32.partialorder %v2270, 0.0
      %vm2415 = vcmp.ge.f32.partialorder %v2272, 0.0
      %vm2416 = vcmp.ge.f32.partialorder %v2275, 0.0
      %vm2417 = vcmp.ge.f32.partialorder %v2277, 0.0
      %vm2418 = vcmp.ge.f32.partialorder %v2280, 0.0
      %vm2419 = vcmp.ge.f32.partialorder %v2282, 0.0
      %vm2420 = vcmp.ge.f32.partialorder %v2285, 0.0
      %vm2421 = vcmp.ge.f32.partialorder %v2287, 0.0
      %vm2422 = vcmp.ge.f32.partialorder %v2290, 0.0
      %vm2423 = vcmp.ge.f32.partialorder %v2292, 0.0
      %vm2424 = vcmp.ge.f32.partialorder %v2295, 0.0
      %vm2425 = vcmp.ge.f32.partialorder %v2297, 0.0
      %vm2426 = vcmp.ge.f32.partialorder %v2300, 0.0
      %vm2427 = vcmp.ge.f32.partialorder %v2302, 0.0
      %vm2428 = vcmp.ge.f32.partialorder %v2305, 0.0
      %vm2429 = vcmp.ge.f32.partialorder %v2307, 0.0
      %vm2430 = vcmp.ge.f32.partialorder %v2310, 0.0
      %vm2431 = vcmp.ge.f32.partialorder %v2312, 0.0
      %vm2432 = vcmp.ge.f32.partialorder %v2315, 0.0
      %vm2433 = vcmp.ge.f32.partialorder %v2317, 0.0
      %vm2434 = vcmp.ge.f32.partialorder %v2320, 0.0
      %vm2435 = vcmp.ge.f32.partialorder %v2322, 0.0
      %vm2436 = vcmp.ge.f32.partialorder %v2325, 0.0
      %vm2437 = vcmp.ge.f32.partialorder %v2327, 0.0
      %vm2438 = vcmp.ge.f32.partialorder %v2330, 0.0
      %vm2439 = vcmp.ge.f32.partialorder %v2332, 0.0
      %vm2440 = vcmp.ge.f32.partialorder %v2335, 0.0
      %vm2441 = vcmp.ge.f32.partialorder %v2337, 0.0
      %vm2442 = vcmp.ge.f32.partialorder %v2340, 0.0
      %vm2443 = vcmp.ge.f32.partialorder %v2342, 0.0
      %vm2444 = vcmp.ge.f32.partialorder %v2345, 0.0
      %vm2445 = vcmp.ge.f32.partialorder %v2347, 0.0
      %vm2446 = vcmp.ge.f32.partialorder %v2350, 0.0
      %vm2447 = vcmp.ge.f32.partialorder %v2352, 0.0
      %vm2448 = vcmp.ge.f32.partialorder %v2355, 0.0
      %vm2449 = vcmp.ge.f32.partialorder %v2357, 0.0
      %vm2450 = vcmp.ge.f32.partialorder %v2360, 0.0
      %vm2451 = vcmp.ge.f32.partialorder %v2362, 0.0
      %vm2452 = vcmp.ge.f32.partialorder %v2365, 0.0
      %vm2453 = vcmp.ge.f32.partialorder %v2367, 0.0
      %vm2454 = vcmp.ge.f32.partialorder %v2370, 0.0
      %vm2455 = vcmp.ge.f32.partialorder %v2372, 0.0
      %vm2456 = vcmp.ge.f32.partialorder %v2375, 0.0
      %vm2457 = vcmp.ge.f32.partialorder %v2377, 0.0
      %vm2458 = vcmp.ge.f32.partialorder %v2380, 0.0
      %vm2459 = vcmp.ge.f32.partialorder %v2382, 0.0
      %vm2460 = vcmp.ge.f32.partialorder %v2385, 0.0
      %vm2461 = vcmp.ge.f32.partialorder %v2387, 0.0
      %vm2462 = vcmp.ge.f32.partialorder %v2390, 0.0
      %vm2463 = vcmp.ge.f32.partialorder %v2392, 0.0
      %vm2464 = vcmp.ge.f32.partialorder %v2395, 0.0
      %vm2465 = vcmp.ge.f32.partialorder %v2397, 0.0
      %vm2466 = vcmp.ge.f32.partialorder %v2400, 0.0
      %vm2467 = vcmp.ge.f32.partialorder %v2402, 0.0
      %v2468 = vmul.f32 %v2245, 0.01
      %v2469 = vmul.f32 %v2247, 0.01
      %v2470 = vmul.f32 %v2250, 0.01
      %v2471 = vmul.f32 %v2252, 0.01
      %v2472 = vmul.f32 %v2255, 0.01
      %v2473 = vmul.f32 %v2257, 0.01
      %v2474 = vmul.f32 %v2260, 0.01
      %v2475 = vmul.f32 %v2262, 0.01
      %v2476 = vmul.f32 %v2265, 0.01
      %v2477 = vmul.f32 %v2267, 0.01
      %v2478 = vmul.f32 %v2270, 0.01
      %v2479 = vmul.f32 %v2272, 0.01
      %v2480 = vmul.f32 %v2275, 0.01
      %v2481 = vmul.f32 %v2277, 0.01
      %v2482 = vmul.f32 %v2280, 0.01
      %v2483 = vmul.f32 %v2282, 0.01
      %v2484 = vmul.f32 %v2285, 0.01
      %v2485 = vmul.f32 %v2287, 0.01
      %v2486 = vmul.f32 %v2290, 0.01
      %v2487 = vmul.f32 %v2292, 0.01
      %v2488 = vmul.f32 %v2295, 0.01
      %v2489 = vmul.f32 %v2297, 0.01
      %v2490 = vmul.f32 %v2300, 0.01
      %v2491 = vmul.f32 %v2302, 0.01
      %v2492 = vmul.f32 %v2305, 0.01
      %v2493 = vmul.f32 %v2307, 0.01
      %v2494 = vmul.f32 %v2310, 0.01
      %v2495 = vmul.f32 %v2312, 0.01
      %v2496 = vmul.f32 %v2315, 0.01
      %v2497 = vmul.f32 %v2317, 0.01
      %v2498 = vmul.f32 %v2320, 0.01
      %v2499 = vmul.f32 %v2322, 0.01
      %v2500 = vmul.f32 %v2325, 0.01
      %v2501 = vmul.f32 %v2327, 0.01
      %v2502 = vmul.f32 %v2330, 0.01
      %v2503 = vmul.f32 %v2332, 0.01
      %v2504 = vmul.f32 %v2335, 0.01
      %v2505 = vmul.f32 %v2337, 0.01
      %v2506 = vmul.f32 %v2340, 0.01
      %v2507 = vmul.f32 %v2342, 0.01
      %v2508 = vmul.f32 %v2345, 0.01
      %v2509 = vmul.f32 %v2347, 0.01
      %v2510 = vmul.f32 %v2350, 0.01
      %v2511 = vmul.f32 %v2352, 0.01
      %v2512 = vmul.f32 %v2355, 0.01
      %v2513 = vmul.f32 %v2357, 0.01
      %v2514 = vmul.f32 %v2360, 0.01
      %v2515 = vmul.f32 %v2362, 0.01
      %v2516 = vmul.f32 %v2365, 0.01
      %v2517 = vmul.f32 %v2367, 0.01
      %v2518 = vmul.f32 %v2370, 0.01
      %v2519 = vmul.f32 %v2372, 0.01
      %v2520 = vmul.f32 %v2375, 0.01
      %v2521 = vmul.f32 %v2377, 0.01
      %v2522 = vmul.f32 %v2380, 0.01
      %v2523 = vmul.f32 %v2382, 0.01
      %v2524 = vmul.f32 %v2385, 0.01
      %v2525 = vmul.f32 %v2387, 0.01
      %v2526 = vmul.f32 %v2390, 0.01
      %v2527 = vmul.f32 %v2392, 0.01
      %v2528 = vmul.f32 %v2395, 0.01
      %v2529 = vmul.f32 %v2397, 0.01
      %v2530 = vmul.f32 %v2400, 0.01
      %v2531 = vmul.f32 %v2402, 0.01
      %v2532 = vsel %vm2404, %v2245, %v2468
      %v2533 = vsel %vm2405, %v2247, %v2469
      %v2534 = vsel %vm2406, %v2250, %v2470
      %v2535 = vsel %vm2407, %v2252, %v2471
      %v2536 = vsel %vm2408, %v2255, %v2472
      %v2537 = vsel %vm2409, %v2257, %v2473
      %v2538 = vsel %vm2410, %v2260, %v2474
      %v2539 = vsel %vm2411, %v2262, %v2475
      %v2540 = vsel %vm2412, %v2265, %v2476
      %v2541 = vsel %vm2413, %v2267, %v2477
      %v2542 = vsel %vm2414, %v2270, %v2478
      %v2543 = vsel %vm2415, %v2272, %v2479
      %v2544 = vsel %vm2416, %v2275, %v2480
      %v2545 = vsel %vm2417, %v2277, %v2481
      %v2546 = vsel %vm2418, %v2280, %v2482
      %v2547 = vsel %vm2419, %v2282, %v2483
      %v2548 = vsel %vm2420, %v2285, %v2484
      %v2549 = vsel %vm2421, %v2287, %v2485
      %v2550 = vsel %vm2422, %v2290, %v2486
      %v2551 = vsel %vm2423, %v2292, %v2487
      %v2552 = vsel %vm2424, %v2295, %v2488
      %v2553 = vsel %vm2425, %v2297, %v2489
      %v2554 = vsel %vm2426, %v2300, %v2490
      %v2555 = vsel %vm2427, %v2302, %v2491
      %v2556 = vsel %vm2428, %v2305, %v2492
      %v2557 = vsel %vm2429, %v2307, %v2493
      %v2558 = vsel %vm2430, %v2310, %v2494
      %v2559 = vsel %vm2431, %v2312, %v2495
      %v2560 = vsel %vm2432, %v2315, %v2496
      %v2561 = vsel %vm2433, %v2317, %v2497
      %v2562 = vsel %vm2434, %v2320, %v2498
      %v2563 = vsel %vm2435, %v2322, %v2499
      %v2564 = vsel %vm2436, %v2325, %v2500
      %v2565 = vsel %vm2437, %v2327, %v2501
      %v2566 = vsel %vm2438, %v2330, %v2502
      %v2567 = vsel %vm2439, %v2332, %v2503
      %v2568 = vsel %vm2440, %v2335, %v2504
      %v2569 = vsel %vm2441, %v2337, %v2505
      %v2570 = vsel %vm2442, %v2340, %v2506
      %v2571 = vsel %vm2443, %v2342, %v2507
      %v2572 = vsel %vm2444, %v2345, %v2508
      %v2573 = vsel %vm2445, %v2347, %v2509
      %v2574 = vsel %vm2446, %v2350, %v2510
      %v2575 = vsel %vm2447, %v2352, %v2511
      %v2576 = vsel %vm2448, %v2355, %v2512
      %v2577 = vsel %vm2449, %v2357, %v2513
      %v2578 = vsel %vm2450, %v2360, %v2514
      %v2579 = vsel %vm2451, %v2362, %v2515
      %v2580 = vsel %vm2452, %v2365, %v2516
      %v2581 = vsel %vm2453, %v2367, %v2517
      %v2582 = vsel %vm2454, %v2370, %v2518
      %v2583 = vsel %vm2455, %v2372, %v2519
      %v2584 = vsel %vm2456, %v2375, %v2520
      %v2585 = vsel %vm2457, %v2377, %v2521
      %v2586 = vsel %vm2458, %v2380, %v2522
      %v2587 = vsel %vm2459, %v2382, %v2523
      %v2588 = vsel %vm2460, %v2385, %v2524
      %v2589 = vsel %vm2461, %v2387, %v2525
      %v2590 = vsel %vm2462, %v2390, %v2526
      %v2591 = vsel %vm2463, %v2392, %v2527
      %v2592 = vsel %vm2464, %v2395, %v2528
      %v2593 = vsel %vm2465, %v2397, %v2529
      %v2594 = vsel %vm2466, %v2400, %v2530
      %v2595 = vsel %vm2467, %v2402, %v2531
      %v2596 = vpack.c.bf16 %v2532, %v2532
      %v2597 = vpack.c.bf16 %v2533, %v2533
      %v2598 = vpack.c.bf16 %v2534, %v2534
      %v2599 = vpack.c.bf16 %v2535, %v2535
      %v2600 = vpack.c.bf16 %v2536, %v2536
      %v2601 = vpack.c.bf16 %v2537, %v2537
      %v2602 = vpack.c.bf16 %v2538, %v2538
      %v2603 = vpack.c.bf16 %v2539, %v2539
      %v2604 = vpack.c.bf16 %v2540, %v2540
      %v2605 = vpack.c.bf16 %v2541, %v2541
      %v2606 = vpack.c.bf16 %v2542, %v2542
      %v2607 = vpack.c.bf16 %v2543, %v2543
      %v2608 = vpack.c.bf16 %v2544, %v2544
      %v2609 = vpack.c.bf16 %v2545, %v2545
      %v2610 = vpack.c.bf16 %v2546, %v2546
      %v2611 = vpack.c.bf16 %v2547, %v2547
      %v2612 = vpack.c.bf16 %v2548, %v2548
      %v2613 = vpack.c.bf16 %v2549, %v2549
      %v2614 = vpack.c.bf16 %v2550, %v2550
      %v2615 = vpack.c.bf16 %v2551, %v2551
      %v2616 = vpack.c.bf16 %v2552, %v2552
      %v2617 = vpack.c.bf16 %v2553, %v2553
      %v2618 = vpack.c.bf16 %v2554, %v2554
      %v2619 = vpack.c.bf16 %v2555, %v2555
      %v2620 = vpack.c.bf16 %v2556, %v2556
      %v2621 = vpack.c.bf16 %v2557, %v2557
      %v2622 = vpack.c.bf16 %v2558, %v2558
      %v2623 = vpack.c.bf16 %v2559, %v2559
      %v2624 = vpack.c.bf16 %v2560, %v2560
      %v2625 = vpack.c.bf16 %v2561, %v2561
      %v2626 = vpack.c.bf16 %v2562, %v2562
      %v2627 = vpack.c.bf16 %v2563, %v2563
      %v2628 = vpack.c.bf16 %v2564, %v2564
      %v2629 = vpack.c.bf16 %v2565, %v2565
      %v2630 = vpack.c.bf16 %v2566, %v2566
      %v2631 = vpack.c.bf16 %v2567, %v2567
      %v2632 = vpack.c.bf16 %v2568, %v2568
      %v2633 = vpack.c.bf16 %v2569, %v2569
      %v2634 = vpack.c.bf16 %v2570, %v2570
      %v2635 = vpack.c.bf16 %v2571, %v2571
      %v2636 = vpack.c.bf16 %v2572, %v2572
      %v2637 = vpack.c.bf16 %v2573, %v2573
      %v2638 = vpack.c.bf16 %v2574, %v2574
      %v2639 = vpack.c.bf16 %v2575, %v2575
      %v2640 = vpack.c.bf16 %v2576, %v2576
      %v2641 = vpack.c.bf16 %v2577, %v2577
      %v2642 = vpack.c.bf16 %v2578, %v2578
      %v2643 = vpack.c.bf16 %v2579, %v2579
      %v2644 = vpack.c.bf16 %v2580, %v2580
      %v2645 = vpack.c.bf16 %v2581, %v2581
      %v2646 = vpack.c.bf16 %v2582, %v2582
      %v2647 = vpack.c.bf16 %v2583, %v2583
      %v2648 = vpack.c.bf16 %v2584, %v2584
      %v2649 = vpack.c.bf16 %v2585, %v2585
      %v2650 = vpack.c.bf16 %v2586, %v2586
      %v2651 = vpack.c.bf16 %v2587, %v2587
      %v2652 = vpack.c.bf16 %v2588, %v2588
      %v2653 = vpack.c.bf16 %v2589, %v2589
      %v2654 = vpack.c.bf16 %v2590, %v2590
      %v2655 = vpack.c.bf16 %v2591, %v2591
      %v2656 = vpack.c.bf16 %v2592, %v2592
      %v2657 = vpack.c.bf16 %v2593, %v2593
      %v2658 = vpack.c.bf16 %v2594, %v2594
      %v2659 = vpack.c.bf16 %v2595, %v2595
      %2660 = vst [vmem:[%s175] sm:$0xf] %v2596
      %2661 = vst [vmem:[%s175 + $0x4] sm:$0xf] %v2597
      %2662 = vst [vmem:[%s175 + $0x8] sm:$0xf] %v2598
      %2663 = vst [vmem:[%s175 + $0xc] sm:$0xf] %v2599
      %2664 = vst [vmem:[%s175 + $0x10] sm:$0xf] %v2600
      %2665 = vst [vmem:[%s175 + $0x14] sm:$0xf] %v2601
      %2666 = vst [vmem:[%s175 + $0x18] sm:$0xf] %v2602
      %2667 = vst [vmem:[%s175 + $0x1c] sm:$0xf] %v2603
      %2668 = vst [vmem:[%s175 + $0x20] sm:$0xf] %v2604
      %2669 = vst [vmem:[%s175 + $0x24] sm:$0xf] %v2605
      %2670 = vst [vmem:[%s175 + $0x28] sm:$0xf] %v2606
      %2671 = vst [vmem:[%s175 + $0x2c] sm:$0xf] %v2607
      %2672 = vst [vmem:[%s175 + $0x30] sm:$0xf] %v2608
      %2673 = vst [vmem:[%s175 + $0x34] sm:$0xf] %v2609
      %2674 = vst [vmem:[%s175 + $0x38] sm:$0xf] %v2610
      %2675 = vst [vmem:[%s175 + $0x3c] sm:$0xf] %v2611
      %2676 = vst [vmem:[%s175 + $0x40] sm:$0xf] %v2612
      %2677 = vst [vmem:[%s175 + $0x44] sm:$0xf] %v2613
      %2678 = vst [vmem:[%s175 + $0x48] sm:$0xf] %v2614
      %2679 = vst [vmem:[%s175 + $0x4c] sm:$0xf] %v2615
      %2680 = vst [vmem:[%s175 + $0x50] sm:$0xf] %v2616
      %2681 = vst [vmem:[%s175 + $0x54] sm:$0xf] %v2617
      %2682 = vst [vmem:[%s175 + $0x58] sm:$0xf] %v2618
      %2683 = vst [vmem:[%s175 + $0x5c] sm:$0xf] %v2619
      %2684 = vst [vmem:[%s175 + $0x60] sm:$0xf] %v2620
      %2685 = vst [vmem:[%s175 + $0x64] sm:$0xf] %v2621
      %2686 = vst [vmem:[%s175 + $0x68] sm:$0xf] %v2622
      %2687 = vst [vmem:[%s175 + $0x6c] sm:$0xf] %v2623
      %2688 = vst [vmem:[%s175 + $0x70] sm:$0xf] %v2624
      %2689 = vst [vmem:[%s175 + $0x74] sm:$0xf] %v2625
      %2690 = vst [vmem:[%s175 + $0x78] sm:$0xf] %v2626
      %2691 = vst [vmem:[%s175 + $0x7c] sm:$0xf] %v2627
      %2692 = vst [vmem:[%s175 + $0x80] sm:$0xf] %v2628
      %2693 = vst [vmem:[%s175 + $0x84] sm:$0xf] %v2629
      %2694 = vst [vmem:[%s175 + $0x88] sm:$0xf] %v2630
      %2695 = vst [vmem:[%s175 + $0x8c] sm:$0xf] %v2631
      %2696 = vst [vmem:[%s175 + $0x90] sm:$0xf] %v2632
      %2697 = vst [vmem:[%s175 + $0x94] sm:$0xf] %v2633
      %2698 = vst [vmem:[%s175 + $0x98] sm:$0xf] %v2634
      %2699 = vst [vmem:[%s175 + $0x9c] sm:$0xf] %v2635
      %2700 = vst [vmem:[%s175 + $0xa0] sm:$0xf] %v2636
      %2701 = vst [vmem:[%s175 + $0xa4] sm:$0xf] %v2637
      %2702 = vst [vmem:[%s175 + $0xa8] sm:$0xf] %v2638
      %2703 = vst [vmem:[%s175 + $0xac] sm:$0xf] %v2639
      %2704 = vst [vmem:[%s175 + $0xb0] sm:$0xf] %v2640
      %2705 = vst [vmem:[%s175 + $0xb4] sm:$0xf] %v2641
      %2706 = vst [vmem:[%s175 + $0xb8] sm:$0xf] %v2642
      %2707 = vst [vmem:[%s175 + $0xbc] sm:$0xf] %v2643
      %2708 = vst [vmem:[%s175 + $0xc0] sm:$0xf] %v2644
      %2709 = vst [vmem:[%s175 + $0xc4] sm:$0xf] %v2645
      %2710 = vst [vmem:[%s175 + $0xc8] sm:$0xf] %v2646
      %2711 = vst [vmem:[%s175 + $0xcc] sm:$0xf] %v2647
      %2712 = vst [vmem:[%s175 + $0xd0] sm:$0xf] %v2648
      %2713 = vst [vmem:[%s175 + $0xd4] sm:$0xf] %v2649
      %2714 = vst [vmem:[%s175 + $0xd8] sm:$0xf] %v2650
      %2715 = vst [vmem:[%s175 + $0xdc] sm:$0xf] %v2651
      %2716 = vst [vmem:[%s175 + $0xe0] sm:$0xf] %v2652
      %2717 = vst [vmem:[%s175 + $0xe4] sm:$0xf] %v2653
      %2718 = vst [vmem:[%s175 + $0xe8] sm:$0xf] %v2654
      %2719 = vst [vmem:[%s175 + $0xec] sm:$0xf] %v2655
      %2720 = vst [vmem:[%s175 + $0xf0] sm:$0xf] %v2656
      %2721 = vst [vmem:[%s175 + $0xf4] sm:$0xf] %v2657
      %2722 = vst [vmem:[%s175 + $0xf8] sm:$0xf] %v2658
      %2723 = vst [vmem:[%s175 + $0xfc] sm:$0xf] %v2659
      %s2724 = smul.u32 64, %s14
      %p2725 = scmp.lt.s32.totalorder %s2724, 127
      %s2726 = scalar_select %p2725, %s2724, 127
      %s2727 = smul.addr %s2726, 4
      %s2728 = scalar_lea.vmem %s3, %s2727
      // Predicated region
      $region33: #{opnet_forward.9} parent=31 // pred_check
        %p2729 = pneg %p100
      $region34: #{opnet_forward.9} parent=31 // pred_check_branch
        %2731 = sbr.rel (%p2729) target = $region36
      $region35: #{opnet_forward.9} parent=31 // pred_region
        %s2732 = smul.u32 64, %s14
      $region36: #{opnet_forward.9} parent=31 // pred_fallthru
        _
    $region32: #{opnet_forward.9} parent=5 // pred_fallthru
      _
    %p2733 = scmp.le.s32.totalorder 2, %s9
    // Predicated region
    $region37: #{opnet_forward.9} parent=5 // pred_check
      %p2734 = pneg %p2733
    $region38: #{opnet_forward.9} parent=5 // pred_check_branch
      %2736 = sbr.rel (%p2734) target = $region40
    $region39: #{opnet_forward.9} parent=5 // pred_region
      %s2737 = ssub.s32 %s9, 2
      // Predicated region
      $region41: #{opnet_forward.9} parent=39 // pred_check
        %p2738 = pneg %p106
      $region42: #{opnet_forward.9} parent=39 // pred_check_branch
        %2740 = sbr.rel (%p2738) target = $region44
      $region43: #{opnet_forward.9} parent=39 // pred_region
        %s2741 = smul.u32 64, %s15
        %p2742 = scmp.lt.s32.totalorder %s2741, 127
        %s2743 = scalar_select %p2742, %s2741, 127
        %s2744 = smul.addr %s2743, 4
        %s2745 = scalar_lea.vmem %s3, %s2744
      $region44: #{opnet_forward.9} parent=39 // pred_fallthru
        _
    $region40: #{opnet_forward.9} parent=5 // pred_fallthru
      _
  $region6: #{opnet_forward.9} parent=0 // loop_footer
    %s13 = sadd.s32 1, %s9
  $region7: #{opnet_forward.9} parent=0 // loop_footer_branch
    %8 = sbr.rel target = $region3
  $region8: #{opnet_forward.9} parent=0 // loop_exit
    _

// kernel: opnet_forward.10
$region0: #{opnet_forward.10}
  #allocation0 [shape = 'u32[]', space=smem, size = 0x4, offset = 0x4, fixed_abs, tag = 'smem constant byte address 0x4 - core index']
  #allocation1 [shape = 'u32[72,128]{1,0:T(1,128)}', space=vmem, size = 0x9000, scoped, tag = 'internal scratch']
  %s0 = inlined_call_operand.vmem [shape: bf16[256,1152], index: 0, kind: input, shape index: {}]
  %s1 = inlined_call_operand.vmem [shape: bf16[1152,256], index: 1, kind: input, shape index: {}]
  %s2 = inlined_call_operand.vmem [shape: f32[1,256], index: 2, kind: input, shape index: {}]
  %s3 = inlined_call_operand.vmem [shape: bf16[256,256], index: 3, kind: output, shape index: {}]
  %s4 = sld [smem:[#allocation0]]
  $region45: #{opnet_forward.10} parent=0
    _
  %s6 = ssub.s32 1, %s4
  %s7 = scalar_select 0, %s6, %s4
  loop: start=0, step=1, limit=4
  $region2: #{opnet_forward.10} parent=0 // loop_pre_header
    _
  $region3: #{opnet_forward.10} parent=0 // loop_header
    %s9 = sphi 0, %s13
    %p10 = scmp.ge.s32.totalorder %s9, 4
    %s19 = sphi 0, %s21
    %s22 = sphi 0, %s19
    %s23 = sphi 0, %s22
    %s39 = sphi 0, %s23
    %s43 = sphi 0, %s43
    %s45 = sphi 0, %s43
    %s46 = sphi 0, %s45
    %s60 = sphi 0, %s46
    %s64 = sphi 0, %s64
    %s66 = sphi 0, %s64
    %s67 = sphi 0, %s66
    %s81 = sphi 0, %s67
    %s87 = sphi 0, %s89
    %s90 = sphi 0, %s87
    %s91 = sphi 0, %s90
    %s107 = sphi 0, %s91
  $region4: #{opnet_forward.10} parent=0 // loop_header_branch
    %12 = sbr.rel (%p10) target = $region8
  $region5: #{opnet_forward.10} parent=0 // loop_body
    %s14 = ssub.s32 %s9, 1
    %s15 = ssub.s32 %s9, 2
    %s16 = sadd.s32 %s9, 1
    %s17 = ssub.s32 %s9, %s16
    %p18 = scmp.eq.s32.totalorder %s17, 0
    %s20 = sadd.s32 %s19, 1
    %s21 = scalar_select %p18, %s19, %s20
    %p24 = pneg %p18
    %p25 = scmp.eq.s32.totalorder %s9, 1
    %p26 = por %p24, %p25
    %p27 = scmp.ne.s32.totalorder %s19, %s22
    %p28 = scmp.eq.s32.totalorder %s9, 0
    %p29 = por %p27, %p28
    %p30 = scmp.ne.s32.totalorder %s19, %s22
    %p31 = scmp.eq.s32.totalorder %s14, 1
    %p32 = por %p30, %p31
    %p33 = scmp.ne.s32.totalorder %s22, %s23
    %p34 = scmp.eq.s32.totalorder %s14, 0
    %p35 = por %p33, %p34
    %p36 = scmp.ne.s32.totalorder %s22, %s23
    %p37 = scmp.eq.s32.totalorder %s15, 1
    %p38 = por %p36, %p37
    %p40 = scmp.ne.s32.totalorder %s23, %s39
    %p41 = scmp.eq.s32.totalorder %s15, 0
    %p42 = por %p40, %p41
    %s44 = sadd.s32 %s43, 1
    %p47 = scmp.eq.s32.totalorder %s9, 1
    %p48 = scmp.ne.s32.totalorder %s43, %s45
    %p49 = scmp.eq.s32.totalorder %s9, 0
    %p50 = por %p48, %p49
    %p51 = scmp.ne.s32.totalorder %s43, %s45
    %p52 = scmp.eq.s32.totalorder %s14, 1
    %p53 = por %p51, %p52
    %p54 = scmp.ne.s32.totalorder %s45, %s46
    %p55 = scmp.eq.s32.totalorder %s14, 0
    %p56 = por %p54, %p55
    %p57 = scmp.ne.s32.totalorder %s45, %s46
    %p58 = scmp.eq.s32.totalorder %s15, 1
    %p59 = por %p57, %p58
    %p61 = scmp.ne.s32.totalorder %s46, %s60
    %p62 = scmp.eq.s32.totalorder %s15, 0
    %p63 = por %p61, %p62
    %s65 = sadd.s32 %s64, 1
    %p68 = scmp.eq.s32.totalorder %s9, 1
    %p69 = scmp.ne.s32.totalorder %s64, %s66
    %p70 = scmp.eq.s32.totalorder %s9, 0
    %p71 = por %p69, %p70
    %p72 = scmp.ne.s32.totalorder %s64, %s66
    %p73 = scmp.eq.s32.totalorder %s14, 1
    %p74 = por %p72, %p73
    %p75 = scmp.ne.s32.totalorder %s66, %s67
    %p76 = scmp.eq.s32.totalorder %s14, 0
    %p77 = por %p75, %p76
    %p78 = scmp.ne.s32.totalorder %s66, %s67
    %p79 = scmp.eq.s32.totalorder %s15, 1
    %p80 = por %p78, %p79
    %p82 = scmp.ne.s32.totalorder %s67, %s81
    %p83 = scmp.eq.s32.totalorder %s15, 0
    %p84 = por %p82, %p83
    %s85 = ssub.s32 %s9, %s16
    %p86 = scmp.eq.s32.totalorder %s85, 0
    %s88 = sadd.s32 %s87, 1
    %s89 = scalar_select %p86, %s87, %s88
    %p92 = pneg %p86
    %p93 = scmp.eq.s32.totalorder %s9, 1
    %p94 = por %p92, %p93
    %p95 = scmp.ne.s32.totalorder %s87, %s90
    %p96 = scmp.eq.s32.totalorder %s9, 0
    %p97 = por %p95, %p96
    %p98 = scmp.ne.s32.totalorder %s87, %s90
    %p99 = scmp.eq.s32.totalorder %s14, 1
    %p100 = por %p98, %p99
    %p101 = scmp.ne.s32.totalorder %s90, %s91
    %p102 = scmp.eq.s32.totalorder %s14, 0
    %p103 = por %p101, %p102
    %p104 = scmp.ne.s32.totalorder %s90, %s91
    %p105 = scmp.eq.s32.totalorder %s15, 1
    %p106 = por %p104, %p105
    %p108 = scmp.ne.s32.totalorder %s91, %s107
    %p109 = scmp.eq.s32.totalorder %s15, 0
    %p110 = por %p108, %p109
    %p111 = scmp.le.s32.totalorder 1, %s9
    %p112 = scmp.lt.s32.totalorder %s9, 3
    %p113 = pnand %p111, %p112
    %p114 = pneg %p113
    // Predicated region
    $region9: #{opnet_forward.10} parent=5 // pred_check
      _
    $region10: #{opnet_forward.10} parent=5 // pred_check_branch
      %116 = sbr.rel (%p113) target = $region12
    $region11: #{opnet_forward.10} parent=5 // pred_region
      %s117 = ssub.s32 %s9, 1
      // Predicated region
      $region13: #{opnet_forward.10} parent=11 // pred_check
        %p118 = pneg %p56
      $region14: #{opnet_forward.10} parent=11 // pred_check_branch
        %120 = sbr.rel (%p118) target = $region16
      $region15: #{opnet_forward.10} parent=11 // pred_region
        _
      $region16: #{opnet_forward.10} parent=11 // pred_fallthru
        _
      // Predicated region
      $region17: #{opnet_forward.10} parent=11 // pred_check
        %p121 = pneg %p77
      $region18: #{opnet_forward.10} parent=11 // pred_check_branch
        %123 = sbr.rel (%p121) target = $region20
      $region19: #{opnet_forward.10} parent=11 // pred_region
        _
      $region20: #{opnet_forward.10} parent=11 // pred_fallthru
        _
    $region12: #{opnet_forward.10} parent=5 // pred_fallthru
      _
    %p124 = scmp.lt.s32.totalorder %s9, 2
    // Predicated region
    $region21: #{opnet_forward.10} parent=5 // pred_check
      %p125 = pneg %p124
    $region22: #{opnet_forward.10} parent=5 // pred_check_branch
      %127 = sbr.rel (%p125) target = $region24
    $region23: #{opnet_forward.10} parent=5 // pred_region
      // Predicated region
      $region25: #{opnet_forward.10} parent=23 // pred_check
        %p128 = pneg %p29
      $region26: #{opnet_forward.10} parent=23 // pred_check_branch
        %130 = sbr.rel (%p128) target = $region28
      $region27: #{opnet_forward.10} parent=23 // pred_region
        %s131 = smul.u32 16, %s9
        %p132 = scmp.lt.s32.totalorder %s131, 31
        %s133 = scalar_select %p132, %s131, 31
        %s134 = smul.addr %s133, 9
        %s135 = smul.addr %s134, 4
        %s136 = scalar_lea.vmem %s0, %s135
        %s137 = smul.u32 16, %s9
      $region28: #{opnet_forward.10} parent=23 // pred_fallthru
        _
    $region24: #{opnet_forward.10} parent=5 // pred_fallthru
      _
    %p138 = scmp.le.s32.totalorder 1, %s9
    %p139 = scmp.lt.s32.totalorder %s9, 3
    %p140 = pnand %p138, %p139
    %p141 = pneg %p140
    // Predicated region
    $region29: #{opnet_forward.10} parent=5 // pred_check
      _
    $region30: #{opnet_forward.10} parent=5 // pred_check_branch
      %143 = sbr.rel (%p140) target = $region32
    $region31: #{opnet_forward.10} parent=5 // pred_region
      %s144 = ssub.s32 %s9, 1
      %s145 = smul.u32 16, %s14
      %p146 = scmp.lt.s32.totalorder %s145, 31
      %s147 = scalar_select %p146, %s145, 31
      %s148 = smul.addr %s147, 9
      %s149 = smul.addr %s148, 4
      %s150 = scalar_lea.vmem %s0, %s149
      %p151 = pneg %p35
      %p152 = pneg %p32
      %p153 = pneg %p56
      %p154 = pneg %p53
      %p155 = pneg %p77
      %p156 = pneg %p74
      %p157 = pneg %p103
      %p158 = pneg %p100
      %s159 = smul.u32 16, %s14
      %p160 = scmp.lt.s32.totalorder %s159, 31
      %s161 = scalar_select %p160, %s159, 31
      %s162 = smul.addr %s161, 2
      %s163 = smul.addr %s162, 4
      %s164 = scalar_lea.vmem %s3, %s163
      %s165 = smul.u32 16, %s14
      %p166 = scmp.lt.s32.totalorder %s165, 31
      %s167 = scalar_select %p166, %s165, 31
      %s168 = smul.addr %s167, 9
      %s169 = smul.addr %s168, 4
      %s170 = scalar_lea.vmem %s0, %s169
      %s171 = smul.u32 16, %s14
      %s172 = smul.u32 16, %s14
      %p173 = scmp.lt.s32.totalorder %s172, 31
      %s174 = scalar_select %p173, %s172, 31
      %s175 = smul.addr %s174, 2
      %s176 = smul.addr %s175, 4
      %s177 = scalar_lea.vmem %s3, %s176
      %s178 = smul.u32 16, %s14
      %v179 = vld [vmem:[%s170] sm:$0xff]
      %v180 = vld [vmem:[%s170 + $0x8] sm:$0xff]
      %v181 = vld [vmem:[%s170 + $0x10] sm:$0xff]
      %v182 = vld [vmem:[%s170 + $0x18] sm:$0xff]
      %v183 = vld [vmem:[%s170 + $0x20] sm:$0xf]
      %v184 = vld [vmem:[%s170 + $0x24] sm:$0xff]
      %v185 = vld [vmem:[%s170 + $0x2c] sm:$0xff]
      %v186 = vld [vmem:[%s170 + $0x34] sm:$0xff]
      %v187 = vld [vmem:[%s170 + $0x3c] sm:$0xff]
      %v188 = vld [vmem:[%s170 + $0x44] sm:$0xf]
      %v189 = vld [vmem:[%s170 + $0x48] sm:$0xff]
      %v190 = vld [vmem:[%s170 + $0x50] sm:$0xff]
      %v191 = vld [vmem:[%s170 + $0x58] sm:$0xff]
      %v192 = vld [vmem:[%s170 + $0x60] sm:$0xff]
      %v193 = vld [vmem:[%s170 + $0x68] sm:$0xf]
      %v194 = vld [vmem:[%s170 + $0x6c] sm:$0xff]
      %v195 = vld [vmem:[%s170 + $0x74] sm:$0xff]
      %v196 = vld [vmem:[%s170 + $0x7c] sm:$0xff]
      %v197 = vld [vmem:[%s170 + $0x84] sm:$0xff]
      %v198 = vld [vmem:[%s170 + $0x8c] sm:$0xf]
      %v199 = vld [vmem:[%s170 + $0x90] sm:$0xff]
      %v200 = vld [vmem:[%s170 + $0x98] sm:$0xff]
      %v201 = vld [vmem:[%s170 + $0xa0] sm:$0xff]
      %v202 = vld [vmem:[%s170 + $0xa8] sm:$0xff]
      %v203 = vld [vmem:[%s170 + $0xb0] sm:$0xf]
      %v204 = vld [vmem:[%s170 + $0xb4] sm:$0xff]
      %v205 = vld [vmem:[%s170 + $0xbc] sm:$0xff]
      %v206 = vld [vmem:[%s170 + $0xc4] sm:$0xff]
      %v207 = vld [vmem:[%s170 + $0xcc] sm:$0xff]
      %v208 = vld [vmem:[%s170 + $0xd4] sm:$0xf]
      %v209 = vld [vmem:[%s170 + $0xd8] sm:$0xff]
      %v210 = vld [vmem:[%s170 + $0xe0] sm:$0xff]
      %v211 = vld [vmem:[%s170 + $0xe8] sm:$0xff]
      %v212 = vld [vmem:[%s170 + $0xf0] sm:$0xff]
      %v213 = vld [vmem:[%s170 + $0xf8] sm:$0xf]
      %v214 = vld [vmem:[%s170 + $0xfc] sm:$0xff]
      %v215 = vld [vmem:[%s170 + $0x104] sm:$0xff]
      %v216 = vld [vmem:[%s170 + $0x10c] sm:$0xff]
      %v217 = vld [vmem:[%s170 + $0x114] sm:$0xff]
      %v218 = vld [vmem:[%s170 + $0x11c] sm:$0xf]
      %v219 = vld [vmem:[%s170 + $0x120] sm:$0xff]
      %v220 = vld [vmem:[%s170 + $0x128] sm:$0xff]
      %v221 = vld [vmem:[%s170 + $0x130] sm:$0xff]
      %v222 = vld [vmem:[%s170 + $0x138] sm:$0xff]
      %v223 = vld [vmem:[%s170 + $0x140] sm:$0xf]
      %v224 = vld [vmem:[%s170 + $0x144] sm:$0xff]
      %v225 = vld [vmem:[%s170 + $0x14c] sm:$0xff]
      %v226 = vld [vmem:[%s170 + $0x154] sm:$0xff]
      %v227 = vld [vmem:[%s170 + $0x15c] sm:$0xff]
      %v228 = vld [vmem:[%s170 + $0x164] sm:$0xf]
      %v229 = vld [vmem:[%s170 + $0x168] sm:$0xff]
      %v230 = vld [vmem:[%s170 + $0x170] sm:$0xff]
      %v231 = vld [vmem:[%s170 + $0x178] sm:$0xff]
      %v232 = vld [vmem:[%s170 + $0x180] sm:$0xff]
      %v233 = vld [vmem:[%s170 + $0x188] sm:$0xf]
      %v234 = vld [vmem:[%s170 + $0x18c] sm:$0xff]
      %v235 = vld [vmem:[%s170 + $0x194] sm:$0xff]
      %v236 = vld [vmem:[%s170 + $0x19c] sm:$0xff]
      %v237 = vld [vmem:[%s170 + $0x1a4] sm:$0xff]
      %v238 = vld [vmem:[%s170 + $0x1ac] sm:$0xf]
      %v239 = vld [vmem:[%s170 + $0x1b0] sm:$0xff]
      %v240 = vld [vmem:[%s170 + $0x1b8] sm:$0xff]
      %v241 = vld [vmem:[%s170 + $0x1c0] sm:$0xff]
      %v242 = vld [vmem:[%s170 + $0x1c8] sm:$0xff]
      %v243 = vld [vmem:[%s170 + $0x1d0] sm:$0xf]
      %v244 = vld [vmem:[%s170 + $0x1d4] sm:$0xff]
      %v245 = vld [vmem:[%s170 + $0x1dc] sm:$0xff]
      %v246 = vld [vmem:[%s170 + $0x1e4] sm:$0xff]
      %v247 = vld [vmem:[%s170 + $0x1ec] sm:$0xff]
      %v248 = vld [vmem:[%s170 + $0x1f4] sm:$0xf]
      %v249 = vld [vmem:[%s170 + $0x1f8] sm:$0xff]
      %v250 = vld [vmem:[%s170 + $0x200] sm:$0xff]
      %v251 = vld [vmem:[%s170 + $0x208] sm:$0xff]
      %v252 = vld [vmem:[%s170 + $0x210] sm:$0xff]
      %v253 = vld [vmem:[%s170 + $0x218] sm:$0xf]
      %v254 = vld [vmem:[%s170 + $0x21c] sm:$0xff]
      %v255 = vld [vmem:[%s170 + $0x224] sm:$0xff]
      %v256 = vld [vmem:[%s170 + $0x22c] sm:$0xff]
      %v257 = vld [vmem:[%s170 + $0x234] sm:$0xff]
      %v258 = vld [vmem:[%s170 + $0x23c] sm:$0xf]
      %v259 = vld [vmem:[%s1] sm:$0xff]
      %v260 = vld [vmem:[%s1 + $0x8] sm:$0xff]
      %v261 = vld [vmem:[%s1 + $0x10] sm:$0xff]
      %v262 = vld [vmem:[%s1 + $0x18] sm:$0xff]
      %v263 = vld [vmem:[%s1 + $0x20] sm:$0xff]
      %v264 = vld [vmem:[%s1 + $0x28] sm:$0xff]
      %v265 = vld [vmem:[%s1 + $0x30] sm:$0xff]
      %v266 = vld [vmem:[%s1 + $0x38] sm:$0xff]
      %v267 = vld [vmem:[%s1 + $0x40] sm:$0xff]
      %v268 = vld [vmem:[%s1 + $0x48] sm:$0xff]
      %v269 = vld [vmem:[%s1 + $0x50] sm:$0xff]
      %v270 = vld [vmem:[%s1 + $0x58] sm:$0xff]
      %v271 = vld [vmem:[%s1 + $0x60] sm:$0xff]
      %v272 = vld [vmem:[%s1 + $0x68] sm:$0xff]
      %v273 = vld [vmem:[%s1 + $0x70] sm:$0xff]
      %v274 = vld [vmem:[%s1 + $0x78] sm:$0xff]
      %v275 = vld [vmem:[%s1 + $0x80] sm:$0xff]
      %v276 = vld [vmem:[%s1 + $0x88] sm:$0xff]
      %v277 = vld [vmem:[%s1 + $0x90] sm:$0xff]
      %v278 = vld [vmem:[%s1 + $0x98] sm:$0xff]
      %v279 = vld [vmem:[%s1 + $0xa0] sm:$0xff]
      %v280 = vld [vmem:[%s1 + $0xa8] sm:$0xff]
      %v281 = vld [vmem:[%s1 + $0xb0] sm:$0xff]
      %v282 = vld [vmem:[%s1 + $0xb8] sm:$0xff]
      %v283 = vld [vmem:[%s1 + $0xc0] sm:$0xff]
      %v284 = vld [vmem:[%s1 + $0xc8] sm:$0xff]
      %v285 = vld [vmem:[%s1 + $0xd0] sm:$0xff]
      %v286 = vld [vmem:[%s1 + $0xd8] sm:$0xff]
      %v287 = vld [vmem:[%s1 + $0xe0] sm:$0xff]
      %v288 = vld [vmem:[%s1 + $0xe8] sm:$0xff]
      %v289 = vld [vmem:[%s1 + $0xf0] sm:$0xff]
      %v290 = vld [vmem:[%s1 + $0xf8] sm:$0xff]
      %v291 = vld [vmem:[%s1 + $0x100] sm:$0xff]
      %v292 = vld [vmem:[%s1 + $0x108] sm:$0xff]
      %v293 = vld [vmem:[%s1 + $0x110] sm:$0xff]
      %v294 = vld [vmem:[%s1 + $0x118] sm:$0xff]
      %v295 = vld [vmem:[%s1 + $0x120] sm:$0xff]
      %v296 = vld [vmem:[%s1 + $0x128] sm:$0xff]
      %v297 = vld [vmem:[%s1 + $0x130] sm:$0xff]
      %v298 = vld [vmem:[%s1 + $0x138] sm:$0xff]
      %v299 = vld [vmem:[%s1 + $0x140] sm:$0xff]
      %v300 = vld [vmem:[%s1 + $0x148] sm:$0xff]
      %v301 = vld [vmem:[%s1 + $0x150] sm:$0xff]
      %v302 = vld [vmem:[%s1 + $0x158] sm:$0xff]
      %v303 = vld [vmem:[%s1 + $0x160] sm:$0xff]
      %v304 = vld [vmem:[%s1 + $0x168] sm:$0xff]
      %v305 = vld [vmem:[%s1 + $0x170] sm:$0xff]
      %v306 = vld [vmem:[%s1 + $0x178] sm:$0xff]
      %v307 = vld [vmem:[%s1 + $0x180] sm:$0xff]
      %v308 = vld [vmem:[%s1 + $0x188] sm:$0xff]
      %v309 = vld [vmem:[%s1 + $0x190] sm:$0xff]
      %v310 = vld [vmem:[%s1 + $0x198] sm:$0xff]
      %v311 = vld [vmem:[%s1 + $0x1a0] sm:$0xff]
      %v312 = vld [vmem:[%s1 + $0x1a8] sm:$0xff]
      %v313 = vld [vmem:[%s1 + $0x1b0] sm:$0xff]
      %v314 = vld [vmem:[%s1 + $0x1b8] sm:$0xff]
      %v315 = vld [vmem:[%s1 + $0x1c0] sm:$0xff]
      %v316 = vld [vmem:[%s1 + $0x1c8] sm:$0xff]
      %v317 = vld [vmem:[%s1 + $0x1d0] sm:$0xff]
      %v318 = vld [vmem:[%s1 + $0x1d8] sm:$0xff]
      %v319 = vld [vmem:[%s1 + $0x1e0] sm:$0xff]
      %v320 = vld [vmem:[%s1 + $0x1e8] sm:$0xff]
      %v321 = vld [vmem:[%s1 + $0x1f0] sm:$0xff]
      %v322 = vld [vmem:[%s1 + $0x1f8] sm:$0xff]
      %v323 = vld [vmem:[%s1 + $0x200] sm:$0xff]
      %v324 = vld [vmem:[%s1 + $0x208] sm:$0xff]
      %v325 = vld [vmem:[%s1 + $0x210] sm:$0xff]
      %v326 = vld [vmem:[%s1 + $0x218] sm:$0xff]
      %v327 = vld [vmem:[%s1 + $0x220] sm:$0xff]
      %v328 = vld [vmem:[%s1 + $0x228] sm:$0xff]
      %v329 = vld [vmem:[%s1 + $0x230] sm:$0xff]
      %v330 = vld [vmem:[%s1 + $0x238] sm:$0xff]
      %v331 = vld [vmem:[%s1 + $0x240] sm:$0xff]
      %v332 = vld [vmem:[%s1 + $0x248] sm:$0xff]
      %v333 = vld [vmem:[%s1 + $0x250] sm:$0xff]
      %v334 = vld [vmem:[%s1 + $0x258] sm:$0xff]
      %v335 = vld [vmem:[%s1 + $0x260] sm:$0xff]
      %v336 = vld [vmem:[%s1 + $0x268] sm:$0xff]
      %v337 = vld [vmem:[%s1 + $0x270] sm:$0xff]
      %v338 = vld [vmem:[%s1 + $0x278] sm:$0xff]
      %v339 = vld [vmem:[%s1 + $0x280] sm:$0xff]
      %v340 = vld [vmem:[%s1 + $0x288] sm:$0xff]
      %v341 = vld [vmem:[%s1 + $0x290] sm:$0xff]
      %v342 = vld [vmem:[%s1 + $0x298] sm:$0xff]
      %v343 = vld [vmem:[%s1 + $0x2a0] sm:$0xff]
      %v344 = vld [vmem:[%s1 + $0x2a8] sm:$0xff]
      %v345 = vld [vmem:[%s1 + $0x2b0] sm:$0xff]
      %v346 = vld [vmem:[%s1 + $0x2b8] sm:$0xff]
      %v347 = vld [vmem:[%s1 + $0x2c0] sm:$0xff]
      %v348 = vld [vmem:[%s1 + $0x2c8] sm:$0xff]
      %v349 = vld [vmem:[%s1 + $0x2d0] sm:$0xff]
      %v350 = vld [vmem:[%s1 + $0x2d8] sm:$0xff]
      %v351 = vld [vmem:[%s1 + $0x2e0] sm:$0xff]
      %v352 = vld [vmem:[%s1 + $0x2e8] sm:$0xff]
      %v353 = vld [vmem:[%s1 + $0x2f0] sm:$0xff]
      %v354 = vld [vmem:[%s1 + $0x2f8] sm:$0xff]
      %v355 = vld [vmem:[%s1 + $0x300] sm:$0xff]
      %v356 = vld [vmem:[%s1 + $0x308] sm:$0xff]
      %v357 = vld [vmem:[%s1 + $0x310] sm:$0xff]
      %v358 = vld [vmem:[%s1 + $0x318] sm:$0xff]
      %v359 = vld [vmem:[%s1 + $0x320] sm:$0xff]
      %v360 = vld [vmem:[%s1 + $0x328] sm:$0xff]
      %v361 = vld [vmem:[%s1 + $0x330] sm:$0xff]
      %v362 = vld [vmem:[%s1 + $0x338] sm:$0xff]
      %v363 = vld [vmem:[%s1 + $0x340] sm:$0xff]
      %v364 = vld [vmem:[%s1 + $0x348] sm:$0xff]
      %v365 = vld [vmem:[%s1 + $0x350] sm:$0xff]
      %v366 = vld [vmem:[%s1 + $0x358] sm:$0xff]
      %v367 = vld [vmem:[%s1 + $0x360] sm:$0xff]
      %v368 = vld [vmem:[%s1 + $0x368] sm:$0xff]
      %v369 = vld [vmem:[%s1 + $0x370] sm:$0xff]
      %v370 = vld [vmem:[%s1 + $0x378] sm:$0xff]
      %v371 = vld [vmem:[%s1 + $0x380] sm:$0xff]
      %v372 = vld [vmem:[%s1 + $0x388] sm:$0xff]
      %v373 = vld [vmem:[%s1 + $0x390] sm:$0xff]
      %v374 = vld [vmem:[%s1 + $0x398] sm:$0xff]
      %v375 = vld [vmem:[%s1 + $0x3a0] sm:$0xff]
      %v376 = vld [vmem:[%s1 + $0x3a8] sm:$0xff]
      %v377 = vld [vmem:[%s1 + $0x3b0] sm:$0xff]
      %v378 = vld [vmem:[%s1 + $0x3b8] sm:$0xff]
      %v379 = vld [vmem:[%s1 + $0x3c0] sm:$0xff]
      %v380 = vld [vmem:[%s1 + $0x3c8] sm:$0xff]
      %v381 = vld [vmem:[%s1 + $0x3d0] sm:$0xff]
      %v382 = vld [vmem:[%s1 + $0x3d8] sm:$0xff]
      %v383 = vld [vmem:[%s1 + $0x3e0] sm:$0xff]
      %v384 = vld [vmem:[%s1 + $0x3e8] sm:$0xff]
      %v385 = vld [vmem:[%s1 + $0x3f0] sm:$0xff]
      %v386 = vld [vmem:[%s1 + $0x3f8] sm:$0xff]
      %v387 = vld [vmem:[%s1 + $0x400] sm:$0xff]
      %v388 = vld [vmem:[%s1 + $0x408] sm:$0xff]
      %v389 = vld [vmem:[%s1 + $0x410] sm:$0xff]
      %v390 = vld [vmem:[%s1 + $0x418] sm:$0xff]
      %v391 = vld [vmem:[%s1 + $0x420] sm:$0xff]
      %v392 = vld [vmem:[%s1 + $0x428] sm:$0xff]
      %v393 = vld [vmem:[%s1 + $0x430] sm:$0xff]
      %v394 = vld [vmem:[%s1 + $0x438] sm:$0xff]
      %v395 = vld [vmem:[%s1 + $0x440] sm:$0xff]
      %v396 = vld [vmem:[%s1 + $0x448] sm:$0xff]
      %v397 = vld [vmem:[%s1 + $0x450] sm:$0xff]
      %v398 = vld [vmem:[%s1 + $0x458] sm:$0xff]
      %v399 = vld [vmem:[%s1 + $0x460] sm:$0xff]
      %v400 = vld [vmem:[%s1 + $0x468] sm:$0xff]
      %v401 = vld [vmem:[%s1 + $0x470] sm:$0xff]
      %v402 = vld [vmem:[%s1 + $0x478] sm:$0xff]
      %v403 = vld [vmem:[%s2] sm:$0x3]
      %v405 = vperm.slane %v403, 0
      %v406 = vperm.slane %v403, 1
      %v489 = vunpack.c.l.b16 %v179
      %v490 = vunpack.c.h.b16 %v179
      %v491 = vunpack.c.l.b16 %v180
      %v492 = vunpack.c.h.b16 %v180
      %v493 = vunpack.c.l.b16 %v181
      %v494 = vunpack.c.h.b16 %v181
      %v495 = vunpack.c.l.b16 %v182
      %v496 = vunpack.c.h.b16 %v182
      %v497 = vunpack.c.l.b16 %v183
      %v498 = vunpack.c.l.b16 %v184
      %v499 = vunpack.c.h.b16 %v184
      %v500 = vunpack.c.l.b16 %v185
      %v501 = vunpack.c.h.b16 %v185
      %v502 = vunpack.c.l.b16 %v186
      %v503 = vunpack.c.h.b16 %v186
      %v504 = vunpack.c.l.b16 %v187
      %v505 = vunpack.c.h.b16 %v187
      %v506 = vunpack.c.l.b16 %v188
      %v507 = vunpack.c.l.b16 %v189
      %v508 = vunpack.c.h.b16 %v189
      %v509 = vunpack.c.l.b16 %v190
      %v510 = vunpack.c.h.b16 %v190
      %v511 = vunpack.c.l.b16 %v191
      %v512 = vunpack.c.h.b16 %v191
      %v513 = vunpack.c.l.b16 %v192
      %v514 = vunpack.c.h.b16 %v192
      %v515 = vunpack.c.l.b16 %v193
      %v516 = vunpack.c.l.b16 %v194
      %v517 = vunpack.c.h.b16 %v194
      %v518 = vunpack.c.l.b16 %v195
      %v519 = vunpack.c.h.b16 %v195
      %v520 = vunpack.c.l.b16 %v196
      %v521 = vunpack.c.h.b16 %v196
      %v522 = vunpack.c.l.b16 %v197
      %v523 = vunpack.c.h.b16 %v197
      %v524 = vunpack.c.l.b16 %v198
      %v525 = vunpack.c.l.b16 %v199
      %v526 = vunpack.c.h.b16 %v199
      %v527 = vunpack.c.l.b16 %v200
      %v528 = vunpack.c.h.b16 %v200
      %v529 = vunpack.c.l.b16 %v201
      %v530 = vunpack.c.h.b16 %v201
      %v531 = vunpack.c.l.b16 %v202
      %v532 = vunpack.c.h.b16 %v202
      %v533 = vunpack.c.l.b16 %v203
      %v534 = vunpack.c.l.b16 %v204
      %v535 = vunpack.c.h.b16 %v204
      %v536 = vunpack.c.l.b16 %v205
      %v537 = vunpack.c.h.b16 %v205
      %v538 = vunpack.c.l.b16 %v206
      %v539 = vunpack.c.h.b16 %v206
      %v540 = vunpack.c.l.b16 %v207
      %v541 = vunpack.c.h.b16 %v207
      %v542 = vunpack.c.l.b16 %v208
      %v543 = vunpack.c.l.b16 %v209
      %v544 = vunpack.c.h.b16 %v209
      %v545 = vunpack.c.l.b16 %v210
      %v546 = vunpack.c.h.b16 %v210
      %v547 = vunpack.c.l.b16 %v211
      %v548 = vunpack.c.h.b16 %v211
      %v549 = vunpack.c.l.b16 %v212
      %v550 = vunpack.c.h.b16 %v212
      %v551 = vunpack.c.l.b16 %v213
      %v552 = vunpack.c.l.b16 %v214
      %v553 = vunpack.c.h.b16 %v214
      %v554 = vunpack.c.l.b16 %v215
      %v555 = vunpack.c.h.b16 %v215
      %v556 = vunpack.c.l.b16 %v216
      %v557 = vunpack.c.h.b16 %v216
      %v558 = vunpack.c.l.b16 %v217
      %v559 = vunpack.c.h.b16 %v217
      %v560 = vunpack.c.l.b16 %v218
      %v561 = vunpack.c.l.b16 %v219
      %v562 = vunpack.c.h.b16 %v219
      %v563 = vunpack.c.l.b16 %v220
      %v564 = vunpack.c.h.b16 %v220
      %v565 = vunpack.c.l.b16 %v221
      %v566 = vunpack.c.h.b16 %v221
      %v567 = vunpack.c.l.b16 %v222
      %v568 = vunpack.c.h.b16 %v222
      %v569 = vunpack.c.l.b16 %v223
      %v570 = vunpack.c.l.b16 %v224
      %v571 = vunpack.c.h.b16 %v224
      %v572 = vunpack.c.l.b16 %v225
      %v573 = vunpack.c.h.b16 %v225
      %v574 = vunpack.c.l.b16 %v226
      %v575 = vunpack.c.h.b16 %v226
      %v576 = vunpack.c.l.b16 %v227
      %v577 = vunpack.c.h.b16 %v227
      %v578 = vunpack.c.l.b16 %v228
      %v579 = vunpack.c.l.b16 %v229
      %v580 = vunpack.c.h.b16 %v229
      %v581 = vunpack.c.l.b16 %v230
      %v582 = vunpack.c.h.b16 %v230
      %v583 = vunpack.c.l.b16 %v231
      %v584 = vunpack.c.h.b16 %v231
      %v585 = vunpack.c.l.b16 %v232
      %v586 = vunpack.c.h.b16 %v232
      %v587 = vunpack.c.l.b16 %v233
      %v588 = vunpack.c.l.b16 %v234
      %v589 = vunpack.c.h.b16 %v234
      %v590 = vunpack.c.l.b16 %v235
      %v591 = vunpack.c.h.b16 %v235
      %v592 = vunpack.c.l.b16 %v236
      %v593 = vunpack.c.h.b16 %v236
      %v594 = vunpack.c.l.b16 %v237
      %v595 = vunpack.c.h.b16 %v237
      %v596 = vunpack.c.l.b16 %v238
      %v597 = vunpack.c.l.b16 %v239
      %v598 = vunpack.c.h.b16 %v239
      %v599 = vunpack.c.l.b16 %v240
      %v600 = vunpack.c.h.b16 %v240
      %v601 = vunpack.c.l.b16 %v241
      %v602 = vunpack.c.h.b16 %v241
      %v603 = vunpack.c.l.b16 %v242
      %v604 = vunpack.c.h.b16 %v242
      %v605 = vunpack.c.l.b16 %v243
      %v606 = vunpack.c.l.b16 %v244
      %v607 = vunpack.c.h.b16 %v244
      %v608 = vunpack.c.l.b16 %v245
      %v609 = vunpack.c.h.b16 %v245
      %v610 = vunpack.c.l.b16 %v246
      %v611 = vunpack.c.h.b16 %v246
      %v612 = vunpack.c.l.b16 %v247
      %v613 = vunpack.c.h.b16 %v247
      %v614 = vunpack.c.l.b16 %v248
      %v615 = vunpack.c.l.b16 %v249
      %v616 = vunpack.c.h.b16 %v249
      %v617 = vunpack.c.l.b16 %v250
      %v618 = vunpack.c.h.b16 %v250
      %v619 = vunpack.c.l.b16 %v251
      %v620 = vunpack.c.h.b16 %v251
      %v621 = vunpack.c.l.b16 %v252
      %v622 = vunpack.c.h.b16 %v252
      %v623 = vunpack.c.l.b16 %v253
      %v624 = vunpack.c.l.b16 %v254
      %v625 = vunpack.c.h.b16 %v254
      %v626 = vunpack.c.l.b16 %v255
      %v627 = vunpack.c.h.b16 %v255
      %v628 = vunpack.c.l.b16 %v256
      %v629 = vunpack.c.h.b16 %v256
      %v630 = vunpack.c.l.b16 %v257
      %v631 = vunpack.c.h.b16 %v257
      %v632 = vunpack.c.l.b16 %v258
      %v633 = vpack.c.b16 %v498, %v489
      %v634 = vpack.c.b16 %v499, %v490
      %v635 = vpack.c.b16 %v500, %v491
      %v636 = vpack.c.b16 %v501, %v492
      %v637 = vpack.c.b16 %v502, %v493
      %v638 = vpack.c.b16 %v503, %v494
      %v639 = vpack.c.b16 %v504, %v495
      %v640 = vpack.c.b16 %v505, %v496
      %v641 = vpack.c.b16 %v506, %v497
      %v642 = vpack.c.b16 %v516, %v507
      %v643 = vpack.c.b16 %v517, %v508
      %v644 = vpack.c.b16 %v518, %v509
      %v645 = vpack.c.b16 %v519, %v510
      %v646 = vpack.c.b16 %v520, %v511
      %v647 = vpack.c.b16 %v521, %v512
      %v648 = vpack.c.b16 %v522, %v513
      %v649 = vpack.c.b16 %v523, %v514
      %v650 = vpack.c.b16 %v524, %v515
      %v651 = vpack.c.b16 %v534, %v525
      %v652 = vpack.c.b16 %v535, %v526
      %v653 = vpack.c.b16 %v536, %v527
      %v654 = vpack.c.b16 %v537, %v528
      %v655 = vpack.c.b16 %v538, %v529
      %v656 = vpack.c.b16 %v539, %v530
      %v657 = vpack.c.b16 %v540, %v531
      %v658 = vpack.c.b16 %v541, %v532
      %v659 = vpack.c.b16 %v542, %v533
      %v660 = vpack.c.b16 %v552, %v543
      %v661 = vpack.c.b16 %v553, %v544
      %v662 = vpack.c.b16 %v554, %v545
      %v663 = vpack.c.b16 %v555, %v546
      %v664 = vpack.c.b16 %v556, %v547
      %v665 = vpack.c.b16 %v557, %v548
      %v666 = vpack.c.b16 %v558, %v549
      %v667 = vpack.c.b16 %v559, %v550
      %v668 = vpack.c.b16 %v560, %v551
      %v669 = vpack.c.b16 %v570, %v561
      %v670 = vpack.c.b16 %v571, %v562
      %v671 = vpack.c.b16 %v572, %v563
      %v672 = vpack.c.b16 %v573, %v564
      %v673 = vpack.c.b16 %v574, %v565
      %v674 = vpack.c.b16 %v575, %v566
      %v675 = vpack.c.b16 %v576, %v567
      %v676 = vpack.c.b16 %v577, %v568
      %v677 = vpack.c.b16 %v578, %v569
      %v678 = vpack.c.b16 %v588, %v579
      %v679 = vpack.c.b16 %v589, %v580
      %v680 = vpack.c.b16 %v590, %v581
      %v681 = vpack.c.b16 %v591, %v582
      %v682 = vpack.c.b16 %v592, %v583
      %v683 = vpack.c.b16 %v593, %v584
      %v684 = vpack.c.b16 %v594, %v585
      %v685 = vpack.c.b16 %v595, %v586
      %v686 = vpack.c.b16 %v596, %v587
      %v687 = vpack.c.b16 %v606, %v597
      %v688 = vpack.c.b16 %v607, %v598
      %v689 = vpack.c.b16 %v608, %v599
      %v690 = vpack.c.b16 %v609, %v600
      %v691 = vpack.c.b16 %v610, %v601
      %v692 = vpack.c.b16 %v611, %v602
      %v693 = vpack.c.b16 %v612, %v603
      %v694 = vpack.c.b16 %v613, %v604
      %v695 = vpack.c.b16 %v614, %v605
      %v696 = vpack.c.b16 %v624, %v615
      %v697 = vpack.c.b16 %v625, %v616
      %v698 = vpack.c.b16 %v626, %v617
      %v699 = vpack.c.b16 %v627, %v618
      %v700 = vpack.c.b16 %v628, %v619
      %v701 = vpack.c.b16 %v629, %v620
      %v702 = vpack.c.b16 %v630, %v621
      %v703 = vpack.c.b16 %v631, %v622
      %v704 = vpack.c.b16 %v632, %v623
      %v921 = vunpack.c.l.b16 %v259
      %v922 = vunpack.c.h.b16 %v259
      %v923 = vunpack.c.l.b16 %v260
      %v924 = vunpack.c.h.b16 %v260
      %v925 = vunpack.c.l.b16 %v261
      %v926 = vunpack.c.h.b16 %v261
      %v927 = vunpack.c.l.b16 %v262
      %v928 = vunpack.c.h.b16 %v262
      %v929 = vunpack.c.l.b16 %v263
      %v930 = vunpack.c.h.b16 %v263
      %v931 = vunpack.c.l.b16 %v264
      %v932 = vunpack.c.h.b16 %v264
      %v933 = vunpack.c.l.b16 %v265
      %v934 = vunpack.c.h.b16 %v265
      %v935 = vunpack.c.l.b16 %v266
      %v936 = vunpack.c.h.b16 %v266
      %v937 = vunpack.c.l.b16 %v267
      %v938 = vunpack.c.h.b16 %v267
      %v939 = vunpack.c.l.b16 %v268
      %v940 = vunpack.c.h.b16 %v268
      %v941 = vunpack.c.l.b16 %v269
      %v942 = vunpack.c.h.b16 %v269
      %v943 = vunpack.c.l.b16 %v270
      %v944 = vunpack.c.h.b16 %v270
      %v945 = vunpack.c.l.b16 %v271
      %v946 = vunpack.c.h.b16 %v271
      %v947 = vunpack.c.l.b16 %v272
      %v948 = vunpack.c.h.b16 %v272
      %v949 = vunpack.c.l.b16 %v273
      %v950 = vunpack.c.h.b16 %v273
      %v951 = vunpack.c.l.b16 %v274
      %v952 = vunpack.c.h.b16 %v274
      %v953 = vunpack.c.l.b16 %v275
      %v954 = vunpack.c.h.b16 %v275
      %v955 = vunpack.c.l.b16 %v276
      %v956 = vunpack.c.h.b16 %v276
      %v957 = vunpack.c.l.b16 %v277
      %v958 = vunpack.c.h.b16 %v277
      %v959 = vunpack.c.l.b16 %v278
      %v960 = vunpack.c.h.b16 %v278
      %v961 = vunpack.c.l.b16 %v279
      %v962 = vunpack.c.h.b16 %v279
      %v963 = vunpack.c.l.b16 %v280
      %v964 = vunpack.c.h.b16 %v280
      %v965 = vunpack.c.l.b16 %v281
      %v966 = vunpack.c.h.b16 %v281
      %v967 = vunpack.c.l.b16 %v282
      %v968 = vunpack.c.h.b16 %v282
      %v969 = vunpack.c.l.b16 %v283
      %v970 = vunpack.c.h.b16 %v283
      %v971 = vunpack.c.l.b16 %v284
      %v972 = vunpack.c.h.b16 %v284
      %v973 = vunpack.c.l.b16 %v285
      %v974 = vunpack.c.h.b16 %v285
      %v975 = vunpack.c.l.b16 %v286
      %v976 = vunpack.c.h.b16 %v286
      %v977 = vunpack.c.l.b16 %v287
      %v978 = vunpack.c.h.b16 %v287
      %v979 = vunpack.c.l.b16 %v288
      %v980 = vunpack.c.h.b16 %v288
      %v981 = vunpack.c.l.b16 %v289
      %v982 = vunpack.c.h.b16 %v289
      %v983 = vunpack.c.l.b16 %v290
      %v984 = vunpack.c.h.b16 %v290
      %v985 = vunpack.c.l.b16 %v291
      %v986 = vunpack.c.h.b16 %v291
      %v987 = vunpack.c.l.b16 %v292
      %v988 = vunpack.c.h.b16 %v292
      %v989 = vunpack.c.l.b16 %v293
      %v990 = vunpack.c.h.b16 %v293
      %v991 = vunpack.c.l.b16 %v294
      %v992 = vunpack.c.h.b16 %v294
      %v993 = vunpack.c.l.b16 %v295
      %v994 = vunpack.c.h.b16 %v295
      %v995 = vunpack.c.l.b16 %v296
      %v996 = vunpack.c.h.b16 %v296
      %v997 = vunpack.c.l.b16 %v297
      %v998 = vunpack.c.h.b16 %v297
      %v999 = vunpack.c.l.b16 %v298
      %v1000 = vunpack.c.h.b16 %v298
      %v1001 = vunpack.c.l.b16 %v299
      %v1002 = vunpack.c.h.b16 %v299
      %v1003 = vunpack.c.l.b16 %v300
      %v1004 = vunpack.c.h.b16 %v300
      %v1005 = vunpack.c.l.b16 %v301
      %v1006 = vunpack.c.h.b16 %v301
      %v1007 = vunpack.c.l.b16 %v302
      %v1008 = vunpack.c.h.b16 %v302
      %v1009 = vunpack.c.l.b16 %v303
      %v1010 = vunpack.c.h.b16 %v303
      %v1011 = vunpack.c.l.b16 %v304
      %v1012 = vunpack.c.h.b16 %v304
      %v1013 = vunpack.c.l.b16 %v305
      %v1014 = vunpack.c.h.b16 %v305
      %v1015 = vunpack.c.l.b16 %v306
      %v1016 = vunpack.c.h.b16 %v306
      %v1017 = vunpack.c.l.b16 %v307
      %v1018 = vunpack.c.h.b16 %v307
      %v1019 = vunpack.c.l.b16 %v308
      %v1020 = vunpack.c.h.b16 %v308
      %v1021 = vunpack.c.l.b16 %v309
      %v1022 = vunpack.c.h.b16 %v309
      %v1023 = vunpack.c.l.b16 %v310
      %v1024 = vunpack.c.h.b16 %v310
      %v1025 = vunpack.c.l.b16 %v311
      %v1026 = vunpack.c.h.b16 %v311
      %v1027 = vunpack.c.l.b16 %v312
      %v1028 = vunpack.c.h.b16 %v312
      %v1029 = vunpack.c.l.b16 %v313
      %v1030 = vunpack.c.h.b16 %v313
      %v1031 = vunpack.c.l.b16 %v314
      %v1032 = vunpack.c.h.b16 %v314
      %v1033 = vunpack.c.l.b16 %v315
      %v1034 = vunpack.c.h.b16 %v315
      %v1035 = vunpack.c.l.b16 %v316
      %v1036 = vunpack.c.h.b16 %v316
      %v1037 = vunpack.c.l.b16 %v317
      %v1038 = vunpack.c.h.b16 %v317
      %v1039 = vunpack.c.l.b16 %v318
      %v1040 = vunpack.c.h.b16 %v318
      %v1041 = vunpack.c.l.b16 %v319
      %v1042 = vunpack.c.h.b16 %v319
      %v1043 = vunpack.c.l.b16 %v320
      %v1044 = vunpack.c.h.b16 %v320
      %v1045 = vunpack.c.l.b16 %v321
      %v1046 = vunpack.c.h.b16 %v321
      %v1047 = vunpack.c.l.b16 %v322
      %v1048 = vunpack.c.h.b16 %v322
      %v1049 = vunpack.c.l.b16 %v323
      %v1050 = vunpack.c.h.b16 %v323
      %v1051 = vunpack.c.l.b16 %v324
      %v1052 = vunpack.c.h.b16 %v324
      %v1053 = vunpack.c.l.b16 %v325
      %v1054 = vunpack.c.h.b16 %v325
      %v1055 = vunpack.c.l.b16 %v326
      %v1056 = vunpack.c.h.b16 %v326
      %v1057 = vunpack.c.l.b16 %v327
      %v1058 = vunpack.c.h.b16 %v327
      %v1059 = vunpack.c.l.b16 %v328
      %v1060 = vunpack.c.h.b16 %v328
      %v1061 = vunpack.c.l.b16 %v329
      %v1062 = vunpack.c.h.b16 %v329
      %v1063 = vunpack.c.l.b16 %v330
      %v1064 = vunpack.c.h.b16 %v330
      %v1065 = vunpack.c.l.b16 %v331
      %v1066 = vunpack.c.h.b16 %v331
      %v1067 = vunpack.c.l.b16 %v332
      %v1068 = vunpack.c.h.b16 %v332
      %v1069 = vunpack.c.l.b16 %v333
      %v1070 = vunpack.c.h.b16 %v333
      %v1071 = vunpack.c.l.b16 %v334
      %v1072 = vunpack.c.h.b16 %v334
      %v1073 = vunpack.c.l.b16 %v335
      %v1074 = vunpack.c.h.b16 %v335
      %v1075 = vunpack.c.l.b16 %v336
      %v1076 = vunpack.c.h.b16 %v336
      %v1077 = vunpack.c.l.b16 %v337
      %v1078 = vunpack.c.h.b16 %v337
      %v1079 = vunpack.c.l.b16 %v338
      %v1080 = vunpack.c.h.b16 %v338
      %v1081 = vunpack.c.l.b16 %v339
      %v1082 = vunpack.c.h.b16 %v339
      %v1083 = vunpack.c.l.b16 %v340
      %v1084 = vunpack.c.h.b16 %v340
      %v1085 = vunpack.c.l.b16 %v341
      %v1086 = vunpack.c.h.b16 %v341
      %v1087 = vunpack.c.l.b16 %v342
      %v1088 = vunpack.c.h.b16 %v342
      %v1089 = vunpack.c.l.b16 %v343
      %v1090 = vunpack.c.h.b16 %v343
      %v1091 = vunpack.c.l.b16 %v344
      %v1092 = vunpack.c.h.b16 %v344
      %v1093 = vunpack.c.l.b16 %v345
      %v1094 = vunpack.c.h.b16 %v345
      %v1095 = vunpack.c.l.b16 %v346
      %v1096 = vunpack.c.h.b16 %v346
      %v1097 = vunpack.c.l.b16 %v347
      %v1098 = vunpack.c.h.b16 %v347
      %v1099 = vunpack.c.l.b16 %v348
      %v1100 = vunpack.c.h.b16 %v348
      %v1101 = vunpack.c.l.b16 %v349
      %v1102 = vunpack.c.h.b16 %v349
      %v1103 = vunpack.c.l.b16 %v350
      %v1104 = vunpack.c.h.b16 %v350
      %v1105 = vunpack.c.l.b16 %v351
      %v1106 = vunpack.c.h.b16 %v351
      %v1107 = vunpack.c.l.b16 %v352
      %v1108 = vunpack.c.h.b16 %v352
      %v1109 = vunpack.c.l.b16 %v353
      %v1110 = vunpack.c.h.b16 %v353
      %v1111 = vunpack.c.l.b16 %v354
      %v1112 = vunpack.c.h.b16 %v354
      %v1113 = vunpack.c.l.b16 %v355
      %v1114 = vunpack.c.h.b16 %v355
      %v1115 = vunpack.c.l.b16 %v356
      %v1116 = vunpack.c.h.b16 %v356
      %v1117 = vunpack.c.l.b16 %v357
      %v1118 = vunpack.c.h.b16 %v357
      %v1119 = vunpack.c.l.b16 %v358
      %v1120 = vunpack.c.h.b16 %v358
      %v1121 = vunpack.c.l.b16 %v359
      %v1122 = vunpack.c.h.b16 %v359
      %v1123 = vunpack.c.l.b16 %v360
      %v1124 = vunpack.c.h.b16 %v360
      %v1125 = vunpack.c.l.b16 %v361
      %v1126 = vunpack.c.h.b16 %v361
      %v1127 = vunpack.c.l.b16 %v362
      %v1128 = vunpack.c.h.b16 %v362
      %v1129 = vunpack.c.l.b16 %v363
      %v1130 = vunpack.c.h.b16 %v363
      %v1131 = vunpack.c.l.b16 %v364
      %v1132 = vunpack.c.h.b16 %v364
      %v1133 = vunpack.c.l.b16 %v365
      %v1134 = vunpack.c.h.b16 %v365
      %v1135 = vunpack.c.l.b16 %v366
      %v1136 = vunpack.c.h.b16 %v366
      %v1137 = vunpack.c.l.b16 %v367
      %v1138 = vunpack.c.h.b16 %v367
      %v1139 = vunpack.c.l.b16 %v368
      %v1140 = vunpack.c.h.b16 %v368
      %v1141 = vunpack.c.l.b16 %v369
      %v1142 = vunpack.c.h.b16 %v369
      %v1143 = vunpack.c.l.b16 %v370
      %v1144 = vunpack.c.h.b16 %v370
      %v1145 = vunpack.c.l.b16 %v371
      %v1146 = vunpack.c.h.b16 %v371
      %v1147 = vunpack.c.l.b16 %v372
      %v1148 = vunpack.c.h.b16 %v372
      %v1149 = vunpack.c.l.b16 %v373
      %v1150 = vunpack.c.h.b16 %v373
      %v1151 = vunpack.c.l.b16 %v374
      %v1152 = vunpack.c.h.b16 %v374
      %v1153 = vunpack.c.l.b16 %v375
      %v1154 = vunpack.c.h.b16 %v375
      %v1155 = vunpack.c.l.b16 %v376
      %v1156 = vunpack.c.h.b16 %v376
      %v1157 = vunpack.c.l.b16 %v377
      %v1158 = vunpack.c.h.b16 %v377
      %v1159 = vunpack.c.l.b16 %v378
      %v1160 = vunpack.c.h.b16 %v378
      %v1161 = vunpack.c.l.b16 %v379
      %v1162 = vunpack.c.h.b16 %v379
      %v1163 = vunpack.c.l.b16 %v380
      %v1164 = vunpack.c.h.b16 %v380
      %v1165 = vunpack.c.l.b16 %v381
      %v1166 = vunpack.c.h.b16 %v381
      %v1167 = vunpack.c.l.b16 %v382
      %v1168 = vunpack.c.h.b16 %v382
      %v1169 = vunpack.c.l.b16 %v383
      %v1170 = vunpack.c.h.b16 %v383
      %v1171 = vunpack.c.l.b16 %v384
      %v1172 = vunpack.c.h.b16 %v384
      %v1173 = vunpack.c.l.b16 %v385
      %v1174 = vunpack.c.h.b16 %v385
      %v1175 = vunpack.c.l.b16 %v386
      %v1176 = vunpack.c.h.b16 %v386
      %v1177 = vunpack.c.l.b16 %v387
      %v1178 = vunpack.c.h.b16 %v387
      %v1179 = vunpack.c.l.b16 %v388
      %v1180 = vunpack.c.h.b16 %v388
      %v1181 = vunpack.c.l.b16 %v389
      %v1182 = vunpack.c.h.b16 %v389
      %v1183 = vunpack.c.l.b16 %v390
      %v1184 = vunpack.c.h.b16 %v390
      %v1185 = vunpack.c.l.b16 %v391
      %v1186 = vunpack.c.h.b16 %v391
      %v1187 = vunpack.c.l.b16 %v392
      %v1188 = vunpack.c.h.b16 %v392
      %v1189 = vunpack.c.l.b16 %v393
      %v1190 = vunpack.c.h.b16 %v393
      %v1191 = vunpack.c.l.b16 %v394
      %v1192 = vunpack.c.h.b16 %v394
      %v1193 = vunpack.c.l.b16 %v395
      %v1194 = vunpack.c.h.b16 %v395
      %v1195 = vunpack.c.l.b16 %v396
      %v1196 = vunpack.c.h.b16 %v396
      %v1197 = vunpack.c.l.b16 %v397
      %v1198 = vunpack.c.h.b16 %v397
      %v1199 = vunpack.c.l.b16 %v398
      %v1200 = vunpack.c.h.b16 %v398
      %v1201 = vunpack.c.l.b16 %v399
      %v1202 = vunpack.c.h.b16 %v399
      %v1203 = vunpack.c.l.b16 %v400
      %v1204 = vunpack.c.h.b16 %v400
      %v1205 = vunpack.c.l.b16 %v401
      %v1206 = vunpack.c.h.b16 %v401
      %v1207 = vunpack.c.l.b16 %v402
      %v1208 = vunpack.c.h.b16 %v402
      %v1209 = vpack.c.b16 %v923, %v921
      %v1210 = vpack.c.b16 %v924, %v922
      %v1211 = vpack.c.b16 %v927, %v925
      %v1212 = vpack.c.b16 %v928, %v926
      %v1213 = vpack.c.b16 %v931, %v929
      %v1214 = vpack.c.b16 %v932, %v930
      %v1215 = vpack.c.b16 %v935, %v933
      %v1216 = vpack.c.b16 %v936, %v934
      %v1217 = vpack.c.b16 %v939, %v937
      %v1218 = vpack.c.b16 %v940, %v938
      %v1219 = vpack.c.b16 %v943, %v941
      %v1220 = vpack.c.b16 %v944, %v942
      %v1221 = vpack.c.b16 %v947, %v945
      %v1222 = vpack.c.b16 %v948, %v946
      %v1223 = vpack.c.b16 %v951, %v949
      %v1224 = vpack.c.b16 %v952, %v950
      %v1225 = vpack.c.b16 %v955, %v953
      %v1226 = vpack.c.b16 %v956, %v954
      %v1227 = vpack.c.b16 %v959, %v957
      %v1228 = vpack.c.b16 %v960, %v958
      %v1229 = vpack.c.b16 %v963, %v961
      %v1230 = vpack.c.b16 %v964, %v962
      %v1231 = vpack.c.b16 %v967, %v965
      %v1232 = vpack.c.b16 %v968, %v966
      %v1233 = vpack.c.b16 %v971, %v969
      %v1234 = vpack.c.b16 %v972, %v970
      %v1235 = vpack.c.b16 %v975, %v973
      %v1236 = vpack.c.b16 %v976, %v974
      %v1237 = vpack.c.b16 %v979, %v977
      %v1238 = vpack.c.b16 %v980, %v978
      %v1239 = vpack.c.b16 %v983, %v981
      %v1240 = vpack.c.b16 %v984, %v982
      %v1241 = vpack.c.b16 %v987, %v985
      %v1242 = vpack.c.b16 %v988, %v986
      %v1243 = vpack.c.b16 %v991, %v989
      %v1244 = vpack.c.b16 %v992, %v990
      %v1245 = vpack.c.b16 %v995, %v993
      %v1246 = vpack.c.b16 %v996, %v994
      %v1247 = vpack.c.b16 %v999, %v997
      %v1248 = vpack.c.b16 %v1000, %v998
      %v1249 = vpack.c.b16 %v1003, %v1001
      %v1250 = vpack.c.b16 %v1004, %v1002
      %v1251 = vpack.c.b16 %v1007, %v1005
      %v1252 = vpack.c.b16 %v1008, %v1006
      %v1253 = vpack.c.b16 %v1011, %v1009
      %v1254 = vpack.c.b16 %v1012, %v1010
      %v1255 = vpack.c.b16 %v1015, %v1013
      %v1256 = vpack.c.b16 %v1016, %v1014
      %v1257 = vpack.c.b16 %v1019, %v1017
      %v1258 = vpack.c.b16 %v1020, %v1018
      %v1259 = vpack.c.b16 %v1023, %v1021
      %v1260 = vpack.c.b16 %v1024, %v1022
      %v1261 = vpack.c.b16 %v1027, %v1025
      %v1262 = vpack.c.b16 %v1028, %v1026
      %v1263 = vpack.c.b16 %v1031, %v1029
      %v1264 = vpack.c.b16 %v1032, %v1030
      %v1265 = vpack.c.b16 %v1035, %v1033
      %v1266 = vpack.c.b16 %v1036, %v1034
      %v1267 = vpack.c.b16 %v1039, %v1037
      %v1268 = vpack.c.b16 %v1040, %v1038
      %v1269 = vpack.c.b16 %v1043, %v1041
      %v1270 = vpack.c.b16 %v1044, %v1042
      %v1271 = vpack.c.b16 %v1047, %v1045
      %v1272 = vpack.c.b16 %v1048, %v1046
      %v1273 = vpack.c.b16 %v1051, %v1049
      %v1274 = vpack.c.b16 %v1052, %v1050
      %v1275 = vpack.c.b16 %v1055, %v1053
      %v1276 = vpack.c.b16 %v1056, %v1054
      %v1277 = vpack.c.b16 %v1059, %v1057
      %v1278 = vpack.c.b16 %v1060, %v1058
      %v1279 = vpack.c.b16 %v1063, %v1061
      %v1280 = vpack.c.b16 %v1064, %v1062
      %v1281 = vpack.c.b16 %v1067, %v1065
      %v1282 = vpack.c.b16 %v1068, %v1066
      %v1283 = vpack.c.b16 %v1071, %v1069
      %v1284 = vpack.c.b16 %v1072, %v1070
      %v1285 = vpack.c.b16 %v1075, %v1073
      %v1286 = vpack.c.b16 %v1076, %v1074
      %v1287 = vpack.c.b16 %v1079, %v1077
      %v1288 = vpack.c.b16 %v1080, %v1078
      %v1289 = vpack.c.b16 %v1083, %v1081
      %v1290 = vpack.c.b16 %v1084, %v1082
      %v1291 = vpack.c.b16 %v1087, %v1085
      %v1292 = vpack.c.b16 %v1088, %v1086
      %v1293 = vpack.c.b16 %v1091, %v1089
      %v1294 = vpack.c.b16 %v1092, %v1090
      %v1295 = vpack.c.b16 %v1095, %v1093
      %v1296 = vpack.c.b16 %v1096, %v1094
      %v1297 = vpack.c.b16 %v1099, %v1097
      %v1298 = vpack.c.b16 %v1100, %v1098
      %v1299 = vpack.c.b16 %v1103, %v1101
      %v1300 = vpack.c.b16 %v1104, %v1102
      %v1301 = vpack.c.b16 %v1107, %v1105
      %v1302 = vpack.c.b16 %v1108, %v1106
      %v1303 = vpack.c.b16 %v1111, %v1109
      %v1304 = vpack.c.b16 %v1112, %v1110
      %v1305 = vpack.c.b16 %v1115, %v1113
      %v1306 = vpack.c.b16 %v1116, %v1114
      %v1307 = vpack.c.b16 %v1119, %v1117
      %v1308 = vpack.c.b16 %v1120, %v1118
      %v1309 = vpack.c.b16 %v1123, %v1121
      %v1310 = vpack.c.b16 %v1124, %v1122
      %v1311 = vpack.c.b16 %v1127, %v1125
      %v1312 = vpack.c.b16 %v1128, %v1126
      %v1313 = vpack.c.b16 %v1131, %v1129
      %v1314 = vpack.c.b16 %v1132, %v1130
      %v1315 = vpack.c.b16 %v1135, %v1133
      %v1316 = vpack.c.b16 %v1136, %v1134
      %v1317 = vpack.c.b16 %v1139, %v1137
      %v1318 = vpack.c.b16 %v1140, %v1138
      %v1319 = vpack.c.b16 %v1143, %v1141
      %v1320 = vpack.c.b16 %v1144, %v1142
      %v1321 = vpack.c.b16 %v1147, %v1145
      %v1322 = vpack.c.b16 %v1148, %v1146
      %v1323 = vpack.c.b16 %v1151, %v1149
      %v1324 = vpack.c.b16 %v1152, %v1150
      %v1325 = vpack.c.b16 %v1155, %v1153
      %v1326 = vpack.c.b16 %v1156, %v1154
      %v1327 = vpack.c.b16 %v1159, %v1157
      %v1328 = vpack.c.b16 %v1160, %v1158
      %v1329 = vpack.c.b16 %v1163, %v1161
      %v1330 = vpack.c.b16 %v1164, %v1162
      %v1331 = vpack.c.b16 %v1167, %v1165
      %v1332 = vpack.c.b16 %v1168, %v1166
      %v1333 = vpack.c.b16 %v1171, %v1169
      %v1334 = vpack.c.b16 %v1172, %v1170
      %v1335 = vpack.c.b16 %v1175, %v1173
      %v1336 = vpack.c.b16 %v1176, %v1174
      %v1337 = vpack.c.b16 %v1179, %v1177
      %v1338 = vpack.c.b16 %v1180, %v1178
      %v1339 = vpack.c.b16 %v1183, %v1181
      %v1340 = vpack.c.b16 %v1184, %v1182
      %v1341 = vpack.c.b16 %v1187, %v1185
      %v1342 = vpack.c.b16 %v1188, %v1186
      %v1343 = vpack.c.b16 %v1191, %v1189
      %v1344 = vpack.c.b16 %v1192, %v1190
      %v1345 = vpack.c.b16 %v1195, %v1193
      %v1346 = vpack.c.b16 %v1196, %v1194
      %v1347 = vpack.c.b16 %v1199, %v1197
      %v1348 = vpack.c.b16 %v1200, %v1198
      %v1349 = vpack.c.b16 %v1203, %v1201
      %v1350 = vpack.c.b16 %v1204, %v1202
      %v1351 = vpack.c.b16 %v1207, %v1205
      %v1352 = vpack.c.b16 %v1208, %v1206
      %1497 = vmatpush.bf16.msra.mxu0 %v1223
      %1498 = vmatpush.bf16.msra.mxu0 %v1221
      %1499 = vmatpush.bf16.msra.mxu0 %v1219
      %1500 = vmatpush.bf16.msra.mxu0 %v1217
      %1501 = vmatpush.bf16.msra.mxu0 %v1215
      %1502 = vmatpush.bf16.msra.mxu0 %v1213
      %1503 = vmatpush.bf16.msra.mxu0 %v1211
      %1504 = vmatpush.bf16.msra.mxu0 %v1209
      %1505 = vmatmul.bf16.gmra.mxu0 %v633
      %v1506 = vpop.f32.mrf.mxu0
      %v1507 = vadd.f32 %v405, %v1506
      %v1508 = vpop.f32.mrf.mxu0
      %v1509 = vadd.f32 %v405, %v1508
      %1510 = vmatmul.bf16.gmra.mxu0 %v642
      %v1511 = vpop.f32.mrf.mxu0
      %v1512 = vadd.f32 %v405, %v1511
      %v1513 = vpop.f32.mrf.mxu0
      %v1514 = vadd.f32 %v405, %v1513
      %1515 = vmatmul.bf16.gmra.mxu0 %v651
      %v1516 = vpop.f32.mrf.mxu0
      %v1517 = vadd.f32 %v405, %v1516
      %v1518 = vpop.f32.mrf.mxu0
      %v1519 = vadd.f32 %v405, %v1518
      %1520 = vmatmul.bf16.gmra.mxu0 %v660
      %v1521 = vpop.f32.mrf.mxu0
      %v1522 = vadd.f32 %v405, %v1521
      %v1523 = vpop.f32.mrf.mxu0
      %v1524 = vadd.f32 %v405, %v1523
      %1525 = vmatmul.bf16.gmra.mxu0 %v669
      %v1526 = vpop.f32.mrf.mxu0
      %v1527 = vadd.f32 %v405, %v1526
      %v1528 = vpop.f32.mrf.mxu0
      %v1529 = vadd.f32 %v405, %v1528
      %1530 = vmatmul.bf16.gmra.mxu0 %v678
      %v1531 = vpop.f32.mrf.mxu0
      %v1532 = vadd.f32 %v405, %v1531
      %v1533 = vpop.f32.mrf.mxu0
      %v1534 = vadd.f32 %v405, %v1533
      %1535 = vmatmul.bf16.gmra.mxu0 %v687
      %v1536 = vpop.f32.mrf.mxu0
      %v1537 = vadd.f32 %v405, %v1536
      %v1538 = vpop.f32.mrf.mxu0
      %v1539 = vadd.f32 %v405, %v1538
      %1540 = vmatmul.bf16.gmra.mxu0 %v696
      %v1541 = vpop.f32.mrf.mxu0
      %v1542 = vadd.f32 %v405, %v1541
      %v1543 = vpop.f32.mrf.mxu0
      %v1544 = vadd.f32 %v405, %v1543
      %1545 = vdwg.mxu0
      %1546 = vmatpush.bf16.msra.mxu0 %v1239
      %1547 = vmatpush.bf16.msra.mxu0 %v1237
      %1548 = vmatpush.bf16.msra.mxu0 %v1235
      %1549 = vmatpush.bf16.msra.mxu0 %v1233
      %1550 = vmatpush.bf16.msra.mxu0 %v1231
      %1551 = vmatpush.bf16.msra.mxu0 %v1229
      %1552 = vmatpush.bf16.msra.mxu0 %v1227
      %1553 = vmatpush.bf16.msra.mxu0 %v1225
      %1554 = vmatmul.bf16.gmra.mxu0 %v634
      %v1555 = vpop.f32.mrf.mxu0
      %v1556 = vadd.f32 %v1507, %v1555
      %v1557 = vpop.f32.mrf.mxu0
      %v1558 = vadd.f32 %v1509, %v1557
      %1559 = vmatmul.bf16.gmra.mxu0 %v643
      %v1560 = vpop.f32.mrf.mxu0
      %v1561 = vadd.f32 %v1512, %v1560
      %v1562 = vpop.f32.mrf.mxu0
      %v1563 = vadd.f32 %v1514, %v1562
      %1564 = vmatmul.bf16.gmra.mxu0 %v652
      %v1565 = vpop.f32.mrf.mxu0
      %v1566 = vadd.f32 %v1517, %v1565
      %v1567 = vpop.f32.mrf.mxu0
      %v1568 = vadd.f32 %v1519, %v1567
      %1569 = vmatmul.bf16.gmra.mxu0 %v661
      %v1570 = vpop.f32.mrf.mxu0
      %v1571 = vadd.f32 %v1522, %v1570
      %v1572 = vpop.f32.mrf.mxu0
      %v1573 = vadd.f32 %v1524, %v1572
      %1574 = vmatmul.bf16.gmra.mxu0 %v670
      %v1575 = vpop.f32.mrf.mxu0
      %v1576 = vadd.f32 %v1527, %v1575
      %v1577 = vpop.f32.mrf.mxu0
      %v1578 = vadd.f32 %v1529, %v1577
      %1579 = vmatmul.bf16.gmra.mxu0 %v679
      %v1580 = vpop.f32.mrf.mxu0
      %v1581 = vadd.f32 %v1532, %v1580
      %v1582 = vpop.f32.mrf.mxu0
      %v1583 = vadd.f32 %v1534, %v1582
      %1584 = vmatmul.bf16.gmra.mxu0 %v688
      %v1585 = vpop.f32.mrf.mxu0
      %v1586 = vadd.f32 %v1537, %v1585
      %v1587 = vpop.f32.mrf.mxu0
      %v1588 = vadd.f32 %v1539, %v1587
      %1589 = vmatmul.bf16.gmra.mxu0 %v697
      %v1590 = vpop.f32.mrf.mxu0
      %v1591 = vadd.f32 %v1542, %v1590
      %v1592 = vpop.f32.mrf.mxu0
      %v1593 = vadd.f32 %v1544, %v1592
      %1594 = vdwg.mxu0
      %1595 = vmatpush.bf16.msra.mxu0 %v1255
      %1596 = vmatpush.bf16.msra.mxu0 %v1253
      %1597 = vmatpush.bf16.msra.mxu0 %v1251
      %1598 = vmatpush.bf16.msra.mxu0 %v1249
      %1599 = vmatpush.bf16.msra.mxu0 %v1247
      %1600 = vmatpush.bf16.msra.mxu0 %v1245
      %1601 = vmatpush.bf16.msra.mxu0 %v1243
      %1602 = vmatpush.bf16.msra.mxu0 %v1241
      %1603 = vmatmul.bf16.gmra.mxu0 %v635
      %v1604 = vpop.f32.mrf.mxu0
      %v1605 = vadd.f32 %v1556, %v1604
      %v1606 = vpop.f32.mrf.mxu0
      %v1607 = vadd.f32 %v1558, %v1606
      %1608 = vmatmul.bf16.gmra.mxu0 %v644
      %v1609 = vpop.f32.mrf.mxu0
      %v1610 = vadd.f32 %v1561, %v1609
      %v1611 = vpop.f32.mrf.mxu0
      %v1612 = vadd.f32 %v1563, %v1611
      %1613 = vmatmul.bf16.gmra.mxu0 %v653
      %v1614 = vpop.f32.mrf.mxu0
      %v1615 = vadd.f32 %v1566, %v1614
      %v1616 = vpop.f32.mrf.mxu0
      %v1617 = vadd.f32 %v1568, %v1616
      %1618 = vmatmul.bf16.gmra.mxu0 %v662
      %v1619 = vpop.f32.mrf.mxu0
      %v1620 = vadd.f32 %v1571, %v1619
      %v1621 = vpop.f32.mrf.mxu0
      %v1622 = vadd.f32 %v1573, %v1621
      %1623 = vmatmul.bf16.gmra.mxu0 %v671
      %v1624 = vpop.f32.mrf.mxu0
      %v1625 = vadd.f32 %v1576, %v1624
      %v1626 = vpop.f32.mrf.mxu0
      %v1627 = vadd.f32 %v1578, %v1626
      %1628 = vmatmul.bf16.gmra.mxu0 %v680
      %v1629 = vpop.f32.mrf.mxu0
      %v1630 = vadd.f32 %v1581, %v1629
      %v1631 = vpop.f32.mrf.mxu0
      %v1632 = vadd.f32 %v1583, %v1631
      %1633 = vmatmul.bf16.gmra.mxu0 %v689
      %v1634 = vpop.f32.mrf.mxu0
      %v1635 = vadd.f32 %v1586, %v1634
      %v1636 = vpop.f32.mrf.mxu0
      %v1637 = vadd.f32 %v1588, %v1636
      %1638 = vmatmul.bf16.gmra.mxu0 %v698
      %v1639 = vpop.f32.mrf.mxu0
      %v1640 = vadd.f32 %v1591, %v1639
      %v1641 = vpop.f32.mrf.mxu0
      %v1642 = vadd.f32 %v1593, %v1641
      %1643 = vdwg.mxu0
      %1644 = vmatpush.bf16.msra.mxu0 %v1271
      %1645 = vmatpush.bf16.msra.mxu0 %v1269
      %1646 = vmatpush.bf16.msra.mxu0 %v1267
      %1647 = vmatpush.bf16.msra.mxu0 %v1265
      %1648 = vmatpush.bf16.msra.mxu0 %v1263
      %1649 = vmatpush.bf16.msra.mxu0 %v1261
      %1650 = vmatpush.bf16.msra.mxu0 %v1259
      %1651 = vmatpush.bf16.msra.mxu0 %v1257
      %1652 = vmatmul.bf16.gmra.mxu0 %v636
      %v1653 = vpop.f32.mrf.mxu0
      %v1654 = vadd.f32 %v1605, %v1653
      %v1655 = vpop.f32.mrf.mxu0
      %v1656 = vadd.f32 %v1607, %v1655
      %1657 = vmatmul.bf16.gmra.mxu0 %v645
      %v1658 = vpop.f32.mrf.mxu0
      %v1659 = vadd.f32 %v1610, %v1658
      %v1660 = vpop.f32.mrf.mxu0
      %v1661 = vadd.f32 %v1612, %v1660
      %1662 = vmatmul.bf16.gmra.mxu0 %v654
      %v1663 = vpop.f32.mrf.mxu0
      %v1664 = vadd.f32 %v1615, %v1663
      %v1665 = vpop.f32.mrf.mxu0
      %v1666 = vadd.f32 %v1617, %v1665
      %1667 = vmatmul.bf16.gmra.mxu0 %v663
      %v1668 = vpop.f32.mrf.mxu0
      %v1669 = vadd.f32 %v1620, %v1668
      %v1670 = vpop.f32.mrf.mxu0
      %v1671 = vadd.f32 %v1622, %v1670
      %1672 = vmatmul.bf16.gmra.mxu0 %v672
      %v1673 = vpop.f32.mrf.mxu0
      %v1674 = vadd.f32 %v1625, %v1673
      %v1675 = vpop.f32.mrf.mxu0
      %v1676 = vadd.f32 %v1627, %v1675
      %1677 = vmatmul.bf16.gmra.mxu0 %v681
      %v1678 = vpop.f32.mrf.mxu0
      %v1679 = vadd.f32 %v1630, %v1678
      %v1680 = vpop.f32.mrf.mxu0
      %v1681 = vadd.f32 %v1632, %v1680
      %1682 = vmatmul.bf16.gmra.mxu0 %v690
      %v1683 = vpop.f32.mrf.mxu0
      %v1684 = vadd.f32 %v1635, %v1683
      %v1685 = vpop.f32.mrf.mxu0
      %v1686 = vadd.f32 %v1637, %v1685
      %1687 = vmatmul.bf16.gmra.mxu0 %v699
      %v1688 = vpop.f32.mrf.mxu0
      %v1689 = vadd.f32 %v1640, %v1688
      %v1690 = vpop.f32.mrf.mxu0
      %v1691 = vadd.f32 %v1642, %v1690
      %1692 = vdwg.mxu0
      %1693 = vmatpush.bf16.msra.mxu0 %v1287
      %1694 = vmatpush.bf16.msra.mxu0 %v1285
      %1695 = vmatpush.bf16.msra.mxu0 %v1283
      %1696 = vmatpush.bf16.msra.mxu0 %v1281
      %1697 = vmatpush.bf16.msra.mxu0 %v1279
      %1698 = vmatpush.bf16.msra.mxu0 %v1277
      %1699 = vmatpush.bf16.msra.mxu0 %v1275
      %1700 = vmatpush.bf16.msra.mxu0 %v1273
      %1701 = vmatmul.bf16.gmra.mxu0 %v637
      %v1702 = vpop.f32.mrf.mxu0
      %v1703 = vadd.f32 %v1654, %v1702
      %v1704 = vpop.f32.mrf.mxu0
      %v1705 = vadd.f32 %v1656, %v1704
      %1706 = vmatmul.bf16.gmra.mxu0 %v646
      %v1707 = vpop.f32.mrf.mxu0
      %v1708 = vadd.f32 %v1659, %v1707
      %v1709 = vpop.f32.mrf.mxu0
      %v1710 = vadd.f32 %v1661, %v1709
      %1711 = vmatmul.bf16.gmra.mxu0 %v655
      %v1712 = vpop.f32.mrf.mxu0
      %v1713 = vadd.f32 %v1664, %v1712
      %v1714 = vpop.f32.mrf.mxu0
      %v1715 = vadd.f32 %v1666, %v1714
      %1716 = vmatmul.bf16.gmra.mxu0 %v664
      %v1717 = vpop.f32.mrf.mxu0
      %v1718 = vadd.f32 %v1669, %v1717
      %v1719 = vpop.f32.mrf.mxu0
      %v1720 = vadd.f32 %v1671, %v1719
      %1721 = vmatmul.bf16.gmra.mxu0 %v673
      %v1722 = vpop.f32.mrf.mxu0
      %v1723 = vadd.f32 %v1674, %v1722
      %v1724 = vpop.f32.mrf.mxu0
      %v1725 = vadd.f32 %v1676, %v1724
      %1726 = vmatmul.bf16.gmra.mxu0 %v682
      %v1727 = vpop.f32.mrf.mxu0
      %v1728 = vadd.f32 %v1679, %v1727
      %v1729 = vpop.f32.mrf.mxu0
      %v1730 = vadd.f32 %v1681, %v1729
      %1731 = vmatmul.bf16.gmra.mxu0 %v691
      %v1732 = vpop.f32.mrf.mxu0
      %v1733 = vadd.f32 %v1684, %v1732
      %v1734 = vpop.f32.mrf.mxu0
      %v1735 = vadd.f32 %v1686, %v1734
      %1736 = vmatmul.bf16.gmra.mxu0 %v700
      %v1737 = vpop.f32.mrf.mxu0
      %v1738 = vadd.f32 %v1689, %v1737
      %v1739 = vpop.f32.mrf.mxu0
      %v1740 = vadd.f32 %v1691, %v1739
      %1741 = vdwg.mxu0
      %1742 = vmatpush.bf16.msra.mxu0 %v1303
      %1743 = vmatpush.bf16.msra.mxu0 %v1301
      %1744 = vmatpush.bf16.msra.mxu0 %v1299
      %1745 = vmatpush.bf16.msra.mxu0 %v1297
      %1746 = vmatpush.bf16.msra.mxu0 %v1295
      %1747 = vmatpush.bf16.msra.mxu0 %v1293
      %1748 = vmatpush.bf16.msra.mxu0 %v1291
      %1749 = vmatpush.bf16.msra.mxu0 %v1289
      %1750 = vmatmul.bf16.gmra.mxu0 %v638
      %v1751 = vpop.f32.mrf.mxu0
      %v1752 = vadd.f32 %v1703, %v1751
      %v1753 = vpop.f32.mrf.mxu0
      %v1754 = vadd.f32 %v1705, %v1753
      %1755 = vmatmul.bf16.gmra.mxu0 %v647
      %v1756 = vpop.f32.mrf.mxu0
      %v1757 = vadd.f32 %v1708, %v1756
      %v1758 = vpop.f32.mrf.mxu0
      %v1759 = vadd.f32 %v1710, %v1758
      %1760 = vmatmul.bf16.gmra.mxu0 %v656
      %v1761 = vpop.f32.mrf.mxu0
      %v1762 = vadd.f32 %v1713, %v1761
      %v1763 = vpop.f32.mrf.mxu0
      %v1764 = vadd.f32 %v1715, %v1763
      %1765 = vmatmul.bf16.gmra.mxu0 %v665
      %v1766 = vpop.f32.mrf.mxu0
      %v1767 = vadd.f32 %v1718, %v1766
      %v1768 = vpop.f32.mrf.mxu0
      %v1769 = vadd.f32 %v1720, %v1768
      %1770 = vmatmul.bf16.gmra.mxu0 %v674
      %v1771 = vpop.f32.mrf.mxu0
      %v1772 = vadd.f32 %v1723, %v1771
      %v1773 = vpop.f32.mrf.mxu0
      %v1774 = vadd.f32 %v1725, %v1773
      %1775 = vmatmul.bf16.gmra.mxu0 %v683
      %v1776 = vpop.f32.mrf.mxu0
      %v1777 = vadd.f32 %v1728, %v1776
      %v1778 = vpop.f32.mrf.mxu0
      %v1779 = vadd.f32 %v1730, %v1778
      %1780 = vmatmul.bf16.gmra.mxu0 %v692
      %v1781 = vpop.f32.mrf.mxu0
      %v1782 = vadd.f32 %v1733, %v1781
      %v1783 = vpop.f32.mrf.mxu0
      %v1784 = vadd.f32 %v1735, %v1783
      %1785 = vmatmul.bf16.gmra.mxu0 %v701
      %v1786 = vpop.f32.mrf.mxu0
      %v1787 = vadd.f32 %v1738, %v1786
      %v1788 = vpop.f32.mrf.mxu0
      %v1789 = vadd.f32 %v1740, %v1788
      %1790 = vdwg.mxu0
      %1791 = vmatpush.bf16.msra.mxu0 %v1319
      %1792 = vmatpush.bf16.msra.mxu0 %v1317
      %1793 = vmatpush.bf16.msra.mxu0 %v1315
      %1794 = vmatpush.bf16.msra.mxu0 %v1313
      %1795 = vmatpush.bf16.msra.mxu0 %v1311
      %1796 = vmatpush.bf16.msra.mxu0 %v1309
      %1797 = vmatpush.bf16.msra.mxu0 %v1307
      %1798 = vmatpush.bf16.msra.mxu0 %v1305
      %1799 = vmatmul.bf16.gmra.mxu0 %v639
      %v1800 = vpop.f32.mrf.mxu0
      %v1801 = vadd.f32 %v1752, %v1800
      %v1802 = vpop.f32.mrf.mxu0
      %v1803 = vadd.f32 %v1754, %v1802
      %1804 = vmatmul.bf16.gmra.mxu0 %v648
      %v1805 = vpop.f32.mrf.mxu0
      %v1806 = vadd.f32 %v1757, %v1805
      %v1807 = vpop.f32.mrf.mxu0
      %v1808 = vadd.f32 %v1759, %v1807
      %1809 = vmatmul.bf16.gmra.mxu0 %v657
      %v1810 = vpop.f32.mrf.mxu0
      %v1811 = vadd.f32 %v1762, %v1810
      %v1812 = vpop.f32.mrf.mxu0
      %v1813 = vadd.f32 %v1764, %v1812
      %1814 = vmatmul.bf16.gmra.mxu0 %v666
      %v1815 = vpop.f32.mrf.mxu0
      %v1816 = vadd.f32 %v1767, %v1815
      %v1817 = vpop.f32.mrf.mxu0
      %v1818 = vadd.f32 %v1769, %v1817
      %1819 = vmatmul.bf16.gmra.mxu0 %v675
      %v1820 = vpop.f32.mrf.mxu0
      %v1821 = vadd.f32 %v1772, %v1820
      %v1822 = vpop.f32.mrf.mxu0
      %v1823 = vadd.f32 %v1774, %v1822
      %1824 = vmatmul.bf16.gmra.mxu0 %v684
      %v1825 = vpop.f32.mrf.mxu0
      %v1826 = vadd.f32 %v1777, %v1825
      %v1827 = vpop.f32.mrf.mxu0
      %v1828 = vadd.f32 %v1779, %v1827
      %1829 = vmatmul.bf16.gmra.mxu0 %v693
      %v1830 = vpop.f32.mrf.mxu0
      %v1831 = vadd.f32 %v1782, %v1830
      %v1832 = vpop.f32.mrf.mxu0
      %v1833 = vadd.f32 %v1784, %v1832
      %1834 = vmatmul.bf16.gmra.mxu0 %v702
      %v1835 = vpop.f32.mrf.mxu0
      %v1836 = vadd.f32 %v1787, %v1835
      %v1837 = vpop.f32.mrf.mxu0
      %v1838 = vadd.f32 %v1789, %v1837
      %1839 = vdwg.mxu0
      %1840 = vmatpush.bf16.msra.mxu0 %v1335
      %1841 = vmatpush.bf16.msra.mxu0 %v1333
      %1842 = vmatpush.bf16.msra.mxu0 %v1331
      %1843 = vmatpush.bf16.msra.mxu0 %v1329
      %1844 = vmatpush.bf16.msra.mxu0 %v1327
      %1845 = vmatpush.bf16.msra.mxu0 %v1325
      %1846 = vmatpush.bf16.msra.mxu0 %v1323
      %1847 = vmatpush.bf16.msra.mxu0 %v1321
      %1848 = vmatmul.bf16.gmra.mxu0 %v640
      %v1849 = vpop.f32.mrf.mxu0
      %v1850 = vadd.f32 %v1801, %v1849
      %v1851 = vpop.f32.mrf.mxu0
      %v1852 = vadd.f32 %v1803, %v1851
      %1853 = vmatmul.bf16.gmra.mxu0 %v649
      %v1854 = vpop.f32.mrf.mxu0
      %v1855 = vadd.f32 %v1806, %v1854
      %v1856 = vpop.f32.mrf.mxu0
      %v1857 = vadd.f32 %v1808, %v1856
      %1858 = vmatmul.bf16.gmra.mxu0 %v658
      %v1859 = vpop.f32.mrf.mxu0
      %v1860 = vadd.f32 %v1811, %v1859
      %v1861 = vpop.f32.mrf.mxu0
      %v1862 = vadd.f32 %v1813, %v1861
      %1863 = vmatmul.bf16.gmra.mxu0 %v667
      %v1864 = vpop.f32.mrf.mxu0
      %v1865 = vadd.f32 %v1816, %v1864
      %v1866 = vpop.f32.mrf.mxu0
      %v1867 = vadd.f32 %v1818, %v1866
      %1868 = vmatmul.bf16.gmra.mxu0 %v676
      %v1869 = vpop.f32.mrf.mxu0
      %v1870 = vadd.f32 %v1821, %v1869
      %v1871 = vpop.f32.mrf.mxu0
      %v1872 = vadd.f32 %v1823, %v1871
      %1873 = vmatmul.bf16.gmra.mxu0 %v685
      %v1874 = vpop.f32.mrf.mxu0
      %v1875 = vadd.f32 %v1826, %v1874
      %v1876 = vpop.f32.mrf.mxu0
      %v1877 = vadd.f32 %v1828, %v1876
      %1878 = vmatmul.bf16.gmra.mxu0 %v694
      %v1879 = vpop.f32.mrf.mxu0
      %v1880 = vadd.f32 %v1831, %v1879
      %v1881 = vpop.f32.mrf.mxu0
      %v1882 = vadd.f32 %v1833, %v1881
      %1883 = vmatmul.bf16.gmra.mxu0 %v703
      %v1884 = vpop.f32.mrf.mxu0
      %v1885 = vadd.f32 %v1836, %v1884
      %v1886 = vpop.f32.mrf.mxu0
      %v1887 = vadd.f32 %v1838, %v1886
      %1888 = vdwg.mxu0
      %1889 = vmatpush.bf16.msra.mxu0 %v1351
      %1890 = vmatpush.bf16.msra.mxu0 %v1349
      %1891 = vmatpush.bf16.msra.mxu0 %v1347
      %1892 = vmatpush.bf16.msra.mxu0 %v1345
      %1893 = vmatpush.bf16.msra.mxu0 %v1343
      %1894 = vmatpush.bf16.msra.mxu0 %v1341
      %1895 = vmatpush.bf16.msra.mxu0 %v1339
      %1896 = vmatpush.bf16.msra.mxu0 %v1337
      %1897 = vmatmul.bf16.gmra.mxu0 %v641
      %v1898 = vpop.f32.mrf.mxu0
      %v1899 = vadd.f32 %v1850, %v1898
      %v1900 = vpop.f32.mrf.mxu0
      %v1901 = vadd.f32 %v1852, %v1900
      %1902 = vmatmul.bf16.gmra.mxu0 %v650
      %v1903 = vpop.f32.mrf.mxu0
      %v1904 = vadd.f32 %v1855, %v1903
      %v1905 = vpop.f32.mrf.mxu0
      %v1906 = vadd.f32 %v1857, %v1905
      %1907 = vmatmul.bf16.gmra.mxu0 %v659
      %v1908 = vpop.f32.mrf.mxu0
      %v1909 = vadd.f32 %v1860, %v1908
      %v1910 = vpop.f32.mrf.mxu0
      %v1911 = vadd.f32 %v1862, %v1910
      %1912 = vmatmul.bf16.gmra.mxu0 %v668
      %v1913 = vpop.f32.mrf.mxu0
      %v1914 = vadd.f32 %v1865, %v1913
      %v1915 = vpop.f32.mrf.mxu0
      %v1916 = vadd.f32 %v1867, %v1915
      %1917 = vmatmul.bf16.gmra.mxu0 %v677
      %v1918 = vpop.f32.mrf.mxu0
      %v1919 = vadd.f32 %v1870, %v1918
      %v1920 = vpop.f32.mrf.mxu0
      %v1921 = vadd.f32 %v1872, %v1920
      %1922 = vmatmul.bf16.gmra.mxu0 %v686
      %v1923 = vpop.f32.mrf.mxu0
      %v1924 = vadd.f32 %v1875, %v1923
      %v1925 = vpop.f32.mrf.mxu0
      %v1926 = vadd.f32 %v1877, %v1925
      %1927 = vmatmul.bf16.gmra.mxu0 %v695
      %v1928 = vpop.f32.mrf.mxu0
      %v1929 = vadd.f32 %v1880, %v1928
      %v1930 = vpop.f32.mrf.mxu0
      %v1931 = vadd.f32 %v1882, %v1930
      %1932 = vmatmul.bf16.gmra.mxu0 %v704
      %v1933 = vpop.f32.mrf.mxu0
      %v1934 = vadd.f32 %v1885, %v1933
      %v1935 = vpop.f32.mrf.mxu0
      %v1936 = vadd.f32 %v1887, %v1935
      %1937 = vdwg.mxu0
      %1938 = vmatpush.bf16.msra.mxu0 %v1224
      %1939 = vmatpush.bf16.msra.mxu0 %v1222
      %1940 = vmatpush.bf16.msra.mxu0 %v1220
      %1941 = vmatpush.bf16.msra.mxu0 %v1218
      %1942 = vmatpush.bf16.msra.mxu0 %v1216
      %1943 = vmatpush.bf16.msra.mxu0 %v1214
      %1944 = vmatpush.bf16.msra.mxu0 %v1212
      %1945 = vmatpush.bf16.msra.mxu0 %v1210
      %1946 = vmatmul.bf16.gmra.mxu0 %v633
      %v1947 = vpop.f32.mrf.mxu0
      %v1948 = vadd.f32 %v406, %v1947
      %v1949 = vpop.f32.mrf.mxu0
      %v1950 = vadd.f32 %v406, %v1949
      %1951 = vmatmul.bf16.gmra.mxu0 %v642
      %v1952 = vpop.f32.mrf.mxu0
      %v1953 = vadd.f32 %v406, %v1952
      %v1954 = vpop.f32.mrf.mxu0
      %v1955 = vadd.f32 %v406, %v1954
      %1956 = vmatmul.bf16.gmra.mxu0 %v651
      %v1957 = vpop.f32.mrf.mxu0
      %v1958 = vadd.f32 %v406, %v1957
      %v1959 = vpop.f32.mrf.mxu0
      %v1960 = vadd.f32 %v406, %v1959
      %1961 = vmatmul.bf16.gmra.mxu0 %v660
      %v1962 = vpop.f32.mrf.mxu0
      %v1963 = vadd.f32 %v406, %v1962
      %v1964 = vpop.f32.mrf.mxu0
      %v1965 = vadd.f32 %v406, %v1964
      %1966 = vmatmul.bf16.gmra.mxu0 %v669
      %v1967 = vpop.f32.mrf.mxu0
      %v1968 = vadd.f32 %v406, %v1967
      %v1969 = vpop.f32.mrf.mxu0
      %v1970 = vadd.f32 %v406, %v1969
      %1971 = vmatmul.bf16.gmra.mxu0 %v678
      %v1972 = vpop.f32.mrf.mxu0
      %v1973 = vadd.f32 %v406, %v1972
      %v1974 = vpop.f32.mrf.mxu0
      %v1975 = vadd.f32 %v406, %v1974
      %1976 = vmatmul.bf16.gmra.mxu0 %v687
      %v1977 = vpop.f32.mrf.mxu0
      %v1978 = vadd.f32 %v406, %v1977
      %v1979 = vpop.f32.mrf.mxu0
      %v1980 = vadd.f32 %v406, %v1979
      %1981 = vmatmul.bf16.gmra.mxu0 %v696
      %v1982 = vpop.f32.mrf.mxu0
      %v1983 = vadd.f32 %v406, %v1982
      %v1984 = vpop.f32.mrf.mxu0
      %v1985 = vadd.f32 %v406, %v1984
      %1986 = vdwg.mxu0
      %1987 = vmatpush.bf16.msra.mxu0 %v1240
      %1988 = vmatpush.bf16.msra.mxu0 %v1238
      %1989 = vmatpush.bf16.msra.mxu0 %v1236
      %1990 = vmatpush.bf16.msra.mxu0 %v1234
      %1991 = vmatpush.bf16.msra.mxu0 %v1232
      %1992 = vmatpush.bf16.msra.mxu0 %v1230
      %1993 = vmatpush.bf16.msra.mxu0 %v1228
      %1994 = vmatpush.bf16.msra.mxu0 %v1226
      %1995 = vmatmul.bf16.gmra.mxu0 %v634
      %v1996 = vpop.f32.mrf.mxu0
      %v1997 = vadd.f32 %v1948, %v1996
      %v1998 = vpop.f32.mrf.mxu0
      %v1999 = vadd.f32 %v1950, %v1998
      %2000 = vmatmul.bf16.gmra.mxu0 %v643
      %v2001 = vpop.f32.mrf.mxu0
      %v2002 = vadd.f32 %v1953, %v2001
      %v2003 = vpop.f32.mrf.mxu0
      %v2004 = vadd.f32 %v1955, %v2003
      %2005 = vmatmul.bf16.gmra.mxu0 %v652
      %v2006 = vpop.f32.mrf.mxu0
      %v2007 = vadd.f32 %v1958, %v2006
      %v2008 = vpop.f32.mrf.mxu0
      %v2009 = vadd.f32 %v1960, %v2008
      %2010 = vmatmul.bf16.gmra.mxu0 %v661
      %v2011 = vpop.f32.mrf.mxu0
      %v2012 = vadd.f32 %v1963, %v2011
      %v2013 = vpop.f32.mrf.mxu0
      %v2014 = vadd.f32 %v1965, %v2013
      %2015 = vmatmul.bf16.gmra.mxu0 %v670
      %v2016 = vpop.f32.mrf.mxu0
      %v2017 = vadd.f32 %v1968, %v2016
      %v2018 = vpop.f32.mrf.mxu0
      %v2019 = vadd.f32 %v1970, %v2018
      %2020 = vmatmul.bf16.gmra.mxu0 %v679
      %v2021 = vpop.f32.mrf.mxu0
      %v2022 = vadd.f32 %v1973, %v2021
      %v2023 = vpop.f32.mrf.mxu0
      %v2024 = vadd.f32 %v1975, %v2023
      %2025 = vmatmul.bf16.gmra.mxu0 %v688
      %v2026 = vpop.f32.mrf.mxu0
      %v2027 = vadd.f32 %v1978, %v2026
      %v2028 = vpop.f32.mrf.mxu0
      %v2029 = vadd.f32 %v1980, %v2028
      %2030 = vmatmul.bf16.gmra.mxu0 %v697
      %v2031 = vpop.f32.mrf.mxu0
      %v2032 = vadd.f32 %v1983, %v2031
      %v2033 = vpop.f32.mrf.mxu0
      %v2034 = vadd.f32 %v1985, %v2033
      %2035 = vdwg.mxu0
      %2036 = vmatpush.bf16.msra.mxu0 %v1256
      %2037 = vmatpush.bf16.msra.mxu0 %v1254
      %2038 = vmatpush.bf16.msra.mxu0 %v1252
      %2039 = vmatpush.bf16.msra.mxu0 %v1250
      %2040 = vmatpush.bf16.msra.mxu0 %v1248
      %2041 = vmatpush.bf16.msra.mxu0 %v1246
      %2042 = vmatpush.bf16.msra.mxu0 %v1244
      %2043 = vmatpush.bf16.msra.mxu0 %v1242
      %2044 = vmatmul.bf16.gmra.mxu0 %v635
      %v2045 = vpop.f32.mrf.mxu0
      %v2046 = vadd.f32 %v1997, %v2045
      %v2047 = vpop.f32.mrf.mxu0
      %v2048 = vadd.f32 %v1999, %v2047
      %2049 = vmatmul.bf16.gmra.mxu0 %v644
      %v2050 = vpop.f32.mrf.mxu0
      %v2051 = vadd.f32 %v2002, %v2050
      %v2052 = vpop.f32.mrf.mxu0
      %v2053 = vadd.f32 %v2004, %v2052
      %2054 = vmatmul.bf16.gmra.mxu0 %v653
      %v2055 = vpop.f32.mrf.mxu0
      %v2056 = vadd.f32 %v2007, %v2055
      %v2057 = vpop.f32.mrf.mxu0
      %v2058 = vadd.f32 %v2009, %v2057
      %2059 = vmatmul.bf16.gmra.mxu0 %v662
      %v2060 = vpop.f32.mrf.mxu0
      %v2061 = vadd.f32 %v2012, %v2060
      %v2062 = vpop.f32.mrf.mxu0
      %v2063 = vadd.f32 %v2014, %v2062
      %2064 = vmatmul.bf16.gmra.mxu0 %v671
      %v2065 = vpop.f32.mrf.mxu0
      %v2066 = vadd.f32 %v2017, %v2065
      %v2067 = vpop.f32.mrf.mxu0
      %v2068 = vadd.f32 %v2019, %v2067
      %2069 = vmatmul.bf16.gmra.mxu0 %v680
      %v2070 = vpop.f32.mrf.mxu0
      %v2071 = vadd.f32 %v2022, %v2070
      %v2072 = vpop.f32.mrf.mxu0
      %v2073 = vadd.f32 %v2024, %v2072
      %2074 = vmatmul.bf16.gmra.mxu0 %v689
      %v2075 = vpop.f32.mrf.mxu0
      %v2076 = vadd.f32 %v2027, %v2075
      %v2077 = vpop.f32.mrf.mxu0
      %v2078 = vadd.f32 %v2029, %v2077
      %2079 = vmatmul.bf16.gmra.mxu0 %v698
      %v2080 = vpop.f32.mrf.mxu0
      %v2081 = vadd.f32 %v2032, %v2080
      %v2082 = vpop.f32.mrf.mxu0
      %v2083 = vadd.f32 %v2034, %v2082
      %2084 = vdwg.mxu0
      %2085 = vmatpush.bf16.msra.mxu0 %v1272
      %2086 = vmatpush.bf16.msra.mxu0 %v1270
      %2087 = vmatpush.bf16.msra.mxu0 %v1268
      %2088 = vmatpush.bf16.msra.mxu0 %v1266
      %2089 = vmatpush.bf16.msra.mxu0 %v1264
      %2090 = vmatpush.bf16.msra.mxu0 %v1262
      %2091 = vmatpush.bf16.msra.mxu0 %v1260
      %2092 = vmatpush.bf16.msra.mxu0 %v1258
      %2093 = vmatmul.bf16.gmra.mxu0 %v636
      %v2094 = vpop.f32.mrf.mxu0
      %v2095 = vadd.f32 %v2046, %v2094
      %v2096 = vpop.f32.mrf.mxu0
      %v2097 = vadd.f32 %v2048, %v2096
      %2098 = vmatmul.bf16.gmra.mxu0 %v645
      %v2099 = vpop.f32.mrf.mxu0
      %v2100 = vadd.f32 %v2051, %v2099
      %v2101 = vpop.f32.mrf.mxu0
      %v2102 = vadd.f32 %v2053, %v2101
      %2103 = vmatmul.bf16.gmra.mxu0 %v654
      %v2104 = vpop.f32.mrf.mxu0
      %v2105 = vadd.f32 %v2056, %v2104
      %v2106 = vpop.f32.mrf.mxu0
      %v2107 = vadd.f32 %v2058, %v2106
      %2108 = vmatmul.bf16.gmra.mxu0 %v663
      %v2109 = vpop.f32.mrf.mxu0
      %v2110 = vadd.f32 %v2061, %v2109
      %v2111 = vpop.f32.mrf.mxu0
      %v2112 = vadd.f32 %v2063, %v2111
      %2113 = vmatmul.bf16.gmra.mxu0 %v672
      %v2114 = vpop.f32.mrf.mxu0
      %v2115 = vadd.f32 %v2066, %v2114
      %v2116 = vpop.f32.mrf.mxu0
      %v2117 = vadd.f32 %v2068, %v2116
      %2118 = vmatmul.bf16.gmra.mxu0 %v681
      %v2119 = vpop.f32.mrf.mxu0
      %v2120 = vadd.f32 %v2071, %v2119
      %v2121 = vpop.f32.mrf.mxu0
      %v2122 = vadd.f32 %v2073, %v2121
      %2123 = vmatmul.bf16.gmra.mxu0 %v690
      %v2124 = vpop.f32.mrf.mxu0
      %v2125 = vadd.f32 %v2076, %v2124
      %v2126 = vpop.f32.mrf.mxu0
      %v2127 = vadd.f32 %v2078, %v2126
      %2128 = vmatmul.bf16.gmra.mxu0 %v699
      %v2129 = vpop.f32.mrf.mxu0
      %v2130 = vadd.f32 %v2081, %v2129
      %v2131 = vpop.f32.mrf.mxu0
      %v2132 = vadd.f32 %v2083, %v2131
      %2133 = vdwg.mxu0
      %2134 = vmatpush.bf16.msra.mxu0 %v1288
      %2135 = vmatpush.bf16.msra.mxu0 %v1286
      %2136 = vmatpush.bf16.msra.mxu0 %v1284
      %2137 = vmatpush.bf16.msra.mxu0 %v1282
      %2138 = vmatpush.bf16.msra.mxu0 %v1280
      %2139 = vmatpush.bf16.msra.mxu0 %v1278
      %2140 = vmatpush.bf16.msra.mxu0 %v1276
      %2141 = vmatpush.bf16.msra.mxu0 %v1274
      %2142 = vmatmul.bf16.gmra.mxu0 %v637
      %v2143 = vpop.f32.mrf.mxu0
      %v2144 = vadd.f32 %v2095, %v2143
      %v2145 = vpop.f32.mrf.mxu0
      %v2146 = vadd.f32 %v2097, %v2145
      %2147 = vmatmul.bf16.gmra.mxu0 %v646
      %v2148 = vpop.f32.mrf.mxu0
      %v2149 = vadd.f32 %v2100, %v2148
      %v2150 = vpop.f32.mrf.mxu0
      %v2151 = vadd.f32 %v2102, %v2150
      %2152 = vmatmul.bf16.gmra.mxu0 %v655
      %v2153 = vpop.f32.mrf.mxu0
      %v2154 = vadd.f32 %v2105, %v2153
      %v2155 = vpop.f32.mrf.mxu0
      %v2156 = vadd.f32 %v2107, %v2155
      %2157 = vmatmul.bf16.gmra.mxu0 %v664
      %v2158 = vpop.f32.mrf.mxu0
      %v2159 = vadd.f32 %v2110, %v2158
      %v2160 = vpop.f32.mrf.mxu0
      %v2161 = vadd.f32 %v2112, %v2160
      %2162 = vmatmul.bf16.gmra.mxu0 %v673
      %v2163 = vpop.f32.mrf.mxu0
      %v2164 = vadd.f32 %v2115, %v2163
      %v2165 = vpop.f32.mrf.mxu0
      %v2166 = vadd.f32 %v2117, %v2165
      %2167 = vmatmul.bf16.gmra.mxu0 %v682
      %v2168 = vpop.f32.mrf.mxu0
      %v2169 = vadd.f32 %v2120, %v2168
      %v2170 = vpop.f32.mrf.mxu0
      %v2171 = vadd.f32 %v2122, %v2170
      %2172 = vmatmul.bf16.gmra.mxu0 %v691
      %v2173 = vpop.f32.mrf.mxu0
      %v2174 = vadd.f32 %v2125, %v2173
      %v2175 = vpop.f32.mrf.mxu0
      %v2176 = vadd.f32 %v2127, %v2175
      %2177 = vmatmul.bf16.gmra.mxu0 %v700
      %v2178 = vpop.f32.mrf.mxu0
      %v2179 = vadd.f32 %v2130, %v2178
      %v2180 = vpop.f32.mrf.mxu0
      %v2181 = vadd.f32 %v2132, %v2180
      %2182 = vdwg.mxu0
      %2183 = vmatpush.bf16.msra.mxu0 %v1304
      %2184 = vmatpush.bf16.msra.mxu0 %v1302
      %2185 = vmatpush.bf16.msra.mxu0 %v1300
      %2186 = vmatpush.bf16.msra.mxu0 %v1298
      %2187 = vmatpush.bf16.msra.mxu0 %v1296
      %2188 = vmatpush.bf16.msra.mxu0 %v1294
      %2189 = vmatpush.bf16.msra.mxu0 %v1292
      %2190 = vmatpush.bf16.msra.mxu0 %v1290
      %2191 = vmatmul.bf16.gmra.mxu0 %v638
      %v2192 = vpop.f32.mrf.mxu0
      %v2193 = vadd.f32 %v2144, %v2192
      %v2194 = vpop.f32.mrf.mxu0
      %v2195 = vadd.f32 %v2146, %v2194
      %2196 = vmatmul.bf16.gmra.mxu0 %v647
      %v2197 = vpop.f32.mrf.mxu0
      %v2198 = vadd.f32 %v2149, %v2197
      %v2199 = vpop.f32.mrf.mxu0
      %v2200 = vadd.f32 %v2151, %v2199
      %2201 = vmatmul.bf16.gmra.mxu0 %v656
      %v2202 = vpop.f32.mrf.mxu0
      %v2203 = vadd.f32 %v2154, %v2202
      %v2204 = vpop.f32.mrf.mxu0
      %v2205 = vadd.f32 %v2156, %v2204
      %2206 = vmatmul.bf16.gmra.mxu0 %v665
      %v2207 = vpop.f32.mrf.mxu0
      %v2208 = vadd.f32 %v2159, %v2207
      %v2209 = vpop.f32.mrf.mxu0
      %v2210 = vadd.f32 %v2161, %v2209
      %2211 = vmatmul.bf16.gmra.mxu0 %v674
      %v2212 = vpop.f32.mrf.mxu0
      %v2213 = vadd.f32 %v2164, %v2212
      %v2214 = vpop.f32.mrf.mxu0
      %v2215 = vadd.f32 %v2166, %v2214
      %2216 = vmatmul.bf16.gmra.mxu0 %v683
      %v2217 = vpop.f32.mrf.mxu0
      %v2218 = vadd.f32 %v2169, %v2217
      %v2219 = vpop.f32.mrf.mxu0
      %v2220 = vadd.f32 %v2171, %v2219
      %2221 = vmatmul.bf16.gmra.mxu0 %v692
      %v2222 = vpop.f32.mrf.mxu0
      %v2223 = vadd.f32 %v2174, %v2222
      %v2224 = vpop.f32.mrf.mxu0
      %v2225 = vadd.f32 %v2176, %v2224
      %2226 = vmatmul.bf16.gmra.mxu0 %v701
      %v2227 = vpop.f32.mrf.mxu0
      %v2228 = vadd.f32 %v2179, %v2227
      %v2229 = vpop.f32.mrf.mxu0
      %v2230 = vadd.f32 %v2181, %v2229
      %2231 = vdwg.mxu0
      %2232 = vmatpush.bf16.msra.mxu0 %v1320
      %2233 = vmatpush.bf16.msra.mxu0 %v1318
      %2234 = vmatpush.bf16.msra.mxu0 %v1316
      %2235 = vmatpush.bf16.msra.mxu0 %v1314
      %2236 = vmatpush.bf16.msra.mxu0 %v1312
      %2237 = vmatpush.bf16.msra.mxu0 %v1310
      %2238 = vmatpush.bf16.msra.mxu0 %v1308
      %2239 = vmatpush.bf16.msra.mxu0 %v1306
      %2240 = vmatmul.bf16.gmra.mxu0 %v639
      %v2241 = vpop.f32.mrf.mxu0
      %v2242 = vadd.f32 %v2193, %v2241
      %v2243 = vpop.f32.mrf.mxu0
      %v2244 = vadd.f32 %v2195, %v2243
      %2245 = vmatmul.bf16.gmra.mxu0 %v648
      %v2246 = vpop.f32.mrf.mxu0
      %v2247 = vadd.f32 %v2198, %v2246
      %v2248 = vpop.f32.mrf.mxu0
      %v2249 = vadd.f32 %v2200, %v2248
      %2250 = vmatmul.bf16.gmra.mxu0 %v657
      %v2251 = vpop.f32.mrf.mxu0
      %v2252 = vadd.f32 %v2203, %v2251
      %v2253 = vpop.f32.mrf.mxu0
      %v2254 = vadd.f32 %v2205, %v2253
      %2255 = vmatmul.bf16.gmra.mxu0 %v666
      %v2256 = vpop.f32.mrf.mxu0
      %v2257 = vadd.f32 %v2208, %v2256
      %v2258 = vpop.f32.mrf.mxu0
      %v2259 = vadd.f32 %v2210, %v2258
      %2260 = vmatmul.bf16.gmra.mxu0 %v675
      %v2261 = vpop.f32.mrf.mxu0
      %v2262 = vadd.f32 %v2213, %v2261
      %v2263 = vpop.f32.mrf.mxu0
      %v2264 = vadd.f32 %v2215, %v2263
      %2265 = vmatmul.bf16.gmra.mxu0 %v684
      %v2266 = vpop.f32.mrf.mxu0
      %v2267 = vadd.f32 %v2218, %v2266
      %v2268 = vpop.f32.mrf.mxu0
      %v2269 = vadd.f32 %v2220, %v2268
      %2270 = vmatmul.bf16.gmra.mxu0 %v693
      %v2271 = vpop.f32.mrf.mxu0
      %v2272 = vadd.f32 %v2223, %v2271
      %v2273 = vpop.f32.mrf.mxu0
      %v2274 = vadd.f32 %v2225, %v2273
      %2275 = vmatmul.bf16.gmra.mxu0 %v702
      %v2276 = vpop.f32.mrf.mxu0
      %v2277 = vadd.f32 %v2228, %v2276
      %v2278 = vpop.f32.mrf.mxu0
      %v2279 = vadd.f32 %v2230, %v2278
      %2280 = vdwg.mxu0
      %2281 = vmatpush.bf16.msra.mxu0 %v1336
      %2282 = vmatpush.bf16.msra.mxu0 %v1334
      %2283 = vmatpush.bf16.msra.mxu0 %v1332
      %2284 = vmatpush.bf16.msra.mxu0 %v1330
      %2285 = vmatpush.bf16.msra.mxu0 %v1328
      %2286 = vmatpush.bf16.msra.mxu0 %v1326
      %2287 = vmatpush.bf16.msra.mxu0 %v1324
      %2288 = vmatpush.bf16.msra.mxu0 %v1322
      %2289 = vmatmul.bf16.gmra.mxu0 %v640
      %v2290 = vpop.f32.mrf.mxu0
      %v2291 = vadd.f32 %v2242, %v2290
      %v2292 = vpop.f32.mrf.mxu0
      %v2293 = vadd.f32 %v2244, %v2292
      %2294 = vmatmul.bf16.gmra.mxu0 %v649
      %v2295 = vpop.f32.mrf.mxu0
      %v2296 = vadd.f32 %v2247, %v2295
      %v2297 = vpop.f32.mrf.mxu0
      %v2298 = vadd.f32 %v2249, %v2297
      %2299 = vmatmul.bf16.gmra.mxu0 %v658
      %v2300 = vpop.f32.mrf.mxu0
      %v2301 = vadd.f32 %v2252, %v2300
      %v2302 = vpop.f32.mrf.mxu0
      %v2303 = vadd.f32 %v2254, %v2302
      %2304 = vmatmul.bf16.gmra.mxu0 %v667
      %v2305 = vpop.f32.mrf.mxu0
      %v2306 = vadd.f32 %v2257, %v2305
      %v2307 = vpop.f32.mrf.mxu0
      %v2308 = vadd.f32 %v2259, %v2307
      %2309 = vmatmul.bf16.gmra.mxu0 %v676
      %v2310 = vpop.f32.mrf.mxu0
      %v2311 = vadd.f32 %v2262, %v2310
      %v2312 = vpop.f32.mrf.mxu0
      %v2313 = vadd.f32 %v2264, %v2312
      %2314 = vmatmul.bf16.gmra.mxu0 %v685
      %v2315 = vpop.f32.mrf.mxu0
      %v2316 = vadd.f32 %v2267, %v2315
      %v2317 = vpop.f32.mrf.mxu0
      %v2318 = vadd.f32 %v2269, %v2317
      %2319 = vmatmul.bf16.gmra.mxu0 %v694
      %v2320 = vpop.f32.mrf.mxu0
      %v2321 = vadd.f32 %v2272, %v2320
      %v2322 = vpop.f32.mrf.mxu0
      %v2323 = vadd.f32 %v2274, %v2322
      %2324 = vmatmul.bf16.gmra.mxu0 %v703
      %v2325 = vpop.f32.mrf.mxu0
      %v2326 = vadd.f32 %v2277, %v2325
      %v2327 = vpop.f32.mrf.mxu0
      %v2328 = vadd.f32 %v2279, %v2327
      %2329 = vdwg.mxu0
      %2330 = vmatpush.bf16.msra.mxu0 %v1352
      %2331 = vmatpush.bf16.msra.mxu0 %v1350
      %2332 = vmatpush.bf16.msra.mxu0 %v1348
      %2333 = vmatpush.bf16.msra.mxu0 %v1346
      %2334 = vmatpush.bf16.msra.mxu0 %v1344
      %2335 = vmatpush.bf16.msra.mxu0 %v1342
      %2336 = vmatpush.bf16.msra.mxu0 %v1340
      %2337 = vmatpush.bf16.msra.mxu0 %v1338
      %2338 = vmatmul.bf16.gmra.mxu0 %v641
      %v2339 = vpop.f32.mrf.mxu0
      %v2340 = vadd.f32 %v2291, %v2339
      %v2341 = vpop.f32.mrf.mxu0
      %v2342 = vadd.f32 %v2293, %v2341
      %2343 = vmatmul.bf16.gmra.mxu0 %v650
      %v2344 = vpop.f32.mrf.mxu0
      %v2345 = vadd.f32 %v2296, %v2344
      %v2346 = vpop.f32.mrf.mxu0
      %v2347 = vadd.f32 %v2298, %v2346
      %2348 = vmatmul.bf16.gmra.mxu0 %v659
      %v2349 = vpop.f32.mrf.mxu0
      %v2350 = vadd.f32 %v2301, %v2349
      %v2351 = vpop.f32.mrf.mxu0
      %v2352 = vadd.f32 %v2303, %v2351
      %2353 = vmatmul.bf16.gmra.mxu0 %v668
      %v2354 = vpop.f32.mrf.mxu0
      %v2355 = vadd.f32 %v2306, %v2354
      %v2356 = vpop.f32.mrf.mxu0
      %v2357 = vadd.f32 %v2308, %v2356
      %2358 = vmatmul.bf16.gmra.mxu0 %v677
      %v2359 = vpop.f32.mrf.mxu0
      %v2360 = vadd.f32 %v2311, %v2359
      %v2361 = vpop.f32.mrf.mxu0
      %v2362 = vadd.f32 %v2313, %v2361
      %2363 = vmatmul.bf16.gmra.mxu0 %v686
      %v2364 = vpop.f32.mrf.mxu0
      %v2365 = vadd.f32 %v2316, %v2364
      %v2366 = vpop.f32.mrf.mxu0
      %v2367 = vadd.f32 %v2318, %v2366
      %2368 = vmatmul.bf16.gmra.mxu0 %v695
      %v2369 = vpop.f32.mrf.mxu0
      %v2370 = vadd.f32 %v2321, %v2369
      %v2371 = vpop.f32.mrf.mxu0
      %v2372 = vadd.f32 %v2323, %v2371
      %2373 = vmatmul.bf16.gmra.mxu0 %v704
      %v2374 = vpop.f32.mrf.mxu0
      %v2375 = vadd.f32 %v2326, %v2374
      %v2376 = vpop.f32.mrf.mxu0
      %v2377 = vadd.f32 %v2328, %v2376
      %2378 = vdwg.mxu0
      %vm2379 = vcmp.ge.f32.partialorder %v1899, 0.0
      %vm2380 = vcmp.ge.f32.partialorder %v2340, 0.0
      %vm2381 = vcmp.ge.f32.partialorder %v1901, 0.0
      %vm2382 = vcmp.ge.f32.partialorder %v2342, 0.0
      %vm2383 = vcmp.ge.f32.partialorder %v1904, 0.0
      %vm2384 = vcmp.ge.f32.partialorder %v2345, 0.0
      %vm2385 = vcmp.ge.f32.partialorder %v1906, 0.0
      %vm2386 = vcmp.ge.f32.partialorder %v2347, 0.0
      %vm2387 = vcmp.ge.f32.partialorder %v1909, 0.0
      %vm2388 = vcmp.ge.f32.partialorder %v2350, 0.0
      %vm2389 = vcmp.ge.f32.partialorder %v1911, 0.0
      %vm2390 = vcmp.ge.f32.partialorder %v2352, 0.0
      %vm2391 = vcmp.ge.f32.partialorder %v1914, 0.0
      %vm2392 = vcmp.ge.f32.partialorder %v2355, 0.0
      %vm2393 = vcmp.ge.f32.partialorder %v1916, 0.0
      %vm2394 = vcmp.ge.f32.partialorder %v2357, 0.0
      %vm2395 = vcmp.ge.f32.partialorder %v1919, 0.0
      %vm2396 = vcmp.ge.f32.partialorder %v2360, 0.0
      %vm2397 = vcmp.ge.f32.partialorder %v1921, 0.0
      %vm2398 = vcmp.ge.f32.partialorder %v2362, 0.0
      %vm2399 = vcmp.ge.f32.partialorder %v1924, 0.0
      %vm2400 = vcmp.ge.f32.partialorder %v2365, 0.0
      %vm2401 = vcmp.ge.f32.partialorder %v1926, 0.0
      %vm2402 = vcmp.ge.f32.partialorder %v2367, 0.0
      %vm2403 = vcmp.ge.f32.partialorder %v1929, 0.0
      %vm2404 = vcmp.ge.f32.partialorder %v2370, 0.0
      %vm2405 = vcmp.ge.f32.partialorder %v1931, 0.0
      %vm2406 = vcmp.ge.f32.partialorder %v2372, 0.0
      %vm2407 = vcmp.ge.f32.partialorder %v1934, 0.0
      %vm2408 = vcmp.ge.f32.partialorder %v2375, 0.0
      %vm2409 = vcmp.ge.f32.partialorder %v1936, 0.0
      %vm2410 = vcmp.ge.f32.partialorder %v2377, 0.0
      %v2411 = vmul.f32 %v1899, 0.01
      %v2412 = vmul.f32 %v2340, 0.01
      %v2413 = vmul.f32 %v1901, 0.01
      %v2414 = vmul.f32 %v2342, 0.01
      %v2415 = vmul.f32 %v1904, 0.01
      %v2416 = vmul.f32 %v2345, 0.01
      %v2417 = vmul.f32 %v1906, 0.01
      %v2418 = vmul.f32 %v2347, 0.01
      %v2419 = vmul.f32 %v1909, 0.01
      %v2420 = vmul.f32 %v2350, 0.01
      %v2421 = vmul.f32 %v1911, 0.01
      %v2422 = vmul.f32 %v2352, 0.01
      %v2423 = vmul.f32 %v1914, 0.01
      %v2424 = vmul.f32 %v2355, 0.01
      %v2425 = vmul.f32 %v1916, 0.01
      %v2426 = vmul.f32 %v2357, 0.01
      %v2427 = vmul.f32 %v1919, 0.01
      %v2428 = vmul.f32 %v2360, 0.01
      %v2429 = vmul.f32 %v1921, 0.01
      %v2430 = vmul.f32 %v2362, 0.01
      %v2431 = vmul.f32 %v1924, 0.01
      %v2432 = vmul.f32 %v2365, 0.01
      %v2433 = vmul.f32 %v1926, 0.01
      %v2434 = vmul.f32 %v2367, 0.01
      %v2435 = vmul.f32 %v1929, 0.01
      %v2436 = vmul.f32 %v2370, 0.01
      %v2437 = vmul.f32 %v1931, 0.01
      %v2438 = vmul.f32 %v2372, 0.01
      %v2439 = vmul.f32 %v1934, 0.01
      %v2440 = vmul.f32 %v2375, 0.01
      %v2441 = vmul.f32 %v1936, 0.01
      %v2442 = vmul.f32 %v2377, 0.01
      %v2443 = vsel %vm2379, %v1899, %v2411
      %v2444 = vsel %vm2380, %v2340, %v2412
      %v2445 = vsel %vm2381, %v1901, %v2413
      %v2446 = vsel %vm2382, %v2342, %v2414
      %v2447 = vsel %vm2383, %v1904, %v2415
      %v2448 = vsel %vm2384, %v2345, %v2416
      %v2449 = vsel %vm2385, %v1906, %v2417
      %v2450 = vsel %vm2386, %v2347, %v2418
      %v2451 = vsel %vm2387, %v1909, %v2419
      %v2452 = vsel %vm2388, %v2350, %v2420
      %v2453 = vsel %vm2389, %v1911, %v2421
      %v2454 = vsel %vm2390, %v2352, %v2422
      %v2455 = vsel %vm2391, %v1914, %v2423
      %v2456 = vsel %vm2392, %v2355, %v2424
      %v2457 = vsel %vm2393, %v1916, %v2425
      %v2458 = vsel %vm2394, %v2357, %v2426
      %v2459 = vsel %vm2395, %v1919, %v2427
      %v2460 = vsel %vm2396, %v2360, %v2428
      %v2461 = vsel %vm2397, %v1921, %v2429
      %v2462 = vsel %vm2398, %v2362, %v2430
      %v2463 = vsel %vm2399, %v1924, %v2431
      %v2464 = vsel %vm2400, %v2365, %v2432
      %v2465 = vsel %vm2401, %v1926, %v2433
      %v2466 = vsel %vm2402, %v2367, %v2434
      %v2467 = vsel %vm2403, %v1929, %v2435
      %v2468 = vsel %vm2404, %v2370, %v2436
      %v2469 = vsel %vm2405, %v1931, %v2437
      %v2470 = vsel %vm2406, %v2372, %v2438
      %v2471 = vsel %vm2407, %v1934, %v2439
      %v2472 = vsel %vm2408, %v2375, %v2440
      %v2473 = vsel %vm2409, %v1936, %v2441
      %v2474 = vsel %vm2410, %v2377, %v2442
      %v2475 = vpack.c.bf16 %v2444, %v2443
      %v2476 = vpack.c.bf16 %v2446, %v2445
      %v2477 = vpack.c.bf16 %v2448, %v2447
      %v2478 = vpack.c.bf16 %v2450, %v2449
      %v2479 = vpack.c.bf16 %v2452, %v2451
      %v2480 = vpack.c.bf16 %v2454, %v2453
      %v2481 = vpack.c.bf16 %v2456, %v2455
      %v2482 = vpack.c.bf16 %v2458, %v2457
      %v2483 = vpack.c.bf16 %v2460, %v2459
      %v2484 = vpack.c.bf16 %v2462, %v2461
      %v2485 = vpack.c.bf16 %v2464, %v2463
      %v2486 = vpack.c.bf16 %v2466, %v2465
      %v2487 = vpack.c.bf16 %v2468, %v2467
      %v2488 = vpack.c.bf16 %v2470, %v2469
      %v2489 = vpack.c.bf16 %v2472, %v2471
      %v2490 = vpack.c.bf16 %v2474, %v2473
      %2491 = vst [vmem:[%s177] sm:$0xff] %v2475
      %2492 = vst [vmem:[%s177 + $0x8] sm:$0xff] %v2476
      %2493 = vst [vmem:[%s177 + $0x10] sm:$0xff] %v2477
      %2494 = vst [vmem:[%s177 + $0x18] sm:$0xff] %v2478
      %2495 = vst [vmem:[%s177 + $0x20] sm:$0xff] %v2479
      %2496 = vst [vmem:[%s177 + $0x28] sm:$0xff] %v2480
      %2497 = vst [vmem:[%s177 + $0x30] sm:$0xff] %v2481
      %2498 = vst [vmem:[%s177 + $0x38] sm:$0xff] %v2482
      %2499 = vst [vmem:[%s177 + $0x40] sm:$0xff] %v2483
      %2500 = vst [vmem:[%s177 + $0x48] sm:$0xff] %v2484
      %2501 = vst [vmem:[%s177 + $0x50] sm:$0xff] %v2485
      %2502 = vst [vmem:[%s177 + $0x58] sm:$0xff] %v2486
      %2503 = vst [vmem:[%s177 + $0x60] sm:$0xff] %v2487
      %2504 = vst [vmem:[%s177 + $0x68] sm:$0xff] %v2488
      %2505 = vst [vmem:[%s177 + $0x70] sm:$0xff] %v2489
      %2506 = vst [vmem:[%s177 + $0x78] sm:$0xff] %v2490
      %s2507 = smul.u32 16, %s14
      %p2508 = scmp.lt.s32.totalorder %s2507, 31
      %s2509 = scalar_select %p2508, %s2507, 31
      %s2510 = smul.addr %s2509, 2
      %s2511 = smul.addr %s2510, 4
      %s2512 = scalar_lea.vmem %s3, %s2511
      // Predicated region
      $region33: #{opnet_forward.10} parent=31 // pred_check
        %p2513 = pneg %p100
      $region34: #{opnet_forward.10} parent=31 // pred_check_branch
        %2515 = sbr.rel (%p2513) target = $region36
      $region35: #{opnet_forward.10} parent=31 // pred_region
        %s2516 = smul.u32 16, %s14
      $region36: #{opnet_forward.10} parent=31 // pred_fallthru
        _
    $region32: #{opnet_forward.10} parent=5 // pred_fallthru
      _
    %p2517 = scmp.le.s32.totalorder 2, %s9
    // Predicated region
    $region37: #{opnet_forward.10} parent=5 // pred_check
      %p2518 = pneg %p2517
    $region38: #{opnet_forward.10} parent=5 // pred_check_branch
      %2520 = sbr.rel (%p2518) target = $region40
    $region39: #{opnet_forward.10} parent=5 // pred_region
      %s2521 = ssub.s32 %s9, 2
      // Predicated region
      $region41: #{opnet_forward.10} parent=39 // pred_check
        %p2522 = pneg %p106
      $region42: #{opnet_forward.10} parent=39 // pred_check_branch
        %2524 = sbr.rel (%p2522) target = $region44
      $region43: #{opnet_forward.10} parent=39 // pred_region
        %s2525 = smul.u32 16, %s15
        %p2526 = scmp.lt.s32.totalorder %s2525, 31
        %s2527 = scalar_select %p2526, %s2525, 31
        %s2528 = smul.addr %s2527, 2
        %s2529 = smul.addr %s2528, 4
        %s2530 = scalar_lea.vmem %s3, %s2529
      $region44: #{opnet_forward.10} parent=39 // pred_fallthru
        _
    $region40: #{opnet_forward.10} parent=5 // pred_fallthru
      _
  $region6: #{opnet_forward.10} parent=0 // loop_footer
    %s13 = sadd.s32 1, %s9
  $region7: #{opnet_forward.10} parent=0 // loop_footer_branch
    %8 = sbr.rel target = $region3
  $region8: #{opnet_forward.10} parent=0 // loop_exit
    _

// kernel: opnet_forward.11
$region0: #{opnet_forward.11}
  #allocation0 [shape = 'u32[]', space=smem, size = 0x4, offset = 0x4, fixed_abs, tag = 'smem constant byte address 0x4 - core index']
  #allocation1 [shape = 'u32[72,128]{1,0:T(1,128)}', space=vmem, size = 0x9000, scoped, tag = 'internal scratch']
  %s0 = inlined_call_operand.vmem [shape: bf16[64,2304], index: 0, kind: input, shape index: {}]
  %s1 = inlined_call_operand.vmem [shape: bf16[2304,512], index: 1, kind: input, shape index: {}]
  %s2 = inlined_call_operand.vmem [shape: f32[1,512], index: 2, kind: input, shape index: {}]
  %s3 = inlined_call_operand.vmem [shape: bf16[64,512], index: 3, kind: output, shape index: {}]
  %s4 = sld [smem:[#allocation0]]
  $region45: #{opnet_forward.11} parent=0
    _
  %s6 = ssub.s32 1, %s4
  %s7 = scalar_select 0, %s6, %s4
  loop: start=0, step=1, limit=4
  $region2: #{opnet_forward.11} parent=0 // loop_pre_header
    _
  $region3: #{opnet_forward.11} parent=0 // loop_header
    %s9 = sphi 0, %s13
    %p10 = scmp.ge.s32.totalorder %s9, 4
    %s19 = sphi 0, %s21
    %s22 = sphi 0, %s19
    %s23 = sphi 0, %s22
    %s39 = sphi 0, %s23
    %s43 = sphi 0, %s43
    %s45 = sphi 0, %s43
    %s46 = sphi 0, %s45
    %s60 = sphi 0, %s46
    %s64 = sphi 0, %s64
    %s66 = sphi 0, %s64
    %s67 = sphi 0, %s66
    %s81 = sphi 0, %s67
    %s87 = sphi 0, %s89
    %s90 = sphi 0, %s87
    %s91 = sphi 0, %s90
    %s107 = sphi 0, %s91
  $region4: #{opnet_forward.11} parent=0 // loop_header_branch
    %12 = sbr.rel (%p10) target = $region8
  $region5: #{opnet_forward.11} parent=0 // loop_body
    %s14 = ssub.s32 %s9, 1
    %s15 = ssub.s32 %s9, 2
    %s16 = sadd.s32 %s9, 1
    %s17 = ssub.s32 %s9, %s16
    %p18 = scmp.eq.s32.totalorder %s17, 0
    %s20 = sadd.s32 %s19, 1
    %s21 = scalar_select %p18, %s19, %s20
    %p24 = pneg %p18
    %p25 = scmp.eq.s32.totalorder %s9, 1
    %p26 = por %p24, %p25
    %p27 = scmp.ne.s32.totalorder %s19, %s22
    %p28 = scmp.eq.s32.totalorder %s9, 0
    %p29 = por %p27, %p28
    %p30 = scmp.ne.s32.totalorder %s19, %s22
    %p31 = scmp.eq.s32.totalorder %s14, 1
    %p32 = por %p30, %p31
    %p33 = scmp.ne.s32.totalorder %s22, %s23
    %p34 = scmp.eq.s32.totalorder %s14, 0
    %p35 = por %p33, %p34
    %p36 = scmp.ne.s32.totalorder %s22, %s23
    %p37 = scmp.eq.s32.totalorder %s15, 1
    %p38 = por %p36, %p37
    %p40 = scmp.ne.s32.totalorder %s23, %s39
    %p41 = scmp.eq.s32.totalorder %s15, 0
    %p42 = por %p40, %p41
    %s44 = sadd.s32 %s43, 1
    %p47 = scmp.eq.s32.totalorder %s9, 1
    %p48 = scmp.ne.s32.totalorder %s43, %s45
    %p49 = scmp.eq.s32.totalorder %s9, 0
    %p50 = por %p48, %p49
    %p51 = scmp.ne.s32.totalorder %s43, %s45
    %p52 = scmp.eq.s32.totalorder %s14, 1
    %p53 = por %p51, %p52
    %p54 = scmp.ne.s32.totalorder %s45, %s46
    %p55 = scmp.eq.s32.totalorder %s14, 0
    %p56 = por %p54, %p55
    %p57 = scmp.ne.s32.totalorder %s45, %s46
    %p58 = scmp.eq.s32.totalorder %s15, 1
    %p59 = por %p57, %p58
    %p61 = scmp.ne.s32.totalorder %s46, %s60
    %p62 = scmp.eq.s32.totalorder %s15, 0
    %p63 = por %p61, %p62
    %s65 = sadd.s32 %s64, 1
    %p68 = scmp.eq.s32.totalorder %s9, 1
    %p69 = scmp.ne.s32.totalorder %s64, %s66
    %p70 = scmp.eq.s32.totalorder %s9, 0
    %p71 = por %p69, %p70
    %p72 = scmp.ne.s32.totalorder %s64, %s66
    %p73 = scmp.eq.s32.totalorder %s14, 1
    %p74 = por %p72, %p73
    %p75 = scmp.ne.s32.totalorder %s66, %s67
    %p76 = scmp.eq.s32.totalorder %s14, 0
    %p77 = por %p75, %p76
    %p78 = scmp.ne.s32.totalorder %s66, %s67
    %p79 = scmp.eq.s32.totalorder %s15, 1
    %p80 = por %p78, %p79
    %p82 = scmp.ne.s32.totalorder %s67, %s81
    %p83 = scmp.eq.s32.totalorder %s15, 0
    %p84 = por %p82, %p83
    %s85 = ssub.s32 %s9, %s16
    %p86 = scmp.eq.s32.totalorder %s85, 0
    %s88 = sadd.s32 %s87, 1
    %s89 = scalar_select %p86, %s87, %s88
    %p92 = pneg %p86
    %p93 = scmp.eq.s32.totalorder %s9, 1
    %p94 = por %p92, %p93
    %p95 = scmp.ne.s32.totalorder %s87, %s90
    %p96 = scmp.eq.s32.totalorder %s9, 0
    %p97 = por %p95, %p96
    %p98 = scmp.ne.s32.totalorder %s87, %s90
    %p99 = scmp.eq.s32.totalorder %s14, 1
    %p100 = por %p98, %p99
    %p101 = scmp.ne.s32.totalorder %s90, %s91
    %p102 = scmp.eq.s32.totalorder %s14, 0
    %p103 = por %p101, %p102
    %p104 = scmp.ne.s32.totalorder %s90, %s91
    %p105 = scmp.eq.s32.totalorder %s15, 1
    %p106 = por %p104, %p105
    %p108 = scmp.ne.s32.totalorder %s91, %s107
    %p109 = scmp.eq.s32.totalorder %s15, 0
    %p110 = por %p108, %p109
    %p111 = scmp.le.s32.totalorder 1, %s9
    %p112 = scmp.lt.s32.totalorder %s9, 3
    %p113 = pnand %p111, %p112
    %p114 = pneg %p113
    // Predicated region
    $region9: #{opnet_forward.11} parent=5 // pred_check
      _
    $region10: #{opnet_forward.11} parent=5 // pred_check_branch
      %116 = sbr.rel (%p113) target = $region12
    $region11: #{opnet_forward.11} parent=5 // pred_region
      %s117 = ssub.s32 %s9, 1
      // Predicated region
      $region13: #{opnet_forward.11} parent=11 // pred_check
        %p118 = pneg %p56
      $region14: #{opnet_forward.11} parent=11 // pred_check_branch
        %120 = sbr.rel (%p118) target = $region16
      $region15: #{opnet_forward.11} parent=11 // pred_region
        _
      $region16: #{opnet_forward.11} parent=11 // pred_fallthru
        _
      // Predicated region
      $region17: #{opnet_forward.11} parent=11 // pred_check
        %p121 = pneg %p77
      $region18: #{opnet_forward.11} parent=11 // pred_check_branch
        %123 = sbr.rel (%p121) target = $region20
      $region19: #{opnet_forward.11} parent=11 // pred_region
        _
      $region20: #{opnet_forward.11} parent=11 // pred_fallthru
        _
    $region12: #{opnet_forward.11} parent=5 // pred_fallthru
      _
    %p124 = scmp.lt.s32.totalorder %s9, 2
    // Predicated region
    $region21: #{opnet_forward.11} parent=5 // pred_check
      %p125 = pneg %p124
    $region22: #{opnet_forward.11} parent=5 // pred_check_branch
      %127 = sbr.rel (%p125) target = $region24
    $region23: #{opnet_forward.11} parent=5 // pred_region
      // Predicated region
      $region25: #{opnet_forward.11} parent=23 // pred_check
        %p128 = pneg %p29
      $region26: #{opnet_forward.11} parent=23 // pred_check_branch
        %130 = sbr.rel (%p128) target = $region28
      $region27: #{opnet_forward.11} parent=23 // pred_region
        %s131 = smul.u32 4, %s9
        %p132 = scmp.lt.s32.totalorder %s131, 7
        %s133 = scalar_select %p132, %s131, 7
        %s134 = smul.addr %s133, 18
        %s135 = smul.addr %s134, 4
        %s136 = scalar_lea.vmem %s0, %s135
        %s137 = smul.u32 4, %s9
      $region28: #{opnet_forward.11} parent=23 // pred_fallthru
        _
    $region24: #{opnet_forward.11} parent=5 // pred_fallthru
      _
    %p138 = scmp.le.s32.totalorder 1, %s9
    %p139 = scmp.lt.s32.totalorder %s9, 3
    %p140 = pnand %p138, %p139
    %p141 = pneg %p140
    // Predicated region
    $region29: #{opnet_forward.11} parent=5 // pred_check
      _
    $region30: #{opnet_forward.11} parent=5 // pred_check_branch
      %143 = sbr.rel (%p140) target = $region32
    $region31: #{opnet_forward.11} parent=5 // pred_region
      %s144 = ssub.s32 %s9, 1
      %s145 = smul.u32 4, %s14
      %p146 = scmp.lt.s32.totalorder %s145, 7
      %s147 = scalar_select %p146, %s145, 7
      %s148 = smul.addr %s147, 18
      %s149 = smul.addr %s148, 4
      %s150 = scalar_lea.vmem %s0, %s149
      %p151 = pneg %p35
      %p152 = pneg %p32
      %p153 = pneg %p56
      %p154 = pneg %p53
      %p155 = pneg %p77
      %p156 = pneg %p74
      %p157 = pneg %p103
      %p158 = pneg %p100
      %s159 = smul.u32 4, %s14
      %p160 = scmp.lt.s32.totalorder %s159, 7
      %s161 = scalar_select %p160, %s159, 7
      %s162 = smul.addr %s161, 4
      %s163 = smul.addr %s162, 4
      %s164 = scalar_lea.vmem %s3, %s163
      %s165 = smul.u32 4, %s14
      %p166 = scmp.lt.s32.totalorder %s165, 7
      %s167 = scalar_select %p166, %s165, 7
      %s168 = smul.addr %s167, 18
      %s169 = smul.addr %s168, 4
      %s170 = scalar_lea.vmem %s0, %s169
      %s171 = smul.u32 4, %s14
      %s172 = smul.u32 4, %s14
      %p173 = scmp.lt.s32.totalorder %s172, 7
      %s174 = scalar_select %p173, %s172, 7
      %s175 = smul.addr %s174, 4
      %s176 = smul.addr %s175, 4
      %s177 = scalar_lea.vmem %s3, %s176
      %s178 = smul.u32 4, %s14
      %v179 = vld [vmem:[%s170] sm:$0xff]
      %v180 = vld [vmem:[%s170 + $0x8] sm:$0xff]
      %v181 = vld [vmem:[%s170 + $0x10] sm:$0xff]
      %v182 = vld [vmem:[%s170 + $0x18] sm:$0xff]
      %v183 = vld [vmem:[%s170 + $0x20] sm:$0xff]
      %v184 = vld [vmem:[%s170 + $0x28] sm:$0xff]
      %v185 = vld [vmem:[%s170 + $0x30] sm:$0xff]
      %v186 = vld [vmem:[%s170 + $0x38] sm:$0xff]
      %v187 = vld [vmem:[%s170 + $0x40] sm:$0xff]
      %v188 = vld [vmem:[%s170 + $0x48] sm:$0xff]
      %v189 = vld [vmem:[%s170 + $0x50] sm:$0xff]
      %v190 = vld [vmem:[%s170 + $0x58] sm:$0xff]
      %v191 = vld [vmem:[%s170 + $0x60] sm:$0xff]
      %v192 = vld [vmem:[%s170 + $0x68] sm:$0xff]
      %v193 = vld [vmem:[%s170 + $0x70] sm:$0xff]
      %v194 = vld [vmem:[%s170 + $0x78] sm:$0xff]
      %v195 = vld [vmem:[%s170 + $0x80] sm:$0xff]
      %v196 = vld [vmem:[%s170 + $0x88] sm:$0xff]
      %v197 = vld [vmem:[%s170 + $0x90] sm:$0xff]
      %v198 = vld [vmem:[%s170 + $0x98] sm:$0xff]
      %v199 = vld [vmem:[%s170 + $0xa0] sm:$0xff]
      %v200 = vld [vmem:[%s170 + $0xa8] sm:$0xff]
      %v201 = vld [vmem:[%s170 + $0xb0] sm:$0xff]
      %v202 = vld [vmem:[%s170 + $0xb8] sm:$0xff]
      %v203 = vld [vmem:[%s170 + $0xc0] sm:$0xff]
      %v204 = vld [vmem:[%s170 + $0xc8] sm:$0xff]
      %v205 = vld [vmem:[%s170 + $0xd0] sm:$0xff]
      %v206 = vld [vmem:[%s170 + $0xd8] sm:$0xff]
      %v207 = vld [vmem:[%s170 + $0xe0] sm:$0xff]
      %v208 = vld [vmem:[%s170 + $0xe8] sm:$0xff]
      %v209 = vld [vmem:[%s170 + $0xf0] sm:$0xff]
      %v210 = vld [vmem:[%s170 + $0xf8] sm:$0xff]
      %v211 = vld [vmem:[%s170 + $0x100] sm:$0xff]
      %v212 = vld [vmem:[%s170 + $0x108] sm:$0xff]
      %v213 = vld [vmem:[%s170 + $0x110] sm:$0xff]
      %v214 = vld [vmem:[%s170 + $0x118] sm:$0xff]
      %v215 = vld [vmem:[%s1] sm:$0xff]
      %v216 = vld [vmem:[%s1 + $0x8] sm:$0xff]
      %v217 = vld [vmem:[%s1 + $0x10] sm:$0xff]
      %v218 = vld [vmem:[%s1 + $0x18] sm:$0xff]
      %v219 = vld [vmem:[%s1 + $0x20] sm:$0xff]
      %v220 = vld [vmem:[%s1 + $0x28] sm:$0xff]
      %v221 = vld [vmem:[%s1 + $0x30] sm:$0xff]
      %v222 = vld [vmem:[%s1 + $0x38] sm:$0xff]
      %v223 = vld [vmem:[%s1 + $0x40] sm:$0xff]
      %v224 = vld [vmem:[%s1 + $0x48] sm:$0xff]
      %v225 = vld [vmem:[%s1 + $0x50] sm:$0xff]
      %v226 = vld [vmem:[%s1 + $0x58] sm:$0xff]
      %v227 = vld [vmem:[%s1 + $0x60] sm:$0xff]
      %v228 = vld [vmem:[%s1 + $0x68] sm:$0xff]
      %v229 = vld [vmem:[%s1 + $0x70] sm:$0xff]
      %v230 = vld [vmem:[%s1 + $0x78] sm:$0xff]
      %v231 = vld [vmem:[%s1 + $0x80] sm:$0xff]
      %v232 = vld [vmem:[%s1 + $0x88] sm:$0xff]
      %v233 = vld [vmem:[%s1 + $0x90] sm:$0xff]
      %v234 = vld [vmem:[%s1 + $0x98] sm:$0xff]
      %v235 = vld [vmem:[%s1 + $0xa0] sm:$0xff]
      %v236 = vld [vmem:[%s1 + $0xa8] sm:$0xff]
      %v237 = vld [vmem:[%s1 + $0xb0] sm:$0xff]
      %v238 = vld [vmem:[%s1 + $0xb8] sm:$0xff]
      %v239 = vld [vmem:[%s1 + $0xc0] sm:$0xff]
      %v240 = vld [vmem:[%s1 + $0xc8] sm:$0xff]
      %v241 = vld [vmem:[%s1 + $0xd0] sm:$0xff]
      %v242 = vld [vmem:[%s1 + $0xd8] sm:$0xff]
      %v243 = vld [vmem:[%s1 + $0xe0] sm:$0xff]
      %v244 = vld [vmem:[%s1 + $0xe8] sm:$0xff]
      %v245 = vld [vmem:[%s1 + $0xf0] sm:$0xff]
      %v246 = vld [vmem:[%s1 + $0xf8] sm:$0xff]
      %v247 = vld [vmem:[%s1 + $0x100] sm:$0xff]
      %v248 = vld [vmem:[%s1 + $0x108] sm:$0xff]
      %v249 = vld [vmem:[%s1 + $0x110] sm:$0xff]
      %v250 = vld [vmem:[%s1 + $0x118] sm:$0xff]
      %v251 = vld [vmem:[%s1 + $0x120] sm:$0xff]
      %v252 = vld [vmem:[%s1 + $0x128] sm:$0xff]
      %v253 = vld [vmem:[%s1 + $0x130] sm:$0xff]
      %v254 = vld [vmem:[%s1 + $0x138] sm:$0xff]
      %v255 = vld [vmem:[%s1 + $0x140] sm:$0xff]
      %v256 = vld [vmem:[%s1 + $0x148] sm:$0xff]
      %v257 = vld [vmem:[%s1 + $0x150] sm:$0xff]
      %v258 = vld [vmem:[%s1 + $0x158] sm:$0xff]
      %v259 = vld [vmem:[%s1 + $0x160] sm:$0xff]
      %v260 = vld [vmem:[%s1 + $0x168] sm:$0xff]
      %v261 = vld [vmem:[%s1 + $0x170] sm:$0xff]
      %v262 = vld [vmem:[%s1 + $0x178] sm:$0xff]
      %v263 = vld [vmem:[%s1 + $0x180] sm:$0xff]
      %v264 = vld [vmem:[%s1 + $0x188] sm:$0xff]
      %v265 = vld [vmem:[%s1 + $0x190] sm:$0xff]
      %v266 = vld [vmem:[%s1 + $0x198] sm:$0xff]
      %v267 = vld [vmem:[%s1 + $0x1a0] sm:$0xff]
      %v268 = vld [vmem:[%s1 + $0x1a8] sm:$0xff]
      %v269 = vld [vmem:[%s1 + $0x1b0] sm:$0xff]
      %v270 = vld [vmem:[%s1 + $0x1b8] sm:$0xff]
      %v271 = vld [vmem:[%s1 + $0x1c0] sm:$0xff]
      %v272 = vld [vmem:[%s1 + $0x1c8] sm:$0xff]
      %v273 = vld [vmem:[%s1 + $0x1d0] sm:$0xff]
      %v274 = vld [vmem:[%s1 + $0x1d8] sm:$0xff]
      %v275 = vld [vmem:[%s1 + $0x1e0] sm:$0xff]
      %v276 = vld [vmem:[%s1 + $0x1e8] sm:$0xff]
      %v277 = vld [vmem:[%s1 + $0x1f0] sm:$0xff]
      %v278 = vld [vmem:[%s1 + $0x1f8] sm:$0xff]
      %v279 = vld [vmem:[%s1 + $0x200] sm:$0xff]
      %v280 = vld [vmem:[%s1 + $0x208] sm:$0xff]
      %v281 = vld [vmem:[%s1 + $0x210] sm:$0xff]
      %v282 = vld [vmem:[%s1 + $0x218] sm:$0xff]
      %v283 = vld [vmem:[%s1 + $0x220] sm:$0xff]
      %v284 = vld [vmem:[%s1 + $0x228] sm:$0xff]
      %v285 = vld [vmem:[%s1 + $0x230] sm:$0xff]
      %v286 = vld [vmem:[%s1 + $0x238] sm:$0xff]
      %v287 = vld [vmem:[%s1 + $0x240] sm:$0xff]
      %v288 = vld [vmem:[%s1 + $0x248] sm:$0xff]
      %v289 = vld [vmem:[%s1 + $0x250] sm:$0xff]
      %v290 = vld [vmem:[%s1 + $0x258] sm:$0xff]
      %v291 = vld [vmem:[%s1 + $0x260] sm:$0xff]
      %v292 = vld [vmem:[%s1 + $0x268] sm:$0xff]
      %v293 = vld [vmem:[%s1 + $0x270] sm:$0xff]
      %v294 = vld [vmem:[%s1 + $0x278] sm:$0xff]
      %v295 = vld [vmem:[%s1 + $0x280] sm:$0xff]
      %v296 = vld [vmem:[%s1 + $0x288] sm:$0xff]
      %v297 = vld [vmem:[%s1 + $0x290] sm:$0xff]
      %v298 = vld [vmem:[%s1 + $0x298] sm:$0xff]
      %v299 = vld [vmem:[%s1 + $0x2a0] sm:$0xff]
      %v300 = vld [vmem:[%s1 + $0x2a8] sm:$0xff]
      %v301 = vld [vmem:[%s1 + $0x2b0] sm:$0xff]
      %v302 = vld [vmem:[%s1 + $0x2b8] sm:$0xff]
      %v303 = vld [vmem:[%s1 + $0x2c0] sm:$0xff]
      %v304 = vld [vmem:[%s1 + $0x2c8] sm:$0xff]
      %v305 = vld [vmem:[%s1 + $0x2d0] sm:$0xff]
      %v306 = vld [vmem:[%s1 + $0x2d8] sm:$0xff]
      %v307 = vld [vmem:[%s1 + $0x2e0] sm:$0xff]
      %v308 = vld [vmem:[%s1 + $0x2e8] sm:$0xff]
      %v309 = vld [vmem:[%s1 + $0x2f0] sm:$0xff]
      %v310 = vld [vmem:[%s1 + $0x2f8] sm:$0xff]
      %v311 = vld [vmem:[%s1 + $0x300] sm:$0xff]
      %v312 = vld [vmem:[%s1 + $0x308] sm:$0xff]
      %v313 = vld [vmem:[%s1 + $0x310] sm:$0xff]
      %v314 = vld [vmem:[%s1 + $0x318] sm:$0xff]
      %v315 = vld [vmem:[%s1 + $0x320] sm:$0xff]
      %v316 = vld [vmem:[%s1 + $0x328] sm:$0xff]
      %v317 = vld [vmem:[%s1 + $0x330] sm:$0xff]
      %v318 = vld [vmem:[%s1 + $0x338] sm:$0xff]
      %v319 = vld [vmem:[%s1 + $0x340] sm:$0xff]
      %v320 = vld [vmem:[%s1 + $0x348] sm:$0xff]
      %v321 = vld [vmem:[%s1 + $0x350] sm:$0xff]
      %v322 = vld [vmem:[%s1 + $0x358] sm:$0xff]
      %v323 = vld [vmem:[%s1 + $0x360] sm:$0xff]
      %v324 = vld [vmem:[%s1 + $0x368] sm:$0xff]
      %v325 = vld [vmem:[%s1 + $0x370] sm:$0xff]
      %v326 = vld [vmem:[%s1 + $0x378] sm:$0xff]
      %v327 = vld [vmem:[%s1 + $0x380] sm:$0xff]
      %v328 = vld [vmem:[%s1 + $0x388] sm:$0xff]
      %v329 = vld [vmem:[%s1 + $0x390] sm:$0xff]
      %v330 = vld [vmem:[%s1 + $0x398] sm:$0xff]
      %v331 = vld [vmem:[%s1 + $0x3a0] sm:$0xff]
      %v332 = vld [vmem:[%s1 + $0x3a8] sm:$0xff]
      %v333 = vld [vmem:[%s1 + $0x3b0] sm:$0xff]
      %v334 = vld [vmem:[%s1 + $0x3b8] sm:$0xff]
      %v335 = vld [vmem:[%s1 + $0x3c0] sm:$0xff]
      %v336 = vld [vmem:[%s1 + $0x3c8] sm:$0xff]
      %v337 = vld [vmem:[%s1 + $0x3d0] sm:$0xff]
      %v338 = vld [vmem:[%s1 + $0x3d8] sm:$0xff]
      %v339 = vld [vmem:[%s1 + $0x3e0] sm:$0xff]
      %v340 = vld [vmem:[%s1 + $0x3e8] sm:$0xff]
      %v341 = vld [vmem:[%s1 + $0x3f0] sm:$0xff]
      %v342 = vld [vmem:[%s1 + $0x3f8] sm:$0xff]
      %v343 = vld [vmem:[%s1 + $0x400] sm:$0xff]
      %v344 = vld [vmem:[%s1 + $0x408] sm:$0xff]
      %v345 = vld [vmem:[%s1 + $0x410] sm:$0xff]
      %v346 = vld [vmem:[%s1 + $0x418] sm:$0xff]
      %v347 = vld [vmem:[%s1 + $0x420] sm:$0xff]
      %v348 = vld [vmem:[%s1 + $0x428] sm:$0xff]
      %v349 = vld [vmem:[%s1 + $0x430] sm:$0xff]
      %v350 = vld [vmem:[%s1 + $0x438] sm:$0xff]
      %v351 = vld [vmem:[%s1 + $0x440] sm:$0xff]
      %v352 = vld [vmem:[%s1 + $0x448] sm:$0xff]
      %v353 = vld [vmem:[%s1 + $0x450] sm:$0xff]
      %v354 = vld [vmem:[%s1 + $0x458] sm:$0xff]
      %v355 = vld [vmem:[%s1 + $0x460] sm:$0xff]
      %v356 = vld [vmem:[%s1 + $0x468] sm:$0xff]
      %v357 = vld [vmem:[%s1 + $0x470] sm:$0xff]
      %v358 = vld [vmem:[%s1 + $0x478] sm:$0xff]
      %v359 = vld [vmem:[%s1 + $0x480] sm:$0xff]
      %v360 = vld [vmem:[%s1 + $0x488] sm:$0xff]
      %v361 = vld [vmem:[%s1 + $0x490] sm:$0xff]
      %v362 = vld [vmem:[%s1 + $0x498] sm:$0xff]
      %v363 = vld [vmem:[%s1 + $0x4a0] sm:$0xff]
      %v364 = vld [vmem:[%s1 + $0x4a8] sm:$0xff]
      %v365 = vld [vmem:[%s1 + $0x4b0] sm:$0xff]
      %v366 = vld [vmem:[%s1 + $0x4b8] sm:$0xff]
      %v367 = vld [vmem:[%s1 + $0x4c0] sm:$0xff]
      %v368 = vld [vmem:[%s1 + $0x4c8] sm:$0xff]
      %v369 = vld [vmem:[%s1 + $0x4d0] sm:$0xff]
      %v370 = vld [vmem:[%s1 + $0x4d8] sm:$0xff]
      %v371 = vld [vmem:[%s1 + $0x4e0] sm:$0xff]
      %v372 = vld [vmem:[%s1 + $0x4e8] sm:$0xff]
      %v373 = vld [vmem:[%s1 + $0x4f0] sm:$0xff]
      %v374 = vld [vmem:[%s1 + $0x4f8] sm:$0xff]
      %v375 = vld [vmem:[%s1 + $0x500] sm:$0xff]
      %v376 = vld [vmem:[%s1 + $0x508] sm:$0xff]
      %v377 = vld [vmem:[%s1 + $0x510] sm:$0xff]
      %v378 = vld [vmem:[%s1 + $0x518] sm:$0xff]
      %v379 = vld [vmem:[%s1 + $0x520] sm:$0xff]
      %v380 = vld [vmem:[%s1 + $0x528] sm:$0xff]
      %v381 = vld [vmem:[%s1 + $0x530] sm:$0xff]
      %v382 = vld [vmem:[%s1 + $0x538] sm:$0xff]
      %v383 = vld [vmem:[%s1 + $0x540] sm:$0xff]
      %v384 = vld [vmem:[%s1 + $0x548] sm:$0xff]
      %v385 = vld [vmem:[%s1 + $0x550] sm:$0xff]
      %v386 = vld [vmem:[%s1 + $0x558] sm:$0xff]
      %v387 = vld [vmem:[%s1 + $0x560] sm:$0xff]
      %v388 = vld [vmem:[%s1 + $0x568] sm:$0xff]
      %v389 = vld [vmem:[%s1 + $0x570] sm:$0xff]
      %v390 = vld [vmem:[%s1 + $0x578] sm:$0xff]
      %v391 = vld [vmem:[%s1 + $0x580] sm:$0xff]
      %v392 = vld [vmem:[%s1 + $0x588] sm:$0xff]
      %v393 = vld [vmem:[%s1 + $0x590] sm:$0xff]
      %v394 = vld [vmem:[%s1 + $0x598] sm:$0xff]
      %v395 = vld [vmem:[%s1 + $0x5a0] sm:$0xff]
      %v396 = vld [vmem:[%s1 + $0x5a8] sm:$0xff]
      %v397 = vld [vmem:[%s1 + $0x5b0] sm:$0xff]
      %v398 = vld [vmem:[%s1 + $0x5b8] sm:$0xff]
      %v399 = vld [vmem:[%s1 + $0x5c0] sm:$0xff]
      %v400 = vld [vmem:[%s1 + $0x5c8] sm:$0xff]
      %v401 = vld [vmem:[%s1 + $0x5d0] sm:$0xff]
      %v402 = vld [vmem:[%s1 + $0x5d8] sm:$0xff]
      %v403 = vld [vmem:[%s1 + $0x5e0] sm:$0xff]
      %v404 = vld [vmem:[%s1 + $0x5e8] sm:$0xff]
      %v405 = vld [vmem:[%s1 + $0x5f0] sm:$0xff]
      %v406 = vld [vmem:[%s1 + $0x5f8] sm:$0xff]
      %v407 = vld [vmem:[%s1 + $0x600] sm:$0xff]
      %v408 = vld [vmem:[%s1 + $0x608] sm:$0xff]
      %v409 = vld [vmem:[%s1 + $0x610] sm:$0xff]
      %v410 = vld [vmem:[%s1 + $0x618] sm:$0xff]
      %v411 = vld [vmem:[%s1 + $0x620] sm:$0xff]
      %v412 = vld [vmem:[%s1 + $0x628] sm:$0xff]
      %v413 = vld [vmem:[%s1 + $0x630] sm:$0xff]
      %v414 = vld [vmem:[%s1 + $0x638] sm:$0xff]
      %v415 = vld [vmem:[%s1 + $0x640] sm:$0xff]
      %v416 = vld [vmem:[%s1 + $0x648] sm:$0xff]
      %v417 = vld [vmem:[%s1 + $0x650] sm:$0xff]
      %v418 = vld [vmem:[%s1 + $0x658] sm:$0xff]
      %v419 = vld [vmem:[%s1 + $0x660] sm:$0xff]
      %v420 = vld [vmem:[%s1 + $0x668] sm:$0xff]
      %v421 = vld [vmem:[%s1 + $0x670] sm:$0xff]
      %v422 = vld [vmem:[%s1 + $0x678] sm:$0xff]
      %v423 = vld [vmem:[%s1 + $0x680] sm:$0xff]
      %v424 = vld [vmem:[%s1 + $0x688] sm:$0xff]
      %v425 = vld [vmem:[%s1 + $0x690] sm:$0xff]
      %v426 = vld [vmem:[%s1 + $0x698] sm:$0xff]
      %v427 = vld [vmem:[%s1 + $0x6a0] sm:$0xff]
      %v428 = vld [vmem:[%s1 + $0x6a8] sm:$0xff]
      %v429 = vld [vmem:[%s1 + $0x6b0] sm:$0xff]
      %v430 = vld [vmem:[%s1 + $0x6b8] sm:$0xff]
      %v431 = vld [vmem:[%s1 + $0x6c0] sm:$0xff]
      %v432 = vld [vmem:[%s1 + $0x6c8] sm:$0xff]
      %v433 = vld [vmem:[%s1 + $0x6d0] sm:$0xff]
      %v434 = vld [vmem:[%s1 + $0x6d8] sm:$0xff]
      %v435 = vld [vmem:[%s1 + $0x6e0] sm:$0xff]
      %v436 = vld [vmem:[%s1 + $0x6e8] sm:$0xff]
      %v437 = vld [vmem:[%s1 + $0x6f0] sm:$0xff]
      %v438 = vld [vmem:[%s1 + $0x6f8] sm:$0xff]
      %v439 = vld [vmem:[%s1 + $0x700] sm:$0xff]
      %v440 = vld [vmem:[%s1 + $0x708] sm:$0xff]
      %v441 = vld [vmem:[%s1 + $0x710] sm:$0xff]
      %v442 = vld [vmem:[%s1 + $0x718] sm:$0xff]
      %v443 = vld [vmem:[%s1 + $0x720] sm:$0xff]
      %v444 = vld [vmem:[%s1 + $0x728] sm:$0xff]
      %v445 = vld [vmem:[%s1 + $0x730] sm:$0xff]
      %v446 = vld [vmem:[%s1 + $0x738] sm:$0xff]
      %v447 = vld [vmem:[%s1 + $0x740] sm:$0xff]
      %v448 = vld [vmem:[%s1 + $0x748] sm:$0xff]
      %v449 = vld [vmem:[%s1 + $0x750] sm:$0xff]
      %v450 = vld [vmem:[%s1 + $0x758] sm:$0xff]
      %v451 = vld [vmem:[%s1 + $0x760] sm:$0xff]
      %v452 = vld [vmem:[%s1 + $0x768] sm:$0xff]
      %v453 = vld [vmem:[%s1 + $0x770] sm:$0xff]
      %v454 = vld [vmem:[%s1 + $0x778] sm:$0xff]
      %v455 = vld [vmem:[%s1 + $0x780] sm:$0xff]
      %v456 = vld [vmem:[%s1 + $0x788] sm:$0xff]
      %v457 = vld [vmem:[%s1 + $0x790] sm:$0xff]
      %v458 = vld [vmem:[%s1 + $0x798] sm:$0xff]
      %v459 = vld [vmem:[%s1 + $0x7a0] sm:$0xff]
      %v460 = vld [vmem:[%s1 + $0x7a8] sm:$0xff]
      %v461 = vld [vmem:[%s1 + $0x7b0] sm:$0xff]
      %v462 = vld [vmem:[%s1 + $0x7b8] sm:$0xff]
      %v463 = vld [vmem:[%s1 + $0x7c0] sm:$0xff]
      %v464 = vld [vmem:[%s1 + $0x7c8] sm:$0xff]
      %v465 = vld [vmem:[%s1 + $0x7d0] sm:$0xff]
      %v466 = vld [vmem:[%s1 + $0x7d8] sm:$0xff]
      %v467 = vld [vmem:[%s1 + $0x7e0] sm:$0xff]
      %v468 = vld [vmem:[%s1 + $0x7e8] sm:$0xff]
      %v469 = vld [vmem:[%s1 + $0x7f0] sm:$0xff]
      %v470 = vld [vmem:[%s1 + $0x7f8] sm:$0xff]
      %v471 = vld [vmem:[%s1 + $0x800] sm:$0xff]
      %v472 = vld [vmem:[%s1 + $0x808] sm:$0xff]
      %v473 = vld [vmem:[%s1 + $0x810] sm:$0xff]
      %v474 = vld [vmem:[%s1 + $0x818] sm:$0xff]
      %v475 = vld [vmem:[%s1 + $0x820] sm:$0xff]
      %v476 = vld [vmem:[%s1 + $0x828] sm:$0xff]
      %v477 = vld [vmem:[%s1 + $0x830] sm:$0xff]
      %v478 = vld [vmem:[%s1 + $0x838] sm:$0xff]
      %v479 = vld [vmem:[%s1 + $0x840] sm:$0xff]
      %v480 = vld [vmem:[%s1 + $0x848] sm:$0xff]
      %v481 = vld [vmem:[%s1 + $0x850] sm:$0xff]
      %v482 = vld [vmem:[%s1 + $0x858] sm:$0xff]
      %v483 = vld [vmem:[%s1 + $0x860] sm:$0xff]
      %v484 = vld [vmem:[%s1 + $0x868] sm:$0xff]
      %v485 = vld [vmem:[%s1 + $0x870] sm:$0xff]
      %v486 = vld [vmem:[%s1 + $0x878] sm:$0xff]
      %v487 = vld [vmem:[%s1 + $0x880] sm:$0xff]
      %v488 = vld [vmem:[%s1 + $0x888] sm:$0xff]
      %v489 = vld [vmem:[%s1 + $0x890] sm:$0xff]
      %v490 = vld [vmem:[%s1 + $0x898] sm:$0xff]
      %v491 = vld [vmem:[%s1 + $0x8a0] sm:$0xff]
      %v492 = vld [vmem:[%s1 + $0x8a8] sm:$0xff]
      %v493 = vld [vmem:[%s1 + $0x8b0] sm:$0xff]
      %v494 = vld [vmem:[%s1 + $0x8b8] sm:$0xff]
      %v495 = vld [vmem:[%s1 + $0x8c0] sm:$0xff]
      %v496 = vld [vmem:[%s1 + $0x8c8] sm:$0xff]
      %v497 = vld [vmem:[%s1 + $0x8d0] sm:$0xff]
      %v498 = vld [vmem:[%s1 + $0x8d8] sm:$0xff]
      %v499 = vld [vmem:[%s1 + $0x8e0] sm:$0xff]
      %v500 = vld [vmem:[%s1 + $0x8e8] sm:$0xff]
      %v501 = vld [vmem:[%s1 + $0x8f0] sm:$0xff]
      %v502 = vld [vmem:[%s1 + $0x8f8] sm:$0xff]
      %v503 = vld [vmem:[%s1 + $0x900] sm:$0xff]
      %v504 = vld [vmem:[%s1 + $0x908] sm:$0xff]
      %v505 = vld [vmem:[%s1 + $0x910] sm:$0xff]
      %v506 = vld [vmem:[%s1 + $0x918] sm:$0xff]
      %v507 = vld [vmem:[%s1 + $0x920] sm:$0xff]
      %v508 = vld [vmem:[%s1 + $0x928] sm:$0xff]
      %v509 = vld [vmem:[%s1 + $0x930] sm:$0xff]
      %v510 = vld [vmem:[%s1 + $0x938] sm:$0xff]
      %v511 = vld [vmem:[%s1 + $0x940] sm:$0xff]
      %v512 = vld [vmem:[%s1 + $0x948] sm:$0xff]
      %v513 = vld [vmem:[%s1 + $0x950] sm:$0xff]
      %v514 = vld [vmem:[%s1 + $0x958] sm:$0xff]
      %v515 = vld [vmem:[%s1 + $0x960] sm:$0xff]
      %v516 = vld [vmem:[%s1 + $0x968] sm:$0xff]
      %v517 = vld [vmem:[%s1 + $0x970] sm:$0xff]
      %v518 = vld [vmem:[%s1 + $0x978] sm:$0xff]
      %v519 = vld [vmem:[%s1 + $0x980] sm:$0xff]
      %v520 = vld [vmem:[%s1 + $0x988] sm:$0xff]
      %v521 = vld [vmem:[%s1 + $0x990] sm:$0xff]
      %v522 = vld [vmem:[%s1 + $0x998] sm:$0xff]
      %v523 = vld [vmem:[%s1 + $0x9a0] sm:$0xff]
      %v524 = vld [vmem:[%s1 + $0x9a8] sm:$0xff]
      %v525 = vld [vmem:[%s1 + $0x9b0] sm:$0xff]
      %v526 = vld [vmem:[%s1 + $0x9b8] sm:$0xff]
      %v527 = vld [vmem:[%s1 + $0x9c0] sm:$0xff]
      %v528 = vld [vmem:[%s1 + $0x9c8] sm:$0xff]
      %v529 = vld [vmem:[%s1 + $0x9d0] sm:$0xff]
      %v530 = vld [vmem:[%s1 + $0x9d8] sm:$0xff]
      %v531 = vld [vmem:[%s1 + $0x9e0] sm:$0xff]
      %v532 = vld [vmem:[%s1 + $0x9e8] sm:$0xff]
      %v533 = vld [vmem:[%s1 + $0x9f0] sm:$0xff]
      %v534 = vld [vmem:[%s1 + $0x9f8] sm:$0xff]
      %v535 = vld [vmem:[%s1 + $0xa00] sm:$0xff]
      %v536 = vld [vmem:[%s1 + $0xa08] sm:$0xff]
      %v537 = vld [vmem:[%s1 + $0xa10] sm:$0xff]
      %v538 = vld [vmem:[%s1 + $0xa18] sm:$0xff]
      %v539 = vld [vmem:[%s1 + $0xa20] sm:$0xff]
      %v540 = vld [vmem:[%s1 + $0xa28] sm:$0xff]
      %v541 = vld [vmem:[%s1 + $0xa30] sm:$0xff]
      %v542 = vld [vmem:[%s1 + $0xa38] sm:$0xff]
      %v543 = vld [vmem:[%s1 + $0xa40] sm:$0xff]
      %v544 = vld [vmem:[%s1 + $0xa48] sm:$0xff]
      %v545 = vld [vmem:[%s1 + $0xa50] sm:$0xff]
      %v546 = vld [vmem:[%s1 + $0xa58] sm:$0xff]
      %v547 = vld [vmem:[%s1 + $0xa60] sm:$0xff]
      %v548 = vld [vmem:[%s1 + $0xa68] sm:$0xff]
      %v549 = vld [vmem:[%s1 + $0xa70] sm:$0xff]
      %v550 = vld [vmem:[%s1 + $0xa78] sm:$0xff]
      %v551 = vld [vmem:[%s1 + $0xa80] sm:$0xff]
      %v552 = vld [vmem:[%s1 + $0xa88] sm:$0xff]
      %v553 = vld [vmem:[%s1 + $0xa90] sm:$0xff]
      %v554 = vld [vmem:[%s1 + $0xa98] sm:$0xff]
      %v555 = vld [vmem:[%s1 + $0xaa0] sm:$0xff]
      %v556 = vld [vmem:[%s1 + $0xaa8] sm:$0xff]
      %v557 = vld [vmem:[%s1 + $0xab0] sm:$0xff]
      %v558 = vld [vmem:[%s1 + $0xab8] sm:$0xff]
      %v559 = vld [vmem:[%s1 + $0xac0] sm:$0xff]
      %v560 = vld [vmem:[%s1 + $0xac8] sm:$0xff]
      %v561 = vld [vmem:[%s1 + $0xad0] sm:$0xff]
      %v562 = vld [vmem:[%s1 + $0xad8] sm:$0xff]
      %v563 = vld [vmem:[%s1 + $0xae0] sm:$0xff]
      %v564 = vld [vmem:[%s1 + $0xae8] sm:$0xff]
      %v565 = vld [vmem:[%s1 + $0xaf0] sm:$0xff]
      %v566 = vld [vmem:[%s1 + $0xaf8] sm:$0xff]
      %v567 = vld [vmem:[%s1 + $0xb00] sm:$0xff]
      %v568 = vld [vmem:[%s1 + $0xb08] sm:$0xff]
      %v569 = vld [vmem:[%s1 + $0xb10] sm:$0xff]
      %v570 = vld [vmem:[%s1 + $0xb18] sm:$0xff]
      %v571 = vld [vmem:[%s1 + $0xb20] sm:$0xff]
      %v572 = vld [vmem:[%s1 + $0xb28] sm:$0xff]
      %v573 = vld [vmem:[%s1 + $0xb30] sm:$0xff]
      %v574 = vld [vmem:[%s1 + $0xb38] sm:$0xff]
      %v575 = vld [vmem:[%s1 + $0xb40] sm:$0xff]
      %v576 = vld [vmem:[%s1 + $0xb48] sm:$0xff]
      %v577 = vld [vmem:[%s1 + $0xb50] sm:$0xff]
      %v578 = vld [vmem:[%s1 + $0xb58] sm:$0xff]
      %v579 = vld [vmem:[%s1 + $0xb60] sm:$0xff]
      %v580 = vld [vmem:[%s1 + $0xb68] sm:$0xff]
      %v581 = vld [vmem:[%s1 + $0xb70] sm:$0xff]
      %v582 = vld [vmem:[%s1 + $0xb78] sm:$0xff]
      %v583 = vld [vmem:[%s1 + $0xb80] sm:$0xff]
      %v584 = vld [vmem:[%s1 + $0xb88] sm:$0xff]
      %v585 = vld [vmem:[%s1 + $0xb90] sm:$0xff]
      %v586 = vld [vmem:[%s1 + $0xb98] sm:$0xff]
      %v587 = vld [vmem:[%s1 + $0xba0] sm:$0xff]
      %v588 = vld [vmem:[%s1 + $0xba8] sm:$0xff]
      %v589 = vld [vmem:[%s1 + $0xbb0] sm:$0xff]
      %v590 = vld [vmem:[%s1 + $0xbb8] sm:$0xff]
      %v591 = vld [vmem:[%s1 + $0xbc0] sm:$0xff]
      %v592 = vld [vmem:[%s1 + $0xbc8] sm:$0xff]
      %v593 = vld [vmem:[%s1 + $0xbd0] sm:$0xff]
      %v594 = vld [vmem:[%s1 + $0xbd8] sm:$0xff]
      %v595 = vld [vmem:[%s1 + $0xbe0] sm:$0xff]
      %v596 = vld [vmem:[%s1 + $0xbe8] sm:$0xff]
      %v597 = vld [vmem:[%s1 + $0xbf0] sm:$0xff]
      %v598 = vld [vmem:[%s1 + $0xbf8] sm:$0xff]
      %v599 = vld [vmem:[%s1 + $0xc00] sm:$0xff]
      %v600 = vld [vmem:[%s1 + $0xc08] sm:$0xff]
      %v601 = vld [vmem:[%s1 + $0xc10] sm:$0xff]
      %v602 = vld [vmem:[%s1 + $0xc18] sm:$0xff]
      %v603 = vld [vmem:[%s1 + $0xc20] sm:$0xff]
      %v604 = vld [vmem:[%s1 + $0xc28] sm:$0xff]
      %v605 = vld [vmem:[%s1 + $0xc30] sm:$0xff]
      %v606 = vld [vmem:[%s1 + $0xc38] sm:$0xff]
      %v607 = vld [vmem:[%s1 + $0xc40] sm:$0xff]
      %v608 = vld [vmem:[%s1 + $0xc48] sm:$0xff]
      %v609 = vld [vmem:[%s1 + $0xc50] sm:$0xff]
      %v610 = vld [vmem:[%s1 + $0xc58] sm:$0xff]
      %v611 = vld [vmem:[%s1 + $0xc60] sm:$0xff]
      %v612 = vld [vmem:[%s1 + $0xc68] sm:$0xff]
      %v613 = vld [vmem:[%s1 + $0xc70] sm:$0xff]
      %v614 = vld [vmem:[%s1 + $0xc78] sm:$0xff]
      %v615 = vld [vmem:[%s1 + $0xc80] sm:$0xff]
      %v616 = vld [vmem:[%s1 + $0xc88] sm:$0xff]
      %v617 = vld [vmem:[%s1 + $0xc90] sm:$0xff]
      %v618 = vld [vmem:[%s1 + $0xc98] sm:$0xff]
      %v619 = vld [vmem:[%s1 + $0xca0] sm:$0xff]
      %v620 = vld [vmem:[%s1 + $0xca8] sm:$0xff]
      %v621 = vld [vmem:[%s1 + $0xcb0] sm:$0xff]
      %v622 = vld [vmem:[%s1 + $0xcb8] sm:$0xff]
      %v623 = vld [vmem:[%s1 + $0xcc0] sm:$0xff]
      %v624 = vld [vmem:[%s1 + $0xcc8] sm:$0xff]
      %v625 = vld [vmem:[%s1 + $0xcd0] sm:$0xff]
      %v626 = vld [vmem:[%s1 + $0xcd8] sm:$0xff]
      %v627 = vld [vmem:[%s1 + $0xce0] sm:$0xff]
      %v628 = vld [vmem:[%s1 + $0xce8] sm:$0xff]
      %v629 = vld [vmem:[%s1 + $0xcf0] sm:$0xff]
      %v630 = vld [vmem:[%s1 + $0xcf8] sm:$0xff]
      %v631 = vld [vmem:[%s1 + $0xd00] sm:$0xff]
      %v632 = vld [vmem:[%s1 + $0xd08] sm:$0xff]
      %v633 = vld [vmem:[%s1 + $0xd10] sm:$0xff]
      %v634 = vld [vmem:[%s1 + $0xd18] sm:$0xff]
      %v635 = vld [vmem:[%s1 + $0xd20] sm:$0xff]
      %v636 = vld [vmem:[%s1 + $0xd28] sm:$0xff]
      %v637 = vld [vmem:[%s1 + $0xd30] sm:$0xff]
      %v638 = vld [vmem:[%s1 + $0xd38] sm:$0xff]
      %v639 = vld [vmem:[%s1 + $0xd40] sm:$0xff]
      %v640 = vld [vmem:[%s1 + $0xd48] sm:$0xff]
      %v641 = vld [vmem:[%s1 + $0xd50] sm:$0xff]
      %v642 = vld [vmem:[%s1 + $0xd58] sm:$0xff]
      %v643 = vld [vmem:[%s1 + $0xd60] sm:$0xff]
      %v644 = vld [vmem:[%s1 + $0xd68] sm:$0xff]
      %v645 = vld [vmem:[%s1 + $0xd70] sm:$0xff]
      %v646 = vld [vmem:[%s1 + $0xd78] sm:$0xff]
      %v647 = vld [vmem:[%s1 + $0xd80] sm:$0xff]
      %v648 = vld [vmem:[%s1 + $0xd88] sm:$0xff]
      %v649 = vld [vmem:[%s1 + $0xd90] sm:$0xff]
      %v650 = vld [vmem:[%s1 + $0xd98] sm:$0xff]
      %v651 = vld [vmem:[%s1 + $0xda0] sm:$0xff]
      %v652 = vld [vmem:[%s1 + $0xda8] sm:$0xff]
      %v653 = vld [vmem:[%s1 + $0xdb0] sm:$0xff]
      %v654 = vld [vmem:[%s1 + $0xdb8] sm:$0xff]
      %v655 = vld [vmem:[%s1 + $0xdc0] sm:$0xff]
      %v656 = vld [vmem:[%s1 + $0xdc8] sm:$0xff]
      %v657 = vld [vmem:[%s1 + $0xdd0] sm:$0xff]
      %v658 = vld [vmem:[%s1 + $0xdd8] sm:$0xff]
      %v659 = vld [vmem:[%s1 + $0xde0] sm:$0xff]
      %v660 = vld [vmem:[%s1 + $0xde8] sm:$0xff]
      %v661 = vld [vmem:[%s1 + $0xdf0] sm:$0xff]
      %v662 = vld [vmem:[%s1 + $0xdf8] sm:$0xff]
      %v663 = vld [vmem:[%s1 + $0xe00] sm:$0xff]
      %v664 = vld [vmem:[%s1 + $0xe08] sm:$0xff]
      %v665 = vld [vmem:[%s1 + $0xe10] sm:$0xff]
      %v666 = vld [vmem:[%s1 + $0xe18] sm:$0xff]
      %v667 = vld [vmem:[%s1 + $0xe20] sm:$0xff]
      %v668 = vld [vmem:[%s1 + $0xe28] sm:$0xff]
      %v669 = vld [vmem:[%s1 + $0xe30] sm:$0xff]
      %v670 = vld [vmem:[%s1 + $0xe38] sm:$0xff]
      %v671 = vld [vmem:[%s1 + $0xe40] sm:$0xff]
      %v672 = vld [vmem:[%s1 + $0xe48] sm:$0xff]
      %v673 = vld [vmem:[%s1 + $0xe50] sm:$0xff]
      %v674 = vld [vmem:[%s1 + $0xe58] sm:$0xff]
      %v675 = vld [vmem:[%s1 + $0xe60] sm:$0xff]
      %v676 = vld [vmem:[%s1 + $0xe68] sm:$0xff]
      %v677 = vld [vmem:[%s1 + $0xe70] sm:$0xff]
      %v678 = vld [vmem:[%s1 + $0xe78] sm:$0xff]
      %v679 = vld [vmem:[%s1 + $0xe80] sm:$0xff]
      %v680 = vld [vmem:[%s1 + $0xe88] sm:$0xff]
      %v681 = vld [vmem:[%s1 + $0xe90] sm:$0xff]
      %v682 = vld [vmem:[%s1 + $0xe98] sm:$0xff]
      %v683 = vld [vmem:[%s1 + $0xea0] sm:$0xff]
      %v684 = vld [vmem:[%s1 + $0xea8] sm:$0xff]
      %v685 = vld [vmem:[%s1 + $0xeb0] sm:$0xff]
      %v686 = vld [vmem:[%s1 + $0xeb8] sm:$0xff]
      %v687 = vld [vmem:[%s1 + $0xec0] sm:$0xff]
      %v688 = vld [vmem:[%s1 + $0xec8] sm:$0xff]
      %v689 = vld [vmem:[%s1 + $0xed0] sm:$0xff]
      %v690 = vld [vmem:[%s1 + $0xed8] sm:$0xff]
      %v691 = vld [vmem:[%s1 + $0xee0] sm:$0xff]
      %v692 = vld [vmem:[%s1 + $0xee8] sm:$0xff]
      %v693 = vld [vmem:[%s1 + $0xef0] sm:$0xff]
      %v694 = vld [vmem:[%s1 + $0xef8] sm:$0xff]
      %v695 = vld [vmem:[%s1 + $0xf00] sm:$0xff]
      %v696 = vld [vmem:[%s1 + $0xf08] sm:$0xff]
      %v697 = vld [vmem:[%s1 + $0xf10] sm:$0xff]
      %v698 = vld [vmem:[%s1 + $0xf18] sm:$0xff]
      %v699 = vld [vmem:[%s1 + $0xf20] sm:$0xff]
      %v700 = vld [vmem:[%s1 + $0xf28] sm:$0xff]
      %v701 = vld [vmem:[%s1 + $0xf30] sm:$0xff]
      %v702 = vld [vmem:[%s1 + $0xf38] sm:$0xff]
      %v703 = vld [vmem:[%s1 + $0xf40] sm:$0xff]
      %v704 = vld [vmem:[%s1 + $0xf48] sm:$0xff]
      %v705 = vld [vmem:[%s1 + $0xf50] sm:$0xff]
      %v706 = vld [vmem:[%s1 + $0xf58] sm:$0xff]
      %v707 = vld [vmem:[%s1 + $0xf60] sm:$0xff]
      %v708 = vld [vmem:[%s1 + $0xf68] sm:$0xff]
      %v709 = vld [vmem:[%s1 + $0xf70] sm:$0xff]
      %v710 = vld [vmem:[%s1 + $0xf78] sm:$0xff]
      %v711 = vld [vmem:[%s1 + $0xf80] sm:$0xff]
      %v712 = vld [vmem:[%s1 + $0xf88] sm:$0xff]
      %v713 = vld [vmem:[%s1 + $0xf90] sm:$0xff]
      %v714 = vld [vmem:[%s1 + $0xf98] sm:$0xff]
      %v715 = vld [vmem:[%s1 + $0xfa0] sm:$0xff]
      %v716 = vld [vmem:[%s1 + $0xfa8] sm:$0xff]
      %v717 = vld [vmem:[%s1 + $0xfb0] sm:$0xff]
      %v718 = vld [vmem:[%s1 + $0xfb8] sm:$0xff]
      %v719 = vld [vmem:[%s1 + $0xfc0] sm:$0xff]
      %v720 = vld [vmem:[%s1 + $0xfc8] sm:$0xff]
      %v721 = vld [vmem:[%s1 + $0xfd0] sm:$0xff]
      %v722 = vld [vmem:[%s1 + $0xfd8] sm:$0xff]
      %v723 = vld [vmem:[%s1 + $0xfe0] sm:$0xff]
      %v724 = vld [vmem:[%s1 + $0xfe8] sm:$0xff]
      %v725 = vld [vmem:[%s1 + $0xff0] sm:$0xff]
      %v726 = vld [vmem:[%s1 + $0xff8] sm:$0xff]
      %v727 = vld [vmem:[%s1 + $0x1000] sm:$0xff]
      %v728 = vld [vmem:[%s1 + $0x1008] sm:$0xff]
      %v729 = vld [vmem:[%s1 + $0x1010] sm:$0xff]
      %v730 = vld [vmem:[%s1 + $0x1018] sm:$0xff]
      %v731 = vld [vmem:[%s1 + $0x1020] sm:$0xff]
      %v732 = vld [vmem:[%s1 + $0x1028] sm:$0xff]
      %v733 = vld [vmem:[%s1 + $0x1030] sm:$0xff]
      %v734 = vld [vmem:[%s1 + $0x1038] sm:$0xff]
      %v735 = vld [vmem:[%s1 + $0x1040] sm:$0xff]
      %v736 = vld [vmem:[%s1 + $0x1048] sm:$0xff]
      %v737 = vld [vmem:[%s1 + $0x1050] sm:$0xff]
      %v738 = vld [vmem:[%s1 + $0x1058] sm:$0xff]
      %v739 = vld [vmem:[%s1 + $0x1060] sm:$0xff]
      %v740 = vld [vmem:[%s1 + $0x1068] sm:$0xff]
      %v741 = vld [vmem:[%s1 + $0x1070] sm:$0xff]
      %v742 = vld [vmem:[%s1 + $0x1078] sm:$0xff]
      %v743 = vld [vmem:[%s1 + $0x1080] sm:$0xff]
      %v744 = vld [vmem:[%s1 + $0x1088] sm:$0xff]
      %v745 = vld [vmem:[%s1 + $0x1090] sm:$0xff]
      %v746 = vld [vmem:[%s1 + $0x1098] sm:$0xff]
      %v747 = vld [vmem:[%s1 + $0x10a0] sm:$0xff]
      %v748 = vld [vmem:[%s1 + $0x10a8] sm:$0xff]
      %v749 = vld [vmem:[%s1 + $0x10b0] sm:$0xff]
      %v750 = vld [vmem:[%s1 + $0x10b8] sm:$0xff]
      %v751 = vld [vmem:[%s1 + $0x10c0] sm:$0xff]
      %v752 = vld [vmem:[%s1 + $0x10c8] sm:$0xff]
      %v753 = vld [vmem:[%s1 + $0x10d0] sm:$0xff]
      %v754 = vld [vmem:[%s1 + $0x10d8] sm:$0xff]
      %v755 = vld [vmem:[%s1 + $0x10e0] sm:$0xff]
      %v756 = vld [vmem:[%s1 + $0x10e8] sm:$0xff]
      %v757 = vld [vmem:[%s1 + $0x10f0] sm:$0xff]
      %v758 = vld [vmem:[%s1 + $0x10f8] sm:$0xff]
      %v759 = vld [vmem:[%s1 + $0x1100] sm:$0xff]
      %v760 = vld [vmem:[%s1 + $0x1108] sm:$0xff]
      %v761 = vld [vmem:[%s1 + $0x1110] sm:$0xff]
      %v762 = vld [vmem:[%s1 + $0x1118] sm:$0xff]
      %v763 = vld [vmem:[%s1 + $0x1120] sm:$0xff]
      %v764 = vld [vmem:[%s1 + $0x1128] sm:$0xff]
      %v765 = vld [vmem:[%s1 + $0x1130] sm:$0xff]
      %v766 = vld [vmem:[%s1 + $0x1138] sm:$0xff]
      %v767 = vld [vmem:[%s1 + $0x1140] sm:$0xff]
      %v768 = vld [vmem:[%s1 + $0x1148] sm:$0xff]
      %v769 = vld [vmem:[%s1 + $0x1150] sm:$0xff]
      %v770 = vld [vmem:[%s1 + $0x1158] sm:$0xff]
      %v771 = vld [vmem:[%s1 + $0x1160] sm:$0xff]
      %v772 = vld [vmem:[%s1 + $0x1168] sm:$0xff]
      %v773 = vld [vmem:[%s1 + $0x1170] sm:$0xff]
      %v774 = vld [vmem:[%s1 + $0x1178] sm:$0xff]
      %v775 = vld [vmem:[%s1 + $0x1180] sm:$0xff]
      %v776 = vld [vmem:[%s1 + $0x1188] sm:$0xff]
      %v777 = vld [vmem:[%s1 + $0x1190] sm:$0xff]
      %v778 = vld [vmem:[%s1 + $0x1198] sm:$0xff]
      %v779 = vld [vmem:[%s1 + $0x11a0] sm:$0xff]
      %v780 = vld [vmem:[%s1 + $0x11a8] sm:$0xff]
      %v781 = vld [vmem:[%s1 + $0x11b0] sm:$0xff]
      %v782 = vld [vmem:[%s1 + $0x11b8] sm:$0xff]
      %v783 = vld [vmem:[%s1 + $0x11c0] sm:$0xff]
      %v784 = vld [vmem:[%s1 + $0x11c8] sm:$0xff]
      %v785 = vld [vmem:[%s1 + $0x11d0] sm:$0xff]
      %v786 = vld [vmem:[%s1 + $0x11d8] sm:$0xff]
      %v787 = vld [vmem:[%s1 + $0x11e0] sm:$0xff]
      %v788 = vld [vmem:[%s1 + $0x11e8] sm:$0xff]
      %v789 = vld [vmem:[%s1 + $0x11f0] sm:$0xff]
      %v790 = vld [vmem:[%s1 + $0x11f8] sm:$0xff]
      %v791 = vld [vmem:[%s2] sm:$0xf]
      %v793 = vperm.slane %v791, 0
      %v794 = vperm.slane %v791, 1
      %v795 = vperm.slane %v791, 2
      %v796 = vperm.slane %v791, 3
      %v837 = vunpack.c.l.b16 %v179
      %v838 = vunpack.c.h.b16 %v179
      %v839 = vunpack.c.l.b16 %v180
      %v840 = vunpack.c.h.b16 %v180
      %v841 = vunpack.c.l.b16 %v181
      %v842 = vunpack.c.h.b16 %v181
      %v843 = vunpack.c.l.b16 %v182
      %v844 = vunpack.c.h.b16 %v182
      %v845 = vunpack.c.l.b16 %v183
      %v846 = vunpack.c.h.b16 %v183
      %v847 = vunpack.c.l.b16 %v184
      %v848 = vunpack.c.h.b16 %v184
      %v849 = vunpack.c.l.b16 %v185
      %v850 = vunpack.c.h.b16 %v185
      %v851 = vunpack.c.l.b16 %v186
      %v852 = vunpack.c.h.b16 %v186
      %v853 = vunpack.c.l.b16 %v187
      %v854 = vunpack.c.h.b16 %v187
      %v855 = vunpack.c.l.b16 %v188
      %v856 = vunpack.c.h.b16 %v188
      %v857 = vunpack.c.l.b16 %v189
      %v858 = vunpack.c.h.b16 %v189
      %v859 = vunpack.c.l.b16 %v190
      %v860 = vunpack.c.h.b16 %v190
      %v861 = vunpack.c.l.b16 %v191
      %v862 = vunpack.c.h.b16 %v191
      %v863 = vunpack.c.l.b16 %v192
      %v864 = vunpack.c.h.b16 %v192
      %v865 = vunpack.c.l.b16 %v193
      %v866 = vunpack.c.h.b16 %v193
      %v867 = vunpack.c.l.b16 %v194
      %v868 = vunpack.c.h.b16 %v194
      %v869 = vunpack.c.l.b16 %v195
      %v870 = vunpack.c.h.b16 %v195
      %v871 = vunpack.c.l.b16 %v196
      %v872 = vunpack.c.h.b16 %v196
      %v873 = vunpack.c.l.b16 %v197
      %v874 = vunpack.c.h.b16 %v197
      %v875 = vunpack.c.l.b16 %v198
      %v876 = vunpack.c.h.b16 %v198
      %v877 = vunpack.c.l.b16 %v199
      %v878 = vunpack.c.h.b16 %v199
      %v879 = vunpack.c.l.b16 %v200
      %v880 = vunpack.c.h.b16 %v200
      %v881 = vunpack.c.l.b16 %v201
      %v882 = vunpack.c.h.b16 %v201
      %v883 = vunpack.c.l.b16 %v202
      %v884 = vunpack.c.h.b16 %v202
      %v885 = vunpack.c.l.b16 %v203
      %v886 = vunpack.c.h.b16 %v203
      %v887 = vunpack.c.l.b16 %v204
      %v888 = vunpack.c.h.b16 %v204
      %v889 = vunpack.c.l.b16 %v205
      %v890 = vunpack.c.h.b16 %v205
      %v891 = vunpack.c.l.b16 %v206
      %v892 = vunpack.c.h.b16 %v206
      %v893 = vunpack.c.l.b16 %v207
      %v894 = vunpack.c.h.b16 %v207
      %v895 = vunpack.c.l.b16 %v208
      %v896 = vunpack.c.h.b16 %v208
      %v897 = vunpack.c.l.b16 %v209
      %v898 = vunpack.c.h.b16 %v209
      %v899 = vunpack.c.l.b16 %v210
      %v900 = vunpack.c.h.b16 %v210
      %v901 = vunpack.c.l.b16 %v211
      %v902 = vunpack.c.h.b16 %v211
      %v903 = vunpack.c.l.b16 %v212
      %v904 = vunpack.c.h.b16 %v212
      %v905 = vunpack.c.l.b16 %v213
      %v906 = vunpack.c.h.b16 %v213
      %v907 = vunpack.c.l.b16 %v214
      %v908 = vunpack.c.h.b16 %v214
      %v909 = vpack.c.b16 %v855, %v837
      %v910 = vpack.c.b16 %v856, %v838
      %v911 = vpack.c.b16 %v857, %v839
      %v912 = vpack.c.b16 %v858, %v840
      %v913 = vpack.c.b16 %v859, %v841
      %v914 = vpack.c.b16 %v860, %v842
      %v915 = vpack.c.b16 %v861, %v843
      %v916 = vpack.c.b16 %v862, %v844
      %v917 = vpack.c.b16 %v863, %v845
      %v918 = vpack.c.b16 %v864, %v846
      %v919 = vpack.c.b16 %v865, %v847
      %v920 = vpack.c.b16 %v866, %v848
      %v921 = vpack.c.b16 %v867, %v849
      %v922 = vpack.c.b16 %v868, %v850
      %v923 = vpack.c.b16 %v869, %v851
      %v924 = vpack.c.b16 %v870, %v852
      %v925 = vpack.c.b16 %v871, %v853
      %v926 = vpack.c.b16 %v872, %v854
      %v927 = vpack.c.b16 %v891, %v873
      %v928 = vpack.c.b16 %v892, %v874
      %v929 = vpack.c.b16 %v893, %v875
      %v930 = vpack.c.b16 %v894, %v876
      %v931 = vpack.c.b16 %v895, %v877
      %v932 = vpack.c.b16 %v896, %v878
      %v933 = vpack.c.b16 %v897, %v879
      %v934 = vpack.c.b16 %v898, %v880
      %v935 = vpack.c.b16 %v899, %v881
      %v936 = vpack.c.b16 %v900, %v882
      %v937 = vpack.c.b16 %v901, %v883
      %v938 = vpack.c.b16 %v902, %v884
      %v939 = vpack.c.b16 %v903, %v885
      %v940 = vpack.c.b16 %v904, %v886
      %v941 = vpack.c.b16 %v905, %v887
      %v942 = vpack.c.b16 %v906, %v888
      %v943 = vpack.c.b16 %v907, %v889
      %v944 = vpack.c.b16 %v908, %v890
      %v1557 = vunpack.c.l.b16 %v215
      %v1558 = vunpack.c.h.b16 %v215
      %v1559 = vunpack.c.l.b16 %v216
      %v1560 = vunpack.c.h.b16 %v216
      %v1561 = vunpack.c.l.b16 %v217
      %v1562 = vunpack.c.h.b16 %v217
      %v1563 = vunpack.c.l.b16 %v218
      %v1564 = vunpack.c.h.b16 %v218
      %v1565 = vunpack.c.l.b16 %v219
      %v1566 = vunpack.c.h.b16 %v219
      %v1567 = vunpack.c.l.b16 %v220
      %v1568 = vunpack.c.h.b16 %v220
      %v1569 = vunpack.c.l.b16 %v221
      %v1570 = vunpack.c.h.b16 %v221
      %v1571 = vunpack.c.l.b16 %v222
      %v1572 = vunpack.c.h.b16 %v222
      %v1573 = vunpack.c.l.b16 %v223
      %v1574 = vunpack.c.h.b16 %v223
      %v1575 = vunpack.c.l.b16 %v224
      %v1576 = vunpack.c.h.b16 %v224
      %v1577 = vunpack.c.l.b16 %v225
      %v1578 = vunpack.c.h.b16 %v225
      %v1579 = vunpack.c.l.b16 %v226
      %v1580 = vunpack.c.h.b16 %v226
      %v1581 = vunpack.c.l.b16 %v227
      %v1582 = vunpack.c.h.b16 %v227
      %v1583 = vunpack.c.l.b16 %v228
      %v1584 = vunpack.c.h.b16 %v228
      %v1585 = vunpack.c.l.b16 %v229
      %v1586 = vunpack.c.h.b16 %v229
      %v1587 = vunpack.c.l.b16 %v230
      %v1588 = vunpack.c.h.b16 %v230
      %v1589 = vunpack.c.l.b16 %v231
      %v1590 = vunpack.c.h.b16 %v231
      %v1591 = vunpack.c.l.b16 %v232
      %v1592 = vunpack.c.h.b16 %v232
      %v1593 = vunpack.c.l.b16 %v233
      %v1594 = vunpack.c.h.b16 %v233
      %v1595 = vunpack.c.l.b16 %v234
      %v1596 = vunpack.c.h.b16 %v234
      %v1597 = vunpack.c.l.b16 %v235
      %v1598 = vunpack.c.h.b16 %v235
      %v1599 = vunpack.c.l.b16 %v236
      %v1600 = vunpack.c.h.b16 %v236
      %v1601 = vunpack.c.l.b16 %v237
      %v1602 = vunpack.c.h.b16 %v237
      %v1603 = vunpack.c.l.b16 %v238
      %v1604 = vunpack.c.h.b16 %v238
      %v1605 = vunpack.c.l.b16 %v239
      %v1606 = vunpack.c.h.b16 %v239
      %v1607 = vunpack.c.l.b16 %v240
      %v1608 = vunpack.c.h.b16 %v240
      %v1609 = vunpack.c.l.b16 %v241
      %v1610 = vunpack.c.h.b16 %v241
      %v1611 = vunpack.c.l.b16 %v242
      %v1612 = vunpack.c.h.b16 %v242
      %v1613 = vunpack.c.l.b16 %v243
      %v1614 = vunpack.c.h.b16 %v243
      %v1615 = vunpack.c.l.b16 %v244
      %v1616 = vunpack.c.h.b16 %v244
      %v1617 = vunpack.c.l.b16 %v245
      %v1618 = vunpack.c.h.b16 %v245
      %v1619 = vunpack.c.l.b16 %v246
      %v1620 = vunpack.c.h.b16 %v246
      %v1621 = vunpack.c.l.b16 %v247
      %v1622 = vunpack.c.h.b16 %v247
      %v1623 = vunpack.c.l.b16 %v248
      %v1624 = vunpack.c.h.b16 %v248
      %v1625 = vunpack.c.l.b16 %v249
      %v1626 = vunpack.c.h.b16 %v249
      %v1627 = vunpack.c.l.b16 %v250
      %v1628 = vunpack.c.h.b16 %v250
      %v1629 = vunpack.c.l.b16 %v251
      %v1630 = vunpack.c.h.b16 %v251
      %v1631 = vunpack.c.l.b16 %v252
      %v1632 = vunpack.c.h.b16 %v252
      %v1633 = vunpack.c.l.b16 %v253
      %v1634 = vunpack.c.h.b16 %v253
      %v1635 = vunpack.c.l.b16 %v254
      %v1636 = vunpack.c.h.b16 %v254
      %v1637 = vunpack.c.l.b16 %v255
      %v1638 = vunpack.c.h.b16 %v255
      %v1639 = vunpack.c.l.b16 %v256
      %v1640 = vunpack.c.h.b16 %v256
      %v1641 = vunpack.c.l.b16 %v257
      %v1642 = vunpack.c.h.b16 %v257
      %v1643 = vunpack.c.l.b16 %v258
      %v1644 = vunpack.c.h.b16 %v258
      %v1645 = vunpack.c.l.b16 %v259
      %v1646 = vunpack.c.h.b16 %v259
      %v1647 = vunpack.c.l.b16 %v260
      %v1648 = vunpack.c.h.b16 %v260
      %v1649 = vunpack.c.l.b16 %v261
      %v1650 = vunpack.c.h.b16 %v261
      %v1651 = vunpack.c.l.b16 %v262
      %v1652 = vunpack.c.h.b16 %v262
      %v1653 = vunpack.c.l.b16 %v263
      %v1654 = vunpack.c.h.b16 %v263
      %v1655 = vunpack.c.l.b16 %v264
      %v1656 = vunpack.c.h.b16 %v264
      %v1657 = vunpack.c.l.b16 %v265
      %v1658 = vunpack.c.h.b16 %v265
      %v1659 = vunpack.c.l.b16 %v266
      %v1660 = vunpack.c.h.b16 %v266
      %v1661 = vunpack.c.l.b16 %v267
      %v1662 = vunpack.c.h.b16 %v267
      %v1663 = vunpack.c.l.b16 %v268
      %v1664 = vunpack.c.h.b16 %v268
      %v1665 = vunpack.c.l.b16 %v269
      %v1666 = vunpack.c.h.b16 %v269
      %v1667 = vunpack.c.l.b16 %v270
      %v1668 = vunpack.c.h.b16 %v270
      %v1669 = vunpack.c.l.b16 %v271
      %v1670 = vunpack.c.h.b16 %v271
      %v1671 = vunpack.c.l.b16 %v272
      %v1672 = vunpack.c.h.b16 %v272
      %v1673 = vunpack.c.l.b16 %v273
      %v1674 = vunpack.c.h.b16 %v273
      %v1675 = vunpack.c.l.b16 %v274
      %v1676 = vunpack.c.h.b16 %v274
      %v1677 = vunpack.c.l.b16 %v275
      %v1678 = vunpack.c.h.b16 %v275
      %v1679 = vunpack.c.l.b16 %v276
      %v1680 = vunpack.c.h.b16 %v276
      %v1681 = vunpack.c.l.b16 %v277
      %v1682 = vunpack.c.h.b16 %v277
      %v1683 = vunpack.c.l.b16 %v278
      %v1684 = vunpack.c.h.b16 %v278
      %v1685 = vunpack.c.l.b16 %v279
      %v1686 = vunpack.c.h.b16 %v279
      %v1687 = vunpack.c.l.b16 %v280
      %v1688 = vunpack.c.h.b16 %v280
      %v1689 = vunpack.c.l.b16 %v281
      %v1690 = vunpack.c.h.b16 %v281
      %v1691 = vunpack.c.l.b16 %v282
      %v1692 = vunpack.c.h.b16 %v282
      %v1693 = vunpack.c.l.b16 %v283
      %v1694 = vunpack.c.h.b16 %v283
      %v1695 = vunpack.c.l.b16 %v284
      %v1696 = vunpack.c.h.b16 %v284
      %v1697 = vunpack.c.l.b16 %v285
      %v1698 = vunpack.c.h.b16 %v285
      %v1699 = vunpack.c.l.b16 %v286
      %v1700 = vunpack.c.h.b16 %v286
      %v1701 = vunpack.c.l.b16 %v287
      %v1702 = vunpack.c.h.b16 %v287
      %v1703 = vunpack.c.l.b16 %v288
      %v1704 = vunpack.c.h.b16 %v288
      %v1705 = vunpack.c.l.b16 %v289
      %v1706 = vunpack.c.h.b16 %v289
      %v1707 = vunpack.c.l.b16 %v290
      %v1708 = vunpack.c.h.b16 %v290
      %v1709 = vunpack.c.l.b16 %v291
      %v1710 = vunpack.c.h.b16 %v291
      %v1711 = vunpack.c.l.b16 %v292
      %v1712 = vunpack.c.h.b16 %v292
      %v1713 = vunpack.c.l.b16 %v293
      %v1714 = vunpack.c.h.b16 %v293
      %v1715 = vunpack.c.l.b16 %v294
      %v1716 = vunpack.c.h.b16 %v294
      %v1717 = vunpack.c.l.b16 %v295
      %v1718 = vunpack.c.h.b16 %v295
      %v1719 = vunpack.c.l.b16 %v296
      %v1720 = vunpack.c.h.b16 %v296
      %v1721 = vunpack.c.l.b16 %v297
      %v1722 = vunpack.c.h.b16 %v297
      %v1723 = vunpack.c.l.b16 %v298
      %v1724 = vunpack.c.h.b16 %v298
      %v1725 = vunpack.c.l.b16 %v299
      %v1726 = vunpack.c.h.b16 %v299
      %v1727 = vunpack.c.l.b16 %v300
      %v1728 = vunpack.c.h.b16 %v300
      %v1729 = vunpack.c.l.b16 %v301
      %v1730 = vunpack.c.h.b16 %v301
      %v1731 = vunpack.c.l.b16 %v302
      %v1732 = vunpack.c.h.b16 %v302
      %v1733 = vunpack.c.l.b16 %v303
      %v1734 = vunpack.c.h.b16 %v303
      %v1735 = vunpack.c.l.b16 %v304
      %v1736 = vunpack.c.h.b16 %v304
      %v1737 = vunpack.c.l.b16 %v305
      %v1738 = vunpack.c.h.b16 %v305
      %v1739 = vunpack.c.l.b16 %v306
      %v1740 = vunpack.c.h.b16 %v306
      %v1741 = vunpack.c.l.b16 %v307
      %v1742 = vunpack.c.h.b16 %v307
      %v1743 = vunpack.c.l.b16 %v308
      %v1744 = vunpack.c.h.b16 %v308
      %v1745 = vunpack.c.l.b16 %v309
      %v1746 = vunpack.c.h.b16 %v309
      %v1747 = vunpack.c.l.b16 %v310
      %v1748 = vunpack.c.h.b16 %v310
      %v1749 = vunpack.c.l.b16 %v311
      %v1750 = vunpack.c.h.b16 %v311
      %v1751 = vunpack.c.l.b16 %v312
      %v1752 = vunpack.c.h.b16 %v312
      %v1753 = vunpack.c.l.b16 %v313
      %v1754 = vunpack.c.h.b16 %v313
      %v1755 = vunpack.c.l.b16 %v314
      %v1756 = vunpack.c.h.b16 %v314
      %v1757 = vunpack.c.l.b16 %v315
      %v1758 = vunpack.c.h.b16 %v315
      %v1759 = vunpack.c.l.b16 %v316
      %v1760 = vunpack.c.h.b16 %v316
      %v1761 = vunpack.c.l.b16 %v317
      %v1762 = vunpack.c.h.b16 %v317
      %v1763 = vunpack.c.l.b16 %v318
      %v1764 = vunpack.c.h.b16 %v318
      %v1765 = vunpack.c.l.b16 %v319
      %v1766 = vunpack.c.h.b16 %v319
      %v1767 = vunpack.c.l.b16 %v320
      %v1768 = vunpack.c.h.b16 %v320
      %v1769 = vunpack.c.l.b16 %v321
      %v1770 = vunpack.c.h.b16 %v321
      %v1771 = vunpack.c.l.b16 %v322
      %v1772 = vunpack.c.h.b16 %v322
      %v1773 = vunpack.c.l.b16 %v323
      %v1774 = vunpack.c.h.b16 %v323
      %v1775 = vunpack.c.l.b16 %v324
      %v1776 = vunpack.c.h.b16 %v324
      %v1777 = vunpack.c.l.b16 %v325
      %v1778 = vunpack.c.h.b16 %v325
      %v1779 = vunpack.c.l.b16 %v326
      %v1780 = vunpack.c.h.b16 %v326
      %v1781 = vunpack.c.l.b16 %v327
      %v1782 = vunpack.c.h.b16 %v327
      %v1783 = vunpack.c.l.b16 %v328
      %v1784 = vunpack.c.h.b16 %v328
      %v1785 = vunpack.c.l.b16 %v329
      %v1786 = vunpack.c.h.b16 %v329
      %v1787 = vunpack.c.l.b16 %v330
      %v1788 = vunpack.c.h.b16 %v330
      %v1789 = vunpack.c.l.b16 %v331
      %v1790 = vunpack.c.h.b16 %v331
      %v1791 = vunpack.c.l.b16 %v332
      %v1792 = vunpack.c.h.b16 %v332
      %v1793 = vunpack.c.l.b16 %v333
      %v1794 = vunpack.c.h.b16 %v333
      %v1795 = vunpack.c.l.b16 %v334
      %v1796 = vunpack.c.h.b16 %v334
      %v1797 = vunpack.c.l.b16 %v335
      %v1798 = vunpack.c.h.b16 %v335
      %v1799 = vunpack.c.l.b16 %v336
      %v1800 = vunpack.c.h.b16 %v336
      %v1801 = vunpack.c.l.b16 %v337
      %v1802 = vunpack.c.h.b16 %v337
      %v1803 = vunpack.c.l.b16 %v338
      %v1804 = vunpack.c.h.b16 %v338
      %v1805 = vunpack.c.l.b16 %v339
      %v1806 = vunpack.c.h.b16 %v339
      %v1807 = vunpack.c.l.b16 %v340
      %v1808 = vunpack.c.h.b16 %v340
      %v1809 = vunpack.c.l.b16 %v341
      %v1810 = vunpack.c.h.b16 %v341
      %v1811 = vunpack.c.l.b16 %v342
      %v1812 = vunpack.c.h.b16 %v342
      %v1813 = vunpack.c.l.b16 %v343
      %v1814 = vunpack.c.h.b16 %v343
      %v1815 = vunpack.c.l.b16 %v344
      %v1816 = vunpack.c.h.b16 %v344
      %v1817 = vunpack.c.l.b16 %v345
      %v1818 = vunpack.c.h.b16 %v345
      %v1819 = vunpack.c.l.b16 %v346
      %v1820 = vunpack.c.h.b16 %v346
      %v1821 = vunpack.c.l.b16 %v347
      %v1822 = vunpack.c.h.b16 %v347
      %v1823 = vunpack.c.l.b16 %v348
      %v1824 = vunpack.c.h.b16 %v348
      %v1825 = vunpack.c.l.b16 %v349
      %v1826 = vunpack.c.h.b16 %v349
      %v1827 = vunpack.c.l.b16 %v350
      %v1828 = vunpack.c.h.b16 %v350
      %v1829 = vunpack.c.l.b16 %v351
      %v1830 = vunpack.c.h.b16 %v351
      %v1831 = vunpack.c.l.b16 %v352
      %v1832 = vunpack.c.h.b16 %v352
      %v1833 = vunpack.c.l.b16 %v353
      %v1834 = vunpack.c.h.b16 %v353
      %v1835 = vunpack.c.l.b16 %v354
      %v1836 = vunpack.c.h.b16 %v354
      %v1837 = vunpack.c.l.b16 %v355
      %v1838 = vunpack.c.h.b16 %v355
      %v1839 = vunpack.c.l.b16 %v356
      %v1840 = vunpack.c.h.b16 %v356
      %v1841 = vunpack.c.l.b16 %v357
      %v1842 = vunpack.c.h.b16 %v357
      %v1843 = vunpack.c.l.b16 %v358
      %v1844 = vunpack.c.h.b16 %v358
      %v1845 = vunpack.c.l.b16 %v359
      %v1846 = vunpack.c.h.b16 %v359
      %v1847 = vunpack.c.l.b16 %v360
      %v1848 = vunpack.c.h.b16 %v360
      %v1849 = vunpack.c.l.b16 %v361
      %v1850 = vunpack.c.h.b16 %v361
      %v1851 = vunpack.c.l.b16 %v362
      %v1852 = vunpack.c.h.b16 %v362
      %v1853 = vunpack.c.l.b16 %v363
      %v1854 = vunpack.c.h.b16 %v363
      %v1855 = vunpack.c.l.b16 %v364
      %v1856 = vunpack.c.h.b16 %v364
      %v1857 = vunpack.c.l.b16 %v365
      %v1858 = vunpack.c.h.b16 %v365
      %v1859 = vunpack.c.l.b16 %v366
      %v1860 = vunpack.c.h.b16 %v366
      %v1861 = vunpack.c.l.b16 %v367
      %v1862 = vunpack.c.h.b16 %v367
      %v1863 = vunpack.c.l.b16 %v368
      %v1864 = vunpack.c.h.b16 %v368
      %v1865 = vunpack.c.l.b16 %v369
      %v1866 = vunpack.c.h.b16 %v369
      %v1867 = vunpack.c.l.b16 %v370
      %v1868 = vunpack.c.h.b16 %v370
      %v1869 = vunpack.c.l.b16 %v371
      %v1870 = vunpack.c.h.b16 %v371
      %v1871 = vunpack.c.l.b16 %v372
      %v1872 = vunpack.c.h.b16 %v372
      %v1873 = vunpack.c.l.b16 %v373
      %v1874 = vunpack.c.h.b16 %v373
      %v1875 = vunpack.c.l.b16 %v374
      %v1876 = vunpack.c.h.b16 %v374
      %v1877 = vunpack.c.l.b16 %v375
      %v1878 = vunpack.c.h.b16 %v375
      %v1879 = vunpack.c.l.b16 %v376
      %v1880 = vunpack.c.h.b16 %v376
      %v1881 = vunpack.c.l.b16 %v377
      %v1882 = vunpack.c.h.b16 %v377
      %v1883 = vunpack.c.l.b16 %v378
      %v1884 = vunpack.c.h.b16 %v378
      %v1885 = vunpack.c.l.b16 %v379
      %v1886 = vunpack.c.h.b16 %v379
      %v1887 = vunpack.c.l.b16 %v380
      %v1888 = vunpack.c.h.b16 %v380
      %v1889 = vunpack.c.l.b16 %v381
      %v1890 = vunpack.c.h.b16 %v381
      %v1891 = vunpack.c.l.b16 %v382
      %v1892 = vunpack.c.h.b16 %v382
      %v1893 = vunpack.c.l.b16 %v383
      %v1894 = vunpack.c.h.b16 %v383
      %v1895 = vunpack.c.l.b16 %v384
      %v1896 = vunpack.c.h.b16 %v384
      %v1897 = vunpack.c.l.b16 %v385
      %v1898 = vunpack.c.h.b16 %v385
      %v1899 = vunpack.c.l.b16 %v386
      %v1900 = vunpack.c.h.b16 %v386
      %v1901 = vunpack.c.l.b16 %v387
      %v1902 = vunpack.c.h.b16 %v387
      %v1903 = vunpack.c.l.b16 %v388
      %v1904 = vunpack.c.h.b16 %v388
      %v1905 = vunpack.c.l.b16 %v389
      %v1906 = vunpack.c.h.b16 %v389
      %v1907 = vunpack.c.l.b16 %v390
      %v1908 = vunpack.c.h.b16 %v390
      %v1909 = vunpack.c.l.b16 %v391
      %v1910 = vunpack.c.h.b16 %v391
      %v1911 = vunpack.c.l.b16 %v392
      %v1912 = vunpack.c.h.b16 %v392
      %v1913 = vunpack.c.l.b16 %v393
      %v1914 = vunpack.c.h.b16 %v393
      %v1915 = vunpack.c.l.b16 %v394
      %v1916 = vunpack.c.h.b16 %v394
      %v1917 = vunpack.c.l.b16 %v395
      %v1918 = vunpack.c.h.b16 %v395
      %v1919 = vunpack.c.l.b16 %v396
      %v1920 = vunpack.c.h.b16 %v396
      %v1921 = vunpack.c.l.b16 %v397
      %v1922 = vunpack.c.h.b16 %v397
      %v1923 = vunpack.c.l.b16 %v398
      %v1924 = vunpack.c.h.b16 %v398
      %v1925 = vunpack.c.l.b16 %v399
      %v1926 = vunpack.c.h.b16 %v399
      %v1927 = vunpack.c.l.b16 %v400
      %v1928 = vunpack.c.h.b16 %v400
      %v1929 = vunpack.c.l.b16 %v401
      %v1930 = vunpack.c.h.b16 %v401
      %v1931 = vunpack.c.l.b16 %v402
      %v1932 = vunpack.c.h.b16 %v402
      %v1933 = vunpack.c.l.b16 %v403
      %v1934 = vunpack.c.h.b16 %v403
      %v1935 = vunpack.c.l.b16 %v404
      %v1936 = vunpack.c.h.b16 %v404
      %v1937 = vunpack.c.l.b16 %v405
      %v1938 = vunpack.c.h.b16 %v405
      %v1939 = vunpack.c.l.b16 %v406
      %v1940 = vunpack.c.h.b16 %v406
      %v1941 = vunpack.c.l.b16 %v407
      %v1942 = vunpack.c.h.b16 %v407
      %v1943 = vunpack.c.l.b16 %v408
      %v1944 = vunpack.c.h.b16 %v408
      %v1945 = vunpack.c.l.b16 %v409
      %v1946 = vunpack.c.h.b16 %v409
      %v1947 = vunpack.c.l.b16 %v410
      %v1948 = vunpack.c.h.b16 %v410
      %v1949 = vunpack.c.l.b16 %v411
      %v1950 = vunpack.c.h.b16 %v411
      %v1951 = vunpack.c.l.b16 %v412
      %v1952 = vunpack.c.h.b16 %v412
      %v1953 = vunpack.c.l.b16 %v413
      %v1954 = vunpack.c.h.b16 %v413
      %v1955 = vunpack.c.l.b16 %v414
      %v1956 = vunpack.c.h.b16 %v414
      %v1957 = vunpack.c.l.b16 %v415
      %v1958 = vunpack.c.h.b16 %v415
      %v1959 = vunpack.c.l.b16 %v416
      %v1960 = vunpack.c.h.b16 %v416
      %v1961 = vunpack.c.l.b16 %v417
      %v1962 = vunpack.c.h.b16 %v417
      %v1963 = vunpack.c.l.b16 %v418
      %v1964 = vunpack.c.h.b16 %v418
      %v1965 = vunpack.c.l.b16 %v419
      %v1966 = vunpack.c.h.b16 %v419
      %v1967 = vunpack.c.l.b16 %v420
      %v1968 = vunpack.c.h.b16 %v420
      %v1969 = vunpack.c.l.b16 %v421
      %v1970 = vunpack.c.h.b16 %v421
      %v1971 = vunpack.c.l.b16 %v422
      %v1972 = vunpack.c.h.b16 %v422
      %v1973 = vunpack.c.l.b16 %v423
      %v1974 = vunpack.c.h.b16 %v423
      %v1975 = vunpack.c.l.b16 %v424
      %v1976 = vunpack.c.h.b16 %v424
      %v1977 = vunpack.c.l.b16 %v425
      %v1978 = vunpack.c.h.b16 %v425
      %v1979 = vunpack.c.l.b16 %v426
      %v1980 = vunpack.c.h.b16 %v426
      %v1981 = vunpack.c.l.b16 %v427
      %v1982 = vunpack.c.h.b16 %v427
      %v1983 = vunpack.c.l.b16 %v428
      %v1984 = vunpack.c.h.b16 %v428
      %v1985 = vunpack.c.l.b16 %v429
      %v1986 = vunpack.c.h.b16 %v429
      %v1987 = vunpack.c.l.b16 %v430
      %v1988 = vunpack.c.h.b16 %v430
      %v1989 = vunpack.c.l.b16 %v431
      %v1990 = vunpack.c.h.b16 %v431
      %v1991 = vunpack.c.l.b16 %v432
      %v1992 = vunpack.c.h.b16 %v432
      %v1993 = vunpack.c.l.b16 %v433
      %v1994 = vunpack.c.h.b16 %v433
      %v1995 = vunpack.c.l.b16 %v434
      %v1996 = vunpack.c.h.b16 %v434
      %v1997 = vunpack.c.l.b16 %v435
      %v1998 = vunpack.c.h.b16 %v435
      %v1999 = vunpack.c.l.b16 %v436
      %v2000 = vunpack.c.h.b16 %v436
      %v2001 = vunpack.c.l.b16 %v437
      %v2002 = vunpack.c.h.b16 %v437
      %v2003 = vunpack.c.l.b16 %v438
      %v2004 = vunpack.c.h.b16 %v438
      %v2005 = vunpack.c.l.b16 %v439
      %v2006 = vunpack.c.h.b16 %v439
      %v2007 = vunpack.c.l.b16 %v440
      %v2008 = vunpack.c.h.b16 %v440
      %v2009 = vunpack.c.l.b16 %v441
      %v2010 = vunpack.c.h.b16 %v441
      %v2011 = vunpack.c.l.b16 %v442
      %v2012 = vunpack.c.h.b16 %v442
      %v2013 = vunpack.c.l.b16 %v443
      %v2014 = vunpack.c.h.b16 %v443
      %v2015 = vunpack.c.l.b16 %v444
      %v2016 = vunpack.c.h.b16 %v444
      %v2017 = vunpack.c.l.b16 %v445
      %v2018 = vunpack.c.h.b16 %v445
      %v2019 = vunpack.c.l.b16 %v446
      %v2020 = vunpack.c.h.b16 %v446
      %v2021 = vunpack.c.l.b16 %v447
      %v2022 = vunpack.c.h.b16 %v447
      %v2023 = vunpack.c.l.b16 %v448
      %v2024 = vunpack.c.h.b16 %v448
      %v2025 = vunpack.c.l.b16 %v449
      %v2026 = vunpack.c.h.b16 %v449
      %v2027 = vunpack.c.l.b16 %v450
      %v2028 = vunpack.c.h.b16 %v450
      %v2029 = vunpack.c.l.b16 %v451
      %v2030 = vunpack.c.h.b16 %v451
      %v2031 = vunpack.c.l.b16 %v452
      %v2032 = vunpack.c.h.b16 %v452
      %v2033 = vunpack.c.l.b16 %v453
      %v2034 = vunpack.c.h.b16 %v453
      %v2035 = vunpack.c.l.b16 %v454
      %v2036 = vunpack.c.h.b16 %v454
      %v2037 = vunpack.c.l.b16 %v455
      %v2038 = vunpack.c.h.b16 %v455
      %v2039 = vunpack.c.l.b16 %v456
      %v2040 = vunpack.c.h.b16 %v456
      %v2041 = vunpack.c.l.b16 %v457
      %v2042 = vunpack.c.h.b16 %v457
      %v2043 = vunpack.c.l.b16 %v458
      %v2044 = vunpack.c.h.b16 %v458
      %v2045 = vunpack.c.l.b16 %v459
      %v2046 = vunpack.c.h.b16 %v459
      %v2047 = vunpack.c.l.b16 %v460
      %v2048 = vunpack.c.h.b16 %v460
      %v2049 = vunpack.c.l.b16 %v461
      %v2050 = vunpack.c.h.b16 %v461
      %v2051 = vunpack.c.l.b16 %v462
      %v2052 = vunpack.c.h.b16 %v462
      %v2053 = vunpack.c.l.b16 %v463
      %v2054 = vunpack.c.h.b16 %v463
      %v2055 = vunpack.c.l.b16 %v464
      %v2056 = vunpack.c.h.b16 %v464
      %v2057 = vunpack.c.l.b16 %v465
      %v2058 = vunpack.c.h.b16 %v465
      %v2059 = vunpack.c.l.b16 %v466
      %v2060 = vunpack.c.h.b16 %v466
      %v2061 = vunpack.c.l.b16 %v467
      %v2062 = vunpack.c.h.b16 %v467
      %v2063 = vunpack.c.l.b16 %v468
      %v2064 = vunpack.c.h.b16 %v468
      %v2065 = vunpack.c.l.b16 %v469
      %v2066 = vunpack.c.h.b16 %v469
      %v2067 = vunpack.c.l.b16 %v470
      %v2068 = vunpack.c.h.b16 %v470
      %v2069 = vunpack.c.l.b16 %v471
      %v2070 = vunpack.c.h.b16 %v471
      %v2071 = vunpack.c.l.b16 %v472
      %v2072 = vunpack.c.h.b16 %v472
      %v2073 = vunpack.c.l.b16 %v473
      %v2074 = vunpack.c.h.b16 %v473
      %v2075 = vunpack.c.l.b16 %v474
      %v2076 = vunpack.c.h.b16 %v474
      %v2077 = vunpack.c.l.b16 %v475
      %v2078 = vunpack.c.h.b16 %v475
      %v2079 = vunpack.c.l.b16 %v476
      %v2080 = vunpack.c.h.b16 %v476
      %v2081 = vunpack.c.l.b16 %v477
      %v2082 = vunpack.c.h.b16 %v477
      %v2083 = vunpack.c.l.b16 %v478
      %v2084 = vunpack.c.h.b16 %v478
      %v2085 = vunpack.c.l.b16 %v479
      %v2086 = vunpack.c.h.b16 %v479
      %v2087 = vunpack.c.l.b16 %v480
      %v2088 = vunpack.c.h.b16 %v480
      %v2089 = vunpack.c.l.b16 %v481
      %v2090 = vunpack.c.h.b16 %v481
      %v2091 = vunpack.c.l.b16 %v482
      %v2092 = vunpack.c.h.b16 %v482
      %v2093 = vunpack.c.l.b16 %v483
      %v2094 = vunpack.c.h.b16 %v483
      %v2095 = vunpack.c.l.b16 %v484
      %v2096 = vunpack.c.h.b16 %v484
      %v2097 = vunpack.c.l.b16 %v485
      %v2098 = vunpack.c.h.b16 %v485
      %v2099 = vunpack.c.l.b16 %v486
      %v2100 = vunpack.c.h.b16 %v486
      %v2101 = vunpack.c.l.b16 %v487
      %v2102 = vunpack.c.h.b16 %v487
      %v2103 = vunpack.c.l.b16 %v488
      %v2104 = vunpack.c.h.b16 %v488
      %v2105 = vunpack.c.l.b16 %v489
      %v2106 = vunpack.c.h.b16 %v489
      %v2107 = vunpack.c.l.b16 %v490
      %v2108 = vunpack.c.h.b16 %v490
      %v2109 = vunpack.c.l.b16 %v491
      %v2110 = vunpack.c.h.b16 %v491
      %v2111 = vunpack.c.l.b16 %v492
      %v2112 = vunpack.c.h.b16 %v492
      %v2113 = vunpack.c.l.b16 %v493
      %v2114 = vunpack.c.h.b16 %v493
      %v2115 = vunpack.c.l.b16 %v494
      %v2116 = vunpack.c.h.b16 %v494
      %v2117 = vunpack.c.l.b16 %v495
      %v2118 = vunpack.c.h.b16 %v495
      %v2119 = vunpack.c.l.b16 %v496
      %v2120 = vunpack.c.h.b16 %v496
      %v2121 = vunpack.c.l.b16 %v497
      %v2122 = vunpack.c.h.b16 %v497
      %v2123 = vunpack.c.l.b16 %v498
      %v2124 = vunpack.c.h.b16 %v498
      %v2125 = vunpack.c.l.b16 %v499
      %v2126 = vunpack.c.h.b16 %v499
      %v2127 = vunpack.c.l.b16 %v500
      %v2128 = vunpack.c.h.b16 %v500
      %v2129 = vunpack.c.l.b16 %v501
      %v2130 = vunpack.c.h.b16 %v501
      %v2131 = vunpack.c.l.b16 %v502
      %v2132 = vunpack.c.h.b16 %v502
      %v2133 = vunpack.c.l.b16 %v503
      %v2134 = vunpack.c.h.b16 %v503
      %v2135 = vunpack.c.l.b16 %v504
      %v2136 = vunpack.c.h.b16 %v504
      %v2137 = vunpack.c.l.b16 %v505
      %v2138 = vunpack.c.h.b16 %v505
      %v2139 = vunpack.c.l.b16 %v506
      %v2140 = vunpack.c.h.b16 %v506
      %v2141 = vunpack.c.l.b16 %v507
      %v2142 = vunpack.c.h.b16 %v507
      %v2143 = vunpack.c.l.b16 %v508
      %v2144 = vunpack.c.h.b16 %v508
      %v2145 = vunpack.c.l.b16 %v509
      %v2146 = vunpack.c.h.b16 %v509
      %v2147 = vunpack.c.l.b16 %v510
      %v2148 = vunpack.c.h.b16 %v510
      %v2149 = vunpack.c.l.b16 %v511
      %v2150 = vunpack.c.h.b16 %v511
      %v2151 = vunpack.c.l.b16 %v512
      %v2152 = vunpack.c.h.b16 %v512
      %v2153 = vunpack.c.l.b16 %v513
      %v2154 = vunpack.c.h.b16 %v513
      %v2155 = vunpack.c.l.b16 %v514
      %v2156 = vunpack.c.h.b16 %v514
      %v2157 = vunpack.c.l.b16 %v515
      %v2158 = vunpack.c.h.b16 %v515
      %v2159 = vunpack.c.l.b16 %v516
      %v2160 = vunpack.c.h.b16 %v516
      %v2161 = vunpack.c.l.b16 %v517
      %v2162 = vunpack.c.h.b16 %v517
      %v2163 = vunpack.c.l.b16 %v518
      %v2164 = vunpack.c.h.b16 %v518
      %v2165 = vunpack.c.l.b16 %v519
      %v2166 = vunpack.c.h.b16 %v519
      %v2167 = vunpack.c.l.b16 %v520
      %v2168 = vunpack.c.h.b16 %v520
      %v2169 = vunpack.c.l.b16 %v521
      %v2170 = vunpack.c.h.b16 %v521
      %v2171 = vunpack.c.l.b16 %v522
      %v2172 = vunpack.c.h.b16 %v522
      %v2173 = vunpack.c.l.b16 %v523
      %v2174 = vunpack.c.h.b16 %v523
      %v2175 = vunpack.c.l.b16 %v524
      %v2176 = vunpack.c.h.b16 %v524
      %v2177 = vunpack.c.l.b16 %v525
      %v2178 = vunpack.c.h.b16 %v525
      %v2179 = vunpack.c.l.b16 %v526
      %v2180 = vunpack.c.h.b16 %v526
      %v2181 = vunpack.c.l.b16 %v527
      %v2182 = vunpack.c.h.b16 %v527
      %v2183 = vunpack.c.l.b16 %v528
      %v2184 = vunpack.c.h.b16 %v528
      %v2185 = vunpack.c.l.b16 %v529
      %v2186 = vunpack.c.h.b16 %v529
      %v2187 = vunpack.c.l.b16 %v530
      %v2188 = vunpack.c.h.b16 %v530
      %v2189 = vunpack.c.l.b16 %v531
      %v2190 = vunpack.c.h.b16 %v531
      %v2191 = vunpack.c.l.b16 %v532
      %v2192 = vunpack.c.h.b16 %v532
      %v2193 = vunpack.c.l.b16 %v533
      %v2194 = vunpack.c.h.b16 %v533
      %v2195 = vunpack.c.l.b16 %v534
      %v2196 = vunpack.c.h.b16 %v534
      %v2197 = vunpack.c.l.b16 %v535
      %v2198 = vunpack.c.h.b16 %v535
      %v2199 = vunpack.c.l.b16 %v536
      %v2200 = vunpack.c.h.b16 %v536
      %v2201 = vunpack.c.l.b16 %v537
      %v2202 = vunpack.c.h.b16 %v537
      %v2203 = vunpack.c.l.b16 %v538
      %v2204 = vunpack.c.h.b16 %v538
      %v2205 = vunpack.c.l.b16 %v539
      %v2206 = vunpack.c.h.b16 %v539
      %v2207 = vunpack.c.l.b16 %v540
      %v2208 = vunpack.c.h.b16 %v540
      %v2209 = vunpack.c.l.b16 %v541
      %v2210 = vunpack.c.h.b16 %v541
      %v2211 = vunpack.c.l.b16 %v542
      %v2212 = vunpack.c.h.b16 %v542
      %v2213 = vunpack.c.l.b16 %v543
      %v2214 = vunpack.c.h.b16 %v543
      %v2215 = vunpack.c.l.b16 %v544
      %v2216 = vunpack.c.h.b16 %v544
      %v2217 = vunpack.c.l.b16 %v545
      %v2218 = vunpack.c.h.b16 %v545
      %v2219 = vunpack.c.l.b16 %v546
      %v2220 = vunpack.c.h.b16 %v546
      %v2221 = vunpack.c.l.b16 %v547
      %v2222 = vunpack.c.h.b16 %v547
      %v2223 = vunpack.c.l.b16 %v548
      %v2224 = vunpack.c.h.b16 %v548
      %v2225 = vunpack.c.l.b16 %v549
      %v2226 = vunpack.c.h.b16 %v549
      %v2227 = vunpack.c.l.b16 %v550
      %v2228 = vunpack.c.h.b16 %v550
      %v2229 = vunpack.c.l.b16 %v551
      %v2230 = vunpack.c.h.b16 %v551
      %v2231 = vunpack.c.l.b16 %v552
      %v2232 = vunpack.c.h.b16 %v552
      %v2233 = vunpack.c.l.b16 %v553
      %v2234 = vunpack.c.h.b16 %v553
      %v2235 = vunpack.c.l.b16 %v554
      %v2236 = vunpack.c.h.b16 %v554
      %v2237 = vunpack.c.l.b16 %v555
      %v2238 = vunpack.c.h.b16 %v555
      %v2239 = vunpack.c.l.b16 %v556
      %v2240 = vunpack.c.h.b16 %v556
      %v2241 = vunpack.c.l.b16 %v557
      %v2242 = vunpack.c.h.b16 %v557
      %v2243 = vunpack.c.l.b16 %v558
      %v2244 = vunpack.c.h.b16 %v558
      %v2245 = vunpack.c.l.b16 %v559
      %v2246 = vunpack.c.h.b16 %v559
      %v2247 = vunpack.c.l.b16 %v560
      %v2248 = vunpack.c.h.b16 %v560
      %v2249 = vunpack.c.l.b16 %v561
      %v2250 = vunpack.c.h.b16 %v561
      %v2251 = vunpack.c.l.b16 %v562
      %v2252 = vunpack.c.h.b16 %v562
      %v2253 = vunpack.c.l.b16 %v563
      %v2254 = vunpack.c.h.b16 %v563
      %v2255 = vunpack.c.l.b16 %v564
      %v2256 = vunpack.c.h.b16 %v564
      %v2257 = vunpack.c.l.b16 %v565
      %v2258 = vunpack.c.h.b16 %v565
      %v2259 = vunpack.c.l.b16 %v566
      %v2260 = vunpack.c.h.b16 %v566
      %v2261 = vunpack.c.l.b16 %v567
      %v2262 = vunpack.c.h.b16 %v567
      %v2263 = vunpack.c.l.b16 %v568
      %v2264 = vunpack.c.h.b16 %v568
      %v2265 = vunpack.c.l.b16 %v569
      %v2266 = vunpack.c.h.b16 %v569
      %v2267 = vunpack.c.l.b16 %v570
      %v2268 = vunpack.c.h.b16 %v570
      %v2269 = vunpack.c.l.b16 %v571
      %v2270 = vunpack.c.h.b16 %v571
      %v2271 = vunpack.c.l.b16 %v572
      %v2272 = vunpack.c.h.b16 %v572
      %v2273 = vunpack.c.l.b16 %v573
      %v2274 = vunpack.c.h.b16 %v573
      %v2275 = vunpack.c.l.b16 %v574
      %v2276 = vunpack.c.h.b16 %v574
      %v2277 = vunpack.c.l.b16 %v575
      %v2278 = vunpack.c.h.b16 %v575
      %v2279 = vunpack.c.l.b16 %v576
      %v2280 = vunpack.c.h.b16 %v576
      %v2281 = vunpack.c.l.b16 %v577
      %v2282 = vunpack.c.h.b16 %v577
      %v2283 = vunpack.c.l.b16 %v578
      %v2284 = vunpack.c.h.b16 %v578
      %v2285 = vunpack.c.l.b16 %v579
      %v2286 = vunpack.c.h.b16 %v579
      %v2287 = vunpack.c.l.b16 %v580
      %v2288 = vunpack.c.h.b16 %v580
      %v2289 = vunpack.c.l.b16 %v581
      %v2290 = vunpack.c.h.b16 %v581
      %v2291 = vunpack.c.l.b16 %v582
      %v2292 = vunpack.c.h.b16 %v582
      %v2293 = vunpack.c.l.b16 %v583
      %v2294 = vunpack.c.h.b16 %v583
      %v2295 = vunpack.c.l.b16 %v584
      %v2296 = vunpack.c.h.b16 %v584
      %v2297 = vunpack.c.l.b16 %v585
      %v2298 = vunpack.c.h.b16 %v585
      %v2299 = vunpack.c.l.b16 %v586
      %v2300 = vunpack.c.h.b16 %v586
      %v2301 = vunpack.c.l.b16 %v587
      %v2302 = vunpack.c.h.b16 %v587
      %v2303 = vunpack.c.l.b16 %v588
      %v2304 = vunpack.c.h.b16 %v588
      %v2305 = vunpack.c.l.b16 %v589
      %v2306 = vunpack.c.h.b16 %v589
      %v2307 = vunpack.c.l.b16 %v590
      %v2308 = vunpack.c.h.b16 %v590
      %v2309 = vunpack.c.l.b16 %v591
      %v2310 = vunpack.c.h.b16 %v591
      %v2311 = vunpack.c.l.b16 %v592
      %v2312 = vunpack.c.h.b16 %v592
      %v2313 = vunpack.c.l.b16 %v593
      %v2314 = vunpack.c.h.b16 %v593
      %v2315 = vunpack.c.l.b16 %v594
      %v2316 = vunpack.c.h.b16 %v594
      %v2317 = vunpack.c.l.b16 %v595
      %v2318 = vunpack.c.h.b16 %v595
      %v2319 = vunpack.c.l.b16 %v596
      %v2320 = vunpack.c.h.b16 %v596
      %v2321 = vunpack.c.l.b16 %v597
      %v2322 = vunpack.c.h.b16 %v597
      %v2323 = vunpack.c.l.b16 %v598
      %v2324 = vunpack.c.h.b16 %v598
      %v2325 = vunpack.c.l.b16 %v599
      %v2326 = vunpack.c.h.b16 %v599
      %v2327 = vunpack.c.l.b16 %v600
      %v2328 = vunpack.c.h.b16 %v600
      %v2329 = vunpack.c.l.b16 %v601
      %v2330 = vunpack.c.h.b16 %v601
      %v2331 = vunpack.c.l.b16 %v602
      %v2332 = vunpack.c.h.b16 %v602
      %v2333 = vunpack.c.l.b16 %v603
      %v2334 = vunpack.c.h.b16 %v603
      %v2335 = vunpack.c.l.b16 %v604
      %v2336 = vunpack.c.h.b16 %v604
      %v2337 = vunpack.c.l.b16 %v605
      %v2338 = vunpack.c.h.b16 %v605
      %v2339 = vunpack.c.l.b16 %v606
      %v2340 = vunpack.c.h.b16 %v606
      %v2341 = vunpack.c.l.b16 %v607
      %v2342 = vunpack.c.h.b16 %v607
      %v2343 = vunpack.c.l.b16 %v608
      %v2344 = vunpack.c.h.b16 %v608
      %v2345 = vunpack.c.l.b16 %v609
      %v2346 = vunpack.c.h.b16 %v609
      %v2347 = vunpack.c.l.b16 %v610
      %v2348 = vunpack.c.h.b16 %v610
      %v2349 = vunpack.c.l.b16 %v611
      %v2350 = vunpack.c.h.b16 %v611
      %v2351 = vunpack.c.l.b16 %v612
      %v2352 = vunpack.c.h.b16 %v612
      %v2353 = vunpack.c.l.b16 %v613
      %v2354 = vunpack.c.h.b16 %v613
      %v2355 = vunpack.c.l.b16 %v614
      %v2356 = vunpack.c.h.b16 %v614
      %v2357 = vunpack.c.l.b16 %v615
      %v2358 = vunpack.c.h.b16 %v615
      %v2359 = vunpack.c.l.b16 %v616
      %v2360 = vunpack.c.h.b16 %v616
      %v2361 = vunpack.c.l.b16 %v617
      %v2362 = vunpack.c.h.b16 %v617
      %v2363 = vunpack.c.l.b16 %v618
      %v2364 = vunpack.c.h.b16 %v618
      %v2365 = vunpack.c.l.b16 %v619
      %v2366 = vunpack.c.h.b16 %v619
      %v2367 = vunpack.c.l.b16 %v620
      %v2368 = vunpack.c.h.b16 %v620
      %v2369 = vunpack.c.l.b16 %v621
      %v2370 = vunpack.c.h.b16 %v621
      %v2371 = vunpack.c.l.b16 %v622
      %v2372 = vunpack.c.h.b16 %v622
      %v2373 = vunpack.c.l.b16 %v623
      %v2374 = vunpack.c.h.b16 %v623
      %v2375 = vunpack.c.l.b16 %v624
      %v2376 = vunpack.c.h.b16 %v624
      %v2377 = vunpack.c.l.b16 %v625
      %v2378 = vunpack.c.h.b16 %v625
      %v2379 = vunpack.c.l.b16 %v626
      %v2380 = vunpack.c.h.b16 %v626
      %v2381 = vunpack.c.l.b16 %v627
      %v2382 = vunpack.c.h.b16 %v627
      %v2383 = vunpack.c.l.b16 %v628
      %v2384 = vunpack.c.h.b16 %v628
      %v2385 = vunpack.c.l.b16 %v629
      %v2386 = vunpack.c.h.b16 %v629
      %v2387 = vunpack.c.l.b16 %v630
      %v2388 = vunpack.c.h.b16 %v630
      %v2389 = vunpack.c.l.b16 %v631
      %v2390 = vunpack.c.h.b16 %v631
      %v2391 = vunpack.c.l.b16 %v632
      %v2392 = vunpack.c.h.b16 %v632
      %v2393 = vunpack.c.l.b16 %v633
      %v2394 = vunpack.c.h.b16 %v633
      %v2395 = vunpack.c.l.b16 %v634
      %v2396 = vunpack.c.h.b16 %v634
      %v2397 = vunpack.c.l.b16 %v635
      %v2398 = vunpack.c.h.b16 %v635
      %v2399 = vunpack.c.l.b16 %v636
      %v2400 = vunpack.c.h.b16 %v636
      %v2401 = vunpack.c.l.b16 %v637
      %v2402 = vunpack.c.h.b16 %v637
      %v2403 = vunpack.c.l.b16 %v638
      %v2404 = vunpack.c.h.b16 %v638
      %v2405 = vunpack.c.l.b16 %v639
      %v2406 = vunpack.c.h.b16 %v639
      %v2407 = vunpack.c.l.b16 %v640
      %v2408 = vunpack.c.h.b16 %v640
      %v2409 = vunpack.c.l.b16 %v641
      %v2410 = vunpack.c.h.b16 %v641
      %v2411 = vunpack.c.l.b16 %v642
      %v2412 = vunpack.c.h.b16 %v642
      %v2413 = vunpack.c.l.b16 %v643
      %v2414 = vunpack.c.h.b16 %v643
      %v2415 = vunpack.c.l.b16 %v644
      %v2416 = vunpack.c.h.b16 %v644
      %v2417 = vunpack.c.l.b16 %v645
      %v2418 = vunpack.c.h.b16 %v645
      %v2419 = vunpack.c.l.b16 %v646
      %v2420 = vunpack.c.h.b16 %v646
      %v2421 = vunpack.c.l.b16 %v647
      %v2422 = vunpack.c.h.b16 %v647
      %v2423 = vunpack.c.l.b16 %v648
      %v2424 = vunpack.c.h.b16 %v648
      %v2425 = vunpack.c.l.b16 %v649
      %v2426 = vunpack.c.h.b16 %v649
      %v2427 = vunpack.c.l.b16 %v650
      %v2428 = vunpack.c.h.b16 %v650
      %v2429 = vunpack.c.l.b16 %v651
      %v2430 = vunpack.c.h.b16 %v651
      %v2431 = vunpack.c.l.b16 %v652
      %v2432 = vunpack.c.h.b16 %v652
      %v2433 = vunpack.c.l.b16 %v653
      %v2434 = vunpack.c.h.b16 %v653
      %v2435 = vunpack.c.l.b16 %v654
      %v2436 = vunpack.c.h.b16 %v654
      %v2437 = vunpack.c.l.b16 %v655
      %v2438 = vunpack.c.h.b16 %v655
      %v2439 = vunpack.c.l.b16 %v656
      %v2440 = vunpack.c.h.b16 %v656
      %v2441 = vunpack.c.l.b16 %v657
      %v2442 = vunpack.c.h.b16 %v657
      %v2443 = vunpack.c.l.b16 %v658
      %v2444 = vunpack.c.h.b16 %v658
      %v2445 = vunpack.c.l.b16 %v659
      %v2446 = vunpack.c.h.b16 %v659
      %v2447 = vunpack.c.l.b16 %v660
      %v2448 = vunpack.c.h.b16 %v660
      %v2449 = vunpack.c.l.b16 %v661
      %v2450 = vunpack.c.h.b16 %v661
      %v2451 = vunpack.c.l.b16 %v662
      %v2452 = vunpack.c.h.b16 %v662
      %v2453 = vunpack.c.l.b16 %v663
      %v2454 = vunpack.c.h.b16 %v663
      %v2455 = vunpack.c.l.b16 %v664
      %v2456 = vunpack.c.h.b16 %v664
      %v2457 = vunpack.c.l.b16 %v665
      %v2458 = vunpack.c.h.b16 %v665
      %v2459 = vunpack.c.l.b16 %v666
      %v2460 = vunpack.c.h.b16 %v666
      %v2461 = vunpack.c.l.b16 %v667
      %v2462 = vunpack.c.h.b16 %v667
      %v2463 = vunpack.c.l.b16 %v668
      %v2464 = vunpack.c.h.b16 %v668
      %v2465 = vunpack.c.l.b16 %v669
      %v2466 = vunpack.c.h.b16 %v669
      %v2467 = vunpack.c.l.b16 %v670
      %v2468 = vunpack.c.h.b16 %v670
      %v2469 = vunpack.c.l.b16 %v671
      %v2470 = vunpack.c.h.b16 %v671
      %v2471 = vunpack.c.l.b16 %v672
      %v2472 = vunpack.c.h.b16 %v672
      %v2473 = vunpack.c.l.b16 %v673
      %v2474 = vunpack.c.h.b16 %v673
      %v2475 = vunpack.c.l.b16 %v674
      %v2476 = vunpack.c.h.b16 %v674
      %v2477 = vunpack.c.l.b16 %v675
      %v2478 = vunpack.c.h.b16 %v675
      %v2479 = vunpack.c.l.b16 %v676
      %v2480 = vunpack.c.h.b16 %v676
      %v2481 = vunpack.c.l.b16 %v677
      %v2482 = vunpack.c.h.b16 %v677
      %v2483 = vunpack.c.l.b16 %v678
      %v2484 = vunpack.c.h.b16 %v678
      %v2485 = vunpack.c.l.b16 %v679
      %v2486 = vunpack.c.h.b16 %v679
      %v2487 = vunpack.c.l.b16 %v680
      %v2488 = vunpack.c.h.b16 %v680
      %v2489 = vunpack.c.l.b16 %v681
      %v2490 = vunpack.c.h.b16 %v681
      %v2491 = vunpack.c.l.b16 %v682
      %v2492 = vunpack.c.h.b16 %v682
      %v2493 = vunpack.c.l.b16 %v683
      %v2494 = vunpack.c.h.b16 %v683
      %v2495 = vunpack.c.l.b16 %v684
      %v2496 = vunpack.c.h.b16 %v684
      %v2497 = vunpack.c.l.b16 %v685
      %v2498 = vunpack.c.h.b16 %v685
      %v2499 = vunpack.c.l.b16 %v686
      %v2500 = vunpack.c.h.b16 %v686
      %v2501 = vunpack.c.l.b16 %v687
      %v2502 = vunpack.c.h.b16 %v687
      %v2503 = vunpack.c.l.b16 %v688
      %v2504 = vunpack.c.h.b16 %v688
      %v2505 = vunpack.c.l.b16 %v689
      %v2506 = vunpack.c.h.b16 %v689
      %v2507 = vunpack.c.l.b16 %v690
      %v2508 = vunpack.c.h.b16 %v690
      %v2509 = vunpack.c.l.b16 %v691
      %v2510 = vunpack.c.h.b16 %v691
      %v2511 = vunpack.c.l.b16 %v692
      %v2512 = vunpack.c.h.b16 %v692
      %v2513 = vunpack.c.l.b16 %v693
      %v2514 = vunpack.c.h.b16 %v693
      %v2515 = vunpack.c.l.b16 %v694
      %v2516 = vunpack.c.h.b16 %v694
      %v2517 = vunpack.c.l.b16 %v695
      %v2518 = vunpack.c.h.b16 %v695
      %v2519 = vunpack.c.l.b16 %v696
      %v2520 = vunpack.c.h.b16 %v696
      %v2521 = vunpack.c.l.b16 %v697
      %v2522 = vunpack.c.h.b16 %v697
      %v2523 = vunpack.c.l.b16 %v698
      %v2524 = vunpack.c.h.b16 %v698
      %v2525 = vunpack.c.l.b16 %v699
      %v2526 = vunpack.c.h.b16 %v699
      %v2527 = vunpack.c.l.b16 %v700
      %v2528 = vunpack.c.h.b16 %v700
      %v2529 = vunpack.c.l.b16 %v701
      %v2530 = vunpack.c.h.b16 %v701
      %v2531 = vunpack.c.l.b16 %v702
      %v2532 = vunpack.c.h.b16 %v702
      %v2533 = vunpack.c.l.b16 %v703
      %v2534 = vunpack.c.h.b16 %v703
      %v2535 = vunpack.c.l.b16 %v704
      %v2536 = vunpack.c.h.b16 %v704
      %v2537 = vunpack.c.l.b16 %v705
      %v2538 = vunpack.c.h.b16 %v705
      %v2539 = vunpack.c.l.b16 %v706
      %v2540 = vunpack.c.h.b16 %v706
      %v2541 = vunpack.c.l.b16 %v707
      %v2542 = vunpack.c.h.b16 %v707
      %v2543 = vunpack.c.l.b16 %v708
      %v2544 = vunpack.c.h.b16 %v708
      %v2545 = vunpack.c.l.b16 %v709
      %v2546 = vunpack.c.h.b16 %v709
      %v2547 = vunpack.c.l.b16 %v710
      %v2548 = vunpack.c.h.b16 %v710
      %v2549 = vunpack.c.l.b16 %v711
      %v2550 = vunpack.c.h.b16 %v711
      %v2551 = vunpack.c.l.b16 %v712
      %v2552 = vunpack.c.h.b16 %v712
      %v2553 = vunpack.c.l.b16 %v713
      %v2554 = vunpack.c.h.b16 %v713
      %v2555 = vunpack.c.l.b16 %v714
      %v2556 = vunpack.c.h.b16 %v714
      %v2557 = vunpack.c.l.b16 %v715
      %v2558 = vunpack.c.h.b16 %v715
      %v2559 = vunpack.c.l.b16 %v716
      %v2560 = vunpack.c.h.b16 %v716
      %v2561 = vunpack.c.l.b16 %v717
      %v2562 = vunpack.c.h.b16 %v717
      %v2563 = vunpack.c.l.b16 %v718
      %v2564 = vunpack.c.h.b16 %v718
      %v2565 = vunpack.c.l.b16 %v719
      %v2566 = vunpack.c.h.b16 %v719
      %v2567 = vunpack.c.l.b16 %v720
      %v2568 = vunpack.c.h.b16 %v720
      %v2569 = vunpack.c.l.b16 %v721
      %v2570 = vunpack.c.h.b16 %v721
      %v2571 = vunpack.c.l.b16 %v722
      %v2572 = vunpack.c.h.b16 %v722
      %v2573 = vunpack.c.l.b16 %v723
      %v2574 = vunpack.c.h.b16 %v723
      %v2575 = vunpack.c.l.b16 %v724
      %v2576 = vunpack.c.h.b16 %v724
      %v2577 = vunpack.c.l.b16 %v725
      %v2578 = vunpack.c.h.b16 %v725
      %v2579 = vunpack.c.l.b16 %v726
      %v2580 = vunpack.c.h.b16 %v726
      %v2581 = vunpack.c.l.b16 %v727
      %v2582 = vunpack.c.h.b16 %v727
      %v2583 = vunpack.c.l.b16 %v728
      %v2584 = vunpack.c.h.b16 %v728
      %v2585 = vunpack.c.l.b16 %v729
      %v2586 = vunpack.c.h.b16 %v729
      %v2587 = vunpack.c.l.b16 %v730
      %v2588 = vunpack.c.h.b16 %v730
      %v2589 = vunpack.c.l.b16 %v731
      %v2590 = vunpack.c.h.b16 %v731
      %v2591 = vunpack.c.l.b16 %v732
      %v2592 = vunpack.c.h.b16 %v732
      %v2593 = vunpack.c.l.b16 %v733
      %v2594 = vunpack.c.h.b16 %v733
      %v2595 = vunpack.c.l.b16 %v734
      %v2596 = vunpack.c.h.b16 %v734
      %v2597 = vunpack.c.l.b16 %v735
      %v2598 = vunpack.c.h.b16 %v735
      %v2599 = vunpack.c.l.b16 %v736
      %v2600 = vunpack.c.h.b16 %v736
      %v2601 = vunpack.c.l.b16 %v737
      %v2602 = vunpack.c.h.b16 %v737
      %v2603 = vunpack.c.l.b16 %v738
      %v2604 = vunpack.c.h.b16 %v738
      %v2605 = vunpack.c.l.b16 %v739
      %v2606 = vunpack.c.h.b16 %v739
      %v2607 = vunpack.c.l.b16 %v740
      %v2608 = vunpack.c.h.b16 %v740
      %v2609 = vunpack.c.l.b16 %v741
      %v2610 = vunpack.c.h.b16 %v741
      %v2611 = vunpack.c.l.b16 %v742
      %v2612 = vunpack.c.h.b16 %v742
      %v2613 = vunpack.c.l.b16 %v743
      %v2614 = vunpack.c.h.b16 %v743
      %v2615 = vunpack.c.l.b16 %v744
      %v2616 = vunpack.c.h.b16 %v744
      %v2617 = vunpack.c.l.b16 %v745
      %v2618 = vunpack.c.h.b16 %v745
      %v2619 = vunpack.c.l.b16 %v746
      %v2620 = vunpack.c.h.b16 %v746
      %v2621 = vunpack.c.l.b16 %v747
      %v2622 = vunpack.c.h.b16 %v747
      %v2623 = vunpack.c.l.b16 %v748
      %v2624 = vunpack.c.h.b16 %v748
      %v2625 = vunpack.c.l.b16 %v749
      %v2626 = vunpack.c.h.b16 %v749
      %v2627 = vunpack.c.l.b16 %v750
      %v2628 = vunpack.c.h.b16 %v750
      %v2629 = vunpack.c.l.b16 %v751
      %v2630 = vunpack.c.h.b16 %v751
      %v2631 = vunpack.c.l.b16 %v752
      %v2632 = vunpack.c.h.b16 %v752
      %v2633 = vunpack.c.l.b16 %v753
      %v2634 = vunpack.c.h.b16 %v753
      %v2635 = vunpack.c.l.b16 %v754
      %v2636 = vunpack.c.h.b16 %v754
      %v2637 = vunpack.c.l.b16 %v755
      %v2638 = vunpack.c.h.b16 %v755
      %v2639 = vunpack.c.l.b16 %v756
      %v2640 = vunpack.c.h.b16 %v756
      %v2641 = vunpack.c.l.b16 %v757
      %v2642 = vunpack.c.h.b16 %v757
      %v2643 = vunpack.c.l.b16 %v758
      %v2644 = vunpack.c.h.b16 %v758
      %v2645 = vunpack.c.l.b16 %v759
      %v2646 = vunpack.c.h.b16 %v759
      %v2647 = vunpack.c.l.b16 %v760
      %v2648 = vunpack.c.h.b16 %v760
      %v2649 = vunpack.c.l.b16 %v761
      %v2650 = vunpack.c.h.b16 %v761
      %v2651 = vunpack.c.l.b16 %v762
      %v2652 = vunpack.c.h.b16 %v762
      %v2653 = vunpack.c.l.b16 %v763
      %v2654 = vunpack.c.h.b16 %v763
      %v2655 = vunpack.c.l.b16 %v764
      %v2656 = vunpack.c.h.b16 %v764
      %v2657 = vunpack.c.l.b16 %v765
      %v2658 = vunpack.c.h.b16 %v765
      %v2659 = vunpack.c.l.b16 %v766
      %v2660 = vunpack.c.h.b16 %v766
      %v2661 = vunpack.c.l.b16 %v767
      %v2662 = vunpack.c.h.b16 %v767
      %v2663 = vunpack.c.l.b16 %v768
      %v2664 = vunpack.c.h.b16 %v768
      %v2665 = vunpack.c.l.b16 %v769
      %v2666 = vunpack.c.h.b16 %v769
      %v2667 = vunpack.c.l.b16 %v770
      %v2668 = vunpack.c.h.b16 %v770
      %v2669 = vunpack.c.l.b16 %v771
      %v2670 = vunpack.c.h.b16 %v771
      %v2671 = vunpack.c.l.b16 %v772
      %v2672 = vunpack.c.h.b16 %v772
      %v2673 = vunpack.c.l.b16 %v773
      %v2674 = vunpack.c.h.b16 %v773
      %v2675 = vunpack.c.l.b16 %v774
      %v2676 = vunpack.c.h.b16 %v774
      %v2677 = vunpack.c.l.b16 %v775
      %v2678 = vunpack.c.h.b16 %v775
      %v2679 = vunpack.c.l.b16 %v776
      %v2680 = vunpack.c.h.b16 %v776
      %v2681 = vunpack.c.l.b16 %v777
      %v2682 = vunpack.c.h.b16 %v777
      %v2683 = vunpack.c.l.b16 %v778
      %v2684 = vunpack.c.h.b16 %v778
      %v2685 = vunpack.c.l.b16 %v779
      %v2686 = vunpack.c.h.b16 %v779
      %v2687 = vunpack.c.l.b16 %v780
      %v2688 = vunpack.c.h.b16 %v780
      %v2689 = vunpack.c.l.b16 %v781
      %v2690 = vunpack.c.h.b16 %v781
      %v2691 = vunpack.c.l.b16 %v782
      %v2692 = vunpack.c.h.b16 %v782
      %v2693 = vunpack.c.l.b16 %v783
      %v2694 = vunpack.c.h.b16 %v783
      %v2695 = vunpack.c.l.b16 %v784
      %v2696 = vunpack.c.h.b16 %v784
      %v2697 = vunpack.c.l.b16 %v785
      %v2698 = vunpack.c.h.b16 %v785
      %v2699 = vunpack.c.l.b16 %v786
      %v2700 = vunpack.c.h.b16 %v786
      %v2701 = vunpack.c.l.b16 %v787
      %v2702 = vunpack.c.h.b16 %v787
      %v2703 = vunpack.c.l.b16 %v788
      %v2704 = vunpack.c.h.b16 %v788
      %v2705 = vunpack.c.l.b16 %v789
      %v2706 = vunpack.c.h.b16 %v789
      %v2707 = vunpack.c.l.b16 %v790
      %v2708 = vunpack.c.h.b16 %v790
      %v2709 = vpack.c.b16 %v1561, %v1557
      %v2710 = vpack.c.b16 %v1562, %v1558
      %v2711 = vpack.c.b16 %v1563, %v1559
      %v2712 = vpack.c.b16 %v1564, %v1560
      %v2713 = vpack.c.b16 %v1569, %v1565
      %v2714 = vpack.c.b16 %v1570, %v1566
      %v2715 = vpack.c.b16 %v1571, %v1567
      %v2716 = vpack.c.b16 %v1572, %v1568
      %v2717 = vpack.c.b16 %v1577, %v1573
      %v2718 = vpack.c.b16 %v1578, %v1574
      %v2719 = vpack.c.b16 %v1579, %v1575
      %v2720 = vpack.c.b16 %v1580, %v1576
      %v2721 = vpack.c.b16 %v1585, %v1581
      %v2722 = vpack.c.b16 %v1586, %v1582
      %v2723 = vpack.c.b16 %v1587, %v1583
      %v2724 = vpack.c.b16 %v1588, %v1584
      %v2725 = vpack.c.b16 %v1593, %v1589
      %v2726 = vpack.c.b16 %v1594, %v1590
      %v2727 = vpack.c.b16 %v1595, %v1591
      %v2728 = vpack.c.b16 %v1596, %v1592
      %v2729 = vpack.c.b16 %v1601, %v1597
      %v2730 = vpack.c.b16 %v1602, %v1598
      %v2731 = vpack.c.b16 %v1603, %v1599
      %v2732 = vpack.c.b16 %v1604, %v1600
      %v2733 = vpack.c.b16 %v1609, %v1605
      %v2734 = vpack.c.b16 %v1610, %v1606
      %v2735 = vpack.c.b16 %v1611, %v1607
      %v2736 = vpack.c.b16 %v1612, %v1608
      %v2737 = vpack.c.b16 %v1617, %v1613
      %v2738 = vpack.c.b16 %v1618, %v1614
      %v2739 = vpack.c.b16 %v1619, %v1615
      %v2740 = vpack.c.b16 %v1620, %v1616
      %v2741 = vpack.c.b16 %v1625, %v1621
      %v2742 = vpack.c.b16 %v1626, %v1622
      %v2743 = vpack.c.b16 %v1627, %v1623
      %v2744 = vpack.c.b16 %v1628, %v1624
      %v2745 = vpack.c.b16 %v1633, %v1629
      %v2746 = vpack.c.b16 %v1634, %v1630
      %v2747 = vpack.c.b16 %v1635, %v1631
      %v2748 = vpack.c.b16 %v1636, %v1632
      %v2749 = vpack.c.b16 %v1641, %v1637
      %v2750 = vpack.c.b16 %v1642, %v1638
      %v2751 = vpack.c.b16 %v1643, %v1639
      %v2752 = vpack.c.b16 %v1644, %v1640
      %v2753 = vpack.c.b16 %v1649, %v1645
      %v2754 = vpack.c.b16 %v1650, %v1646
      %v2755 = vpack.c.b16 %v1651, %v1647
      %v2756 = vpack.c.b16 %v1652, %v1648
      %v2757 = vpack.c.b16 %v1657, %v1653
      %v2758 = vpack.c.b16 %v1658, %v1654
      %v2759 = vpack.c.b16 %v1659, %v1655
      %v2760 = vpack.c.b16 %v1660, %v1656
      %v2761 = vpack.c.b16 %v1665, %v1661
      %v2762 = vpack.c.b16 %v1666, %v1662
      %v2763 = vpack.c.b16 %v1667, %v1663
      %v2764 = vpack.c.b16 %v1668, %v1664
      %v2765 = vpack.c.b16 %v1673, %v1669
      %v2766 = vpack.c.b16 %v1674, %v1670
      %v2767 = vpack.c.b16 %v1675, %v1671
      %v2768 = vpack.c.b16 %v1676, %v1672
      %v2769 = vpack.c.b16 %v1681, %v1677
      %v2770 = vpack.c.b16 %v1682, %v1678
      %v2771 = vpack.c.b16 %v1683, %v1679
      %v2772 = vpack.c.b16 %v1684, %v1680
      %v2773 = vpack.c.b16 %v1689, %v1685
      %v2774 = vpack.c.b16 %v1690, %v1686
      %v2775 = vpack.c.b16 %v1691, %v1687
      %v2776 = vpack.c.b16 %v1692, %v1688
      %v2777 = vpack.c.b16 %v1697, %v1693
      %v2778 = vpack.c.b16 %v1698, %v1694
      %v2779 = vpack.c.b16 %v1699, %v1695
      %v2780 = vpack.c.b16 %v1700, %v1696
      %v2781 = vpack.c.b16 %v1705, %v1701
      %v2782 = vpack.c.b16 %v1706, %v1702
      %v2783 = vpack.c.b16 %v1707, %v1703
      %v2784 = vpack.c.b16 %v1708, %v1704
      %v2785 = vpack.c.b16 %v1713, %v1709
      %v2786 = vpack.c.b16 %v1714, %v1710
      %v2787 = vpack.c.b16 %v1715, %v1711
      %v2788 = vpack.c.b16 %v1716, %v1712
      %v2789 = vpack.c.b16 %v1721, %v1717
      %v2790 = vpack.c.b16 %v1722, %v1718
      %v2791 = vpack.c.b16 %v1723, %v1719
      %v2792 = vpack.c.b16 %v1724, %v1720
      %v2793 = vpack.c.b16 %v1729, %v1725
      %v2794 = vpack.c.b16 %v1730, %v1726
      %v2795 = vpack.c.b16 %v1731, %v1727
      %v2796 = vpack.c.b16 %v1732, %v1728
      %v2797 = vpack.c.b16 %v1737, %v1733
      %v2798 = vpack.c.b16 %v1738, %v1734
      %v2799 = vpack.c.b16 %v1739, %v1735
      %v2800 = vpack.c.b16 %v1740, %v1736
      %v2801 = vpack.c.b16 %v1745, %v1741
      %v2802 = vpack.c.b16 %v1746, %v1742
      %v2803 = vpack.c.b16 %v1747, %v1743
      %v2804 = vpack.c.b16 %v1748, %v1744
      %v2805 = vpack.c.b16 %v1753, %v1749
      %v2806 = vpack.c.b16 %v1754, %v1750
      %v2807 = vpack.c.b16 %v1755, %v1751
      %v2808 = vpack.c.b16 %v1756, %v1752
      %v2809 = vpack.c.b16 %v1761, %v1757
      %v2810 = vpack.c.b16 %v1762, %v1758
      %v2811 = vpack.c.b16 %v1763, %v1759
      %v2812 = vpack.c.b16 %v1764, %v1760
      %v2813 = vpack.c.b16 %v1769, %v1765
      %v2814 = vpack.c.b16 %v1770, %v1766
      %v2815 = vpack.c.b16 %v1771, %v1767
      %v2816 = vpack.c.b16 %v1772, %v1768
      %v2817 = vpack.c.b16 %v1777, %v1773
      %v2818 = vpack.c.b16 %v1778, %v1774
      %v2819 = vpack.c.b16 %v1779, %v1775
      %v2820 = vpack.c.b16 %v1780, %v1776
      %v2821 = vpack.c.b16 %v1785, %v1781
      %v2822 = vpack.c.b16 %v1786, %v1782
      %v2823 = vpack.c.b16 %v1787, %v1783
      %v2824 = vpack.c.b16 %v1788, %v1784
      %v2825 = vpack.c.b16 %v1793, %v1789
      %v2826 = vpack.c.b16 %v1794, %v1790
      %v2827 = vpack.c.b16 %v1795, %v1791
      %v2828 = vpack.c.b16 %v1796, %v1792
      %v2829 = vpack.c.b16 %v1801, %v1797
      %v2830 = vpack.c.b16 %v1802, %v1798
      %v2831 = vpack.c.b16 %v1803, %v1799
      %v2832 = vpack.c.b16 %v1804, %v1800
      %v2833 = vpack.c.b16 %v1809, %v1805
      %v2834 = vpack.c.b16 %v1810, %v1806
      %v2835 = vpack.c.b16 %v1811, %v1807
      %v2836 = vpack.c.b16 %v1812, %v1808
      %v2837 = vpack.c.b16 %v1817, %v1813
      %v2838 = vpack.c.b16 %v1818, %v1814
      %v2839 = vpack.c.b16 %v1819, %v1815
      %v2840 = vpack.c.b16 %v1820, %v1816
      %v2841 = vpack.c.b16 %v1825, %v1821
      %v2842 = vpack.c.b16 %v1826, %v1822
      %v2843 = vpack.c.b16 %v1827, %v1823
      %v2844 = vpack.c.b16 %v1828, %v1824
      %v2845 = vpack.c.b16 %v1833, %v1829
      %v2846 = vpack.c.b16 %v1834, %v1830
      %v2847 = vpack.c.b16 %v1835, %v1831
      %v2848 = vpack.c.b16 %v1836, %v1832
      %v2849 = vpack.c.b16 %v1841, %v1837
      %v2850 = vpack.c.b16 %v1842, %v1838
      %v2851 = vpack.c.b16 %v1843, %v1839
      %v2852 = vpack.c.b16 %v1844, %v1840
      %v2853 = vpack.c.b16 %v1849, %v1845
      %v2854 = vpack.c.b16 %v1850, %v1846
      %v2855 = vpack.c.b16 %v1851, %v1847
      %v2856 = vpack.c.b16 %v1852, %v1848
      %v2857 = vpack.c.b16 %v1857, %v1853
      %v2858 = vpack.c.b16 %v1858, %v1854
      %v2859 = vpack.c.b16 %v1859, %v1855
      %v2860 = vpack.c.b16 %v1860, %v1856
      %v2861 = vpack.c.b16 %v1865, %v1861
      %v2862 = vpack.c.b16 %v1866, %v1862
      %v2863 = vpack.c.b16 %v1867, %v1863
      %v2864 = vpack.c.b16 %v1868, %v1864
      %v2865 = vpack.c.b16 %v1873, %v1869
      %v2866 = vpack.c.b16 %v1874, %v1870
      %v2867 = vpack.c.b16 %v1875, %v1871
      %v2868 = vpack.c.b16 %v1876, %v1872
      %v2869 = vpack.c.b16 %v1881, %v1877
      %v2870 = vpack.c.b16 %v1882, %v1878
      %v2871 = vpack.c.b16 %v1883, %v1879
      %v2872 = vpack.c.b16 %v1884, %v1880
      %v2873 = vpack.c.b16 %v1889, %v1885
      %v2874 = vpack.c.b16 %v1890, %v1886
      %v2875 = vpack.c.b16 %v1891, %v1887
      %v2876 = vpack.c.b16 %v1892, %v1888
      %v2877 = vpack.c.b16 %v1897, %v1893
      %v2878 = vpack.c.b16 %v1898, %v1894
      %v2879 = vpack.c.b16 %v1899, %v1895
      %v2880 = vpack.c.b16 %v1900, %v1896
      %v2881 = vpack.c.b16 %v1905, %v1901
      %v2882 = vpack.c.b16 %v1906, %v1902
      %v2883 = vpack.c.b16 %v1907, %v1903
      %v2884 = vpack.c.b16 %v1908, %v1904
      %v2885 = vpack.c.b16 %v1913, %v1909
      %v2886 = vpack.c.b16 %v1914, %v1910
      %v2887 = vpack.c.b16 %v1915, %v1911
      %v2888 = vpack.c.b16 %v1916, %v1912
      %v2889 = vpack.c.b16 %v1921, %v1917
      %v2890 = vpack.c.b16 %v1922, %v1918
      %v2891 = vpack.c.b16 %v1923, %v1919
      %v2892 = vpack.c.b16 %v1924, %v1920
      %v2893 = vpack.c.b16 %v1929, %v1925
      %v2894 = vpack.c.b16 %v1930, %v1926
      %v2895 = vpack.c.b16 %v1931, %v1927
      %v2896 = vpack.c.b16 %v1932, %v1928
      %v2897 = vpack.c.b16 %v1937, %v1933
      %v2898 = vpack.c.b16 %v1938, %v1934
      %v2899 = vpack.c.b16 %v1939, %v1935
      %v2900 = vpack.c.b16 %v1940, %v1936
      %v2901 = vpack.c.b16 %v1945, %v1941
      %v2902 = vpack.c.b16 %v1946, %v1942
      %v2903 = vpack.c.b16 %v1947, %v1943
      %v2904 = vpack.c.b16 %v1948, %v1944
      %v2905 = vpack.c.b16 %v1953, %v1949
      %v2906 = vpack.c.b16 %v1954, %v1950
      %v2907 = vpack.c.b16 %v1955, %v1951
      %v2908 = vpack.c.b16 %v1956, %v1952
      %v2909 = vpack.c.b16 %v1961, %v1957
      %v2910 = vpack.c.b16 %v1962, %v1958
      %v2911 = vpack.c.b16 %v1963, %v1959
      %v2912 = vpack.c.b16 %v1964, %v1960
      %v2913 = vpack.c.b16 %v1969, %v1965
      %v2914 = vpack.c.b16 %v1970, %v1966
      %v2915 = vpack.c.b16 %v1971, %v1967
      %v2916 = vpack.c.b16 %v1972, %v1968
      %v2917 = vpack.c.b16 %v1977, %v1973
      %v2918 = vpack.c.b16 %v1978, %v1974
      %v2919 = vpack.c.b16 %v1979, %v1975
      %v2920 = vpack.c.b16 %v1980, %v1976
      %v2921 = vpack.c.b16 %v1985, %v1981
      %v2922 = vpack.c.b16 %v1986, %v1982
      %v2923 = vpack.c.b16 %v1987, %v1983
      %v2924 = vpack.c.b16 %v1988, %v1984
      %v2925 = vpack.c.b16 %v1993, %v1989
      %v2926 = vpack.c.b16 %v1994, %v1990
      %v2927 = vpack.c.b16 %v1995, %v1991
      %v2928 = vpack.c.b16 %v1996, %v1992
      %v2929 = vpack.c.b16 %v2001, %v1997
      %v2930 = vpack.c.b16 %v2002, %v1998
      %v2931 = vpack.c.b16 %v2003, %v1999
      %v2932 = vpack.c.b16 %v2004, %v2000
      %v2933 = vpack.c.b16 %v2009, %v2005
      %v2934 = vpack.c.b16 %v2010, %v2006
      %v2935 = vpack.c.b16 %v2011, %v2007
      %v2936 = vpack.c.b16 %v2012, %v2008
      %v2937 = vpack.c.b16 %v2017, %v2013
      %v2938 = vpack.c.b16 %v2018, %v2014
      %v2939 = vpack.c.b16 %v2019, %v2015
      %v2940 = vpack.c.b16 %v2020, %v2016
      %v2941 = vpack.c.b16 %v2025, %v2021
      %v2942 = vpack.c.b16 %v2026, %v2022
      %v2943 = vpack.c.b16 %v2027, %v2023
      %v2944 = vpack.c.b16 %v2028, %v2024
      %v2945 = vpack.c.b16 %v2033, %v2029
      %v2946 = vpack.c.b16 %v2034, %v2030
      %v2947 = vpack.c.b16 %v2035, %v2031
      %v2948 = vpack.c.b16 %v2036, %v2032
      %v2949 = vpack.c.b16 %v2041, %v2037
      %v2950 = vpack.c.b16 %v2042, %v2038
      %v2951 = vpack.c.b16 %v2043, %v2039
      %v2952 = vpack.c.b16 %v2044, %v2040
      %v2953 = vpack.c.b16 %v2049, %v2045
      %v2954 = vpack.c.b16 %v2050, %v2046
      %v2955 = vpack.c.b16 %v2051, %v2047
      %v2956 = vpack.c.b16 %v2052, %v2048
      %v2957 = vpack.c.b16 %v2057, %v2053
      %v2958 = vpack.c.b16 %v2058, %v2054
      %v2959 = vpack.c.b16 %v2059, %v2055
      %v2960 = vpack.c.b16 %v2060, %v2056
      %v2961 = vpack.c.b16 %v2065, %v2061
      %v2962 = vpack.c.b16 %v2066, %v2062
      %v2963 = vpack.c.b16 %v2067, %v2063
      %v2964 = vpack.c.b16 %v2068, %v2064
      %v2965 = vpack.c.b16 %v2073, %v2069
      %v2966 = vpack.c.b16 %v2074, %v2070
      %v2967 = vpack.c.b16 %v2075, %v2071
      %v2968 = vpack.c.b16 %v2076, %v2072
      %v2969 = vpack.c.b16 %v2081, %v2077
      %v2970 = vpack.c.b16 %v2082, %v2078
      %v2971 = vpack.c.b16 %v2083, %v2079
      %v2972 = vpack.c.b16 %v2084, %v2080
      %v2973 = vpack.c.b16 %v2089, %v2085
      %v2974 = vpack.c.b16 %v2090, %v2086
      %v2975 = vpack.c.b16 %v2091, %v2087
      %v2976 = vpack.c.b16 %v2092, %v2088
      %v2977 = vpack.c.b16 %v2097, %v2093
      %v2978 = vpack.c.b16 %v2098, %v2094
      %v2979 = vpack.c.b16 %v2099, %v2095
      %v2980 = vpack.c.b16 %v2100, %v2096
      %v2981 = vpack.c.b16 %v2105, %v2101
      %v2982 = vpack.c.b16 %v2106, %v2102
      %v2983 = vpack.c.b16 %v2107, %v2103
      %v2984 = vpack.c.b16 %v2108, %v2104
      %v2985 = vpack.c.b16 %v2113, %v2109
      %v2986 = vpack.c.b16 %v2114, %v2110
      %v2987 = vpack.c.b16 %v2115, %v2111
      %v2988 = vpack.c.b16 %v2116, %v2112
      %v2989 = vpack.c.b16 %v2121, %v2117
      %v2990 = vpack.c.b16 %v2122, %v2118
      %v2991 = vpack.c.b16 %v2123, %v2119
      %v2992 = vpack.c.b16 %v2124, %v2120
      %v2993 = vpack.c.b16 %v2129, %v2125
      %v2994 = vpack.c.b16 %v2130, %v2126
      %v2995 = vpack.c.b16 %v2131, %v2127
      %v2996 = vpack.c.b16 %v2132, %v2128
      %v2997 = vpack.c.b16 %v2137, %v2133
      %v2998 = vpack.c.b16 %v2138, %v2134
      %v2999 = vpack.c.b16 %v2139, %v2135
      %v3000 = vpack.c.b16 %v2140, %v2136
      %v3001 = vpack.c.b16 %v2145, %v2141
      %v3002 = vpack.c.b16 %v2146, %v2142
      %v3003 = vpack.c.b16 %v2147, %v2143
      %v3004 = vpack.c.b16 %v2148, %v2144
      %v3005 = vpack.c.b16 %v2153, %v2149
      %v3006 = vpack.c.b16 %v2154, %v2150
      %v3007 = vpack.c.b16 %v2155, %v2151
      %v3008 = vpack.c.b16 %v2156, %v2152
      %v3009 = vpack.c.b16 %v2161, %v2157
      %v3010 = vpack.c.b16 %v2162, %v2158
      %v3011 = vpack.c.b16 %v2163, %v2159
      %v3012 = vpack.c.b16 %v2164, %v2160
      %v3013 = vpack.c.b16 %v2169, %v2165
      %v3014 = vpack.c.b16 %v2170, %v2166
      %v3015 = vpack.c.b16 %v2171, %v2167
      %v3016 = vpack.c.b16 %v2172, %v2168
      %v3017 = vpack.c.b16 %v2177, %v2173
      %v3018 = vpack.c.b16 %v2178, %v2174
      %v3019 = vpack.c.b16 %v2179, %v2175
      %v3020 = vpack.c.b16 %v2180, %v2176
      %v3021 = vpack.c.b16 %v2185, %v2181
      %v3022 = vpack.c.b16 %v2186, %v2182
      %v3023 = vpack.c.b16 %v2187, %v2183
      %v3024 = vpack.c.b16 %v2188, %v2184
      %v3025 = vpack.c.b16 %v2193, %v2189
      %v3026 = vpack.c.b16 %v2194, %v2190
      %v3027 = vpack.c.b16 %v2195, %v2191
      %v3028 = vpack.c.b16 %v2196, %v2192
      %v3029 = vpack.c.b16 %v2201, %v2197
      %v3030 = vpack.c.b16 %v2202, %v2198
      %v3031 = vpack.c.b16 %v2203, %v2199
      %v3032 = vpack.c.b16 %v2204, %v2200
      %v3033 = vpack.c.b16 %v2209, %v2205
      %v3034 = vpack.c.b16 %v2210, %v2206
      %v3035 = vpack.c.b16 %v2211, %v2207
      %v3036 = vpack.c.b16 %v2212, %v2208
      %v3037 = vpack.c.b16 %v2217, %v2213
      %v3038 = vpack.c.b16 %v2218, %v2214
      %v3039 = vpack.c.b16 %v2219, %v2215
      %v3040 = vpack.c.b16 %v2220, %v2216
      %v3041 = vpack.c.b16 %v2225, %v2221
      %v3042 = vpack.c.b16 %v2226, %v2222
      %v3043 = vpack.c.b16 %v2227, %v2223
      %v3044 = vpack.c.b16 %v2228, %v2224
      %v3045 = vpack.c.b16 %v2233, %v2229
      %v3046 = vpack.c.b16 %v2234, %v2230
      %v3047 = vpack.c.b16 %v2235, %v2231
      %v3048 = vpack.c.b16 %v2236, %v2232
      %v3049 = vpack.c.b16 %v2241, %v2237
      %v3050 = vpack.c.b16 %v2242, %v2238
      %v3051 = vpack.c.b16 %v2243, %v2239
      %v3052 = vpack.c.b16 %v2244, %v2240
      %v3053 = vpack.c.b16 %v2249, %v2245
      %v3054 = vpack.c.b16 %v2250, %v2246
      %v3055 = vpack.c.b16 %v2251, %v2247
      %v3056 = vpack.c.b16 %v2252, %v2248
      %v3057 = vpack.c.b16 %v2257, %v2253
      %v3058 = vpack.c.b16 %v2258, %v2254
      %v3059 = vpack.c.b16 %v2259, %v2255
      %v3060 = vpack.c.b16 %v2260, %v2256
      %v3061 = vpack.c.b16 %v2265, %v2261
      %v3062 = vpack.c.b16 %v2266, %v2262
      %v3063 = vpack.c.b16 %v2267, %v2263
      %v3064 = vpack.c.b16 %v2268, %v2264
      %v3065 = vpack.c.b16 %v2273, %v2269
      %v3066 = vpack.c.b16 %v2274, %v2270
      %v3067 = vpack.c.b16 %v2275, %v2271
      %v3068 = vpack.c.b16 %v2276, %v2272
      %v3069 = vpack.c.b16 %v2281, %v2277
      %v3070 = vpack.c.b16 %v2282, %v2278
      %v3071 = vpack.c.b16 %v2283, %v2279
      %v3072 = vpack.c.b16 %v2284, %v2280
      %v3073 = vpack.c.b16 %v2289, %v2285
      %v3074 = vpack.c.b16 %v2290, %v2286
      %v3075 = vpack.c.b16 %v2291, %v2287
      %v3076 = vpack.c.b16 %v2292, %v2288
      %v3077 = vpack.c.b16 %v2297, %v2293
      %v3078 = vpack.c.b16 %v2298, %v2294
      %v3079 = vpack.c.b16 %v2299, %v2295
      %v3080 = vpack.c.b16 %v2300, %v2296
      %v3081 = vpack.c.b16 %v2305, %v2301
      %v3082 = vpack.c.b16 %v2306, %v2302
      %v3083 = vpack.c.b16 %v2307, %v2303
      %v3084 = vpack.c.b16 %v2308, %v2304
      %v3085 = vpack.c.b16 %v2313, %v2309
      %v3086 = vpack.c.b16 %v2314, %v2310
      %v3087 = vpack.c.b16 %v2315, %v2311
      %v3088 = vpack.c.b16 %v2316, %v2312
      %v3089 = vpack.c.b16 %v2321, %v2317
      %v3090 = vpack.c.b16 %v2322, %v2318
      %v3091 = vpack.c.b16 %v2323, %v2319
      %v3092 = vpack.c.b16 %v2324, %v2320
      %v3093 = vpack.c.b16 %v2329, %v2325
      %v3094 = vpack.c.b16 %v2330, %v2326
      %v3095 = vpack.c.b16 %v2331, %v2327
      %v3096 = vpack.c.b16 %v2332, %v2328
      %v3097 = vpack.c.b16 %v2337, %v2333
      %v3098 = vpack.c.b16 %v2338, %v2334
      %v3099 = vpack.c.b16 %v2339, %v2335
      %v3100 = vpack.c.b16 %v2340, %v2336
      %v3101 = vpack.c.b16 %v2345, %v2341
      %v3102 = vpack.c.b16 %v2346, %v2342
      %v3103 = vpack.c.b16 %v2347, %v2343
      %v3104 = vpack.c.b16 %v2348, %v2344
      %v3105 = vpack.c.b16 %v2353, %v2349
      %v3106 = vpack.c.b16 %v2354, %v2350
      %v3107 = vpack.c.b16 %v2355, %v2351
      %v3108 = vpack.c.b16 %v2356, %v2352
      %v3109 = vpack.c.b16 %v2361, %v2357
      %v3110 = vpack.c.b16 %v2362, %v2358
      %v3111 = vpack.c.b16 %v2363, %v2359
      %v3112 = vpack.c.b16 %v2364, %v2360
      %v3113 = vpack.c.b16 %v2369, %v2365
      %v3114 = vpack.c.b16 %v2370, %v2366
      %v3115 = vpack.c.b16 %v2371, %v2367
      %v3116 = vpack.c.b16 %v2372, %v2368
      %v3117 = vpack.c.b16 %v2377, %v2373
      %v3118 = vpack.c.b16 %v2378, %v2374
      %v3119 = vpack.c.b16 %v2379, %v2375
      %v3120 = vpack.c.b16 %v2380, %v2376
      %v3121 = vpack.c.b16 %v2385, %v2381
      %v3122 = vpack.c.b16 %v2386, %v2382
      %v3123 = vpack.c.b16 %v2387, %v2383
      %v3124 = vpack.c.b16 %v2388, %v2384
      %v3125 = vpack.c.b16 %v2393, %v2389
      %v3126 = vpack.c.b16 %v2394, %v2390
      %v3127 = vpack.c.b16 %v2395, %v2391
      %v3128 = vpack.c.b16 %v2396, %v2392
      %v3129 = vpack.c.b16 %v2401, %v2397
      %v3130 = vpack.c.b16 %v2402, %v2398
      %v3131 = vpack.c.b16 %v2403, %v2399
      %v3132 = vpack.c.b16 %v2404, %v2400
      %v3133 = vpack.c.b16 %v2409, %v2405
      %v3134 = vpack.c.b16 %v2410, %v2406
      %v3135 = vpack.c.b16 %v2411, %v2407
      %v3136 = vpack.c.b16 %v2412, %v2408
      %v3137 = vpack.c.b16 %v2417, %v2413
      %v3138 = vpack.c.b16 %v2418, %v2414
      %v3139 = vpack.c.b16 %v2419, %v2415
      %v3140 = vpack.c.b16 %v2420, %v2416
      %v3141 = vpack.c.b16 %v2425, %v2421
      %v3142 = vpack.c.b16 %v2426, %v2422
      %v3143 = vpack.c.b16 %v2427, %v2423
      %v3144 = vpack.c.b16 %v2428, %v2424
      %v3145 = vpack.c.b16 %v2433, %v2429
      %v3146 = vpack.c.b16 %v2434, %v2430
      %v3147 = vpack.c.b16 %v2435, %v2431
      %v3148 = vpack.c.b16 %v2436, %v2432
      %v3149 = vpack.c.b16 %v2441, %v2437
      %v3150 = vpack.c.b16 %v2442, %v2438
      %v3151 = vpack.c.b16 %v2443, %v2439
      %v3152 = vpack.c.b16 %v2444, %v2440
      %v3153 = vpack.c.b16 %v2449, %v2445
      %v3154 = vpack.c.b16 %v2450, %v2446
      %v3155 = vpack.c.b16 %v2451, %v2447
      %v3156 = vpack.c.b16 %v2452, %v2448
      %v3157 = vpack.c.b16 %v2457, %v2453
      %v3158 = vpack.c.b16 %v2458, %v2454
      %v3159 = vpack.c.b16 %v2459, %v2455
      %v3160 = vpack.c.b16 %v2460, %v2456
      %v3161 = vpack.c.b16 %v2465, %v2461
      %v3162 = vpack.c.b16 %v2466, %v2462
      %v3163 = vpack.c.b16 %v2467, %v2463
      %v3164 = vpack.c.b16 %v2468, %v2464
      %v3165 = vpack.c.b16 %v2473, %v2469
      %v3166 = vpack.c.b16 %v2474, %v2470
      %v3167 = vpack.c.b16 %v2475, %v2471
      %v3168 = vpack.c.b16 %v2476, %v2472
      %v3169 = vpack.c.b16 %v2481, %v2477
      %v3170 = vpack.c.b16 %v2482, %v2478
      %v3171 = vpack.c.b16 %v2483, %v2479
      %v3172 = vpack.c.b16 %v2484, %v2480
      %v3173 = vpack.c.b16 %v2489, %v2485
      %v3174 = vpack.c.b16 %v2490, %v2486
      %v3175 = vpack.c.b16 %v2491, %v2487
      %v3176 = vpack.c.b16 %v2492, %v2488
      %v3177 = vpack.c.b16 %v2497, %v2493
      %v3178 = vpack.c.b16 %v2498, %v2494
      %v3179 = vpack.c.b16 %v2499, %v2495
      %v3180 = vpack.c.b16 %v2500, %v2496
      %v3181 = vpack.c.b16 %v2505, %v2501
      %v3182 = vpack.c.b16 %v2506, %v2502
      %v3183 = vpack.c.b16 %v2507, %v2503
      %v3184 = vpack.c.b16 %v2508, %v2504
      %v3185 = vpack.c.b16 %v2513, %v2509
      %v3186 = vpack.c.b16 %v2514, %v2510
      %v3187 = vpack.c.b16 %v2515, %v2511
      %v3188 = vpack.c.b16 %v2516, %v2512
      %v3189 = vpack.c.b16 %v2521, %v2517
      %v3190 = vpack.c.b16 %v2522, %v2518
      %v3191 = vpack.c.b16 %v2523, %v2519
      %v3192 = vpack.c.b16 %v2524, %v2520
      %v3193 = vpack.c.b16 %v2529, %v2525
      %v3194 = vpack.c.b16 %v2530, %v2526
      %v3195 = vpack.c.b16 %v2531, %v2527
      %v3196 = vpack.c.b16 %v2532, %v2528
      %v3197 = vpack.c.b16 %v2537, %v2533
      %v3198 = vpack.c.b16 %v2538, %v2534
      %v3199 = vpack.c.b16 %v2539, %v2535
      %v3200 = vpack.c.b16 %v2540, %v2536
      %v3201 = vpack.c.b16 %v2545, %v2541
      %v3202 = vpack.c.b16 %v2546, %v2542
      %v3203 = vpack.c.b16 %v2547, %v2543
      %v3204 = vpack.c.b16 %v2548, %v2544
      %v3205 = vpack.c.b16 %v2553, %v2549
      %v3206 = vpack.c.b16 %v2554, %v2550
      %v3207 = vpack.c.b16 %v2555, %v2551
      %v3208 = vpack.c.b16 %v2556, %v2552
      %v3209 = vpack.c.b16 %v2561, %v2557
      %v3210 = vpack.c.b16 %v2562, %v2558
      %v3211 = vpack.c.b16 %v2563, %v2559
      %v3212 = vpack.c.b16 %v2564, %v2560
      %v3213 = vpack.c.b16 %v2569, %v2565
      %v3214 = vpack.c.b16 %v2570, %v2566
      %v3215 = vpack.c.b16 %v2571, %v2567
      %v3216 = vpack.c.b16 %v2572, %v2568
      %v3217 = vpack.c.b16 %v2577, %v2573
      %v3218 = vpack.c.b16 %v2578, %v2574
      %v3219 = vpack.c.b16 %v2579, %v2575
      %v3220 = vpack.c.b16 %v2580, %v2576
      %v3221 = vpack.c.b16 %v2585, %v2581
      %v3222 = vpack.c.b16 %v2586, %v2582
      %v3223 = vpack.c.b16 %v2587, %v2583
      %v3224 = vpack.c.b16 %v2588, %v2584
      %v3225 = vpack.c.b16 %v2593, %v2589
      %v3226 = vpack.c.b16 %v2594, %v2590
      %v3227 = vpack.c.b16 %v2595, %v2591
      %v3228 = vpack.c.b16 %v2596, %v2592
      %v3229 = vpack.c.b16 %v2601, %v2597
      %v3230 = vpack.c.b16 %v2602, %v2598
      %v3231 = vpack.c.b16 %v2603, %v2599
      %v3232 = vpack.c.b16 %v2604, %v2600
      %v3233 = vpack.c.b16 %v2609, %v2605
      %v3234 = vpack.c.b16 %v2610, %v2606
      %v3235 = vpack.c.b16 %v2611, %v2607
      %v3236 = vpack.c.b16 %v2612, %v2608
      %v3237 = vpack.c.b16 %v2617, %v2613
      %v3238 = vpack.c.b16 %v2618, %v2614
      %v3239 = vpack.c.b16 %v2619, %v2615
      %v3240 = vpack.c.b16 %v2620, %v2616
      %v3241 = vpack.c.b16 %v2625, %v2621
      %v3242 = vpack.c.b16 %v2626, %v2622
      %v3243 = vpack.c.b16 %v2627, %v2623
      %v3244 = vpack.c.b16 %v2628, %v2624
      %v3245 = vpack.c.b16 %v2633, %v2629
      %v3246 = vpack.c.b16 %v2634, %v2630
      %v3247 = vpack.c.b16 %v2635, %v2631
      %v3248 = vpack.c.b16 %v2636, %v2632
      %v3249 = vpack.c.b16 %v2641, %v2637
      %v3250 = vpack.c.b16 %v2642, %v2638
      %v3251 = vpack.c.b16 %v2643, %v2639
      %v3252 = vpack.c.b16 %v2644, %v2640
      %v3253 = vpack.c.b16 %v2649, %v2645
      %v3254 = vpack.c.b16 %v2650, %v2646
      %v3255 = vpack.c.b16 %v2651, %v2647
      %v3256 = vpack.c.b16 %v2652, %v2648
      %v3257 = vpack.c.b16 %v2657, %v2653
      %v3258 = vpack.c.b16 %v2658, %v2654
      %v3259 = vpack.c.b16 %v2659, %v2655
      %v3260 = vpack.c.b16 %v2660, %v2656
      %v3261 = vpack.c.b16 %v2665, %v2661
      %v3262 = vpack.c.b16 %v2666, %v2662
      %v3263 = vpack.c.b16 %v2667, %v2663
      %v3264 = vpack.c.b16 %v2668, %v2664
      %v3265 = vpack.c.b16 %v2673, %v2669
      %v3266 = vpack.c.b16 %v2674, %v2670
      %v3267 = vpack.c.b16 %v2675, %v2671
      %v3268 = vpack.c.b16 %v2676, %v2672
      %v3269 = vpack.c.b16 %v2681, %v2677
      %v3270 = vpack.c.b16 %v2682, %v2678
      %v3271 = vpack.c.b16 %v2683, %v2679
      %v3272 = vpack.c.b16 %v2684, %v2680
      %v3273 = vpack.c.b16 %v2689, %v2685
      %v3274 = vpack.c.b16 %v2690, %v2686
      %v3275 = vpack.c.b16 %v2691, %v2687
      %v3276 = vpack.c.b16 %v2692, %v2688
      %v3277 = vpack.c.b16 %v2697, %v2693
      %v3278 = vpack.c.b16 %v2698, %v2694
      %v3279 = vpack.c.b16 %v2699, %v2695
      %v3280 = vpack.c.b16 %v2700, %v2696
      %v3281 = vpack.c.b16 %v2705, %v2701
      %v3282 = vpack.c.b16 %v2706, %v2702
      %v3283 = vpack.c.b16 %v2707, %v2703
      %v3284 = vpack.c.b16 %v2708, %v2704
      %3861 = vmatpush.bf16.msra.mxu0 %v2737
      %3862 = vmatpush.bf16.msra.mxu0 %v2733
      %3863 = vmatpush.bf16.msra.mxu0 %v2729
      %3864 = vmatpush.bf16.msra.mxu0 %v2725
      %3865 = vmatpush.bf16.msra.mxu0 %v2721
      %3866 = vmatpush.bf16.msra.mxu0 %v2717
      %3867 = vmatpush.bf16.msra.mxu0 %v2713
      %3868 = vmatpush.bf16.msra.mxu0 %v2709
      %3869 = vmatmul.bf16.gmra.mxu0 %v909
      %v3870 = vpop.f32.mrf.mxu0
      %v3871 = vadd.f32 %v793, %v3870
      %v3872 = vpop.f32.mrf.mxu0
      %v3873 = vadd.f32 %v793, %v3872
      %3874 = vmatmul.bf16.gmra.mxu0 %v927
      %v3875 = vpop.f32.mrf.mxu0
      %v3876 = vadd.f32 %v793, %v3875
      %v3877 = vpop.f32.mrf.mxu0
      %v3878 = vadd.f32 %v793, %v3877
      %3879 = vdwg.mxu0
      %3880 = vmatpush.bf16.msra.mxu0 %v2769
      %3881 = vmatpush.bf16.msra.mxu0 %v2765
      %3882 = vmatpush.bf16.msra.mxu0 %v2761
      %3883 = vmatpush.bf16.msra.mxu0 %v2757
      %3884 = vmatpush.bf16.msra.mxu0 %v2753
      %3885 = vmatpush.bf16.msra.mxu0 %v2749
      %3886 = vmatpush.bf16.msra.mxu0 %v2745
      %3887 = vmatpush.bf16.msra.mxu0 %v2741
      %3888 = vmatmul.bf16.gmra.mxu0 %v910
      %v3889 = vpop.f32.mrf.mxu0
      %v3890 = vadd.f32 %v3871, %v3889
      %v3891 = vpop.f32.mrf.mxu0
      %v3892 = vadd.f32 %v3873, %v3891
      %3893 = vmatmul.bf16.gmra.mxu0 %v928
      %v3894 = vpop.f32.mrf.mxu0
      %v3895 = vadd.f32 %v3876, %v3894
      %v3896 = vpop.f32.mrf.mxu0
      %v3897 = vadd.f32 %v3878, %v3896
      %3898 = vdwg.mxu0
      %3899 = vmatpush.bf16.msra.mxu0 %v2801
      %3900 = vmatpush.bf16.msra.mxu0 %v2797
      %3901 = vmatpush.bf16.msra.mxu0 %v2793
      %3902 = vmatpush.bf16.msra.mxu0 %v2789
      %3903 = vmatpush.bf16.msra.mxu0 %v2785
      %3904 = vmatpush.bf16.msra.mxu0 %v2781
      %3905 = vmatpush.bf16.msra.mxu0 %v2777
      %3906 = vmatpush.bf16.msra.mxu0 %v2773
      %3907 = vmatmul.bf16.gmra.mxu0 %v911
      %v3908 = vpop.f32.mrf.mxu0
      %v3909 = vadd.f32 %v3890, %v3908
      %v3910 = vpop.f32.mrf.mxu0
      %v3911 = vadd.f32 %v3892, %v3910
      %3912 = vmatmul.bf16.gmra.mxu0 %v929
      %v3913 = vpop.f32.mrf.mxu0
      %v3914 = vadd.f32 %v3895, %v3913
      %v3915 = vpop.f32.mrf.mxu0
      %v3916 = vadd.f32 %v3897, %v3915
      %3917 = vdwg.mxu0
      %3918 = vmatpush.bf16.msra.mxu0 %v2833
      %3919 = vmatpush.bf16.msra.mxu0 %v2829
      %3920 = vmatpush.bf16.msra.mxu0 %v2825
      %3921 = vmatpush.bf16.msra.mxu0 %v2821
      %3922 = vmatpush.bf16.msra.mxu0 %v2817
      %3923 = vmatpush.bf16.msra.mxu0 %v2813
      %3924 = vmatpush.bf16.msra.mxu0 %v2809
      %3925 = vmatpush.bf16.msra.mxu0 %v2805
      %3926 = vmatmul.bf16.gmra.mxu0 %v912
      %v3927 = vpop.f32.mrf.mxu0
      %v3928 = vadd.f32 %v3909, %v3927
      %v3929 = vpop.f32.mrf.mxu0
      %v3930 = vadd.f32 %v3911, %v3929
      %3931 = vmatmul.bf16.gmra.mxu0 %v930
      %v3932 = vpop.f32.mrf.mxu0
      %v3933 = vadd.f32 %v3914, %v3932
      %v3934 = vpop.f32.mrf.mxu0
      %v3935 = vadd.f32 %v3916, %v3934
      %3936 = vdwg.mxu0
      %3937 = vmatpush.bf16.msra.mxu0 %v2865
      %3938 = vmatpush.bf16.msra.mxu0 %v2861
      %3939 = vmatpush.bf16.msra.mxu0 %v2857
      %3940 = vmatpush.bf16.msra.mxu0 %v2853
      %3941 = vmatpush.bf16.msra.mxu0 %v2849
      %3942 = vmatpush.bf16.msra.mxu0 %v2845
      %3943 = vmatpush.bf16.msra.mxu0 %v2841
      %3944 = vmatpush.bf16.msra.mxu0 %v2837
      %3945 = vmatmul.bf16.gmra.mxu0 %v913
      %v3946 = vpop.f32.mrf.mxu0
      %v3947 = vadd.f32 %v3928, %v3946
      %v3948 = vpop.f32.mrf.mxu0
      %v3949 = vadd.f32 %v3930, %v3948
      %3950 = vmatmul.bf16.gmra.mxu0 %v931
      %v3951 = vpop.f32.mrf.mxu0
      %v3952 = vadd.f32 %v3933, %v3951
      %v3953 = vpop.f32.mrf.mxu0
      %v3954 = vadd.f32 %v3935, %v3953
      %3955 = vdwg.mxu0
      %3956 = vmatpush.bf16.msra.mxu0 %v2897
      %3957 = vmatpush.bf16.msra.mxu0 %v2893
      %3958 = vmatpush.bf16.msra.mxu0 %v2889
      %3959 = vmatpush.bf16.msra.mxu0 %v2885
      %3960 = vmatpush.bf16.msra.mxu0 %v2881
      %3961 = vmatpush.bf16.msra.mxu0 %v2877
      %3962 = vmatpush.bf16.msra.mxu0 %v2873
      %3963 = vmatpush.bf16.msra.mxu0 %v2869
      %3964 = vmatmul.bf16.gmra.mxu0 %v914
      %v3965 = vpop.f32.mrf.mxu0
      %v3966 = vadd.f32 %v3947, %v3965
      %v3967 = vpop.f32.mrf.mxu0
      %v3968 = vadd.f32 %v3949, %v3967
      %3969 = vmatmul.bf16.gmra.mxu0 %v932
      %v3970 = vpop.f32.mrf.mxu0
      %v3971 = vadd.f32 %v3952, %v3970
      %v3972 = vpop.f32.mrf.mxu0
      %v3973 = vadd.f32 %v3954, %v3972
      %3974 = vdwg.mxu0
      %3975 = vmatpush.bf16.msra.mxu0 %v2929
      %3976 = vmatpush.bf16.msra.mxu0 %v2925
      %3977 = vmatpush.bf16.msra.mxu0 %v2921
      %3978 = vmatpush.bf16.msra.mxu0 %v2917
      %3979 = vmatpush.bf16.msra.mxu0 %v2913
      %3980 = vmatpush.bf16.msra.mxu0 %v2909
      %3981 = vmatpush.bf16.msra.mxu0 %v2905
      %3982 = vmatpush.bf16.msra.mxu0 %v2901
      %3983 = vmatmul.bf16.gmra.mxu0 %v915
      %v3984 = vpop.f32.mrf.mxu0
      %v3985 = vadd.f32 %v3966, %v3984
      %v3986 = vpop.f32.mrf.mxu0
      %v3987 = vadd.f32 %v3968, %v3986
      %3988 = vmatmul.bf16.gmra.mxu0 %v933
      %v3989 = vpop.f32.mrf.mxu0
      %v3990 = vadd.f32 %v3971, %v3989
      %v3991 = vpop.f32.mrf.mxu0
      %v3992 = vadd.f32 %v3973, %v3991
      %3993 = vdwg.mxu0
      %3994 = vmatpush.bf16.msra.mxu0 %v2961
      %3995 = vmatpush.bf16.msra.mxu0 %v2957
      %3996 = vmatpush.bf16.msra.mxu0 %v2953
      %3997 = vmatpush.bf16.msra.mxu0 %v2949
      %3998 = vmatpush.bf16.msra.mxu0 %v2945
      %3999 = vmatpush.bf16.msra.mxu0 %v2941
      %4000 = vmatpush.bf16.msra.mxu0 %v2937
      %4001 = vmatpush.bf16.msra.mxu0 %v2933
      %4002 = vmatmul.bf16.gmra.mxu0 %v916
      %v4003 = vpop.f32.mrf.mxu0
      %v4004 = vadd.f32 %v3985, %v4003
      %v4005 = vpop.f32.mrf.mxu0
      %v4006 = vadd.f32 %v3987, %v4005
      %4007 = vmatmul.bf16.gmra.mxu0 %v934
      %v4008 = vpop.f32.mrf.mxu0
      %v4009 = vadd.f32 %v3990, %v4008
      %v4010 = vpop.f32.mrf.mxu0
      %v4011 = vadd.f32 %v3992, %v4010
      %4012 = vdwg.mxu0
      %4013 = vmatpush.bf16.msra.mxu0 %v2993
      %4014 = vmatpush.bf16.msra.mxu0 %v2989
      %4015 = vmatpush.bf16.msra.mxu0 %v2985
      %4016 = vmatpush.bf16.msra.mxu0 %v2981
      %4017 = vmatpush.bf16.msra.mxu0 %v2977
      %4018 = vmatpush.bf16.msra.mxu0 %v2973
      %4019 = vmatpush.bf16.msra.mxu0 %v2969
      %4020 = vmatpush.bf16.msra.mxu0 %v2965
      %4021 = vmatmul.bf16.gmra.mxu0 %v917
      %v4022 = vpop.f32.mrf.mxu0
      %v4023 = vadd.f32 %v4004, %v4022
      %v4024 = vpop.f32.mrf.mxu0
      %v4025 = vadd.f32 %v4006, %v4024
      %4026 = vmatmul.bf16.gmra.mxu0 %v935
      %v4027 = vpop.f32.mrf.mxu0
      %v4028 = vadd.f32 %v4009, %v4027
      %v4029 = vpop.f32.mrf.mxu0
      %v4030 = vadd.f32 %v4011, %v4029
      %4031 = vdwg.mxu0
      %4032 = vmatpush.bf16.msra.mxu0 %v3025
      %4033 = vmatpush.bf16.msra.mxu0 %v3021
      %4034 = vmatpush.bf16.msra.mxu0 %v3017
      %4035 = vmatpush.bf16.msra.mxu0 %v3013
      %4036 = vmatpush.bf16.msra.mxu0 %v3009
      %4037 = vmatpush.bf16.msra.mxu0 %v3005
      %4038 = vmatpush.bf16.msra.mxu0 %v3001
      %4039 = vmatpush.bf16.msra.mxu0 %v2997
      %4040 = vmatmul.bf16.gmra.mxu0 %v918
      %v4041 = vpop.f32.mrf.mxu0
      %v4042 = vadd.f32 %v4023, %v4041
      %v4043 = vpop.f32.mrf.mxu0
      %v4044 = vadd.f32 %v4025, %v4043
      %4045 = vmatmul.bf16.gmra.mxu0 %v936
      %v4046 = vpop.f32.mrf.mxu0
      %v4047 = vadd.f32 %v4028, %v4046
      %v4048 = vpop.f32.mrf.mxu0
      %v4049 = vadd.f32 %v4030, %v4048
      %4050 = vdwg.mxu0
      %4051 = vmatpush.bf16.msra.mxu0 %v3057
      %4052 = vmatpush.bf16.msra.mxu0 %v3053
      %4053 = vmatpush.bf16.msra.mxu0 %v3049
      %4054 = vmatpush.bf16.msra.mxu0 %v3045
      %4055 = vmatpush.bf16.msra.mxu0 %v3041
      %4056 = vmatpush.bf16.msra.mxu0 %v3037
      %4057 = vmatpush.bf16.msra.mxu0 %v3033
      %4058 = vmatpush.bf16.msra.mxu0 %v3029
      %4059 = vmatmul.bf16.gmra.mxu0 %v919
      %v4060 = vpop.f32.mrf.mxu0
      %v4061 = vadd.f32 %v4042, %v4060
      %v4062 = vpop.f32.mrf.mxu0
      %v4063 = vadd.f32 %v4044, %v4062
      %4064 = vmatmul.bf16.gmra.mxu0 %v937
      %v4065 = vpop.f32.mrf.mxu0
      %v4066 = vadd.f32 %v4047, %v4065
      %v4067 = vpop.f32.mrf.mxu0
      %v4068 = vadd.f32 %v4049, %v4067
      %4069 = vdwg.mxu0
      %4070 = vmatpush.bf16.msra.mxu0 %v3089
      %4071 = vmatpush.bf16.msra.mxu0 %v3085
      %4072 = vmatpush.bf16.msra.mxu0 %v3081
      %4073 = vmatpush.bf16.msra.mxu0 %v3077
      %4074 = vmatpush.bf16.msra.mxu0 %v3073
      %4075 = vmatpush.bf16.msra.mxu0 %v3069
      %4076 = vmatpush.bf16.msra.mxu0 %v3065
      %4077 = vmatpush.bf16.msra.mxu0 %v3061
      %4078 = vmatmul.bf16.gmra.mxu0 %v920
      %v4079 = vpop.f32.mrf.mxu0
      %v4080 = vadd.f32 %v4061, %v4079
      %v4081 = vpop.f32.mrf.mxu0
      %v4082 = vadd.f32 %v4063, %v4081
      %4083 = vmatmul.bf16.gmra.mxu0 %v938
      %v4084 = vpop.f32.mrf.mxu0
      %v4085 = vadd.f32 %v4066, %v4084
      %v4086 = vpop.f32.mrf.mxu0
      %v4087 = vadd.f32 %v4068, %v4086
      %4088 = vdwg.mxu0
      %4089 = vmatpush.bf16.msra.mxu0 %v3121
      %4090 = vmatpush.bf16.msra.mxu0 %v3117
      %4091 = vmatpush.bf16.msra.mxu0 %v3113
      %4092 = vmatpush.bf16.msra.mxu0 %v3109
      %4093 = vmatpush.bf16.msra.mxu0 %v3105
      %4094 = vmatpush.bf16.msra.mxu0 %v3101
      %4095 = vmatpush.bf16.msra.mxu0 %v3097
      %4096 = vmatpush.bf16.msra.mxu0 %v3093
      %4097 = vmatmul.bf16.gmra.mxu0 %v921
      %v4098 = vpop.f32.mrf.mxu0
      %v4099 = vadd.f32 %v4080, %v4098
      %v4100 = vpop.f32.mrf.mxu0
      %v4101 = vadd.f32 %v4082, %v4100
      %4102 = vmatmul.bf16.gmra.mxu0 %v939
      %v4103 = vpop.f32.mrf.mxu0
      %v4104 = vadd.f32 %v4085, %v4103
      %v4105 = vpop.f32.mrf.mxu0
      %v4106 = vadd.f32 %v4087, %v4105
      %4107 = vdwg.mxu0
      %4108 = vmatpush.bf16.msra.mxu0 %v3153
      %4109 = vmatpush.bf16.msra.mxu0 %v3149
      %4110 = vmatpush.bf16.msra.mxu0 %v3145
      %4111 = vmatpush.bf16.msra.mxu0 %v3141
      %4112 = vmatpush.bf16.msra.mxu0 %v3137
      %4113 = vmatpush.bf16.msra.mxu0 %v3133
      %4114 = vmatpush.bf16.msra.mxu0 %v3129
      %4115 = vmatpush.bf16.msra.mxu0 %v3125
      %4116 = vmatmul.bf16.gmra.mxu0 %v922
      %v4117 = vpop.f32.mrf.mxu0
      %v4118 = vadd.f32 %v4099, %v4117
      %v4119 = vpop.f32.mrf.mxu0
      %v4120 = vadd.f32 %v4101, %v4119
      %4121 = vmatmul.bf16.gmra.mxu0 %v940
      %v4122 = vpop.f32.mrf.mxu0
      %v4123 = vadd.f32 %v4104, %v4122
      %v4124 = vpop.f32.mrf.mxu0
      %v4125 = vadd.f32 %v4106, %v4124
      %4126 = vdwg.mxu0
      %4127 = vmatpush.bf16.msra.mxu0 %v3185
      %4128 = vmatpush.bf16.msra.mxu0 %v3181
      %4129 = vmatpush.bf16.msra.mxu0 %v3177
      %4130 = vmatpush.bf16.msra.mxu0 %v3173
      %4131 = vmatpush.bf16.msra.mxu0 %v3169
      %4132 = vmatpush.bf16.msra.mxu0 %v3165
      %4133 = vmatpush.bf16.msra.mxu0 %v3161
      %4134 = vmatpush.bf16.msra.mxu0 %v3157
      %4135 = vmatmul.bf16.gmra.mxu0 %v923
      %v4136 = vpop.f32.mrf.mxu0
      %v4137 = vadd.f32 %v4118, %v4136
      %v4138 = vpop.f32.mrf.mxu0
      %v4139 = vadd.f32 %v4120, %v4138
      %4140 = vmatmul.bf16.gmra.mxu0 %v941
      %v4141 = vpop.f32.mrf.mxu0
      %v4142 = vadd.f32 %v4123, %v4141
      %v4143 = vpop.f32.mrf.mxu0
      %v4144 = vadd.f32 %v4125, %v4143
      %4145 = vdwg.mxu0
      %4146 = vmatpush.bf16.msra.mxu0 %v3217
      %4147 = vmatpush.bf16.msra.mxu0 %v3213
      %4148 = vmatpush.bf16.msra.mxu0 %v3209
      %4149 = vmatpush.bf16.msra.mxu0 %v3205
      %4150 = vmatpush.bf16.msra.mxu0 %v3201
      %4151 = vmatpush.bf16.msra.mxu0 %v3197
      %4152 = vmatpush.bf16.msra.mxu0 %v3193
      %4153 = vmatpush.bf16.msra.mxu0 %v3189
      %4154 = vmatmul.bf16.gmra.mxu0 %v924
      %v4155 = vpop.f32.mrf.mxu0
      %v4156 = vadd.f32 %v4137, %v4155
      %v4157 = vpop.f32.mrf.mxu0
      %v4158 = vadd.f32 %v4139, %v4157
      %4159 = vmatmul.bf16.gmra.mxu0 %v942
      %v4160 = vpop.f32.mrf.mxu0
      %v4161 = vadd.f32 %v4142, %v4160
      %v4162 = vpop.f32.mrf.mxu0
      %v4163 = vadd.f32 %v4144, %v4162
      %4164 = vdwg.mxu0
      %4165 = vmatpush.bf16.msra.mxu0 %v3249
      %4166 = vmatpush.bf16.msra.mxu0 %v3245
      %4167 = vmatpush.bf16.msra.mxu0 %v3241
      %4168 = vmatpush.bf16.msra.mxu0 %v3237
      %4169 = vmatpush.bf16.msra.mxu0 %v3233
      %4170 = vmatpush.bf16.msra.mxu0 %v3229
      %4171 = vmatpush.bf16.msra.mxu0 %v3225
      %4172 = vmatpush.bf16.msra.mxu0 %v3221
      %4173 = vmatmul.bf16.gmra.mxu0 %v925
      %v4174 = vpop.f32.mrf.mxu0
      %v4175 = vadd.f32 %v4156, %v4174
      %v4176 = vpop.f32.mrf.mxu0
      %v4177 = vadd.f32 %v4158, %v4176
      %4178 = vmatmul.bf16.gmra.mxu0 %v943
      %v4179 = vpop.f32.mrf.mxu0
      %v4180 = vadd.f32 %v4161, %v4179
      %v4181 = vpop.f32.mrf.mxu0
      %v4182 = vadd.f32 %v4163, %v4181
      %4183 = vdwg.mxu0
      %4184 = vmatpush.bf16.msra.mxu0 %v3281
      %4185 = vmatpush.bf16.msra.mxu0 %v3277
      %4186 = vmatpush.bf16.msra.mxu0 %v3273
      %4187 = vmatpush.bf16.msra.mxu0 %v3269
      %4188 = vmatpush.bf16.msra.mxu0 %v3265
      %4189 = vmatpush.bf16.msra.mxu0 %v3261
      %4190 = vmatpush.bf16.msra.mxu0 %v3257
      %4191 = vmatpush.bf16.msra.mxu0 %v3253
      %4192 = vmatmul.bf16.gmra.mxu0 %v926
      %v4193 = vpop.f32.mrf.mxu0
      %v4194 = vadd.f32 %v4175, %v4193
      %v4195 = vpop.f32.mrf.mxu0
      %v4196 = vadd.f32 %v4177, %v4195
      %4197 = vmatmul.bf16.gmra.mxu0 %v944
      %v4198 = vpop.f32.mrf.mxu0
      %v4199 = vadd.f32 %v4180, %v4198
      %v4200 = vpop.f32.mrf.mxu0
      %v4201 = vadd.f32 %v4182, %v4200
      %4202 = vdwg.mxu0
      %4203 = vmatpush.bf16.msra.mxu0 %v2738
      %4204 = vmatpush.bf16.msra.mxu0 %v2734
      %4205 = vmatpush.bf16.msra.mxu0 %v2730
      %4206 = vmatpush.bf16.msra.mxu0 %v2726
      %4207 = vmatpush.bf16.msra.mxu0 %v2722
      %4208 = vmatpush.bf16.msra.mxu0 %v2718
      %4209 = vmatpush.bf16.msra.mxu0 %v2714
      %4210 = vmatpush.bf16.msra.mxu0 %v2710
      %4211 = vmatmul.bf16.gmra.mxu0 %v909
      %v4212 = vpop.f32.mrf.mxu0
      %v4213 = vadd.f32 %v794, %v4212
      %v4214 = vpop.f32.mrf.mxu0
      %v4215 = vadd.f32 %v794, %v4214
      %4216 = vmatmul.bf16.gmra.mxu0 %v927
      %v4217 = vpop.f32.mrf.mxu0
      %v4218 = vadd.f32 %v794, %v4217
      %v4219 = vpop.f32.mrf.mxu0
      %v4220 = vadd.f32 %v794, %v4219
      %4221 = vdwg.mxu0
      %4222 = vmatpush.bf16.msra.mxu0 %v2770
      %4223 = vmatpush.bf16.msra.mxu0 %v2766
      %4224 = vmatpush.bf16.msra.mxu0 %v2762
      %4225 = vmatpush.bf16.msra.mxu0 %v2758
      %4226 = vmatpush.bf16.msra.mxu0 %v2754
      %4227 = vmatpush.bf16.msra.mxu0 %v2750
      %4228 = vmatpush.bf16.msra.mxu0 %v2746
      %4229 = vmatpush.bf16.msra.mxu0 %v2742
      %4230 = vmatmul.bf16.gmra.mxu0 %v910
      %v4231 = vpop.f32.mrf.mxu0
      %v4232 = vadd.f32 %v4213, %v4231
      %v4233 = vpop.f32.mrf.mxu0
      %v4234 = vadd.f32 %v4215, %v4233
      %4235 = vmatmul.bf16.gmra.mxu0 %v928
      %v4236 = vpop.f32.mrf.mxu0
      %v4237 = vadd.f32 %v4218, %v4236
      %v4238 = vpop.f32.mrf.mxu0
      %v4239 = vadd.f32 %v4220, %v4238
      %4240 = vdwg.mxu0
      %4241 = vmatpush.bf16.msra.mxu0 %v2802
      %4242 = vmatpush.bf16.msra.mxu0 %v2798
      %4243 = vmatpush.bf16.msra.mxu0 %v2794
      %4244 = vmatpush.bf16.msra.mxu0 %v2790
      %4245 = vmatpush.bf16.msra.mxu0 %v2786
      %4246 = vmatpush.bf16.msra.mxu0 %v2782
      %4247 = vmatpush.bf16.msra.mxu0 %v2778
      %4248 = vmatpush.bf16.msra.mxu0 %v2774
      %4249 = vmatmul.bf16.gmra.mxu0 %v911
      %v4250 = vpop.f32.mrf.mxu0
      %v4251 = vadd.f32 %v4232, %v4250
      %v4252 = vpop.f32.mrf.mxu0
      %v4253 = vadd.f32 %v4234, %v4252
      %4254 = vmatmul.bf16.gmra.mxu0 %v929
      %v4255 = vpop.f32.mrf.mxu0
      %v4256 = vadd.f32 %v4237, %v4255
      %v4257 = vpop.f32.mrf.mxu0
      %v4258 = vadd.f32 %v4239, %v4257
      %4259 = vdwg.mxu0
      %4260 = vmatpush.bf16.msra.mxu0 %v2834
      %4261 = vmatpush.bf16.msra.mxu0 %v2830
      %4262 = vmatpush.bf16.msra.mxu0 %v2826
      %4263 = vmatpush.bf16.msra.mxu0 %v2822
      %4264 = vmatpush.bf16.msra.mxu0 %v2818
      %4265 = vmatpush.bf16.msra.mxu0 %v2814
      %4266 = vmatpush.bf16.msra.mxu0 %v2810
      %4267 = vmatpush.bf16.msra.mxu0 %v2806
      %4268 = vmatmul.bf16.gmra.mxu0 %v912
      %v4269 = vpop.f32.mrf.mxu0
      %v4270 = vadd.f32 %v4251, %v4269
      %v4271 = vpop.f32.mrf.mxu0
      %v4272 = vadd.f32 %v4253, %v4271
      %4273 = vmatmul.bf16.gmra.mxu0 %v930
      %v4274 = vpop.f32.mrf.mxu0
      %v4275 = vadd.f32 %v4256, %v4274
      %v4276 = vpop.f32.mrf.mxu0
      %v4277 = vadd.f32 %v4258, %v4276
      %4278 = vdwg.mxu0
      %4279 = vmatpush.bf16.msra.mxu0 %v2866
      %4280 = vmatpush.bf16.msra.mxu0 %v2862
      %4281 = vmatpush.bf16.msra.mxu0 %v2858
      %4282 = vmatpush.bf16.msra.mxu0 %v2854
      %4283 = vmatpush.bf16.msra.mxu0 %v2850
      %4284 = vmatpush.bf16.msra.mxu0 %v2846
      %4285 = vmatpush.bf16.msra.mxu0 %v2842
      %4286 = vmatpush.bf16.msra.mxu0 %v2838
      %4287 = vmatmul.bf16.gmra.mxu0 %v913
      %v4288 = vpop.f32.mrf.mxu0
      %v4289 = vadd.f32 %v4270, %v4288
      %v4290 = vpop.f32.mrf.mxu0
      %v4291 = vadd.f32 %v4272, %v4290
      %4292 = vmatmul.bf16.gmra.mxu0 %v931
      %v4293 = vpop.f32.mrf.mxu0
      %v4294 = vadd.f32 %v4275, %v4293
      %v4295 = vpop.f32.mrf.mxu0
      %v4296 = vadd.f32 %v4277, %v4295
      %4297 = vdwg.mxu0
      %4298 = vmatpush.bf16.msra.mxu0 %v2898
      %4299 = vmatpush.bf16.msra.mxu0 %v2894
      %4300 = vmatpush.bf16.msra.mxu0 %v2890
      %4301 = vmatpush.bf16.msra.mxu0 %v2886
      %4302 = vmatpush.bf16.msra.mxu0 %v2882
      %4303 = vmatpush.bf16.msra.mxu0 %v2878
      %4304 = vmatpush.bf16.msra.mxu0 %v2874
      %4305 = vmatpush.bf16.msra.mxu0 %v2870
      %4306 = vmatmul.bf16.gmra.mxu0 %v914
      %v4307 = vpop.f32.mrf.mxu0
      %v4308 = vadd.f32 %v4289, %v4307
      %v4309 = vpop.f32.mrf.mxu0
      %v4310 = vadd.f32 %v4291, %v4309
      %4311 = vmatmul.bf16.gmra.mxu0 %v932
      %v4312 = vpop.f32.mrf.mxu0
      %v4313 = vadd.f32 %v4294, %v4312
      %v4314 = vpop.f32.mrf.mxu0
      %v4315 = vadd.f32 %v4296, %v4314
      %4316 = vdwg.mxu0
      %4317 = vmatpush.bf16.msra.mxu0 %v2930
      %4318 = vmatpush.bf16.msra.mxu0 %v2926
      %4319 = vmatpush.bf16.msra.mxu0 %v2922
      %4320 = vmatpush.bf16.msra.mxu0 %v2918
      %4321 = vmatpush.bf16.msra.mxu0 %v2914
      %4322 = vmatpush.bf16.msra.mxu0 %v2910
      %4323 = vmatpush.bf16.msra.mxu0 %v2906
      %4324 = vmatpush.bf16.msra.mxu0 %v2902
      %4325 = vmatmul.bf16.gmra.mxu0 %v915
      %v4326 = vpop.f32.mrf.mxu0
      %v4327 = vadd.f32 %v4308, %v4326
      %v4328 = vpop.f32.mrf.mxu0
      %v4329 = vadd.f32 %v4310, %v4328
      %4330 = vmatmul.bf16.gmra.mxu0 %v933
      %v4331 = vpop.f32.mrf.mxu0
      %v4332 = vadd.f32 %v4313, %v4331
      %v4333 = vpop.f32.mrf.mxu0
      %v4334 = vadd.f32 %v4315, %v4333
      %4335 = vdwg.mxu0
      %4336 = vmatpush.bf16.msra.mxu0 %v2962
      %4337 = vmatpush.bf16.msra.mxu0 %v2958
      %4338 = vmatpush.bf16.msra.mxu0 %v2954
      %4339 = vmatpush.bf16.msra.mxu0 %v2950
      %4340 = vmatpush.bf16.msra.mxu0 %v2946
      %4341 = vmatpush.bf16.msra.mxu0 %v2942
      %4342 = vmatpush.bf16.msra.mxu0 %v2938
      %4343 = vmatpush.bf16.msra.mxu0 %v2934
      %4344 = vmatmul.bf16.gmra.mxu0 %v916
      %v4345 = vpop.f32.mrf.mxu0
      %v4346 = vadd.f32 %v4327, %v4345
      %v4347 = vpop.f32.mrf.mxu0
      %v4348 = vadd.f32 %v4329, %v4347
      %4349 = vmatmul.bf16.gmra.mxu0 %v934
      %v4350 = vpop.f32.mrf.mxu0
      %v4351 = vadd.f32 %v4332, %v4350
      %v4352 = vpop.f32.mrf.mxu0
      %v4353 = vadd.f32 %v4334, %v4352
      %4354 = vdwg.mxu0
      %4355 = vmatpush.bf16.msra.mxu0 %v2994
      %4356 = vmatpush.bf16.msra.mxu0 %v2990
      %4357 = vmatpush.bf16.msra.mxu0 %v2986
      %4358 = vmatpush.bf16.msra.mxu0 %v2982
      %4359 = vmatpush.bf16.msra.mxu0 %v2978
      %4360 = vmatpush.bf16.msra.mxu0 %v2974
      %4361 = vmatpush.bf16.msra.mxu0 %v2970
      %4362 = vmatpush.bf16.msra.mxu0 %v2966
      %4363 = vmatmul.bf16.gmra.mxu0 %v917
      %v4364 = vpop.f32.mrf.mxu0
      %v4365 = vadd.f32 %v4346, %v4364
      %v4366 = vpop.f32.mrf.mxu0
      %v4367 = vadd.f32 %v4348, %v4366
      %4368 = vmatmul.bf16.gmra.mxu0 %v935
      %v4369 = vpop.f32.mrf.mxu0
      %v4370 = vadd.f32 %v4351, %v4369
      %v4371 = vpop.f32.mrf.mxu0
      %v4372 = vadd.f32 %v4353, %v4371
      %4373 = vdwg.mxu0
      %4374 = vmatpush.bf16.msra.mxu0 %v3026
      %4375 = vmatpush.bf16.msra.mxu0 %v3022
      %4376 = vmatpush.bf16.msra.mxu0 %v3018
      %4377 = vmatpush.bf16.msra.mxu0 %v3014
      %4378 = vmatpush.bf16.msra.mxu0 %v3010
      %4379 = vmatpush.bf16.msra.mxu0 %v3006
      %4380 = vmatpush.bf16.msra.mxu0 %v3002
      %4381 = vmatpush.bf16.msra.mxu0 %v2998
      %4382 = vmatmul.bf16.gmra.mxu0 %v918
      %v4383 = vpop.f32.mrf.mxu0
      %v4384 = vadd.f32 %v4365, %v4383
      %v4385 = vpop.f32.mrf.mxu0
      %v4386 = vadd.f32 %v4367, %v4385
      %4387 = vmatmul.bf16.gmra.mxu0 %v936
      %v4388 = vpop.f32.mrf.mxu0
      %v4389 = vadd.f32 %v4370, %v4388
      %v4390 = vpop.f32.mrf.mxu0
      %v4391 = vadd.f32 %v4372, %v4390
      %4392 = vdwg.mxu0
      %4393 = vmatpush.bf16.msra.mxu0 %v3058
      %4394 = vmatpush.bf16.msra.mxu0 %v3054
      %4395 = vmatpush.bf16.msra.mxu0 %v3050
      %4396 = vmatpush.bf16.msra.mxu0 %v3046
      %4397 = vmatpush.bf16.msra.mxu0 %v3042
      %4398 = vmatpush.bf16.msra.mxu0 %v3038
      %4399 = vmatpush.bf16.msra.mxu0 %v3034
      %4400 = vmatpush.bf16.msra.mxu0 %v3030
      %4401 = vmatmul.bf16.gmra.mxu0 %v919
      %v4402 = vpop.f32.mrf.mxu0
      %v4403 = vadd.f32 %v4384, %v4402
      %v4404 = vpop.f32.mrf.mxu0
      %v4405 = vadd.f32 %v4386, %v4404
      %4406 = vmatmul.bf16.gmra.mxu0 %v937
      %v4407 = vpop.f32.mrf.mxu0
      %v4408 = vadd.f32 %v4389, %v4407
      %v4409 = vpop.f32.mrf.mxu0
      %v4410 = vadd.f32 %v4391, %v4409
      %4411 = vdwg.mxu0
      %4412 = vmatpush.bf16.msra.mxu0 %v3090
      %4413 = vmatpush.bf16.msra.mxu0 %v3086
      %4414 = vmatpush.bf16.msra.mxu0 %v3082
      %4415 = vmatpush.bf16.msra.mxu0 %v3078
      %4416 = vmatpush.bf16.msra.mxu0 %v3074
      %4417 = vmatpush.bf16.msra.mxu0 %v3070
      %4418 = vmatpush.bf16.msra.mxu0 %v3066
      %4419 = vmatpush.bf16.msra.mxu0 %v3062
      %4420 = vmatmul.bf16.gmra.mxu0 %v920
      %v4421 = vpop.f32.mrf.mxu0
      %v4422 = vadd.f32 %v4403, %v4421
      %v4423 = vpop.f32.mrf.mxu0
      %v4424 = vadd.f32 %v4405, %v4423
      %4425 = vmatmul.bf16.gmra.mxu0 %v938
      %v4426 = vpop.f32.mrf.mxu0
      %v4427 = vadd.f32 %v4408, %v4426
      %v4428 = vpop.f32.mrf.mxu0
      %v4429 = vadd.f32 %v4410, %v4428
      %4430 = vdwg.mxu0
      %4431 = vmatpush.bf16.msra.mxu0 %v3122
      %4432 = vmatpush.bf16.msra.mxu0 %v3118
      %4433 = vmatpush.bf16.msra.mxu0 %v3114
      %4434 = vmatpush.bf16.msra.mxu0 %v3110
      %4435 = vmatpush.bf16.msra.mxu0 %v3106
      %4436 = vmatpush.bf16.msra.mxu0 %v3102
      %4437 = vmatpush.bf16.msra.mxu0 %v3098
      %4438 = vmatpush.bf16.msra.mxu0 %v3094
      %4439 = vmatmul.bf16.gmra.mxu0 %v921
      %v4440 = vpop.f32.mrf.mxu0
      %v4441 = vadd.f32 %v4422, %v4440
      %v4442 = vpop.f32.mrf.mxu0
      %v4443 = vadd.f32 %v4424, %v4442
      %4444 = vmatmul.bf16.gmra.mxu0 %v939
      %v4445 = vpop.f32.mrf.mxu0
      %v4446 = vadd.f32 %v4427, %v4445
      %v4447 = vpop.f32.mrf.mxu0
      %v4448 = vadd.f32 %v4429, %v4447
      %4449 = vdwg.mxu0
      %4450 = vmatpush.bf16.msra.mxu0 %v3154
      %4451 = vmatpush.bf16.msra.mxu0 %v3150
      %4452 = vmatpush.bf16.msra.mxu0 %v3146
      %4453 = vmatpush.bf16.msra.mxu0 %v3142
      %4454 = vmatpush.bf16.msra.mxu0 %v3138
      %4455 = vmatpush.bf16.msra.mxu0 %v3134
      %4456 = vmatpush.bf16.msra.mxu0 %v3130
      %4457 = vmatpush.bf16.msra.mxu0 %v3126
      %4458 = vmatmul.bf16.gmra.mxu0 %v922
      %v4459 = vpop.f32.mrf.mxu0
      %v4460 = vadd.f32 %v4441, %v4459
      %v4461 = vpop.f32.mrf.mxu0
      %v4462 = vadd.f32 %v4443, %v4461
      %4463 = vmatmul.bf16.gmra.mxu0 %v940
      %v4464 = vpop.f32.mrf.mxu0
      %v4465 = vadd.f32 %v4446, %v4464
      %v4466 = vpop.f32.mrf.mxu0
      %v4467 = vadd.f32 %v4448, %v4466
      %4468 = vdwg.mxu0
      %4469 = vmatpush.bf16.msra.mxu0 %v3186
      %4470 = vmatpush.bf16.msra.mxu0 %v3182
      %4471 = vmatpush.bf16.msra.mxu0 %v3178
      %4472 = vmatpush.bf16.msra.mxu0 %v3174
      %4473 = vmatpush.bf16.msra.mxu0 %v3170
      %4474 = vmatpush.bf16.msra.mxu0 %v3166
      %4475 = vmatpush.bf16.msra.mxu0 %v3162
      %4476 = vmatpush.bf16.msra.mxu0 %v3158
      %4477 = vmatmul.bf16.gmra.mxu0 %v923
      %v4478 = vpop.f32.mrf.mxu0
      %v4479 = vadd.f32 %v4460, %v4478
      %v4480 = vpop.f32.mrf.mxu0
      %v4481 = vadd.f32 %v4462, %v4480
      %4482 = vmatmul.bf16.gmra.mxu0 %v941
      %v4483 = vpop.f32.mrf.mxu0
      %v4484 = vadd.f32 %v4465, %v4483
      %v4485 = vpop.f32.mrf.mxu0
      %v4486 = vadd.f32 %v4467, %v4485
      %4487 = vdwg.mxu0
      %4488 = vmatpush.bf16.msra.mxu0 %v3218
      %4489 = vmatpush.bf16.msra.mxu0 %v3214
      %4490 = vmatpush.bf16.msra.mxu0 %v3210
      %4491 = vmatpush.bf16.msra.mxu0 %v3206
      %4492 = vmatpush.bf16.msra.mxu0 %v3202
      %4493 = vmatpush.bf16.msra.mxu0 %v3198
      %4494 = vmatpush.bf16.msra.mxu0 %v3194
      %4495 = vmatpush.bf16.msra.mxu0 %v3190
      %4496 = vmatmul.bf16.gmra.mxu0 %v924
      %v4497 = vpop.f32.mrf.mxu0
      %v4498 = vadd.f32 %v4479, %v4497
      %v4499 = vpop.f32.mrf.mxu0
      %v4500 = vadd.f32 %v4481, %v4499
      %4501 = vmatmul.bf16.gmra.mxu0 %v942
      %v4502 = vpop.f32.mrf.mxu0
      %v4503 = vadd.f32 %v4484, %v4502
      %v4504 = vpop.f32.mrf.mxu0
      %v4505 = vadd.f32 %v4486, %v4504
      %4506 = vdwg.mxu0
      %4507 = vmatpush.bf16.msra.mxu0 %v3250
      %4508 = vmatpush.bf16.msra.mxu0 %v3246
      %4509 = vmatpush.bf16.msra.mxu0 %v3242
      %4510 = vmatpush.bf16.msra.mxu0 %v3238
      %4511 = vmatpush.bf16.msra.mxu0 %v3234
      %4512 = vmatpush.bf16.msra.mxu0 %v3230
      %4513 = vmatpush.bf16.msra.mxu0 %v3226
      %4514 = vmatpush.bf16.msra.mxu0 %v3222
      %4515 = vmatmul.bf16.gmra.mxu0 %v925
      %v4516 = vpop.f32.mrf.mxu0
      %v4517 = vadd.f32 %v4498, %v4516
      %v4518 = vpop.f32.mrf.mxu0
      %v4519 = vadd.f32 %v4500, %v4518
      %4520 = vmatmul.bf16.gmra.mxu0 %v943
      %v4521 = vpop.f32.mrf.mxu0
      %v4522 = vadd.f32 %v4503, %v4521
      %v4523 = vpop.f32.mrf.mxu0
      %v4524 = vadd.f32 %v4505, %v4523
      %4525 = vdwg.mxu0
      %4526 = vmatpush.bf16.msra.mxu0 %v3282
      %4527 = vmatpush.bf16.msra.mxu0 %v3278
      %4528 = vmatpush.bf16.msra.mxu0 %v3274
      %4529 = vmatpush.bf16.msra.mxu0 %v3270
      %4530 = vmatpush.bf16.msra.mxu0 %v3266
      %4531 = vmatpush.bf16.msra.mxu0 %v3262
      %4532 = vmatpush.bf16.msra.mxu0 %v3258
      %4533 = vmatpush.bf16.msra.mxu0 %v3254
      %4534 = vmatmul.bf16.gmra.mxu0 %v926
      %v4535 = vpop.f32.mrf.mxu0
      %v4536 = vadd.f32 %v4517, %v4535
      %v4537 = vpop.f32.mrf.mxu0
      %v4538 = vadd.f32 %v4519, %v4537
      %4539 = vmatmul.bf16.gmra.mxu0 %v944
      %v4540 = vpop.f32.mrf.mxu0
      %v4541 = vadd.f32 %v4522, %v4540
      %v4542 = vpop.f32.mrf.mxu0
      %v4543 = vadd.f32 %v4524, %v4542
      %4544 = vdwg.mxu0
      %4545 = vmatpush.bf16.msra.mxu0 %v2739
      %4546 = vmatpush.bf16.msra.mxu0 %v2735
      %4547 = vmatpush.bf16.msra.mxu0 %v2731
      %4548 = vmatpush.bf16.msra.mxu0 %v2727
      %4549 = vmatpush.bf16.msra.mxu0 %v2723
      %4550 = vmatpush.bf16.msra.mxu0 %v2719
      %4551 = vmatpush.bf16.msra.mxu0 %v2715
      %4552 = vmatpush.bf16.msra.mxu0 %v2711
      %4553 = vmatmul.bf16.gmra.mxu0 %v909
      %v4554 = vpop.f32.mrf.mxu0
      %v4555 = vadd.f32 %v795, %v4554
      %v4556 = vpop.f32.mrf.mxu0
      %v4557 = vadd.f32 %v795, %v4556
      %4558 = vmatmul.bf16.gmra.mxu0 %v927
      %v4559 = vpop.f32.mrf.mxu0
      %v4560 = vadd.f32 %v795, %v4559
      %v4561 = vpop.f32.mrf.mxu0
      %v4562 = vadd.f32 %v795, %v4561
      %4563 = vdwg.mxu0
      %4564 = vmatpush.bf16.msra.mxu0 %v2771
      %4565 = vmatpush.bf16.msra.mxu0 %v2767
      %4566 = vmatpush.bf16.msra.mxu0 %v2763
      %4567 = vmatpush.bf16.msra.mxu0 %v2759
      %4568 = vmatpush.bf16.msra.mxu0 %v2755
      %4569 = vmatpush.bf16.msra.mxu0 %v2751
      %4570 = vmatpush.bf16.msra.mxu0 %v2747
      %4571 = vmatpush.bf16.msra.mxu0 %v2743
      %4572 = vmatmul.bf16.gmra.mxu0 %v910
      %v4573 = vpop.f32.mrf.mxu0
      %v4574 = vadd.f32 %v4555, %v4573
      %v4575 = vpop.f32.mrf.mxu0
      %v4576 = vadd.f32 %v4557, %v4575
      %4577 = vmatmul.bf16.gmra.mxu0 %v928
      %v4578 = vpop.f32.mrf.mxu0
      %v4579 = vadd.f32 %v4560, %v4578
      %v4580 = vpop.f32.mrf.mxu0
      %v4581 = vadd.f32 %v4562, %v4580
      %4582 = vdwg.mxu0
      %4583 = vmatpush.bf16.msra.mxu0 %v2803
      %4584 = vmatpush.bf16.msra.mxu0 %v2799
      %4585 = vmatpush.bf16.msra.mxu0 %v2795
      %4586 = vmatpush.bf16.msra.mxu0 %v2791
      %4587 = vmatpush.bf16.msra.mxu0 %v2787
      %4588 = vmatpush.bf16.msra.mxu0 %v2783
      %4589 = vmatpush.bf16.msra.mxu0 %v2779
      %4590 = vmatpush.bf16.msra.mxu0 %v2775
      %4591 = vmatmul.bf16.gmra.mxu0 %v911
      %v4592 = vpop.f32.mrf.mxu0
      %v4593 = vadd.f32 %v4574, %v4592
      %v4594 = vpop.f32.mrf.mxu0
      %v4595 = vadd.f32 %v4576, %v4594
      %4596 = vmatmul.bf16.gmra.mxu0 %v929
      %v4597 = vpop.f32.mrf.mxu0
      %v4598 = vadd.f32 %v4579, %v4597
      %v4599 = vpop.f32.mrf.mxu0
      %v4600 = vadd.f32 %v4581, %v4599
      %4601 = vdwg.mxu0
      %4602 = vmatpush.bf16.msra.mxu0 %v2835
      %4603 = vmatpush.bf16.msra.mxu0 %v2831
      %4604 = vmatpush.bf16.msra.mxu0 %v2827
      %4605 = vmatpush.bf16.msra.mxu0 %v2823
      %4606 = vmatpush.bf16.msra.mxu0 %v2819
      %4607 = vmatpush.bf16.msra.mxu0 %v2815
      %4608 = vmatpush.bf16.msra.mxu0 %v2811
      %4609 = vmatpush.bf16.msra.mxu0 %v2807
      %4610 = vmatmul.bf16.gmra.mxu0 %v912
      %v4611 = vpop.f32.mrf.mxu0
      %v4612 = vadd.f32 %v4593, %v4611
      %v4613 = vpop.f32.mrf.mxu0
      %v4614 = vadd.f32 %v4595, %v4613
      %4615 = vmatmul.bf16.gmra.mxu0 %v930
      %v4616 = vpop.f32.mrf.mxu0
      %v4617 = vadd.f32 %v4598, %v4616
      %v4618 = vpop.f32.mrf.mxu0
      %v4619 = vadd.f32 %v4600, %v4618
      %4620 = vdwg.mxu0
      %4621 = vmatpush.bf16.msra.mxu0 %v2867
      %4622 = vmatpush.bf16.msra.mxu0 %v2863
      %4623 = vmatpush.bf16.msra.mxu0 %v2859
      %4624 = vmatpush.bf16.msra.mxu0 %v2855
      %4625 = vmatpush.bf16.msra.mxu0 %v2851
      %4626 = vmatpush.bf16.msra.mxu0 %v2847
      %4627 = vmatpush.bf16.msra.mxu0 %v2843
      %4628 = vmatpush.bf16.msra.mxu0 %v2839
      %4629 = vmatmul.bf16.gmra.mxu0 %v913
      %v4630 = vpop.f32.mrf.mxu0
      %v4631 = vadd.f32 %v4612, %v4630
      %v4632 = vpop.f32.mrf.mxu0
      %v4633 = vadd.f32 %v4614, %v4632
      %4634 = vmatmul.bf16.gmra.mxu0 %v931
      %v4635 = vpop.f32.mrf.mxu0
      %v4636 = vadd.f32 %v4617, %v4635
      %v4637 = vpop.f32.mrf.mxu0
      %v4638 = vadd.f32 %v4619, %v4637
      %4639 = vdwg.mxu0
      %4640 = vmatpush.bf16.msra.mxu0 %v2899
      %4641 = vmatpush.bf16.msra.mxu0 %v2895
      %4642 = vmatpush.bf16.msra.mxu0 %v2891
      %4643 = vmatpush.bf16.msra.mxu0 %v2887
      %4644 = vmatpush.bf16.msra.mxu0 %v2883
      %4645 = vmatpush.bf16.msra.mxu0 %v2879
      %4646 = vmatpush.bf16.msra.mxu0 %v2875
      %4647 = vmatpush.bf16.msra.mxu0 %v2871
      %4648 = vmatmul.bf16.gmra.mxu0 %v914
      %v4649 = vpop.f32.mrf.mxu0
      %v4650 = vadd.f32 %v4631, %v4649
      %v4651 = vpop.f32.mrf.mxu0
      %v4652 = vadd.f32 %v4633, %v4651
      %4653 = vmatmul.bf16.gmra.mxu0 %v932
      %v4654 = vpop.f32.mrf.mxu0
      %v4655 = vadd.f32 %v4636, %v4654
      %v4656 = vpop.f32.mrf.mxu0
      %v4657 = vadd.f32 %v4638, %v4656
      %4658 = vdwg.mxu0
      %4659 = vmatpush.bf16.msra.mxu0 %v2931
      %4660 = vmatpush.bf16.msra.mxu0 %v2927
      %4661 = vmatpush.bf16.msra.mxu0 %v2923
      %4662 = vmatpush.bf16.msra.mxu0 %v2919
      %4663 = vmatpush.bf16.msra.mxu0 %v2915
      %4664 = vmatpush.bf16.msra.mxu0 %v2911
      %4665 = vmatpush.bf16.msra.mxu0 %v2907
      %4666 = vmatpush.bf16.msra.mxu0 %v2903
      %4667 = vmatmul.bf16.gmra.mxu0 %v915
      %v4668 = vpop.f32.mrf.mxu0
      %v4669 = vadd.f32 %v4650, %v4668
      %v4670 = vpop.f32.mrf.mxu0
      %v4671 = vadd.f32 %v4652, %v4670
      %4672 = vmatmul.bf16.gmra.mxu0 %v933
      %v4673 = vpop.f32.mrf.mxu0
      %v4674 = vadd.f32 %v4655, %v4673
      %v4675 = vpop.f32.mrf.mxu0
      %v4676 = vadd.f32 %v4657, %v4675
      %4677 = vdwg.mxu0
      %4678 = vmatpush.bf16.msra.mxu0 %v2963
      %4679 = vmatpush.bf16.msra.mxu0 %v2959
      %4680 = vmatpush.bf16.msra.mxu0 %v2955
      %4681 = vmatpush.bf16.msra.mxu0 %v2951
      %4682 = vmatpush.bf16.msra.mxu0 %v2947
      %4683 = vmatpush.bf16.msra.mxu0 %v2943
      %4684 = vmatpush.bf16.msra.mxu0 %v2939
      %4685 = vmatpush.bf16.msra.mxu0 %v2935
      %4686 = vmatmul.bf16.gmra.mxu0 %v916
      %v4687 = vpop.f32.mrf.mxu0
      %v4688 = vadd.f32 %v4669, %v4687
      %v4689 = vpop.f32.mrf.mxu0
      %v4690 = vadd.f32 %v4671, %v4689
      %4691 = vmatmul.bf16.gmra.mxu0 %v934
      %v4692 = vpop.f32.mrf.mxu0
      %v4693 = vadd.f32 %v4674, %v4692
      %v4694 = vpop.f32.mrf.mxu0
      %v4695 = vadd.f32 %v4676, %v4694
      %4696 = vdwg.mxu0
      %4697 = vmatpush.bf16.msra.mxu0 %v2995
      %4698 = vmatpush.bf16.msra.mxu0 %v2991
      %4699 = vmatpush.bf16.msra.mxu0 %v2987
      %4700 = vmatpush.bf16.msra.mxu0 %v2983
      %4701 = vmatpush.bf16.msra.mxu0 %v2979
      %4702 = vmatpush.bf16.msra.mxu0 %v2975
      %4703 = vmatpush.bf16.msra.mxu0 %v2971
      %4704 = vmatpush.bf16.msra.mxu0 %v2967
      %4705 = vmatmul.bf16.gmra.mxu0 %v917
      %v4706 = vpop.f32.mrf.mxu0
      %v4707 = vadd.f32 %v4688, %v4706
      %v4708 = vpop.f32.mrf.mxu0
      %v4709 = vadd.f32 %v4690, %v4708
      %4710 = vmatmul.bf16.gmra.mxu0 %v935
      %v4711 = vpop.f32.mrf.mxu0
      %v4712 = vadd.f32 %v4693, %v4711
      %v4713 = vpop.f32.mrf.mxu0
      %v4714 = vadd.f32 %v4695, %v4713
      %4715 = vdwg.mxu0
      %4716 = vmatpush.bf16.msra.mxu0 %v3027
      %4717 = vmatpush.bf16.msra.mxu0 %v3023
      %4718 = vmatpush.bf16.msra.mxu0 %v3019
      %4719 = vmatpush.bf16.msra.mxu0 %v3015
      %4720 = vmatpush.bf16.msra.mxu0 %v3011
      %4721 = vmatpush.bf16.msra.mxu0 %v3007
      %4722 = vmatpush.bf16.msra.mxu0 %v3003
      %4723 = vmatpush.bf16.msra.mxu0 %v2999
      %4724 = vmatmul.bf16.gmra.mxu0 %v918
      %v4725 = vpop.f32.mrf.mxu0
      %v4726 = vadd.f32 %v4707, %v4725
      %v4727 = vpop.f32.mrf.mxu0
      %v4728 = vadd.f32 %v4709, %v4727
      %4729 = vmatmul.bf16.gmra.mxu0 %v936
      %v4730 = vpop.f32.mrf.mxu0
      %v4731 = vadd.f32 %v4712, %v4730
      %v4732 = vpop.f32.mrf.mxu0
      %v4733 = vadd.f32 %v4714, %v4732
      %4734 = vdwg.mxu0
      %4735 = vmatpush.bf16.msra.mxu0 %v3059
      %4736 = vmatpush.bf16.msra.mxu0 %v3055
      %4737 = vmatpush.bf16.msra.mxu0 %v3051
      %4738 = vmatpush.bf16.msra.mxu0 %v3047
      %4739 = vmatpush.bf16.msra.mxu0 %v3043
      %4740 = vmatpush.bf16.msra.mxu0 %v3039
      %4741 = vmatpush.bf16.msra.mxu0 %v3035
      %4742 = vmatpush.bf16.msra.mxu0 %v3031
      %4743 = vmatmul.bf16.gmra.mxu0 %v919
      %v4744 = vpop.f32.mrf.mxu0
      %v4745 = vadd.f32 %v4726, %v4744
      %v4746 = vpop.f32.mrf.mxu0
      %v4747 = vadd.f32 %v4728, %v4746
      %4748 = vmatmul.bf16.gmra.mxu0 %v937
      %v4749 = vpop.f32.mrf.mxu0
      %v4750 = vadd.f32 %v4731, %v4749
      %v4751 = vpop.f32.mrf.mxu0
      %v4752 = vadd.f32 %v4733, %v4751
      %4753 = vdwg.mxu0
      %4754 = vmatpush.bf16.msra.mxu0 %v3091
      %4755 = vmatpush.bf16.msra.mxu0 %v3087
      %4756 = vmatpush.bf16.msra.mxu0 %v3083
      %4757 = vmatpush.bf16.msra.mxu0 %v3079
      %4758 = vmatpush.bf16.msra.mxu0 %v3075
      %4759 = vmatpush.bf16.msra.mxu0 %v3071
      %4760 = vmatpush.bf16.msra.mxu0 %v3067
      %4761 = vmatpush.bf16.msra.mxu0 %v3063
      %4762 = vmatmul.bf16.gmra.mxu0 %v920
      %v4763 = vpop.f32.mrf.mxu0
      %v4764 = vadd.f32 %v4745, %v4763
      %v4765 = vpop.f32.mrf.mxu0
      %v4766 = vadd.f32 %v4747, %v4765
      %4767 = vmatmul.bf16.gmra.mxu0 %v938
      %v4768 = vpop.f32.mrf.mxu0
      %v4769 = vadd.f32 %v4750, %v4768
      %v4770 = vpop.f32.mrf.mxu0
      %v4771 = vadd.f32 %v4752, %v4770
      %4772 = vdwg.mxu0
      %4773 = vmatpush.bf16.msra.mxu0 %v3123
      %4774 = vmatpush.bf16.msra.mxu0 %v3119
      %4775 = vmatpush.bf16.msra.mxu0 %v3115
      %4776 = vmatpush.bf16.msra.mxu0 %v3111
      %4777 = vmatpush.bf16.msra.mxu0 %v3107
      %4778 = vmatpush.bf16.msra.mxu0 %v3103
      %4779 = vmatpush.bf16.msra.mxu0 %v3099
      %4780 = vmatpush.bf16.msra.mxu0 %v3095
      %4781 = vmatmul.bf16.gmra.mxu0 %v921
      %v4782 = vpop.f32.mrf.mxu0
      %v4783 = vadd.f32 %v4764, %v4782
      %v4784 = vpop.f32.mrf.mxu0
      %v4785 = vadd.f32 %v4766, %v4784
      %4786 = vmatmul.bf16.gmra.mxu0 %v939
      %v4787 = vpop.f32.mrf.mxu0
      %v4788 = vadd.f32 %v4769, %v4787
      %v4789 = vpop.f32.mrf.mxu0
      %v4790 = vadd.f32 %v4771, %v4789
      %4791 = vdwg.mxu0
      %4792 = vmatpush.bf16.msra.mxu0 %v3155
      %4793 = vmatpush.bf16.msra.mxu0 %v3151
      %4794 = vmatpush.bf16.msra.mxu0 %v3147
      %4795 = vmatpush.bf16.msra.mxu0 %v3143
      %4796 = vmatpush.bf16.msra.mxu0 %v3139
      %4797 = vmatpush.bf16.msra.mxu0 %v3135
      %4798 = vmatpush.bf16.msra.mxu0 %v3131
      %4799 = vmatpush.bf16.msra.mxu0 %v3127
      %4800 = vmatmul.bf16.gmra.mxu0 %v922
      %v4801 = vpop.f32.mrf.mxu0
      %v4802 = vadd.f32 %v4783, %v4801
      %v4803 = vpop.f32.mrf.mxu0
      %v4804 = vadd.f32 %v4785, %v4803
      %4805 = vmatmul.bf16.gmra.mxu0 %v940
      %v4806 = vpop.f32.mrf.mxu0
      %v4807 = vadd.f32 %v4788, %v4806
      %v4808 = vpop.f32.mrf.mxu0
      %v4809 = vadd.f32 %v4790, %v4808
      %4810 = vdwg.mxu0
      %4811 = vmatpush.bf16.msra.mxu0 %v3187
      %4812 = vmatpush.bf16.msra.mxu0 %v3183
      %4813 = vmatpush.bf16.msra.mxu0 %v3179
      %4814 = vmatpush.bf16.msra.mxu0 %v3175
      %4815 = vmatpush.bf16.msra.mxu0 %v3171
      %4816 = vmatpush.bf16.msra.mxu0 %v3167
      %4817 = vmatpush.bf16.msra.mxu0 %v3163
      %4818 = vmatpush.bf16.msra.mxu0 %v3159
      %4819 = vmatmul.bf16.gmra.mxu0 %v923
      %v4820 = vpop.f32.mrf.mxu0
      %v4821 = vadd.f32 %v4802, %v4820
      %v4822 = vpop.f32.mrf.mxu0
      %v4823 = vadd.f32 %v4804, %v4822
      %4824 = vmatmul.bf16.gmra.mxu0 %v941
      %v4825 = vpop.f32.mrf.mxu0
      %v4826 = vadd.f32 %v4807, %v4825
      %v4827 = vpop.f32.mrf.mxu0
      %v4828 = vadd.f32 %v4809, %v4827
      %4829 = vdwg.mxu0
      %4830 = vmatpush.bf16.msra.mxu0 %v3219
      %4831 = vmatpush.bf16.msra.mxu0 %v3215
      %4832 = vmatpush.bf16.msra.mxu0 %v3211
      %4833 = vmatpush.bf16.msra.mxu0 %v3207
      %4834 = vmatpush.bf16.msra.mxu0 %v3203
      %4835 = vmatpush.bf16.msra.mxu0 %v3199
      %4836 = vmatpush.bf16.msra.mxu0 %v3195
      %4837 = vmatpush.bf16.msra.mxu0 %v3191
      %4838 = vmatmul.bf16.gmra.mxu0 %v924
      %v4839 = vpop.f32.mrf.mxu0
      %v4840 = vadd.f32 %v4821, %v4839
      %v4841 = vpop.f32.mrf.mxu0
      %v4842 = vadd.f32 %v4823, %v4841
      %4843 = vmatmul.bf16.gmra.mxu0 %v942
      %v4844 = vpop.f32.mrf.mxu0
      %v4845 = vadd.f32 %v4826, %v4844
      %v4846 = vpop.f32.mrf.mxu0
      %v4847 = vadd.f32 %v4828, %v4846
      %4848 = vdwg.mxu0
      %4849 = vmatpush.bf16.msra.mxu0 %v3251
      %4850 = vmatpush.bf16.msra.mxu0 %v3247
      %4851 = vmatpush.bf16.msra.mxu0 %v3243
      %4852 = vmatpush.bf16.msra.mxu0 %v3239
      %4853 = vmatpush.bf16.msra.mxu0 %v3235
      %4854 = vmatpush.bf16.msra.mxu0 %v3231
      %4855 = vmatpush.bf16.msra.mxu0 %v3227
      %4856 = vmatpush.bf16.msra.mxu0 %v3223
      %4857 = vmatmul.bf16.gmra.mxu0 %v925
      %v4858 = vpop.f32.mrf.mxu0
      %v4859 = vadd.f32 %v4840, %v4858
      %v4860 = vpop.f32.mrf.mxu0
      %v4861 = vadd.f32 %v4842, %v4860
      %4862 = vmatmul.bf16.gmra.mxu0 %v943
      %v4863 = vpop.f32.mrf.mxu0
      %v4864 = vadd.f32 %v4845, %v4863
      %v4865 = vpop.f32.mrf.mxu0
      %v4866 = vadd.f32 %v4847, %v4865
      %4867 = vdwg.mxu0
      %4868 = vmatpush.bf16.msra.mxu0 %v3283
      %4869 = vmatpush.bf16.msra.mxu0 %v3279
      %4870 = vmatpush.bf16.msra.mxu0 %v3275
      %4871 = vmatpush.bf16.msra.mxu0 %v3271
      %4872 = vmatpush.bf16.msra.mxu0 %v3267
      %4873 = vmatpush.bf16.msra.mxu0 %v3263
      %4874 = vmatpush.bf16.msra.mxu0 %v3259
      %4875 = vmatpush.bf16.msra.mxu0 %v3255
      %4876 = vmatmul.bf16.gmra.mxu0 %v926
      %v4877 = vpop.f32.mrf.mxu0
      %v4878 = vadd.f32 %v4859, %v4877
      %v4879 = vpop.f32.mrf.mxu0
      %v4880 = vadd.f32 %v4861, %v4879
      %4881 = vmatmul.bf16.gmra.mxu0 %v944
      %v4882 = vpop.f32.mrf.mxu0
      %v4883 = vadd.f32 %v4864, %v4882
      %v4884 = vpop.f32.mrf.mxu0
      %v4885 = vadd.f32 %v4866, %v4884
      %4886 = vdwg.mxu0
      %4887 = vmatpush.bf16.msra.mxu0 %v2740
      %4888 = vmatpush.bf16.msra.mxu0 %v2736
      %4889 = vmatpush.bf16.msra.mxu0 %v2732
      %4890 = vmatpush.bf16.msra.mxu0 %v2728
      %4891 = vmatpush.bf16.msra.mxu0 %v2724
      %4892 = vmatpush.bf16.msra.mxu0 %v2720
      %4893 = vmatpush.bf16.msra.mxu0 %v2716
      %4894 = vmatpush.bf16.msra.mxu0 %v2712
      %4895 = vmatmul.bf16.gmra.mxu0 %v909
      %v4896 = vpop.f32.mrf.mxu0
      %v4897 = vadd.f32 %v796, %v4896
      %v4898 = vpop.f32.mrf.mxu0
      %v4899 = vadd.f32 %v796, %v4898
      %4900 = vmatmul.bf16.gmra.mxu0 %v927
      %v4901 = vpop.f32.mrf.mxu0
      %v4902 = vadd.f32 %v796, %v4901
      %v4903 = vpop.f32.mrf.mxu0
      %v4904 = vadd.f32 %v796, %v4903
      %4905 = vdwg.mxu0
      %4906 = vmatpush.bf16.msra.mxu0 %v2772
      %4907 = vmatpush.bf16.msra.mxu0 %v2768
      %4908 = vmatpush.bf16.msra.mxu0 %v2764
      %4909 = vmatpush.bf16.msra.mxu0 %v2760
      %4910 = vmatpush.bf16.msra.mxu0 %v2756
      %4911 = vmatpush.bf16.msra.mxu0 %v2752
      %4912 = vmatpush.bf16.msra.mxu0 %v2748
      %4913 = vmatpush.bf16.msra.mxu0 %v2744
      %4914 = vmatmul.bf16.gmra.mxu0 %v910
      %v4915 = vpop.f32.mrf.mxu0
      %v4916 = vadd.f32 %v4897, %v4915
      %v4917 = vpop.f32.mrf.mxu0
      %v4918 = vadd.f32 %v4899, %v4917
      %4919 = vmatmul.bf16.gmra.mxu0 %v928
      %v4920 = vpop.f32.mrf.mxu0
      %v4921 = vadd.f32 %v4902, %v4920
      %v4922 = vpop.f32.mrf.mxu0
      %v4923 = vadd.f32 %v4904, %v4922
      %4924 = vdwg.mxu0
      %4925 = vmatpush.bf16.msra.mxu0 %v2804
      %4926 = vmatpush.bf16.msra.mxu0 %v2800
      %4927 = vmatpush.bf16.msra.mxu0 %v2796
      %4928 = vmatpush.bf16.msra.mxu0 %v2792
      %4929 = vmatpush.bf16.msra.mxu0 %v2788
      %4930 = vmatpush.bf16.msra.mxu0 %v2784
      %4931 = vmatpush.bf16.msra.mxu0 %v2780
      %4932 = vmatpush.bf16.msra.mxu0 %v2776
      %4933 = vmatmul.bf16.gmra.mxu0 %v911
      %v4934 = vpop.f32.mrf.mxu0
      %v4935 = vadd.f32 %v4916, %v4934
      %v4936 = vpop.f32.mrf.mxu0
      %v4937 = vadd.f32 %v4918, %v4936
      %4938 = vmatmul.bf16.gmra.mxu0 %v929
      %v4939 = vpop.f32.mrf.mxu0
      %v4940 = vadd.f32 %v4921, %v4939
      %v4941 = vpop.f32.mrf.mxu0
      %v4942 = vadd.f32 %v4923, %v4941
      %4943 = vdwg.mxu0
      %4944 = vmatpush.bf16.msra.mxu0 %v2836
      %4945 = vmatpush.bf16.msra.mxu0 %v2832
      %4946 = vmatpush.bf16.msra.mxu0 %v2828
      %4947 = vmatpush.bf16.msra.mxu0 %v2824
      %4948 = vmatpush.bf16.msra.mxu0 %v2820
      %4949 = vmatpush.bf16.msra.mxu0 %v2816
      %4950 = vmatpush.bf16.msra.mxu0 %v2812
      %4951 = vmatpush.bf16.msra.mxu0 %v2808
      %4952 = vmatmul.bf16.gmra.mxu0 %v912
      %v4953 = vpop.f32.mrf.mxu0
      %v4954 = vadd.f32 %v4935, %v4953
      %v4955 = vpop.f32.mrf.mxu0
      %v4956 = vadd.f32 %v4937, %v4955
      %4957 = vmatmul.bf16.gmra.mxu0 %v930
      %v4958 = vpop.f32.mrf.mxu0
      %v4959 = vadd.f32 %v4940, %v4958
      %v4960 = vpop.f32.mrf.mxu0
      %v4961 = vadd.f32 %v4942, %v4960
      %4962 = vdwg.mxu0
      %4963 = vmatpush.bf16.msra.mxu0 %v2868
      %4964 = vmatpush.bf16.msra.mxu0 %v2864
      %4965 = vmatpush.bf16.msra.mxu0 %v2860
      %4966 = vmatpush.bf16.msra.mxu0 %v2856
      %4967 = vmatpush.bf16.msra.mxu0 %v2852
      %4968 = vmatpush.bf16.msra.mxu0 %v2848
      %4969 = vmatpush.bf16.msra.mxu0 %v2844
      %4970 = vmatpush.bf16.msra.mxu0 %v2840
      %4971 = vmatmul.bf16.gmra.mxu0 %v913
      %v4972 = vpop.f32.mrf.mxu0
      %v4973 = vadd.f32 %v4954, %v4972
      %v4974 = vpop.f32.mrf.mxu0
      %v4975 = vadd.f32 %v4956, %v4974
      %4976 = vmatmul.bf16.gmra.mxu0 %v931
      %v4977 = vpop.f32.mrf.mxu0
      %v4978 = vadd.f32 %v4959, %v4977
      %v4979 = vpop.f32.mrf.mxu0
      %v4980 = vadd.f32 %v4961, %v4979
      %4981 = vdwg.mxu0
      %4982 = vmatpush.bf16.msra.mxu0 %v2900
      %4983 = vmatpush.bf16.msra.mxu0 %v2896
      %4984 = vmatpush.bf16.msra.mxu0 %v2892
      %4985 = vmatpush.bf16.msra.mxu0 %v2888
      %4986 = vmatpush.bf16.msra.mxu0 %v2884
      %4987 = vmatpush.bf16.msra.mxu0 %v2880
      %4988 = vmatpush.bf16.msra.mxu0 %v2876
      %4989 = vmatpush.bf16.msra.mxu0 %v2872
      %4990 = vmatmul.bf16.gmra.mxu0 %v914
      %v4991 = vpop.f32.mrf.mxu0
      %v4992 = vadd.f32 %v4973, %v4991
      %v4993 = vpop.f32.mrf.mxu0
      %v4994 = vadd.f32 %v4975, %v4993
      %4995 = vmatmul.bf16.gmra.mxu0 %v932
      %v4996 = vpop.f32.mrf.mxu0
      %v4997 = vadd.f32 %v4978, %v4996
      %v4998 = vpop.f32.mrf.mxu0
      %v4999 = vadd.f32 %v4980, %v4998
      %5000 = vdwg.mxu0
      %5001 = vmatpush.bf16.msra.mxu0 %v2932
      %5002 = vmatpush.bf16.msra.mxu0 %v2928
      %5003 = vmatpush.bf16.msra.mxu0 %v2924
      %5004 = vmatpush.bf16.msra.mxu0 %v2920
      %5005 = vmatpush.bf16.msra.mxu0 %v2916
      %5006 = vmatpush.bf16.msra.mxu0 %v2912
      %5007 = vmatpush.bf16.msra.mxu0 %v2908
      %5008 = vmatpush.bf16.msra.mxu0 %v2904
      %5009 = vmatmul.bf16.gmra.mxu0 %v915
      %v5010 = vpop.f32.mrf.mxu0
      %v5011 = vadd.f32 %v4992, %v5010
      %v5012 = vpop.f32.mrf.mxu0
      %v5013 = vadd.f32 %v4994, %v5012
      %5014 = vmatmul.bf16.gmra.mxu0 %v933
      %v5015 = vpop.f32.mrf.mxu0
      %v5016 = vadd.f32 %v4997, %v5015
      %v5017 = vpop.f32.mrf.mxu0
      %v5018 = vadd.f32 %v4999, %v5017
      %5019 = vdwg.mxu0
      %5020 = vmatpush.bf16.msra.mxu0 %v2964
      %5021 = vmatpush.bf16.msra.mxu0 %v2960
      %5022 = vmatpush.bf16.msra.mxu0 %v2956
      %5023 = vmatpush.bf16.msra.mxu0 %v2952
      %5024 = vmatpush.bf16.msra.mxu0 %v2948
      %5025 = vmatpush.bf16.msra.mxu0 %v2944
      %5026 = vmatpush.bf16.msra.mxu0 %v2940
      %5027 = vmatpush.bf16.msra.mxu0 %v2936
      %5028 = vmatmul.bf16.gmra.mxu0 %v916
      %v5029 = vpop.f32.mrf.mxu0
      %v5030 = vadd.f32 %v5011, %v5029
      %v5031 = vpop.f32.mrf.mxu0
      %v5032 = vadd.f32 %v5013, %v5031
      %5033 = vmatmul.bf16.gmra.mxu0 %v934
      %v5034 = vpop.f32.mrf.mxu0
      %v5035 = vadd.f32 %v5016, %v5034
      %v5036 = vpop.f32.mrf.mxu0
      %v5037 = vadd.f32 %v5018, %v5036
      %5038 = vdwg.mxu0
      %5039 = vmatpush.bf16.msra.mxu0 %v2996
      %5040 = vmatpush.bf16.msra.mxu0 %v2992
      %5041 = vmatpush.bf16.msra.mxu0 %v2988
      %5042 = vmatpush.bf16.msra.mxu0 %v2984
      %5043 = vmatpush.bf16.msra.mxu0 %v2980
      %5044 = vmatpush.bf16.msra.mxu0 %v2976
      %5045 = vmatpush.bf16.msra.mxu0 %v2972
      %5046 = vmatpush.bf16.msra.mxu0 %v2968
      %5047 = vmatmul.bf16.gmra.mxu0 %v917
      %v5048 = vpop.f32.mrf.mxu0
      %v5049 = vadd.f32 %v5030, %v5048
      %v5050 = vpop.f32.mrf.mxu0
      %v5051 = vadd.f32 %v5032, %v5050
      %5052 = vmatmul.bf16.gmra.mxu0 %v935
      %v5053 = vpop.f32.mrf.mxu0
      %v5054 = vadd.f32 %v5035, %v5053
      %v5055 = vpop.f32.mrf.mxu0
      %v5056 = vadd.f32 %v5037, %v5055
      %5057 = vdwg.mxu0
      %5058 = vmatpush.bf16.msra.mxu0 %v3028
      %5059 = vmatpush.bf16.msra.mxu0 %v3024
      %5060 = vmatpush.bf16.msra.mxu0 %v3020
      %5061 = vmatpush.bf16.msra.mxu0 %v3016
      %5062 = vmatpush.bf16.msra.mxu0 %v3012
      %5063 = vmatpush.bf16.msra.mxu0 %v3008
      %5064 = vmatpush.bf16.msra.mxu0 %v3004
      %5065 = vmatpush.bf16.msra.mxu0 %v3000
      %5066 = vmatmul.bf16.gmra.mxu0 %v918
      %v5067 = vpop.f32.mrf.mxu0
      %v5068 = vadd.f32 %v5049, %v5067
      %v5069 = vpop.f32.mrf.mxu0
      %v5070 = vadd.f32 %v5051, %v5069
      %5071 = vmatmul.bf16.gmra.mxu0 %v936
      %v5072 = vpop.f32.mrf.mxu0
      %v5073 = vadd.f32 %v5054, %v5072
      %v5074 = vpop.f32.mrf.mxu0
      %v5075 = vadd.f32 %v5056, %v5074
      %5076 = vdwg.mxu0
      %5077 = vmatpush.bf16.msra.mxu0 %v3060
      %5078 = vmatpush.bf16.msra.mxu0 %v3056
      %5079 = vmatpush.bf16.msra.mxu0 %v3052
      %5080 = vmatpush.bf16.msra.mxu0 %v3048
      %5081 = vmatpush.bf16.msra.mxu0 %v3044
      %5082 = vmatpush.bf16.msra.mxu0 %v3040
      %5083 = vmatpush.bf16.msra.mxu0 %v3036
      %5084 = vmatpush.bf16.msra.mxu0 %v3032
      %5085 = vmatmul.bf16.gmra.mxu0 %v919
      %v5086 = vpop.f32.mrf.mxu0
      %v5087 = vadd.f32 %v5068, %v5086
      %v5088 = vpop.f32.mrf.mxu0
      %v5089 = vadd.f32 %v5070, %v5088
      %5090 = vmatmul.bf16.gmra.mxu0 %v937
      %v5091 = vpop.f32.mrf.mxu0
      %v5092 = vadd.f32 %v5073, %v5091
      %v5093 = vpop.f32.mrf.mxu0
      %v5094 = vadd.f32 %v5075, %v5093
      %5095 = vdwg.mxu0
      %5096 = vmatpush.bf16.msra.mxu0 %v3092
      %5097 = vmatpush.bf16.msra.mxu0 %v3088
      %5098 = vmatpush.bf16.msra.mxu0 %v3084
      %5099 = vmatpush.bf16.msra.mxu0 %v3080
      %5100 = vmatpush.bf16.msra.mxu0 %v3076
      %5101 = vmatpush.bf16.msra.mxu0 %v3072
      %5102 = vmatpush.bf16.msra.mxu0 %v3068
      %5103 = vmatpush.bf16.msra.mxu0 %v3064
      %5104 = vmatmul.bf16.gmra.mxu0 %v920
      %v5105 = vpop.f32.mrf.mxu0
      %v5106 = vadd.f32 %v5087, %v5105
      %v5107 = vpop.f32.mrf.mxu0
      %v5108 = vadd.f32 %v5089, %v5107
      %5109 = vmatmul.bf16.gmra.mxu0 %v938
      %v5110 = vpop.f32.mrf.mxu0
      %v5111 = vadd.f32 %v5092, %v5110
      %v5112 = vpop.f32.mrf.mxu0
      %v5113 = vadd.f32 %v5094, %v5112
      %5114 = vdwg.mxu0
      %5115 = vmatpush.bf16.msra.mxu0 %v3124
      %5116 = vmatpush.bf16.msra.mxu0 %v3120
      %5117 = vmatpush.bf16.msra.mxu0 %v3116
      %5118 = vmatpush.bf16.msra.mxu0 %v3112
      %5119 = vmatpush.bf16.msra.mxu0 %v3108
      %5120 = vmatpush.bf16.msra.mxu0 %v3104
      %5121 = vmatpush.bf16.msra.mxu0 %v3100
      %5122 = vmatpush.bf16.msra.mxu0 %v3096
      %5123 = vmatmul.bf16.gmra.mxu0 %v921
      %v5124 = vpop.f32.mrf.mxu0
      %v5125 = vadd.f32 %v5106, %v5124
      %v5126 = vpop.f32.mrf.mxu0
      %v5127 = vadd.f32 %v5108, %v5126
      %5128 = vmatmul.bf16.gmra.mxu0 %v939
      %v5129 = vpop.f32.mrf.mxu0
      %v5130 = vadd.f32 %v5111, %v5129
      %v5131 = vpop.f32.mrf.mxu0
      %v5132 = vadd.f32 %v5113, %v5131
      %5133 = vdwg.mxu0
      %5134 = vmatpush.bf16.msra.mxu0 %v3156
      %5135 = vmatpush.bf16.msra.mxu0 %v3152
      %5136 = vmatpush.bf16.msra.mxu0 %v3148
      %5137 = vmatpush.bf16.msra.mxu0 %v3144
      %5138 = vmatpush.bf16.msra.mxu0 %v3140
      %5139 = vmatpush.bf16.msra.mxu0 %v3136
      %5140 = vmatpush.bf16.msra.mxu0 %v3132
      %5141 = vmatpush.bf16.msra.mxu0 %v3128
      %5142 = vmatmul.bf16.gmra.mxu0 %v922
      %v5143 = vpop.f32.mrf.mxu0
      %v5144 = vadd.f32 %v5125, %v5143
      %v5145 = vpop.f32.mrf.mxu0
      %v5146 = vadd.f32 %v5127, %v5145
      %5147 = vmatmul.bf16.gmra.mxu0 %v940
      %v5148 = vpop.f32.mrf.mxu0
      %v5149 = vadd.f32 %v5130, %v5148
      %v5150 = vpop.f32.mrf.mxu0
      %v5151 = vadd.f32 %v5132, %v5150
      %5152 = vdwg.mxu0
      %5153 = vmatpush.bf16.msra.mxu0 %v3188
      %5154 = vmatpush.bf16.msra.mxu0 %v3184
      %5155 = vmatpush.bf16.msra.mxu0 %v3180
      %5156 = vmatpush.bf16.msra.mxu0 %v3176
      %5157 = vmatpush.bf16.msra.mxu0 %v3172
      %5158 = vmatpush.bf16.msra.mxu0 %v3168
      %5159 = vmatpush.bf16.msra.mxu0 %v3164
      %5160 = vmatpush.bf16.msra.mxu0 %v3160
      %5161 = vmatmul.bf16.gmra.mxu0 %v923
      %v5162 = vpop.f32.mrf.mxu0
      %v5163 = vadd.f32 %v5144, %v5162
      %v5164 = vpop.f32.mrf.mxu0
      %v5165 = vadd.f32 %v5146, %v5164
      %5166 = vmatmul.bf16.gmra.mxu0 %v941
      %v5167 = vpop.f32.mrf.mxu0
      %v5168 = vadd.f32 %v5149, %v5167
      %v5169 = vpop.f32.mrf.mxu0
      %v5170 = vadd.f32 %v5151, %v5169
      %5171 = vdwg.mxu0
      %5172 = vmatpush.bf16.msra.mxu0 %v3220
      %5173 = vmatpush.bf16.msra.mxu0 %v3216
      %5174 = vmatpush.bf16.msra.mxu0 %v3212
      %5175 = vmatpush.bf16.msra.mxu0 %v3208
      %5176 = vmatpush.bf16.msra.mxu0 %v3204
      %5177 = vmatpush.bf16.msra.mxu0 %v3200
      %5178 = vmatpush.bf16.msra.mxu0 %v3196
      %5179 = vmatpush.bf16.msra.mxu0 %v3192
      %5180 = vmatmul.bf16.gmra.mxu0 %v924
      %v5181 = vpop.f32.mrf.mxu0
      %v5182 = vadd.f32 %v5163, %v5181
      %v5183 = vpop.f32.mrf.mxu0
      %v5184 = vadd.f32 %v5165, %v5183
      %5185 = vmatmul.bf16.gmra.mxu0 %v942
      %v5186 = vpop.f32.mrf.mxu0
      %v5187 = vadd.f32 %v5168, %v5186
      %v5188 = vpop.f32.mrf.mxu0
      %v5189 = vadd.f32 %v5170, %v5188
      %5190 = vdwg.mxu0
      %5191 = vmatpush.bf16.msra.mxu0 %v3252
      %5192 = vmatpush.bf16.msra.mxu0 %v3248
      %5193 = vmatpush.bf16.msra.mxu0 %v3244
      %5194 = vmatpush.bf16.msra.mxu0 %v3240
      %5195 = vmatpush.bf16.msra.mxu0 %v3236
      %5196 = vmatpush.bf16.msra.mxu0 %v3232
      %5197 = vmatpush.bf16.msra.mxu0 %v3228
      %5198 = vmatpush.bf16.msra.mxu0 %v3224
      %5199 = vmatmul.bf16.gmra.mxu0 %v925
      %v5200 = vpop.f32.mrf.mxu0
      %v5201 = vadd.f32 %v5182, %v5200
      %v5202 = vpop.f32.mrf.mxu0
      %v5203 = vadd.f32 %v5184, %v5202
      %5204 = vmatmul.bf16.gmra.mxu0 %v943
      %v5205 = vpop.f32.mrf.mxu0
      %v5206 = vadd.f32 %v5187, %v5205
      %v5207 = vpop.f32.mrf.mxu0
      %v5208 = vadd.f32 %v5189, %v5207
      %5209 = vdwg.mxu0
      %5210 = vmatpush.bf16.msra.mxu0 %v3284
      %5211 = vmatpush.bf16.msra.mxu0 %v3280
      %5212 = vmatpush.bf16.msra.mxu0 %v3276
      %5213 = vmatpush.bf16.msra.mxu0 %v3272
      %5214 = vmatpush.bf16.msra.mxu0 %v3268
      %5215 = vmatpush.bf16.msra.mxu0 %v3264
      %5216 = vmatpush.bf16.msra.mxu0 %v3260
      %5217 = vmatpush.bf16.msra.mxu0 %v3256
      %5218 = vmatmul.bf16.gmra.mxu0 %v926
      %v5219 = vpop.f32.mrf.mxu0
      %v5220 = vadd.f32 %v5201, %v5219
      %v5221 = vpop.f32.mrf.mxu0
      %v5222 = vadd.f32 %v5203, %v5221
      %5223 = vmatmul.bf16.gmra.mxu0 %v944
      %v5224 = vpop.f32.mrf.mxu0
      %v5225 = vadd.f32 %v5206, %v5224
      %v5226 = vpop.f32.mrf.mxu0
      %v5227 = vadd.f32 %v5208, %v5226
      %5228 = vdwg.mxu0
      %vm5229 = vcmp.ge.f32.partialorder %v4194, 0.0
      %vm5230 = vcmp.ge.f32.partialorder %v4536, 0.0
      %vm5231 = vcmp.ge.f32.partialorder %v4878, 0.0
      %vm5232 = vcmp.ge.f32.partialorder %v5220, 0.0
      %vm5233 = vcmp.ge.f32.partialorder %v4196, 0.0
      %vm5234 = vcmp.ge.f32.partialorder %v4538, 0.0
      %vm5235 = vcmp.ge.f32.partialorder %v4880, 0.0
      %vm5236 = vcmp.ge.f32.partialorder %v5222, 0.0
      %vm5237 = vcmp.ge.f32.partialorder %v4199, 0.0
      %vm5238 = vcmp.ge.f32.partialorder %v4541, 0.0
      %vm5239 = vcmp.ge.f32.partialorder %v4883, 0.0
      %vm5240 = vcmp.ge.f32.partialorder %v5225, 0.0
      %vm5241 = vcmp.ge.f32.partialorder %v4201, 0.0
      %vm5242 = vcmp.ge.f32.partialorder %v4543, 0.0
      %vm5243 = vcmp.ge.f32.partialorder %v4885, 0.0
      %vm5244 = vcmp.ge.f32.partialorder %v5227, 0.0
      %v5245 = vmul.f32 %v4194, 0.01
      %v5246 = vmul.f32 %v4536, 0.01
      %v5247 = vmul.f32 %v4878, 0.01
      %v5248 = vmul.f32 %v5220, 0.01
      %v5249 = vmul.f32 %v4196, 0.01
      %v5250 = vmul.f32 %v4538, 0.01
      %v5251 = vmul.f32 %v4880, 0.01
      %v5252 = vmul.f32 %v5222, 0.01
      %v5253 = vmul.f32 %v4199, 0.01
      %v5254 = vmul.f32 %v4541, 0.01
      %v5255 = vmul.f32 %v4883, 0.01
      %v5256 = vmul.f32 %v5225, 0.01
      %v5257 = vmul.f32 %v4201, 0.01
      %v5258 = vmul.f32 %v4543, 0.01
      %v5259 = vmul.f32 %v4885, 0.01
      %v5260 = vmul.f32 %v5227, 0.01
      %v5261 = vsel %vm5229, %v4194, %v5245
      %v5262 = vsel %vm5230, %v4536, %v5246
      %v5263 = vsel %vm5231, %v4878, %v5247
      %v5264 = vsel %vm5232, %v5220, %v5248
      %v5265 = vsel %vm5233, %v4196, %v5249
      %v5266 = vsel %vm5234, %v4538, %v5250
      %v5267 = vsel %vm5235, %v4880, %v5251
      %v5268 = vsel %vm5236, %v5222, %v5252
      %v5269 = vsel %vm5237, %v4199, %v5253
      %v5270 = vsel %vm5238, %v4541, %v5254
      %v5271 = vsel %vm5239, %v4883, %v5255
      %v5272 = vsel %vm5240, %v5225, %v5256
      %v5273 = vsel %vm5241, %v4201, %v5257
      %v5274 = vsel %vm5242, %v4543, %v5258
      %v5275 = vsel %vm5243, %v4885, %v5259
      %v5276 = vsel %vm5244, %v5227, %v5260
      %v5277 = vpack.c.bf16 %v5262, %v5261
      %v5278 = vpack.c.bf16 %v5264, %v5263
      %v5279 = vpack.c.bf16 %v5266, %v5265
      %v5280 = vpack.c.bf16 %v5268, %v5267
      %v5281 = vpack.c.bf16 %v5270, %v5269
      %v5282 = vpack.c.bf16 %v5272, %v5271
      %v5283 = vpack.c.bf16 %v5274, %v5273
      %v5284 = vpack.c.bf16 %v5276, %v5275
      %5285 = vst [vmem:[%s177] sm:$0xff] %v5277
      %5286 = vst [vmem:[%s177 + $0x8] sm:$0xff] %v5278
      %5287 = vst [vmem:[%s177 + $0x10] sm:$0xff] %v5279
      %5288 = vst [vmem:[%s177 + $0x18] sm:$0xff] %v5280
      %5289 = vst [vmem:[%s177 + $0x20] sm:$0xff] %v5281
      %5290 = vst [vmem:[%s177 + $0x28] sm:$0xff] %v5282
      %5291 = vst [vmem:[%s177 + $0x30] sm:$0xff] %v5283
      %5292 = vst [vmem:[%s177 + $0x38] sm:$0xff] %v5284
      %s5293 = smul.u32 4, %s14
      %p5294 = scmp.lt.s32.totalorder %s5293, 7
      %s5295 = scalar_select %p5294, %s5293, 7
      %s5296 = smul.addr %s5295, 4
      %s5297 = smul.addr %s5296, 4
      %s5298 = scalar_lea.vmem %s3, %s5297
      // Predicated region
      $region33: #{opnet_forward.11} parent=31 // pred_check
        %p5299 = pneg %p100
      $region34: #{opnet_forward.11} parent=31 // pred_check_branch
        %5301 = sbr.rel (%p5299) target = $region36
      $region35: #{opnet_forward.11} parent=31 // pred_region
        %s5302 = smul.u32 4, %s14
      $region36: #{opnet_forward.11} parent=31 // pred_fallthru
        _
    $region32: #{opnet_forward.11} parent=5 // pred_fallthru
      _
    %p5303 = scmp.le.s32.totalorder 2, %s9
    // Predicated region
    $region37: #{opnet_forward.11} parent=5 // pred_check
      %p5304 = pneg %p5303
    $region38: #{opnet_forward.11} parent=5 // pred_check_branch
      %5306 = sbr.rel (%p5304) target = $region40
    $region39: #{opnet_forward.11} parent=5 // pred_region
      %s5307 = ssub.s32 %s9, 2
      // Predicated region
      $region41: #{opnet_forward.11} parent=39 // pred_check
        %p5308 = pneg %p106
      $region42: #{opnet_forward.11} parent=39 // pred_check_branch
        %5310 = sbr.rel (%p5308) target = $region44
      $region43: #{opnet_forward.11} parent=39 // pred_region
        %s5311 = smul.u32 4, %s15
        %p5312 = scmp.lt.s32.totalorder %s5311, 7
        %s5313 = scalar_select %p5312, %s5311, 7
        %s5314 = smul.addr %s5313, 4
        %s5315 = smul.addr %s5314, 4
        %s5316 = scalar_lea.vmem %s3, %s5315
      $region44: #{opnet_forward.11} parent=39 // pred_fallthru
        _
    $region40: #{opnet_forward.11} parent=5 // pred_fallthru
      _
  $region6: #{opnet_forward.11} parent=0 // loop_footer
    %s13 = sadd.s32 1, %s9
  $region7: #{opnet_forward.11} parent=0 // loop_footer_branch
    %8 = sbr.rel target = $region3
  $region8: #{opnet_forward.11} parent=0 // loop_exit
    _

</llo_original>
